<compile_context>
chip_gen: v5e
topology: v5e:2x2
jax: 0.10.0
libtpu: 0.0.40
codegen_flags: <defaults>
</compile_context>

<pallas_src>
import functools

import jax
import jax.numpy as jnp
from jax.experimental import pallas as pl
from jax.experimental.pallas import tpu as pltpu

BN_EPS = 1e-5


def tnet_kernel(B, N,
                x_ref,
                w1, b1, g1, be1,
                w2, b2, g2, be2,
                w3, b3, g3, be3,
                b4, b5, b6, w7, b7,
                w4_hbm, w5_hbm, w6_hbm,
                out_ref,
                w4_buf, w5_buf, w6_buf, gf_scr, sem):
    """Single grid point over the full batch (training-mode BatchNorm couples
    all B*N rows)."""
    M = B * N
    f32 = jnp.float32
    bf16 = jnp.bfloat16

    # Kick off the large head-weight DMAs immediately so they overlap with
    # encoder layers 1-3 + BN (single grid point -> no auto-pipelining).
    cp4 = pltpu.make_async_copy(w4_hbm, w4_buf, sem.at[0]); cp4.start()
    cp5 = pltpu.make_async_copy(w5_hbm, w5_buf, sem.at[1]); cp5.start()
    cp6 = pltpu.make_async_copy(w6_hbm, w6_buf, sem.at[2]); cp6.start()

    def linear_bf16(h, w_val, b_val):
        # bf16 operands on the MXU, f32 accumulation, f32 bias add.
        return jnp.dot(h.astype(bf16), w_val, preferred_element_type=f32) + b_val

    def bn_relu(h, g_r, be_r):
        # Training-mode BatchNorm1d (batch stats, biased variance, eps=1e-5).
        # Two-pass mean / centered variance on the VPU/XLU: cheaper than the
        # ones-row MXU matmul trick and numerically cleaner.
        inv_m = 1.0 / M
        mean = jnp.sum(h, axis=0, keepdims=True) * inv_m
        c = h - mean
        var = jnp.sum(c * c, axis=0, keepdims=True) * inv_m
        scale = g_r[...] * jax.lax.rsqrt(var + BN_EPS)
        return jnp.maximum(c * scale + be_r[...], 0.0)

    x = x_ref[...]                                                # (M, 128) f32 (zero-padded K)

    # ---- encoder (layers 1-3 with BN + ReLU) --------------------------------
    h = jnp.dot(x, w1[...], preferred_element_type=f32) + b1[...]    # (M, 64)
    h = bn_relu(h, g1, be1)
    h = bn_relu(linear_bf16(h, w2[...], b2[...]), g2, be2)           # (M, 64)
    h = bn_relu(linear_bf16(h, w3[...], b3[...]), g3, be3)           # (M, 128)

    # ---- Linear(128, 1024) + per-cloud max pool -----------------------------
    cp4.wait()
    h4 = linear_bf16(h, w4_buf[...], b4[...])                        # (M, 1024)
    for b in range(B):   # B is a static Python int -> fully unrolled
        gf_scr[b:b + 1, :] = jnp.max(h4[b * N:(b + 1) * N, :],
                                     axis=0, keepdims=True)
    gfeat = gf_scr[...]                                              # (B, 1024)

    # ---- regression head ----------------------------------------------------
    cp5.wait()
    r = jnp.maximum(linear_bf16(gfeat, w5_buf[...], b5[...]), 0.0)   # (B, 512)
    cp6.wait()
    r = jnp.maximum(linear_bf16(r, w6_buf[...], b6[...]), 0.0)       # (B, 256)
    out_ref[...] = linear_bf16(r, w7[...], b7[...])                  # (B, in_dim^2)


def init_tnet_params(key, in_dim=3):
    """Deterministic synthetic parameters (not a checkpoint load).
    Matmul weights (layers 2..7) are stored in bf16; the tiny first layer stays
    f32.  Biases / BN affine params stay f32."""
    dims = [(in_dim, 64), (64, 64), (64, 128), (128, 1024),
            (1024, 512), (512, 256), (256, in_dim * in_dim)]
    keys = jax.random.split(key, 2 * len(dims))
    params = []
    bn_channels = [64, 64, 128]   # BN after the first three encoder linears
    for li, (din, dout) in enumerate(dims):
        w = (jax.random.normal(keys[2 * li], (din, dout), jnp.float32)
             * (1.0 / jnp.sqrt(din)))
        if li > 0:
            w = w.astype(jnp.bfloat16)
        b = jax.random.normal(keys[2 * li + 1], (1, dout), jnp.float32) * 0.01
        params.extend([w, b])
        if li < 3:
            c = bn_channels[li]
            gamma = 1.0 + 0.01 * jnp.arange(c, dtype=jnp.float32).reshape(1, c)
            beta = 0.01 * jnp.arange(c, dtype=jnp.float32).reshape(1, c)
            params.extend([gamma, beta])
    return params


@jax.jit
def tnet_forward(x, *params):
    (w1, b1, g1, be1, w2, b2, g2, be2, w3, b3, g3, be3,
     w4, b4, w5, b5, w6, b6, w7, b7) = params
    B, N, in_dim = x.shape
    M = B * N
    x2 = x.reshape(M, in_dim).astype(jnp.float32)

    # Zero-pad the tiny first-layer contraction to K=128 so Linear(in_dim,64)
    # runs on the MXU fully lane-aligned (the padded columns/rows contribute 0).
    K1 = 128
    x2p = jnp.pad(x2, ((0, 0), (0, K1 - in_dim)))
    w1p = jnp.pad(w1, ((0, K1 - in_dim), (0, 0)))

    vmem = pl.BlockSpec(memory_space=pltpu.MemorySpace.VMEM)
    hbm = pl.BlockSpec(memory_space=pl.ANY)   # raw HBM ref; DMA'd manually

    vmem_args = (x2p, w1p, b1, g1, be1, w2, b2, g2, be2, w3, b3, g3, be3,
                 b4, b5, b6, w7, b7)
    hbm_args = (w4, w5, w6)

    reg_flat = pl.pallas_call(
        functools.partial(tnet_kernel, B, N),
        out_shape=jax.ShapeDtypeStruct((B, in_dim * in_dim), jnp.float32),
        in_specs=[vmem] * len(vmem_args) + [hbm] * len(hbm_args),
        out_specs=vmem,
        scratch_shapes=[
            pltpu.VMEM(w4.shape, w4.dtype),          # w4 prefetch buffer
            pltpu.VMEM(w5.shape, w5.dtype),          # w5 prefetch buffer
            pltpu.VMEM(w6.shape, w6.dtype),          # w6 prefetch buffer
            pltpu.VMEM((B, 1024), jnp.float32),      # pooled global features
            pltpu.SemaphoreType.DMA((3,)),
        ],
        # Actual VMEM use is a few MiB; keep the limit well under v7x's 64 MiB
        # physical per-TC VMEM so compiler-internal scratch has headroom.
        compiler_params=pltpu.CompilerParams(vmem_limit_bytes=32 << 20),
    )(*vmem_args, *hbm_args)

    eye = jnp.eye(in_dim, dtype=jnp.float32)
    return reg_flat.reshape(B, in_dim, in_dim) + eye[None, :, :]


def tnet_reference(x, *params):
    """Pure-JAX reference mirroring the kernel math: training-mode BatchNorm in
    f32 (two-pass variance), matmul operands in the stored weight dtype (bf16
    for layers 2..7, f32 for layer 1) with f32 accumulation."""
    (w1, b1, g1, be1, w2, b2, g2, be2, w3, b3, g3, be3,
     w4, b4, w5, b5, w6, b6, w7, b7) = params
    B, N, in_dim = x.shape
    h = x.reshape(B * N, in_dim).astype(jnp.float32)

    def lin(h, w, b):
        return jnp.dot(h.astype(w.dtype), w,
                       preferred_element_type=jnp.float32) + b

    def bn_relu(h, g, be):
        mean = jnp.mean(h, axis=0, keepdims=True)
        var = jnp.mean(jnp.square(h - mean), axis=0, keepdims=True)
        return jnp.maximum((h - mean) * jax.lax.rsqrt(var + BN_EPS) * g + be, 0.0)

    h = bn_relu(lin(h, w1, b1), g1, be1)
    h = bn_relu(lin(h, w2, b2), g2, be2)
    h = bn_relu(lin(h, w3, b3), g3, be3)
    h = lin(h, w4, b4)
    g = jnp.max(h.reshape(B, N, -1), axis=1)
    r = jnp.maximum(lin(g, w5, b5), 0.0)
    r = jnp.maximum(lin(r, w6, b6), 0.0)
    r = lin(r, w7, b7)
    return r.reshape(B, in_dim, in_dim) + jnp.eye(in_dim, dtype=jnp.float32)[None]


if __name__ == "__main__":
    B, N, in_dim = 2, 200, 3   # pts_per_obj default = 200, in_dim default = 3

    key = jax.random.PRNGKey(0)
    kx, kp = jax.random.split(key)
    x = jax.random.normal(kx, (B, N, in_dim), dtype=jnp.float32)
    params = init_tnet_params(kp, in_dim=in_dim)

    out = jax.block_until_ready(tnet_forward(x, *params))
    assert out.shape == (B, in_dim, in_dim), out.shape

    ref = jax.block_until_ready(tnet_reference(x, *params))
    max_err = float(jnp.max(jnp.abs(out - ref)))
    assert max_err < 2e-2, f"mismatch vs reference: {max_err}"

    print("KERNEL_OK")
</pallas_src>

<mosaic_0001>
module attributes {stable_mosaic.version = 11 : i64} {
  func.func @tnet_kernel(%arg0: memref<400x128xf32, #tpu.memory_space<vmem>>, %arg1: memref<128x64xf32, #tpu.memory_space<vmem>>, %arg2: memref<1x64xf32, #tpu.memory_space<vmem>>, %arg3: memref<1x64xf32, #tpu.memory_space<vmem>>, %arg4: memref<1x64xf32, #tpu.memory_space<vmem>>, %arg5: memref<64x64xbf16, #tpu.memory_space<vmem>>, %arg6: memref<1x64xf32, #tpu.memory_space<vmem>>, %arg7: memref<1x64xf32, #tpu.memory_space<vmem>>, %arg8: memref<1x64xf32, #tpu.memory_space<vmem>>, %arg9: memref<64x128xbf16, #tpu.memory_space<vmem>>, %arg10: memref<1x128xf32, #tpu.memory_space<vmem>>, %arg11: memref<1x128xf32, #tpu.memory_space<vmem>>, %arg12: memref<1x128xf32, #tpu.memory_space<vmem>>, %arg13: memref<1x1024xf32, #tpu.memory_space<vmem>>, %arg14: memref<1x512xf32, #tpu.memory_space<vmem>>, %arg15: memref<1x256xf32, #tpu.memory_space<vmem>>, %arg16: memref<256x9xbf16, #tpu.memory_space<vmem>>, %arg17: memref<1x9xf32, #tpu.memory_space<vmem>>, %arg18: memref<128x1024xbf16, #tpu.memory_space<any>>, %arg19: memref<1024x512xbf16, #tpu.memory_space<any>>, %arg20: memref<512x256xbf16, #tpu.memory_space<any>>, %arg21: memref<2x9xf32, #tpu.memory_space<vmem>>, %arg22: memref<128x1024xbf16, #tpu.memory_space<vmem>>, %arg23: memref<1024x512xbf16, #tpu.memory_space<vmem>>, %arg24: memref<512x256xbf16, #tpu.memory_space<vmem>>, %arg25: memref<2x1024xf32, #tpu.memory_space<vmem>>, %arg26: memref<3x!tpu.dma_semaphore, #tpu.memory_space<semaphore_mem>>) attributes {dimension_semantics = [], scalar_prefetch = 0 : i64, scratch_operands = 5 : i64, tpu.core_type = #tpu.core_type<tc>} {
    %c0_i32 = arith.constant 0 : i32
    %0 = tpu.memref_slice %arg26[%c0_i32] : memref<3x!tpu.dma_semaphore, #tpu.memory_space<semaphore_mem>> -> memref<1x!tpu.dma_semaphore, #tpu.memory_space<semaphore_mem>>
    %1 = tpu.memref_squeeze %0 : memref<1x!tpu.dma_semaphore, #tpu.memory_space<semaphore_mem>> -> memref<!tpu.dma_semaphore, #tpu.memory_space<semaphore_mem>>
    tpu.enqueue_dma source(%arg18 : memref<128x1024xbf16, #tpu.memory_space<any>>) target(%arg22 : memref<128x1024xbf16, #tpu.memory_space<vmem>>) target_semaphore(%1 : memref<!tpu.dma_semaphore, #tpu.memory_space<semaphore_mem>>)
    %c1_i32 = arith.constant 1 : i32
    %2 = tpu.memref_slice %arg26[%c1_i32] : memref<3x!tpu.dma_semaphore, #tpu.memory_space<semaphore_mem>> -> memref<1x!tpu.dma_semaphore, #tpu.memory_space<semaphore_mem>>
    %3 = tpu.memref_squeeze %2 : memref<1x!tpu.dma_semaphore, #tpu.memory_space<semaphore_mem>> -> memref<!tpu.dma_semaphore, #tpu.memory_space<semaphore_mem>>
    tpu.enqueue_dma source(%arg19 : memref<1024x512xbf16, #tpu.memory_space<any>>) target(%arg23 : memref<1024x512xbf16, #tpu.memory_space<vmem>>) target_semaphore(%3 : memref<!tpu.dma_semaphore, #tpu.memory_space<semaphore_mem>>)
    %c2_i32 = arith.constant 2 : i32
    %4 = tpu.memref_slice %arg26[%c2_i32] : memref<3x!tpu.dma_semaphore, #tpu.memory_space<semaphore_mem>> -> memref<1x!tpu.dma_semaphore, #tpu.memory_space<semaphore_mem>>
    %5 = tpu.memref_squeeze %4 : memref<1x!tpu.dma_semaphore, #tpu.memory_space<semaphore_mem>> -> memref<!tpu.dma_semaphore, #tpu.memory_space<semaphore_mem>>
    tpu.enqueue_dma source(%arg20 : memref<512x256xbf16, #tpu.memory_space<any>>) target(%arg24 : memref<512x256xbf16, #tpu.memory_space<vmem>>) target_semaphore(%5 : memref<!tpu.dma_semaphore, #tpu.memory_space<semaphore_mem>>)
    %c0 = arith.constant 0 : index
    %c0_0 = arith.constant 0 : index
    %6 = vector.load %arg0[%c0, %c0_0] : memref<400x128xf32, #tpu.memory_space<vmem>>, vector<400x128xf32>
    %c0_1 = arith.constant 0 : index
    %c0_2 = arith.constant 0 : index
    %7 = vector.load %arg1[%c0_1, %c0_2] : memref<128x64xf32, #tpu.memory_space<vmem>>, vector<128x64xf32>
    %cst = arith.constant dense<0.000000e+00> : vector<400x64xf32>
    %8 = tpu.matmul %6, %7, %cst {dimension_numbers = #tpu.dot_dimension_numbers<[1], [0], [0], [1], [0, 0, 1, 1], [], []>} : vector<400x128xf32>, vector<128x64xf32>, vector<400x64xf32> -> vector<400x64xf32>
    %c0_3 = arith.constant 0 : index
    %c0_4 = arith.constant 0 : index
    %9 = vector.load %arg2[%c0_3, %c0_4] : memref<1x64xf32, #tpu.memory_space<vmem>>, vector<1x64xf32>
    %10 = vector.broadcast %9 : vector<1x64xf32> to vector<400x64xf32>
    %11 = arith.addf %8, %10 : vector<400x64xf32>
    %cst_5 = arith.constant dense<0.000000e+00> : vector<64xf32>
    %12 = vector.multi_reduction <add>, %11, %cst_5 [0] : vector<400x64xf32> to vector<64xf32>
    %13 = vector.shape_cast %12 : vector<64xf32> to vector<1x64xf32>
    %cst_6 = arith.constant 2.500000e-03 : f32
    %14 = vector.broadcast %cst_6 : f32 to vector<1x64xf32>
    %15 = arith.mulf %13, %14 : vector<1x64xf32>
    %16 = vector.broadcast %15 : vector<1x64xf32> to vector<400x64xf32>
    %17 = arith.subf %11, %16 : vector<400x64xf32>
    %18 = arith.mulf %17, %17 : vector<400x64xf32>
    %cst_7 = arith.constant dense<0.000000e+00> : vector<64xf32>
    %19 = vector.multi_reduction <add>, %18, %cst_7 [0] : vector<400x64xf32> to vector<64xf32>
    %20 = vector.shape_cast %19 : vector<64xf32> to vector<1x64xf32>
    %cst_8 = arith.constant 2.500000e-03 : f32
    %21 = vector.broadcast %cst_8 : f32 to vector<1x64xf32>
    %22 = arith.mulf %20, %21 : vector<1x64xf32>
    %c0_9 = arith.constant 0 : index
    %c0_10 = arith.constant 0 : index
    %23 = vector.load %arg3[%c0_9, %c0_10] : memref<1x64xf32, #tpu.memory_space<vmem>>, vector<1x64xf32>
    %cst_11 = arith.constant 9.99999974E-6 : f32
    %24 = vector.broadcast %cst_11 : f32 to vector<1x64xf32>
    %25 = arith.addf %22, %24 : vector<1x64xf32>
    %26 = math.rsqrt %25 : vector<1x64xf32>
    %27 = arith.mulf %23, %26 : vector<1x64xf32>
    %28 = vector.broadcast %27 : vector<1x64xf32> to vector<400x64xf32>
    %29 = arith.mulf %17, %28 : vector<400x64xf32>
    %c0_12 = arith.constant 0 : index
    %c0_13 = arith.constant 0 : index
    %30 = vector.load %arg4[%c0_12, %c0_13] : memref<1x64xf32, #tpu.memory_space<vmem>>, vector<1x64xf32>
    %31 = vector.broadcast %30 : vector<1x64xf32> to vector<400x64xf32>
    %32 = arith.addf %29, %31 : vector<400x64xf32>
    %cst_14 = arith.constant 0.000000e+00 : f32
    %33 = vector.broadcast %cst_14 : f32 to vector<400x64xf32>
    %34 = arith.maximumf %32, %33 : vector<400x64xf32>
    %c0_15 = arith.constant 0 : index
    %c0_16 = arith.constant 0 : index
    %35 = vector.load %arg5[%c0_15, %c0_16] : memref<64x64xbf16, #tpu.memory_space<vmem>>, vector<64x64xbf16>
    %c0_17 = arith.constant 0 : index
    %c0_18 = arith.constant 0 : index
    %36 = vector.load %arg6[%c0_17, %c0_18] : memref<1x64xf32, #tpu.memory_space<vmem>>, vector<1x64xf32>
    %37 = arith.truncf %34 : vector<400x64xf32> to vector<400x64xbf16>
    %cst_19 = arith.constant dense<0.000000e+00> : vector<400x64xf32>
    %38 = tpu.matmul %37, %35, %cst_19 {dimension_numbers = #tpu.dot_dimension_numbers<[1], [0], [0], [1], [0, 0, 1, 1], [], []>} : vector<400x64xbf16>, vector<64x64xbf16>, vector<400x64xf32> -> vector<400x64xf32>
    %39 = vector.broadcast %36 : vector<1x64xf32> to vector<400x64xf32>
    %40 = arith.addf %38, %39 : vector<400x64xf32>
    %cst_20 = arith.constant dense<0.000000e+00> : vector<64xf32>
    %41 = vector.multi_reduction <add>, %40, %cst_20 [0] : vector<400x64xf32> to vector<64xf32>
    %42 = vector.shape_cast %41 : vector<64xf32> to vector<1x64xf32>
    %cst_21 = arith.constant 2.500000e-03 : f32
    %43 = vector.broadcast %cst_21 : f32 to vector<1x64xf32>
    %44 = arith.mulf %42, %43 : vector<1x64xf32>
    %45 = vector.broadcast %44 : vector<1x64xf32> to vector<400x64xf32>
    %46 = arith.subf %40, %45 : vector<400x64xf32>
    %47 = arith.mulf %46, %46 : vector<400x64xf32>
    %cst_22 = arith.constant dense<0.000000e+00> : vector<64xf32>
    %48 = vector.multi_reduction <add>, %47, %cst_22 [0] : vector<400x64xf32> to vector<64xf32>
    %49 = vector.shape_cast %48 : vector<64xf32> to vector<1x64xf32>
    %cst_23 = arith.constant 2.500000e-03 : f32
    %50 = vector.broadcast %cst_23 : f32 to vector<1x64xf32>
    %51 = arith.mulf %49, %50 : vector<1x64xf32>
    %c0_24 = arith.constant 0 : index
    %c0_25 = arith.constant 0 : index
    %52 = vector.load %arg7[%c0_24, %c0_25] : memref<1x64xf32, #tpu.memory_space<vmem>>, vector<1x64xf32>
    %cst_26 = arith.constant 9.99999974E-6 : f32
    %53 = vector.broadcast %cst_26 : f32 to vector<1x64xf32>
    %54 = arith.addf %51, %53 : vector<1x64xf32>
    %55 = math.rsqrt %54 : vector<1x64xf32>
    %56 = arith.mulf %52, %55 : vector<1x64xf32>
    %57 = vector.broadcast %56 : vector<1x64xf32> to vector<400x64xf32>
    %58 = arith.mulf %46, %57 : vector<400x64xf32>
    %c0_27 = arith.constant 0 : index
    %c0_28 = arith.constant 0 : index
    %59 = vector.load %arg8[%c0_27, %c0_28] : memref<1x64xf32, #tpu.memory_space<vmem>>, vector<1x64xf32>
    %60 = vector.broadcast %59 : vector<1x64xf32> to vector<400x64xf32>
    %61 = arith.addf %58, %60 : vector<400x64xf32>
    %cst_29 = arith.constant 0.000000e+00 : f32
    %62 = vector.broadcast %cst_29 : f32 to vector<400x64xf32>
    %63 = arith.maximumf %61, %62 : vector<400x64xf32>
    %c0_30 = arith.constant 0 : index
    %c0_31 = arith.constant 0 : index
    %64 = vector.load %arg9[%c0_30, %c0_31] : memref<64x128xbf16, #tpu.memory_space<vmem>>, vector<64x128xbf16>
    %c0_32 = arith.constant 0 : index
    %c0_33 = arith.constant 0 : index
    %65 = vector.load %arg10[%c0_32, %c0_33] : memref<1x128xf32, #tpu.memory_space<vmem>>, vector<1x128xf32>
    %66 = arith.truncf %63 : vector<400x64xf32> to vector<400x64xbf16>
    %cst_34 = arith.constant dense<0.000000e+00> : vector<400x128xf32>
    %67 = tpu.matmul %66, %64, %cst_34 {dimension_numbers = #tpu.dot_dimension_numbers<[1], [0], [0], [1], [0, 0, 1, 1], [], []>} : vector<400x64xbf16>, vector<64x128xbf16>, vector<400x128xf32> -> vector<400x128xf32>
    %68 = vector.broadcast %65 : vector<1x128xf32> to vector<400x128xf32>
    %69 = arith.addf %67, %68 : vector<400x128xf32>
    %cst_35 = arith.constant dense<0.000000e+00> : vector<128xf32>
    %70 = vector.multi_reduction <add>, %69, %cst_35 [0] : vector<400x128xf32> to vector<128xf32>
    %71 = vector.shape_cast %70 : vector<128xf32> to vector<1x128xf32>
    %cst_36 = arith.constant 2.500000e-03 : f32
    %72 = vector.broadcast %cst_36 : f32 to vector<1x128xf32>
    %73 = arith.mulf %71, %72 : vector<1x128xf32>
    %74 = vector.broadcast %73 : vector<1x128xf32> to vector<400x128xf32>
    %75 = arith.subf %69, %74 : vector<400x128xf32>
    %76 = arith.mulf %75, %75 : vector<400x128xf32>
    %cst_37 = arith.constant dense<0.000000e+00> : vector<128xf32>
    %77 = vector.multi_reduction <add>, %76, %cst_37 [0] : vector<400x128xf32> to vector<128xf32>
    %78 = vector.shape_cast %77 : vector<128xf32> to vector<1x128xf32>
    %cst_38 = arith.constant 2.500000e-03 : f32
    %79 = vector.broadcast %cst_38 : f32 to vector<1x128xf32>
    %80 = arith.mulf %78, %79 : vector<1x128xf32>
    %c0_39 = arith.constant 0 : index
    %c0_40 = arith.constant 0 : index
    %81 = vector.load %arg11[%c0_39, %c0_40] : memref<1x128xf32, #tpu.memory_space<vmem>>, vector<1x128xf32>
    %cst_41 = arith.constant 9.99999974E-6 : f32
    %82 = vector.broadcast %cst_41 : f32 to vector<1x128xf32>
    %83 = arith.addf %80, %82 : vector<1x128xf32>
    %84 = math.rsqrt %83 : vector<1x128xf32>
    %85 = arith.mulf %81, %84 : vector<1x128xf32>
    %86 = vector.broadcast %85 : vector<1x128xf32> to vector<400x128xf32>
    %87 = arith.mulf %75, %86 : vector<400x128xf32>
    %c0_42 = arith.constant 0 : index
    %c0_43 = arith.constant 0 : index
    %88 = vector.load %arg12[%c0_42, %c0_43] : memref<1x128xf32, #tpu.memory_space<vmem>>, vector<1x128xf32>
    %89 = vector.broadcast %88 : vector<1x128xf32> to vector<400x128xf32>
    %90 = arith.addf %87, %89 : vector<400x128xf32>
    %cst_44 = arith.constant 0.000000e+00 : f32
    %91 = vector.broadcast %cst_44 : f32 to vector<400x128xf32>
    %92 = arith.maximumf %90, %91 : vector<400x128xf32>
    %c0_i32_45 = arith.constant 0 : i32
    %93 = tpu.memref_slice %arg26[%c0_i32_45] : memref<3x!tpu.dma_semaphore, #tpu.memory_space<semaphore_mem>> -> memref<1x!tpu.dma_semaphore, #tpu.memory_space<semaphore_mem>>
    %94 = tpu.memref_squeeze %93 : memref<1x!tpu.dma_semaphore, #tpu.memory_space<semaphore_mem>> -> memref<!tpu.dma_semaphore, #tpu.memory_space<semaphore_mem>>
    tpu.wait_dma2 semaphore(%94 : memref<!tpu.dma_semaphore, #tpu.memory_space<semaphore_mem>>) src(%arg18 : memref<128x1024xbf16, #tpu.memory_space<any>>) dst(%arg22 : memref<128x1024xbf16, #tpu.memory_space<vmem>>)
    %c0_46 = arith.constant 0 : index
    %c0_47 = arith.constant 0 : index
    %95 = vector.load %arg22[%c0_46, %c0_47] : memref<128x1024xbf16, #tpu.memory_space<vmem>>, vector<128x1024xbf16>
    %c0_48 = arith.constant 0 : index
    %c0_49 = arith.constant 0 : index
    %96 = vector.load %arg13[%c0_48, %c0_49] : memref<1x1024xf32, #tpu.memory_space<vmem>>, vector<1x1024xf32>
    %97 = arith.truncf %92 : vector<400x128xf32> to vector<400x128xbf16>
    %cst_50 = arith.constant dense<0.000000e+00> : vector<400x1024xf32>
    %98 = tpu.matmul %97, %95, %cst_50 {dimension_numbers = #tpu.dot_dimension_numbers<[1], [0], [0], [1], [0, 0, 1, 1], [], []>} : vector<400x128xbf16>, vector<128x1024xbf16>, vector<400x1024xf32> -> vector<400x1024xf32>
    %99 = vector.broadcast %96 : vector<1x1024xf32> to vector<400x1024xf32>
    %100 = arith.addf %98, %99 : vector<400x1024xf32>
    %101 = vector.extract_strided_slice %100 {offsets = [0, 0], sizes = [200, 1024], strides = [1, 1]} : vector<400x1024xf32> to vector<200x1024xf32>
    %cst_51 = arith.constant dense<0xFF800000> : vector<1024xf32>
    %102 = vector.multi_reduction <maximumf>, %101, %cst_51 [0] : vector<200x1024xf32> to vector<1024xf32>
    %103 = vector.shape_cast %102 : vector<1024xf32> to vector<1x1024xf32>
    %c0_52 = arith.constant 0 : index
    %c0_53 = arith.constant 0 : index
    %104 = vector.load %arg25[%c0_52, %c0_53] : memref<2x1024xf32, #tpu.memory_space<vmem>>, vector<1x1024xf32>
    tpu.vector_store %arg25[%c0_52, %c0_53], %103 {strides = array<i32>} : memref<2x1024xf32, #tpu.memory_space<vmem>>, vector<1x1024xf32>,
    %105 = vector.extract_strided_slice %100 {offsets = [200, 0], sizes = [200, 1024], strides = [1, 1]} : vector<400x1024xf32> to vector<200x1024xf32>
    %cst_54 = arith.constant dense<0xFF800000> : vector<1024xf32>
    %106 = vector.multi_reduction <maximumf>, %105, %cst_54 [0] : vector<200x1024xf32> to vector<1024xf32>
    %107 = vector.shape_cast %106 : vector<1024xf32> to vector<1x1024xf32>
    %c1 = arith.constant 1 : index
    %c0_55 = arith.constant 0 : index
    %108 = vector.load %arg25[%c1, %c0_55] : memref<2x1024xf32, #tpu.memory_space<vmem>>, vector<1x1024xf32>
    tpu.vector_store %arg25[%c1, %c0_55], %107 {strides = array<i32>} : memref<2x1024xf32, #tpu.memory_space<vmem>>, vector<1x1024xf32>,
    %c0_56 = arith.constant 0 : index
    %c0_57 = arith.constant 0 : index
    %109 = vector.load %arg25[%c0_56, %c0_57] : memref<2x1024xf32, #tpu.memory_space<vmem>>, vector<2x1024xf32>
    %c1_i32_58 = arith.constant 1 : i32
    %110 = tpu.memref_slice %arg26[%c1_i32_58] : memref<3x!tpu.dma_semaphore, #tpu.memory_space<semaphore_mem>> -> memref<1x!tpu.dma_semaphore, #tpu.memory_space<semaphore_mem>>
    %111 = tpu.memref_squeeze %110 : memref<1x!tpu.dma_semaphore, #tpu.memory_space<semaphore_mem>> -> memref<!tpu.dma_semaphore, #tpu.memory_space<semaphore_mem>>
    tpu.wait_dma2 semaphore(%111 : memref<!tpu.dma_semaphore, #tpu.memory_space<semaphore_mem>>) src(%arg19 : memref<1024x512xbf16, #tpu.memory_space<any>>) dst(%arg23 : memref<1024x512xbf16, #tpu.memory_space<vmem>>)
    %c0_59 = arith.constant 0 : index
    %c0_60 = arith.constant 0 : index
    %112 = vector.load %arg23[%c0_59, %c0_60] : memref<1024x512xbf16, #tpu.memory_space<vmem>>, vector<1024x512xbf16>
    %c0_61 = arith.constant 0 : index
    %c0_62 = arith.constant 0 : index
    %113 = vector.load %arg14[%c0_61, %c0_62] : memref<1x512xf32, #tpu.memory_space<vmem>>, vector<1x512xf32>
    %114 = arith.truncf %109 : vector<2x1024xf32> to vector<2x1024xbf16>
    %cst_63 = arith.constant dense<0.000000e+00> : vector<2x512xf32>
    %115 = tpu.matmul %114, %112, %cst_63 {dimension_numbers = #tpu.dot_dimension_numbers<[1], [0], [0], [1], [0, 0, 1, 1], [], []>} : vector<2x1024xbf16>, vector<1024x512xbf16>, vector<2x512xf32> -> vector<2x512xf32>
    %116 = vector.broadcast %113 : vector<1x512xf32> to vector<2x512xf32>
    %117 = arith.addf %115, %116 : vector<2x512xf32>
    %cst_64 = arith.constant 0.000000e+00 : f32
    %118 = vector.broadcast %cst_64 : f32 to vector<2x512xf32>
    %119 = arith.maximumf %117, %118 : vector<2x512xf32>
    %c2_i32_65 = arith.constant 2 : i32
    %120 = tpu.memref_slice %arg26[%c2_i32_65] : memref<3x!tpu.dma_semaphore, #tpu.memory_space<semaphore_mem>> -> memref<1x!tpu.dma_semaphore, #tpu.memory_space<semaphore_mem>>
    %121 = tpu.memref_squeeze %120 : memref<1x!tpu.dma_semaphore, #tpu.memory_space<semaphore_mem>> -> memref<!tpu.dma_semaphore, #tpu.memory_space<semaphore_mem>>
    tpu.wait_dma2 semaphore(%121 : memref<!tpu.dma_semaphore, #tpu.memory_space<semaphore_mem>>) src(%arg20 : memref<512x256xbf16, #tpu.memory_space<any>>) dst(%arg24 : memref<512x256xbf16, #tpu.memory_space<vmem>>)
    %c0_66 = arith.constant 0 : index
    %c0_67 = arith.constant 0 : index
    %122 = vector.load %arg24[%c0_66, %c0_67] : memref<512x256xbf16, #tpu.memory_space<vmem>>, vector<512x256xbf16>
    %c0_68 = arith.constant 0 : index
    %c0_69 = arith.constant 0 : index
    %123 = vector.load %arg15[%c0_68, %c0_69] : memref<1x256xf32, #tpu.memory_space<vmem>>, vector<1x256xf32>
    %124 = arith.truncf %119 : vector<2x512xf32> to vector<2x512xbf16>
    %cst_70 = arith.constant dense<0.000000e+00> : vector<2x256xf32>
    %125 = tpu.matmul %124, %122, %cst_70 {dimension_numbers = #tpu.dot_dimension_numbers<[1], [0], [0], [1], [0, 0, 1, 1], [], []>} : vector<2x512xbf16>, vector<512x256xbf16>, vector<2x256xf32> -> vector<2x256xf32>
    %126 = vector.broadcast %123 : vector<1x256xf32> to vector<2x256xf32>
    %127 = arith.addf %125, %126 : vector<2x256xf32>
    %cst_71 = arith.constant 0.000000e+00 : f32
    %128 = vector.broadcast %cst_71 : f32 to vector<2x256xf32>
    %129 = arith.maximumf %127, %128 : vector<2x256xf32>
    %c0_72 = arith.constant 0 : index
    %c0_73 = arith.constant 0 : index
    %130 = vector.load %arg16[%c0_72, %c0_73] : memref<256x9xbf16, #tpu.memory_space<vmem>>, vector<256x9xbf16>
    %c0_74 = arith.constant 0 : index
    %c0_75 = arith.constant 0 : index
    %131 = vector.load %arg17[%c0_74, %c0_75] : memref<1x9xf32, #tpu.memory_space<vmem>>, vector<1x9xf32>
    %132 = arith.truncf %129 : vector<2x256xf32> to vector<2x256xbf16>
    %cst_76 = arith.constant dense<0.000000e+00> : vector<2x9xf32>
    %133 = tpu.matmul %132, %130, %cst_76 {dimension_numbers = #tpu.dot_dimension_numbers<[1], [0], [0], [1], [0, 0, 1, 1], [], []>} : vector<2x256xbf16>, vector<256x9xbf16>, vector<2x9xf32> -> vector<2x9xf32>
    %134 = vector.broadcast %131 : vector<1x9xf32> to vector<2x9xf32>
    %135 = arith.addf %133, %134 : vector<2x9xf32>
    %c0_77 = arith.constant 0 : index
    %c0_78 = arith.constant 0 : index
    %136 = vector.load %arg21[%c0_77, %c0_78] : memref<2x9xf32, #tpu.memory_space<vmem>>, vector<2x9xf32>
    tpu.vector_store %arg21[%c0_77, %c0_78], %135 {strides = array<i32>} : memref<2x9xf32, #tpu.memory_space<vmem>>, vector<2x9xf32>,
    return
  }
}

</mosaic_0001>

<llo_original>
// kernel: tnet_forward.1
$region0: #{tnet_forward.1}
  #allocation0 [shape = 'u32[]', space=smem, size = 0x4, offset = 0x4, fixed_abs, tag = 'smem constant byte address 0x4 - core index']
  #allocation1 [shape = 'u32[72,128]{1,0:T(1,128)}', space=vmem, size = 0x9000, scoped, tag = 'internal scratch']
  #allocation2 [shape = 'bf16[128,1024]{1,0:T(8,128)(2,1)}', space=vmem, size = 0x40000, scoped, tag = 'scratch operand']
  #allocation3 [shape = 'bf16[1024,512]{1,0:T(8,128)(2,1)}', space=vmem, size = 0x100000, scoped, tag = 'scratch operand']
  #allocation4 [shape = 'bf16[512,256]{1,0:T(8,128)(2,1)}', space=vmem, size = 0x40000, scoped, tag = 'scratch operand']
  #allocation5 [shape = 'f32[2,1024]{1,0:T(2,128)}', space=vmem, size = 0x2000, scoped, tag = 'scratch operand']
  #allocation6 [shape = 's32[3]{0}', space=sflag, size = 0xc, scoped, tag = 'scratch operand']
  #allocation7 [shape = 's32[]', space=sflag, size = 0x4, offset = 0, fixed_abs, tag = 'sflag constant byte address 0x0 - dummy sync flag']
  #allocation8 [shape = 's32[]', space=sflag, size = 0x4, offset = 0, fixed_abs, tag = 'sflag constant byte address 0x0 - dummy sync flag']
  #allocation9 [shape = 's32[]', space=sflag, size = 0x4, offset = 0, fixed_abs, tag = 'sflag constant byte address 0x0 - dummy sync flag']
  #allocation10 [shape = 'u32[]', space=smem, size = 0x4, offset = 0x44, fixed_abs, tag = 'smem constant byte address 0x44 - assertion arg 0']
  #allocation11 [shape = 'u32[]', space=smem, size = 0x4, offset = 0x48, fixed_abs, tag = 'smem constant byte address 0x48 - assertion arg 1']
  #allocation12 [shape = 's32[]', space=sflag, size = 0x4, offset = 0, fixed_abs, tag = 'sflag constant byte address 0x0 - dummy sync flag']
  %s0 = inlined_call_operand.vmem [shape: f32[400,128], index: 0, kind: input, shape index: {}]
  %s1 = inlined_call_operand.vmem [shape: f32[128,64], index: 1, kind: input, shape index: {}]
  %s2 = inlined_call_operand.vmem [shape: f32[1,64], index: 2, kind: input, shape index: {}]
  %s3 = inlined_call_operand.vmem [shape: f32[1,64], index: 3, kind: input, shape index: {}]
  %s4 = inlined_call_operand.vmem [shape: f32[1,64], index: 4, kind: input, shape index: {}]
  %s5 = inlined_call_operand.vmem [shape: bf16[64,64], index: 5, kind: input, shape index: {}]
  %s6 = inlined_call_operand.vmem [shape: f32[1,64], index: 6, kind: input, shape index: {}]
  %s7 = inlined_call_operand.vmem [shape: f32[1,64], index: 7, kind: input, shape index: {}]
  %s8 = inlined_call_operand.vmem [shape: f32[1,64], index: 8, kind: input, shape index: {}]
  %s9 = inlined_call_operand.vmem [shape: bf16[64,128], index: 9, kind: input, shape index: {}]
  %s10 = inlined_call_operand.vmem [shape: f32[1,128], index: 10, kind: input, shape index: {}]
  %s11 = inlined_call_operand.vmem [shape: f32[1,128], index: 11, kind: input, shape index: {}]
  %s12 = inlined_call_operand.vmem [shape: f32[1,128], index: 12, kind: input, shape index: {}]
  %s13 = inlined_call_operand.vmem [shape: f32[1,1024], index: 13, kind: input, shape index: {}]
  %s14 = inlined_call_operand.vmem [shape: f32[1,512], index: 14, kind: input, shape index: {}]
  %s15 = inlined_call_operand.vmem [shape: f32[1,256], index: 15, kind: input, shape index: {}]
  %s16 = inlined_call_operand.vmem [shape: bf16[256,9], index: 16, kind: input, shape index: {}]
  %s17 = inlined_call_operand.vmem [shape: f32[1,9], index: 17, kind: input, shape index: {}]
  %s18 = inlined_call_operand.vmem [shape: bf16[128,1024], index: 18, kind: input, shape index: {}]
  %s19 = inlined_call_operand.hbm [shape: bf16[1024,512], index: 19, kind: input, shape index: {}]
  %s20 = inlined_call_operand.vmem [shape: bf16[512,256], index: 20, kind: input, shape index: {}]
  %s21 = inlined_call_operand.vmem [shape: f32[2,9], index: 21, kind: output, shape index: {}]
  %s22 = sld [smem:[#allocation0]]
  $region124: #{tnet_forward.1} parent=0
    _
  %s24 = ssub.s32 1, %s22
  %s25 = scalar_select 0, %s24, %s22
  // Predicated region
  $region2: #{tnet_forward.1} parent=0 // pred_check
    _
  $region3: #{tnet_forward.1} parent=0 // pred_check_branch
    %27 = sbr.rel (0) target = $region5
  $region4: #{tnet_forward.1} parent=0 // pred_region
    _
  $region5: #{tnet_forward.1} parent=0 // pred_fallthru
    _
  // Predicated region
  $region6: #{tnet_forward.1} parent=0 // pred_check
    _
  $region7: #{tnet_forward.1} parent=0 // pred_check_branch
    %29 = sbr.rel (0) target = $region9
  $region8: #{tnet_forward.1} parent=0 // pred_region
    _
  $region9: #{tnet_forward.1} parent=0 // pred_fallthru
    _
  // Predicated region
  $region10: #{tnet_forward.1} parent=0 // pred_check
    _
  $region11: #{tnet_forward.1} parent=0 // pred_check_branch
    %31 = sbr.rel (0) target = $region13
  $region12: #{tnet_forward.1} parent=0 // pred_region
    _
  $region13: #{tnet_forward.1} parent=0 // pred_fallthru
    _
  // Predicated region
  $region14: #{tnet_forward.1} parent=0 // pred_check
    _
  $region15: #{tnet_forward.1} parent=0 // pred_check_branch
    %33 = sbr.rel (0) target = $region17
  $region16: #{tnet_forward.1} parent=0 // pred_region
    _
  $region17: #{tnet_forward.1} parent=0 // pred_fallthru
    _
  // Predicated region
  $region18: #{tnet_forward.1} parent=0 // pred_check
    _
  $region19: #{tnet_forward.1} parent=0 // pred_check_branch
    %35 = sbr.rel (0) target = $region21
  $region20: #{tnet_forward.1} parent=0 // pred_region
    _
  $region21: #{tnet_forward.1} parent=0 // pred_fallthru
    _
  // Predicated region
  $region22: #{tnet_forward.1} parent=0 // pred_check
    _
  $region23: #{tnet_forward.1} parent=0 // pred_check_branch
    %37 = sbr.rel (0) target = $region25
  $region24: #{tnet_forward.1} parent=0 // pred_region
    _
  $region25: #{tnet_forward.1} parent=0 // pred_fallthru
    _
  // Predicated region
  $region26: #{tnet_forward.1} parent=0 // pred_check
    _
  $region27: #{tnet_forward.1} parent=0 // pred_check_branch
    %39 = sbr.rel (0) target = $region29
  $region28: #{tnet_forward.1} parent=0 // pred_region
    _
  $region29: #{tnet_forward.1} parent=0 // pred_fallthru
    _
  // Predicated region
  $region30: #{tnet_forward.1} parent=0 // pred_check
    _
  $region31: #{tnet_forward.1} parent=0 // pred_check_branch
    %41 = sbr.rel (0) target = $region33
  $region32: #{tnet_forward.1} parent=0 // pred_region
    _
  $region33: #{tnet_forward.1} parent=0 // pred_fallthru
    _
  // Predicated region
  $region34: #{tnet_forward.1} parent=0 // pred_check
    _
  $region35: #{tnet_forward.1} parent=0 // pred_check_branch
    %43 = sbr.rel (0) target = $region37
  $region36: #{tnet_forward.1} parent=0 // pred_region
    _
  $region37: #{tnet_forward.1} parent=0 // pred_fallthru
    _
  // Predicated region
  $region38: #{tnet_forward.1} parent=0 // pred_check
    _
  $region39: #{tnet_forward.1} parent=0 // pred_check_branch
    %45 = sbr.rel (0) target = $region41
  $region40: #{tnet_forward.1} parent=0 // pred_region
    _
  $region41: #{tnet_forward.1} parent=0 // pred_fallthru
    _
  // Predicated region
  $region42: #{tnet_forward.1} parent=0 // pred_check
    _
  $region43: #{tnet_forward.1} parent=0 // pred_check_branch
    %47 = sbr.rel (0) target = $region45
  $region44: #{tnet_forward.1} parent=0 // pred_region
    _
  $region45: #{tnet_forward.1} parent=0 // pred_fallthru
    _
  // Predicated region
  $region46: #{tnet_forward.1} parent=0 // pred_check
    _
  $region47: #{tnet_forward.1} parent=0 // pred_check_branch
    %49 = sbr.rel (0) target = $region49
  $region48: #{tnet_forward.1} parent=0 // pred_region
    _
  $region49: #{tnet_forward.1} parent=0 // pred_fallthru
    _
  // Predicated region
  $region50: #{tnet_forward.1} parent=0 // pred_check
    _
  $region51: #{tnet_forward.1} parent=0 // pred_check_branch
    %51 = sbr.rel (0) target = $region53
  $region52: #{tnet_forward.1} parent=0 // pred_region
    _
  $region53: #{tnet_forward.1} parent=0 // pred_fallthru
    _
  // Predicated region
  $region54: #{tnet_forward.1} parent=0 // pred_check
    _
  $region55: #{tnet_forward.1} parent=0 // pred_check_branch
    %53 = sbr.rel (0) target = $region57
  $region56: #{tnet_forward.1} parent=0 // pred_region
    _
  $region57: #{tnet_forward.1} parent=0 // pred_fallthru
    _
  // Predicated region
  $region58: #{tnet_forward.1} parent=0 // pred_check
    _
  $region59: #{tnet_forward.1} parent=0 // pred_check_branch
    %55 = sbr.rel (0) target = $region61
  $region60: #{tnet_forward.1} parent=0 // pred_region
    _
  $region61: #{tnet_forward.1} parent=0 // pred_fallthru
    _
  // Predicated region
  $region62: #{tnet_forward.1} parent=0 // pred_check
    _
  $region63: #{tnet_forward.1} parent=0 // pred_check_branch
    %57 = sbr.rel (0) target = $region65
  $region64: #{tnet_forward.1} parent=0 // pred_region
    _
  $region65: #{tnet_forward.1} parent=0 // pred_fallthru
    _
  // Predicated region
  $region66: #{tnet_forward.1} parent=0 // pred_check
    _
  $region67: #{tnet_forward.1} parent=0 // pred_check_branch
    %59 = sbr.rel (0) target = $region69
  $region68: #{tnet_forward.1} parent=0 // pred_region
    _
  $region69: #{tnet_forward.1} parent=0 // pred_fallthru
    _
  // Predicated region
  $region70: #{tnet_forward.1} parent=0 // pred_check
    _
  $region71: #{tnet_forward.1} parent=0 // pred_check_branch
    %61 = sbr.rel (0) target = $region73
  $region72: #{tnet_forward.1} parent=0 // pred_region
    _
  $region73: #{tnet_forward.1} parent=0 // pred_fallthru
    _
  // Predicated region
  $region74: #{tnet_forward.1} parent=0 // pred_check
    _
  $region75: #{tnet_forward.1} parent=0 // pred_check_branch
    %64 = sbr.rel (0) target = $region77
  $region76: #{tnet_forward.1} parent=0 // pred_region
    loop: start=0, step=1, limit=1
    $region78: #{tnet_forward.1} parent=76 // loop_pre_header
      _
    $region79: #{tnet_forward.1} parent=76 // loop_header
      %s66 = sphi 0, %s70
      %p67 = scmp.ge.s32.totalorder %s66, 1
      %s71 = sphi %s18, %s18
      %s72 = sphi [#allocation2], [#allocation2]
    $region80: #{tnet_forward.1} parent=76 // loop_header_branch
      %69 = sbr.rel (%p67) target = $region84
    $region81: #{tnet_forward.1} parent=76 // loop_body
      %v73 = vld [vmem:[%s71] sm:$0xff]
      %74 = vst [vmem:[%s72] sm:$0xff] %v73
      %v75 = vld [vmem:[%s71 + $0x8] sm:$0xff]
      %76 = vst [vmem:[%s72 + $0x8] sm:$0xff] %v75
      %v77 = vld [vmem:[%s71 + $0x10] sm:$0xff]
      %78 = vst [vmem:[%s72 + $0x10] sm:$0xff] %v77
      %v79 = vld [vmem:[%s71 + $0x18] sm:$0xff]
      %80 = vst [vmem:[%s72 + $0x18] sm:$0xff] %v79
      %v81 = vld [vmem:[%s71 + $0x20] sm:$0xff]
      %82 = vst [vmem:[%s72 + $0x20] sm:$0xff] %v81
      %v83 = vld [vmem:[%s71 + $0x28] sm:$0xff]
      %84 = vst [vmem:[%s72 + $0x28] sm:$0xff] %v83
      %v85 = vld [vmem:[%s71 + $0x30] sm:$0xff]
      %86 = vst [vmem:[%s72 + $0x30] sm:$0xff] %v85
      %v87 = vld [vmem:[%s71 + $0x38] sm:$0xff]
      %88 = vst [vmem:[%s72 + $0x38] sm:$0xff] %v87
      %v89 = vld [vmem:[%s71 + $0x40] sm:$0xff]
      %90 = vst [vmem:[%s72 + $0x40] sm:$0xff] %v89
      %v91 = vld [vmem:[%s71 + $0x48] sm:$0xff]
      %92 = vst [vmem:[%s72 + $0x48] sm:$0xff] %v91
      %v93 = vld [vmem:[%s71 + $0x50] sm:$0xff]
      %94 = vst [vmem:[%s72 + $0x50] sm:$0xff] %v93
      %v95 = vld [vmem:[%s71 + $0x58] sm:$0xff]
      %96 = vst [vmem:[%s72 + $0x58] sm:$0xff] %v95
      %v97 = vld [vmem:[%s71 + $0x60] sm:$0xff]
      %98 = vst [vmem:[%s72 + $0x60] sm:$0xff] %v97
      %v99 = vld [vmem:[%s71 + $0x68] sm:$0xff]
      %100 = vst [vmem:[%s72 + $0x68] sm:$0xff] %v99
      %v101 = vld [vmem:[%s71 + $0x70] sm:$0xff]
      %102 = vst [vmem:[%s72 + $0x70] sm:$0xff] %v101
      %v103 = vld [vmem:[%s71 + $0x78] sm:$0xff]
      %104 = vst [vmem:[%s72 + $0x78] sm:$0xff] %v103
      %v105 = vld [vmem:[%s71 + $0x80] sm:$0xff]
      %106 = vst [vmem:[%s72 + $0x80] sm:$0xff] %v105
      %v107 = vld [vmem:[%s71 + $0x88] sm:$0xff]
      %108 = vst [vmem:[%s72 + $0x88] sm:$0xff] %v107
      %v109 = vld [vmem:[%s71 + $0x90] sm:$0xff]
      %110 = vst [vmem:[%s72 + $0x90] sm:$0xff] %v109
      %v111 = vld [vmem:[%s71 + $0x98] sm:$0xff]
      %112 = vst [vmem:[%s72 + $0x98] sm:$0xff] %v111
      %v113 = vld [vmem:[%s71 + $0xa0] sm:$0xff]
      %114 = vst [vmem:[%s72 + $0xa0] sm:$0xff] %v113
      %v115 = vld [vmem:[%s71 + $0xa8] sm:$0xff]
      %116 = vst [vmem:[%s72 + $0xa8] sm:$0xff] %v115
      %v117 = vld [vmem:[%s71 + $0xb0] sm:$0xff]
      %118 = vst [vmem:[%s72 + $0xb0] sm:$0xff] %v117
      %v119 = vld [vmem:[%s71 + $0xb8] sm:$0xff]
      %120 = vst [vmem:[%s72 + $0xb8] sm:$0xff] %v119
      %v121 = vld [vmem:[%s71 + $0xc0] sm:$0xff]
      %122 = vst [vmem:[%s72 + $0xc0] sm:$0xff] %v121
      %v123 = vld [vmem:[%s71 + $0xc8] sm:$0xff]
      %124 = vst [vmem:[%s72 + $0xc8] sm:$0xff] %v123
      %v125 = vld [vmem:[%s71 + $0xd0] sm:$0xff]
      %126 = vst [vmem:[%s72 + $0xd0] sm:$0xff] %v125
      %v127 = vld [vmem:[%s71 + $0xd8] sm:$0xff]
      %128 = vst [vmem:[%s72 + $0xd8] sm:$0xff] %v127
      %v129 = vld [vmem:[%s71 + $0xe0] sm:$0xff]
      %130 = vst [vmem:[%s72 + $0xe0] sm:$0xff] %v129
      %v131 = vld [vmem:[%s71 + $0xe8] sm:$0xff]
      %132 = vst [vmem:[%s72 + $0xe8] sm:$0xff] %v131
      %v133 = vld [vmem:[%s71 + $0xf0] sm:$0xff]
      %134 = vst [vmem:[%s72 + $0xf0] sm:$0xff] %v133
      %v135 = vld [vmem:[%s71 + $0xf8] sm:$0xff]
      %136 = vst [vmem:[%s72 + $0xf8] sm:$0xff] %v135
      %v137 = vld [vmem:[%s71 + $0x100] sm:$0xff]
      %138 = vst [vmem:[%s72 + $0x100] sm:$0xff] %v137
      %v139 = vld [vmem:[%s71 + $0x108] sm:$0xff]
      %140 = vst [vmem:[%s72 + $0x108] sm:$0xff] %v139
      %v141 = vld [vmem:[%s71 + $0x110] sm:$0xff]
      %142 = vst [vmem:[%s72 + $0x110] sm:$0xff] %v141
      %v143 = vld [vmem:[%s71 + $0x118] sm:$0xff]
      %144 = vst [vmem:[%s72 + $0x118] sm:$0xff] %v143
      %v145 = vld [vmem:[%s71 + $0x120] sm:$0xff]
      %146 = vst [vmem:[%s72 + $0x120] sm:$0xff] %v145
      %v147 = vld [vmem:[%s71 + $0x128] sm:$0xff]
      %148 = vst [vmem:[%s72 + $0x128] sm:$0xff] %v147
      %v149 = vld [vmem:[%s71 + $0x130] sm:$0xff]
      %150 = vst [vmem:[%s72 + $0x130] sm:$0xff] %v149
      %v151 = vld [vmem:[%s71 + $0x138] sm:$0xff]
      %152 = vst [vmem:[%s72 + $0x138] sm:$0xff] %v151
      %v153 = vld [vmem:[%s71 + $0x140] sm:$0xff]
      %154 = vst [vmem:[%s72 + $0x140] sm:$0xff] %v153
      %v155 = vld [vmem:[%s71 + $0x148] sm:$0xff]
      %156 = vst [vmem:[%s72 + $0x148] sm:$0xff] %v155
      %v157 = vld [vmem:[%s71 + $0x150] sm:$0xff]
      %158 = vst [vmem:[%s72 + $0x150] sm:$0xff] %v157
      %v159 = vld [vmem:[%s71 + $0x158] sm:$0xff]
      %160 = vst [vmem:[%s72 + $0x158] sm:$0xff] %v159
      %v161 = vld [vmem:[%s71 + $0x160] sm:$0xff]
      %162 = vst [vmem:[%s72 + $0x160] sm:$0xff] %v161
      %v163 = vld [vmem:[%s71 + $0x168] sm:$0xff]
      %164 = vst [vmem:[%s72 + $0x168] sm:$0xff] %v163
      %v165 = vld [vmem:[%s71 + $0x170] sm:$0xff]
      %166 = vst [vmem:[%s72 + $0x170] sm:$0xff] %v165
      %v167 = vld [vmem:[%s71 + $0x178] sm:$0xff]
      %168 = vst [vmem:[%s72 + $0x178] sm:$0xff] %v167
      %v169 = vld [vmem:[%s71 + $0x180] sm:$0xff]
      %170 = vst [vmem:[%s72 + $0x180] sm:$0xff] %v169
      %v171 = vld [vmem:[%s71 + $0x188] sm:$0xff]
      %172 = vst [vmem:[%s72 + $0x188] sm:$0xff] %v171
      %v173 = vld [vmem:[%s71 + $0x190] sm:$0xff]
      %174 = vst [vmem:[%s72 + $0x190] sm:$0xff] %v173
      %v175 = vld [vmem:[%s71 + $0x198] sm:$0xff]
      %176 = vst [vmem:[%s72 + $0x198] sm:$0xff] %v175
      %v177 = vld [vmem:[%s71 + $0x1a0] sm:$0xff]
      %178 = vst [vmem:[%s72 + $0x1a0] sm:$0xff] %v177
      %v179 = vld [vmem:[%s71 + $0x1a8] sm:$0xff]
      %180 = vst [vmem:[%s72 + $0x1a8] sm:$0xff] %v179
      %v181 = vld [vmem:[%s71 + $0x1b0] sm:$0xff]
      %182 = vst [vmem:[%s72 + $0x1b0] sm:$0xff] %v181
      %v183 = vld [vmem:[%s71 + $0x1b8] sm:$0xff]
      %184 = vst [vmem:[%s72 + $0x1b8] sm:$0xff] %v183
      %v185 = vld [vmem:[%s71 + $0x1c0] sm:$0xff]
      %186 = vst [vmem:[%s72 + $0x1c0] sm:$0xff] %v185
      %v187 = vld [vmem:[%s71 + $0x1c8] sm:$0xff]
      %188 = vst [vmem:[%s72 + $0x1c8] sm:$0xff] %v187
      %v189 = vld [vmem:[%s71 + $0x1d0] sm:$0xff]
      %190 = vst [vmem:[%s72 + $0x1d0] sm:$0xff] %v189
      %v191 = vld [vmem:[%s71 + $0x1d8] sm:$0xff]
      %192 = vst [vmem:[%s72 + $0x1d8] sm:$0xff] %v191
      %v193 = vld [vmem:[%s71 + $0x1e0] sm:$0xff]
      %194 = vst [vmem:[%s72 + $0x1e0] sm:$0xff] %v193
      %v195 = vld [vmem:[%s71 + $0x1e8] sm:$0xff]
      %196 = vst [vmem:[%s72 + $0x1e8] sm:$0xff] %v195
      %v197 = vld [vmem:[%s71 + $0x1f0] sm:$0xff]
      %198 = vst [vmem:[%s72 + $0x1f0] sm:$0xff] %v197
      %v199 = vld [vmem:[%s71 + $0x1f8] sm:$0xff]
      %200 = vst [vmem:[%s72 + $0x1f8] sm:$0xff] %v199
    $region82: #{tnet_forward.1} parent=76 // loop_footer
      %s70 = sadd.s32 1, %s66
    $region83: #{tnet_forward.1} parent=76 // loop_footer_branch
      %65 = sbr.rel target = $region79
    $region84: #{tnet_forward.1} parent=76 // loop_exit
      _
  $region77: #{tnet_forward.1} parent=0 // pred_fallthru
    _
  // Predicated region
  $region85: #{tnet_forward.1} parent=0 // pred_check
    _
  $region86: #{tnet_forward.1} parent=0 // pred_check_branch
    %202 = sbr.rel target = $region88
  $region87: #{tnet_forward.1} parent=0 // pred_region
    _
  $region88: #{tnet_forward.1} parent=0 // pred_fallthru
    _
  // Predicated region
  $region89: #{tnet_forward.1} parent=0 // pred_check
    _
  $region90: #{tnet_forward.1} parent=0 // pred_check_branch
    %205 = sbr.rel (0) target = $region92
  $region91: #{tnet_forward.1} parent=0 // pred_region
    %206 = vsyncadd [#allocation6], 8192
  $region92: #{tnet_forward.1} parent=0 // pred_fallthru
    _
  %s207 = scalar_lea.sflag [#allocation6], 1
  // Predicated region
  $region93: #{tnet_forward.1} parent=0 // pred_check
    _
  $region94: #{tnet_forward.1} parent=0 // pred_check_branch
    %209 = sbr.rel target = $region96
  $region95: #{tnet_forward.1} parent=0 // pred_region
    %210 = sst [smem:[#allocation10]] [#allocation9]
    %211 = sst [smem:[#allocation11]] [#allocation8]
  $region96: #{tnet_forward.1} parent=0 // pred_fallthru
    _
  %213 = shalt.err (0)
  %s215 = sshll.u32 %s19, 4
  %s216 = int_to_ptr.hbm [resolvable:$true] %s215
  %s217 = sshll.u32 [#allocation3], 4
  %s218 = int_to_ptr.vmem [resolvable:$true] %s217
  %220 = dma.hbm_to_vmem [thread:$0]  %s216, 32768, %s218, %s207
  %s221 = scalar_lea.sflag [#allocation6], 2
  // Predicated region
  $region97: #{tnet_forward.1} parent=0 // pred_check
    _
  $region98: #{tnet_forward.1} parent=0 // pred_check_branch
    %223 = sbr.rel (0) target = $region100
  $region99: #{tnet_forward.1} parent=0 // pred_region
    loop: start=0, step=1, limit=1
    $region101: #{tnet_forward.1} parent=99 // loop_pre_header
      _
    $region102: #{tnet_forward.1} parent=99 // loop_header
      %s225 = sphi 0, %s229
      %p226 = scmp.ge.s32.totalorder %s225, 1
      %s230 = sphi %s20, %s20
      %s231 = sphi [#allocation4], [#allocation4]
    $region103: #{tnet_forward.1} parent=99 // loop_header_branch
      %228 = sbr.rel (%p226) target = $region107
    $region104: #{tnet_forward.1} parent=99 // loop_body
      %v232 = vld [vmem:[%s230] sm:$0xff]
      %233 = vst [vmem:[%s231] sm:$0xff] %v232
      %v234 = vld [vmem:[%s230 + $0x8] sm:$0xff]
      %235 = vst [vmem:[%s231 + $0x8] sm:$0xff] %v234
      %v236 = vld [vmem:[%s230 + $0x10] sm:$0xff]
      %237 = vst [vmem:[%s231 + $0x10] sm:$0xff] %v236
      %v238 = vld [vmem:[%s230 + $0x18] sm:$0xff]
      %239 = vst [vmem:[%s231 + $0x18] sm:$0xff] %v238
      %v240 = vld [vmem:[%s230 + $0x20] sm:$0xff]
      %241 = vst [vmem:[%s231 + $0x20] sm:$0xff] %v240
      %v242 = vld [vmem:[%s230 + $0x28] sm:$0xff]
      %243 = vst [vmem:[%s231 + $0x28] sm:$0xff] %v242
      %v244 = vld [vmem:[%s230 + $0x30] sm:$0xff]
      %245 = vst [vmem:[%s231 + $0x30] sm:$0xff] %v244
      %v246 = vld [vmem:[%s230 + $0x38] sm:$0xff]
      %247 = vst [vmem:[%s231 + $0x38] sm:$0xff] %v246
      %v248 = vld [vmem:[%s230 + $0x40] sm:$0xff]
      %249 = vst [vmem:[%s231 + $0x40] sm:$0xff] %v248
      %v250 = vld [vmem:[%s230 + $0x48] sm:$0xff]
      %251 = vst [vmem:[%s231 + $0x48] sm:$0xff] %v250
      %v252 = vld [vmem:[%s230 + $0x50] sm:$0xff]
      %253 = vst [vmem:[%s231 + $0x50] sm:$0xff] %v252
      %v254 = vld [vmem:[%s230 + $0x58] sm:$0xff]
      %255 = vst [vmem:[%s231 + $0x58] sm:$0xff] %v254
      %v256 = vld [vmem:[%s230 + $0x60] sm:$0xff]
      %257 = vst [vmem:[%s231 + $0x60] sm:$0xff] %v256
      %v258 = vld [vmem:[%s230 + $0x68] sm:$0xff]
      %259 = vst [vmem:[%s231 + $0x68] sm:$0xff] %v258
      %v260 = vld [vmem:[%s230 + $0x70] sm:$0xff]
      %261 = vst [vmem:[%s231 + $0x70] sm:$0xff] %v260
      %v262 = vld [vmem:[%s230 + $0x78] sm:$0xff]
      %263 = vst [vmem:[%s231 + $0x78] sm:$0xff] %v262
      %v264 = vld [vmem:[%s230 + $0x80] sm:$0xff]
      %265 = vst [vmem:[%s231 + $0x80] sm:$0xff] %v264
      %v266 = vld [vmem:[%s230 + $0x88] sm:$0xff]
      %267 = vst [vmem:[%s231 + $0x88] sm:$0xff] %v266
      %v268 = vld [vmem:[%s230 + $0x90] sm:$0xff]
      %269 = vst [vmem:[%s231 + $0x90] sm:$0xff] %v268
      %v270 = vld [vmem:[%s230 + $0x98] sm:$0xff]
      %271 = vst [vmem:[%s231 + $0x98] sm:$0xff] %v270
      %v272 = vld [vmem:[%s230 + $0xa0] sm:$0xff]
      %273 = vst [vmem:[%s231 + $0xa0] sm:$0xff] %v272
      %v274 = vld [vmem:[%s230 + $0xa8] sm:$0xff]
      %275 = vst [vmem:[%s231 + $0xa8] sm:$0xff] %v274
      %v276 = vld [vmem:[%s230 + $0xb0] sm:$0xff]
      %277 = vst [vmem:[%s231 + $0xb0] sm:$0xff] %v276
      %v278 = vld [vmem:[%s230 + $0xb8] sm:$0xff]
      %279 = vst [vmem:[%s231 + $0xb8] sm:$0xff] %v278
      %v280 = vld [vmem:[%s230 + $0xc0] sm:$0xff]
      %281 = vst [vmem:[%s231 + $0xc0] sm:$0xff] %v280
      %v282 = vld [vmem:[%s230 + $0xc8] sm:$0xff]
      %283 = vst [vmem:[%s231 + $0xc8] sm:$0xff] %v282
      %v284 = vld [vmem:[%s230 + $0xd0] sm:$0xff]
      %285 = vst [vmem:[%s231 + $0xd0] sm:$0xff] %v284
      %v286 = vld [vmem:[%s230 + $0xd8] sm:$0xff]
      %287 = vst [vmem:[%s231 + $0xd8] sm:$0xff] %v286
      %v288 = vld [vmem:[%s230 + $0xe0] sm:$0xff]
      %289 = vst [vmem:[%s231 + $0xe0] sm:$0xff] %v288
      %v290 = vld [vmem:[%s230 + $0xe8] sm:$0xff]
      %291 = vst [vmem:[%s231 + $0xe8] sm:$0xff] %v290
      %v292 = vld [vmem:[%s230 + $0xf0] sm:$0xff]
      %293 = vst [vmem:[%s231 + $0xf0] sm:$0xff] %v292
      %v294 = vld [vmem:[%s230 + $0xf8] sm:$0xff]
      %295 = vst [vmem:[%s231 + $0xf8] sm:$0xff] %v294
      %v296 = vld [vmem:[%s230 + $0x100] sm:$0xff]
      %297 = vst [vmem:[%s231 + $0x100] sm:$0xff] %v296
      %v298 = vld [vmem:[%s230 + $0x108] sm:$0xff]
      %299 = vst [vmem:[%s231 + $0x108] sm:$0xff] %v298
      %v300 = vld [vmem:[%s230 + $0x110] sm:$0xff]
      %301 = vst [vmem:[%s231 + $0x110] sm:$0xff] %v300
      %v302 = vld [vmem:[%s230 + $0x118] sm:$0xff]
      %303 = vst [vmem:[%s231 + $0x118] sm:$0xff] %v302
      %v304 = vld [vmem:[%s230 + $0x120] sm:$0xff]
      %305 = vst [vmem:[%s231 + $0x120] sm:$0xff] %v304
      %v306 = vld [vmem:[%s230 + $0x128] sm:$0xff]
      %307 = vst [vmem:[%s231 + $0x128] sm:$0xff] %v306
      %v308 = vld [vmem:[%s230 + $0x130] sm:$0xff]
      %309 = vst [vmem:[%s231 + $0x130] sm:$0xff] %v308
      %v310 = vld [vmem:[%s230 + $0x138] sm:$0xff]
      %311 = vst [vmem:[%s231 + $0x138] sm:$0xff] %v310
      %v312 = vld [vmem:[%s230 + $0x140] sm:$0xff]
      %313 = vst [vmem:[%s231 + $0x140] sm:$0xff] %v312
      %v314 = vld [vmem:[%s230 + $0x148] sm:$0xff]
      %315 = vst [vmem:[%s231 + $0x148] sm:$0xff] %v314
      %v316 = vld [vmem:[%s230 + $0x150] sm:$0xff]
      %317 = vst [vmem:[%s231 + $0x150] sm:$0xff] %v316
      %v318 = vld [vmem:[%s230 + $0x158] sm:$0xff]
      %319 = vst [vmem:[%s231 + $0x158] sm:$0xff] %v318
      %v320 = vld [vmem:[%s230 + $0x160] sm:$0xff]
      %321 = vst [vmem:[%s231 + $0x160] sm:$0xff] %v320
      %v322 = vld [vmem:[%s230 + $0x168] sm:$0xff]
      %323 = vst [vmem:[%s231 + $0x168] sm:$0xff] %v322
      %v324 = vld [vmem:[%s230 + $0x170] sm:$0xff]
      %325 = vst [vmem:[%s231 + $0x170] sm:$0xff] %v324
      %v326 = vld [vmem:[%s230 + $0x178] sm:$0xff]
      %327 = vst [vmem:[%s231 + $0x178] sm:$0xff] %v326
      %v328 = vld [vmem:[%s230 + $0x180] sm:$0xff]
      %329 = vst [vmem:[%s231 + $0x180] sm:$0xff] %v328
      %v330 = vld [vmem:[%s230 + $0x188] sm:$0xff]
      %331 = vst [vmem:[%s231 + $0x188] sm:$0xff] %v330
      %v332 = vld [vmem:[%s230 + $0x190] sm:$0xff]
      %333 = vst [vmem:[%s231 + $0x190] sm:$0xff] %v332
      %v334 = vld [vmem:[%s230 + $0x198] sm:$0xff]
      %335 = vst [vmem:[%s231 + $0x198] sm:$0xff] %v334
      %v336 = vld [vmem:[%s230 + $0x1a0] sm:$0xff]
      %337 = vst [vmem:[%s231 + $0x1a0] sm:$0xff] %v336
      %v338 = vld [vmem:[%s230 + $0x1a8] sm:$0xff]
      %339 = vst [vmem:[%s231 + $0x1a8] sm:$0xff] %v338
      %v340 = vld [vmem:[%s230 + $0x1b0] sm:$0xff]
      %341 = vst [vmem:[%s231 + $0x1b0] sm:$0xff] %v340
      %v342 = vld [vmem:[%s230 + $0x1b8] sm:$0xff]
      %343 = vst [vmem:[%s231 + $0x1b8] sm:$0xff] %v342
      %v344 = vld [vmem:[%s230 + $0x1c0] sm:$0xff]
      %345 = vst [vmem:[%s231 + $0x1c0] sm:$0xff] %v344
      %v346 = vld [vmem:[%s230 + $0x1c8] sm:$0xff]
      %347 = vst [vmem:[%s231 + $0x1c8] sm:$0xff] %v346
      %v348 = vld [vmem:[%s230 + $0x1d0] sm:$0xff]
      %349 = vst [vmem:[%s231 + $0x1d0] sm:$0xff] %v348
      %v350 = vld [vmem:[%s230 + $0x1d8] sm:$0xff]
      %351 = vst [vmem:[%s231 + $0x1d8] sm:$0xff] %v350
      %v352 = vld [vmem:[%s230 + $0x1e0] sm:$0xff]
      %353 = vst [vmem:[%s231 + $0x1e0] sm:$0xff] %v352
      %v354 = vld [vmem:[%s230 + $0x1e8] sm:$0xff]
      %355 = vst [vmem:[%s231 + $0x1e8] sm:$0xff] %v354
      %v356 = vld [vmem:[%s230 + $0x1f0] sm:$0xff]
      %357 = vst [vmem:[%s231 + $0x1f0] sm:$0xff] %v356
      %v358 = vld [vmem:[%s230 + $0x1f8] sm:$0xff]
      %359 = vst [vmem:[%s231 + $0x1f8] sm:$0xff] %v358
    $region105: #{tnet_forward.1} parent=99 // loop_footer
      %s229 = sadd.s32 1, %s225
    $region106: #{tnet_forward.1} parent=99 // loop_footer_branch
      %224 = sbr.rel target = $region102
    $region107: #{tnet_forward.1} parent=99 // loop_exit
      _
  $region100: #{tnet_forward.1} parent=0 // pred_fallthru
    _
  // Predicated region
  $region108: #{tnet_forward.1} parent=0 // pred_check
    _
  $region109: #{tnet_forward.1} parent=0 // pred_check_branch
    %361 = sbr.rel target = $region111
  $region110: #{tnet_forward.1} parent=0 // pred_region
    _
  $region111: #{tnet_forward.1} parent=0 // pred_fallthru
    _
  // Predicated region
  $region112: #{tnet_forward.1} parent=0 // pred_check
    _
  $region113: #{tnet_forward.1} parent=0 // pred_check_branch
    %364 = sbr.rel (0) target = $region115
  $region114: #{tnet_forward.1} parent=0 // pred_region
    %365 = vsyncadd %s221, 8192
  $region115: #{tnet_forward.1} parent=0 // pred_fallthru
    _
  %v366 = vld [vmem:[%s0] sm:$0xff]
  %v367 = vld [vmem:[%s0 + $0x8] sm:$0xff]
  %v368 = vld [vmem:[%s0 + $0x10] sm:$0xff]
  %v369 = vld [vmem:[%s0 + $0x18] sm:$0xff]
  %v370 = vld [vmem:[%s0 + $0x20] sm:$0xff]
  %v371 = vld [vmem:[%s0 + $0x28] sm:$0xff]
  %v372 = vld [vmem:[%s0 + $0x30] sm:$0xff]
  %v373 = vld [vmem:[%s0 + $0x38] sm:$0xff]
  %v374 = vld [vmem:[%s0 + $0x40] sm:$0xff]
  %v375 = vld [vmem:[%s0 + $0x48] sm:$0xff]
  %v376 = vld [vmem:[%s0 + $0x50] sm:$0xff]
  %v377 = vld [vmem:[%s0 + $0x58] sm:$0xff]
  %v378 = vld [vmem:[%s0 + $0x60] sm:$0xff]
  %v379 = vld [vmem:[%s0 + $0x68] sm:$0xff]
  %v380 = vld [vmem:[%s0 + $0x70] sm:$0xff]
  %v381 = vld [vmem:[%s0 + $0x78] sm:$0xff]
  %v382 = vld [vmem:[%s0 + $0x80] sm:$0xff]
  %v383 = vld [vmem:[%s0 + $0x88] sm:$0xff]
  %v384 = vld [vmem:[%s0 + $0x90] sm:$0xff]
  %v385 = vld [vmem:[%s0 + $0x98] sm:$0xff]
  %v386 = vld [vmem:[%s0 + $0xa0] sm:$0xff]
  %v387 = vld [vmem:[%s0 + $0xa8] sm:$0xff]
  %v388 = vld [vmem:[%s0 + $0xb0] sm:$0xff]
  %v389 = vld [vmem:[%s0 + $0xb8] sm:$0xff]
  %v390 = vld [vmem:[%s0 + $0xc0] sm:$0xff]
  %v391 = vld [vmem:[%s0 + $0xc8] sm:$0xff]
  %v392 = vld [vmem:[%s0 + $0xd0] sm:$0xff]
  %v393 = vld [vmem:[%s0 + $0xd8] sm:$0xff]
  %v394 = vld [vmem:[%s0 + $0xe0] sm:$0xff]
  %v395 = vld [vmem:[%s0 + $0xe8] sm:$0xff]
  %v396 = vld [vmem:[%s0 + $0xf0] sm:$0xff]
  %v397 = vld [vmem:[%s0 + $0xf8] sm:$0xff]
  %v398 = vld [vmem:[%s0 + $0x100] sm:$0xff]
  %v399 = vld [vmem:[%s0 + $0x108] sm:$0xff]
  %v400 = vld [vmem:[%s0 + $0x110] sm:$0xff]
  %v401 = vld [vmem:[%s0 + $0x118] sm:$0xff]
  %v402 = vld [vmem:[%s0 + $0x120] sm:$0xff]
  %v403 = vld [vmem:[%s0 + $0x128] sm:$0xff]
  %v404 = vld [vmem:[%s0 + $0x130] sm:$0xff]
  %v405 = vld [vmem:[%s0 + $0x138] sm:$0xff]
  %v406 = vld [vmem:[%s0 + $0x140] sm:$0xff]
  %v407 = vld [vmem:[%s0 + $0x148] sm:$0xff]
  %v408 = vld [vmem:[%s0 + $0x150] sm:$0xff]
  %v409 = vld [vmem:[%s0 + $0x158] sm:$0xff]
  %v410 = vld [vmem:[%s0 + $0x160] sm:$0xff]
  %v411 = vld [vmem:[%s0 + $0x168] sm:$0xff]
  %v412 = vld [vmem:[%s0 + $0x170] sm:$0xff]
  %v413 = vld [vmem:[%s0 + $0x178] sm:$0xff]
  %v414 = vld [vmem:[%s0 + $0x180] sm:$0xff]
  %v415 = vld [vmem:[%s0 + $0x188] sm:$0xff]
  %v416 = vld [vmem:[%s1] sm:$0xff]
  %v417 = vld [vmem:[%s1 + $0x8] sm:$0xff]
  %v418 = vld [vmem:[%s1 + $0x10] sm:$0xff]
  %v419 = vld [vmem:[%s1 + $0x18] sm:$0xff]
  %v420 = vld [vmem:[%s1 + $0x20] sm:$0xff]
  %v421 = vld [vmem:[%s1 + $0x28] sm:$0xff]
  %v422 = vld [vmem:[%s1 + $0x30] sm:$0xff]
  %v423 = vld [vmem:[%s1 + $0x38] sm:$0xff]
  %v424 = vld [vmem:[%s1 + $0x40] sm:$0xff]
  %v425 = vld [vmem:[%s1 + $0x48] sm:$0xff]
  %v426 = vld [vmem:[%s1 + $0x50] sm:$0xff]
  %v427 = vld [vmem:[%s1 + $0x58] sm:$0xff]
  %v428 = vld [vmem:[%s1 + $0x60] sm:$0xff]
  %v429 = vld [vmem:[%s1 + $0x68] sm:$0xff]
  %v430 = vld [vmem:[%s1 + $0x70] sm:$0xff]
  %v431 = vld [vmem:[%s1 + $0x78] sm:$0xff]
  %v432 = vld [vmem:[%s2] sm:$0x1]
  %v434 = vperm.slane %v432, 0
  %436 = vmatpush.msra.mxu0 %v431
  %437 = vmatpush.msra.mxu0 %v430
  %438 = vmatpush.msra.mxu0 %v429
  %439 = vmatpush.msra.mxu0 %v428
  %440 = vmatpush.msra.mxu0 %v427
  %441 = vmatpush.msra.mxu0 %v426
  %442 = vmatpush.msra.mxu0 %v425
  %443 = vmatpush.msra.mxu0 %v424
  %444 = vmatpush.msra.mxu0 %v423
  %445 = vmatpush.msra.mxu0 %v422
  %446 = vmatpush.msra.mxu0 %v421
  %447 = vmatpush.msra.mxu0 %v420
  %448 = vmatpush.msra.mxu0 %v419
  %449 = vmatpush.msra.mxu0 %v418
  %450 = vmatpush.msra.mxu0 %v417
  %451 = vmatpush.msra.mxu0 %v416
  %452 = vmatmul.f32.gmra.mxu0 %v366
  %v453 = vpop.f32.mrf.mxu0
  %v454 = vadd.f32 %v434, %v453
  %455 = vmatmul.f32.gmra.mxu0 %v367
  %v456 = vpop.f32.mrf.mxu0
  %v457 = vadd.f32 %v434, %v456
  %458 = vmatmul.f32.gmra.mxu0 %v368
  %v459 = vpop.f32.mrf.mxu0
  %v460 = vadd.f32 %v434, %v459
  %461 = vmatmul.f32.gmra.mxu0 %v369
  %v462 = vpop.f32.mrf.mxu0
  %v463 = vadd.f32 %v434, %v462
  %464 = vmatmul.f32.gmra.mxu0 %v370
  %v465 = vpop.f32.mrf.mxu0
  %v466 = vadd.f32 %v434, %v465
  %467 = vmatmul.f32.gmra.mxu0 %v371
  %v468 = vpop.f32.mrf.mxu0
  %v469 = vadd.f32 %v434, %v468
  %470 = vmatmul.f32.gmra.mxu0 %v372
  %v471 = vpop.f32.mrf.mxu0
  %v472 = vadd.f32 %v434, %v471
  %473 = vmatmul.f32.gmra.mxu0 %v373
  %v474 = vpop.f32.mrf.mxu0
  %v475 = vadd.f32 %v434, %v474
  %476 = vmatmul.f32.gmra.mxu0 %v374
  %v477 = vpop.f32.mrf.mxu0
  %v478 = vadd.f32 %v434, %v477
  %479 = vmatmul.f32.gmra.mxu0 %v375
  %v480 = vpop.f32.mrf.mxu0
  %v481 = vadd.f32 %v434, %v480
  %482 = vmatmul.f32.gmra.mxu0 %v376
  %v483 = vpop.f32.mrf.mxu0
  %v484 = vadd.f32 %v434, %v483
  %485 = vmatmul.f32.gmra.mxu0 %v377
  %v486 = vpop.f32.mrf.mxu0
  %v487 = vadd.f32 %v434, %v486
  %488 = vmatmul.f32.gmra.mxu0 %v378
  %v489 = vpop.f32.mrf.mxu0
  %v490 = vadd.f32 %v434, %v489
  %491 = vmatmul.f32.gmra.mxu0 %v379
  %v492 = vpop.f32.mrf.mxu0
  %v493 = vadd.f32 %v434, %v492
  %494 = vmatmul.f32.gmra.mxu0 %v380
  %v495 = vpop.f32.mrf.mxu0
  %v496 = vadd.f32 %v434, %v495
  %497 = vmatmul.f32.gmra.mxu0 %v381
  %v498 = vpop.f32.mrf.mxu0
  %v499 = vadd.f32 %v434, %v498
  %500 = vmatmul.f32.gmra.mxu0 %v382
  %v501 = vpop.f32.mrf.mxu0
  %v502 = vadd.f32 %v434, %v501
  %503 = vmatmul.f32.gmra.mxu0 %v383
  %v504 = vpop.f32.mrf.mxu0
  %v505 = vadd.f32 %v434, %v504
  %506 = vmatmul.f32.gmra.mxu0 %v384
  %v507 = vpop.f32.mrf.mxu0
  %v508 = vadd.f32 %v434, %v507
  %509 = vmatmul.f32.gmra.mxu0 %v385
  %v510 = vpop.f32.mrf.mxu0
  %v511 = vadd.f32 %v434, %v510
  %512 = vmatmul.f32.gmra.mxu0 %v386
  %v513 = vpop.f32.mrf.mxu0
  %v514 = vadd.f32 %v434, %v513
  %515 = vmatmul.f32.gmra.mxu0 %v387
  %v516 = vpop.f32.mrf.mxu0
  %v517 = vadd.f32 %v434, %v516
  %518 = vmatmul.f32.gmra.mxu0 %v388
  %v519 = vpop.f32.mrf.mxu0
  %v520 = vadd.f32 %v434, %v519
  %521 = vmatmul.f32.gmra.mxu0 %v389
  %v522 = vpop.f32.mrf.mxu0
  %v523 = vadd.f32 %v434, %v522
  %524 = vmatmul.f32.gmra.mxu0 %v390
  %v525 = vpop.f32.mrf.mxu0
  %v526 = vadd.f32 %v434, %v525
  %527 = vmatmul.f32.gmra.mxu0 %v391
  %v528 = vpop.f32.mrf.mxu0
  %v529 = vadd.f32 %v434, %v528
  %530 = vmatmul.f32.gmra.mxu0 %v392
  %v531 = vpop.f32.mrf.mxu0
  %v532 = vadd.f32 %v434, %v531
  %533 = vmatmul.f32.gmra.mxu0 %v393
  %v534 = vpop.f32.mrf.mxu0
  %v535 = vadd.f32 %v434, %v534
  %536 = vmatmul.f32.gmra.mxu0 %v394
  %v537 = vpop.f32.mrf.mxu0
  %v538 = vadd.f32 %v434, %v537
  %539 = vmatmul.f32.gmra.mxu0 %v395
  %v540 = vpop.f32.mrf.mxu0
  %v541 = vadd.f32 %v434, %v540
  %542 = vmatmul.f32.gmra.mxu0 %v396
  %v543 = vpop.f32.mrf.mxu0
  %v544 = vadd.f32 %v434, %v543
  %545 = vmatmul.f32.gmra.mxu0 %v397
  %v546 = vpop.f32.mrf.mxu0
  %v547 = vadd.f32 %v434, %v546
  %548 = vmatmul.f32.gmra.mxu0 %v398
  %v549 = vpop.f32.mrf.mxu0
  %v550 = vadd.f32 %v434, %v549
  %551 = vmatmul.f32.gmra.mxu0 %v399
  %v552 = vpop.f32.mrf.mxu0
  %v553 = vadd.f32 %v434, %v552
  %554 = vmatmul.f32.gmra.mxu0 %v400
  %v555 = vpop.f32.mrf.mxu0
  %v556 = vadd.f32 %v434, %v555
  %557 = vmatmul.f32.gmra.mxu0 %v401
  %v558 = vpop.f32.mrf.mxu0
  %v559 = vadd.f32 %v434, %v558
  %560 = vmatmul.f32.gmra.mxu0 %v402
  %v561 = vpop.f32.mrf.mxu0
  %v562 = vadd.f32 %v434, %v561
  %563 = vmatmul.f32.gmra.mxu0 %v403
  %v564 = vpop.f32.mrf.mxu0
  %v565 = vadd.f32 %v434, %v564
  %566 = vmatmul.f32.gmra.mxu0 %v404
  %v567 = vpop.f32.mrf.mxu0
  %v568 = vadd.f32 %v434, %v567
  %569 = vmatmul.f32.gmra.mxu0 %v405
  %v570 = vpop.f32.mrf.mxu0
  %v571 = vadd.f32 %v434, %v570
  %572 = vmatmul.f32.gmra.mxu0 %v406
  %v573 = vpop.f32.mrf.mxu0
  %v574 = vadd.f32 %v434, %v573
  %575 = vmatmul.f32.gmra.mxu0 %v407
  %v576 = vpop.f32.mrf.mxu0
  %v577 = vadd.f32 %v434, %v576
  %578 = vmatmul.f32.gmra.mxu0 %v408
  %v579 = vpop.f32.mrf.mxu0
  %v580 = vadd.f32 %v434, %v579
  %581 = vmatmul.f32.gmra.mxu0 %v409
  %v582 = vpop.f32.mrf.mxu0
  %v583 = vadd.f32 %v434, %v582
  %584 = vmatmul.f32.gmra.mxu0 %v410
  %v585 = vpop.f32.mrf.mxu0
  %v586 = vadd.f32 %v434, %v585
  %587 = vmatmul.f32.gmra.mxu0 %v411
  %v588 = vpop.f32.mrf.mxu0
  %v589 = vadd.f32 %v434, %v588
  %590 = vmatmul.f32.gmra.mxu0 %v412
  %v591 = vpop.f32.mrf.mxu0
  %v592 = vadd.f32 %v434, %v591
  %593 = vmatmul.f32.gmra.mxu0 %v413
  %v594 = vpop.f32.mrf.mxu0
  %v595 = vadd.f32 %v434, %v594
  %596 = vmatmul.f32.gmra.mxu0 %v414
  %v597 = vpop.f32.mrf.mxu0
  %v598 = vadd.f32 %v434, %v597
  %599 = vmatmul.f32.gmra.mxu0 %v415
  %v600 = vpop.f32.mrf.mxu0
  %v601 = vadd.f32 %v434, %v600
  %602 = vdwg.mxu0
  %vm603 = vcmask 523264
  %v604 = vsel %vm603, %v454, 0.0
  %v605 = vsel %vm603, %v457, 0.0
  %v606 = vadd.f32 %v604, %v605
  %v607 = vsel %vm603, %v460, 0.0
  %v608 = vadd.f32 %v606, %v607
  %v609 = vsel %vm603, %v463, 0.0
  %v610 = vadd.f32 %v608, %v609
  %v611 = vsel %vm603, %v466, 0.0
  %v612 = vadd.f32 %v610, %v611
  %v613 = vsel %vm603, %v469, 0.0
  %v614 = vadd.f32 %v612, %v613
  %v615 = vsel %vm603, %v472, 0.0
  %v616 = vadd.f32 %v614, %v615
  %v617 = vsel %vm603, %v475, 0.0
  %v618 = vadd.f32 %v616, %v617
  %v619 = vsel %vm603, %v478, 0.0
  %v620 = vadd.f32 %v618, %v619
  %v621 = vsel %vm603, %v481, 0.0
  %v622 = vadd.f32 %v620, %v621
  %v623 = vsel %vm603, %v484, 0.0
  %v624 = vadd.f32 %v622, %v623
  %v625 = vsel %vm603, %v487, 0.0
  %v626 = vadd.f32 %v624, %v625
  %v627 = vsel %vm603, %v490, 0.0
  %v628 = vadd.f32 %v626, %v627
  %v629 = vsel %vm603, %v493, 0.0
  %v630 = vadd.f32 %v628, %v629
  %v631 = vsel %vm603, %v496, 0.0
  %v632 = vadd.f32 %v630, %v631
  %v633 = vsel %vm603, %v499, 0.0
  %v634 = vadd.f32 %v632, %v633
  %v635 = vsel %vm603, %v502, 0.0
  %v636 = vadd.f32 %v634, %v635
  %v637 = vsel %vm603, %v505, 0.0
  %v638 = vadd.f32 %v636, %v637
  %v639 = vsel %vm603, %v508, 0.0
  %v640 = vadd.f32 %v638, %v639
  %v641 = vsel %vm603, %v511, 0.0
  %v642 = vadd.f32 %v640, %v641
  %v643 = vsel %vm603, %v514, 0.0
  %v644 = vadd.f32 %v642, %v643
  %v645 = vsel %vm603, %v517, 0.0
  %v646 = vadd.f32 %v644, %v645
  %v647 = vsel %vm603, %v520, 0.0
  %v648 = vadd.f32 %v646, %v647
  %v649 = vsel %vm603, %v523, 0.0
  %v650 = vadd.f32 %v648, %v649
  %v651 = vsel %vm603, %v526, 0.0
  %v652 = vadd.f32 %v650, %v651
  %v653 = vsel %vm603, %v529, 0.0
  %v654 = vadd.f32 %v652, %v653
  %v655 = vsel %vm603, %v532, 0.0
  %v656 = vadd.f32 %v654, %v655
  %v657 = vsel %vm603, %v535, 0.0
  %v658 = vadd.f32 %v656, %v657
  %v659 = vsel %vm603, %v538, 0.0
  %v660 = vadd.f32 %v658, %v659
  %v661 = vsel %vm603, %v541, 0.0
  %v662 = vadd.f32 %v660, %v661
  %v663 = vsel %vm603, %v544, 0.0
  %v664 = vadd.f32 %v662, %v663
  %v665 = vsel %vm603, %v547, 0.0
  %v666 = vadd.f32 %v664, %v665
  %v667 = vsel %vm603, %v550, 0.0
  %v668 = vadd.f32 %v666, %v667
  %v669 = vsel %vm603, %v553, 0.0
  %v670 = vadd.f32 %v668, %v669
  %v671 = vsel %vm603, %v556, 0.0
  %v672 = vadd.f32 %v670, %v671
  %v673 = vsel %vm603, %v559, 0.0
  %v674 = vadd.f32 %v672, %v673
  %v675 = vsel %vm603, %v562, 0.0
  %v676 = vadd.f32 %v674, %v675
  %v677 = vsel %vm603, %v565, 0.0
  %v678 = vadd.f32 %v676, %v677
  %v679 = vsel %vm603, %v568, 0.0
  %v680 = vadd.f32 %v678, %v679
  %v681 = vsel %vm603, %v571, 0.0
  %v682 = vadd.f32 %v680, %v681
  %v683 = vsel %vm603, %v574, 0.0
  %v684 = vadd.f32 %v682, %v683
  %v685 = vsel %vm603, %v577, 0.0
  %v686 = vadd.f32 %v684, %v685
  %v687 = vsel %vm603, %v580, 0.0
  %v688 = vadd.f32 %v686, %v687
  %v689 = vsel %vm603, %v583, 0.0
  %v690 = vadd.f32 %v688, %v689
  %v691 = vsel %vm603, %v586, 0.0
  %v692 = vadd.f32 %v690, %v691
  %v693 = vsel %vm603, %v589, 0.0
  %v694 = vadd.f32 %v692, %v693
  %v695 = vsel %vm603, %v592, 0.0
  %v696 = vadd.f32 %v694, %v695
  %v697 = vsel %vm603, %v595, 0.0
  %v698 = vadd.f32 %v696, %v697
  %v699 = vsel %vm603, %v598, 0.0
  %v700 = vadd.f32 %v698, %v699
  %v701 = vsel %vm603, %v601, 0.0
  %v702 = vadd.f32 %v700, %v701
  %v703 = vrot.slane %v702, 4
  %v704 = vadd.f32 %v702, %v703
  %v705 = vrot.slane %v704, 2
  %v706 = vadd.f32 %v704, %v705
  %v707 = vrot.slane %v706, 1
  %v708 = vadd.f32 %v706, %v707
  %v709 = vmul.f32 %v708, 0.0025
  %v710 = vsub.f32 %v454, %v709
  %v711 = vsub.f32 %v457, %v709
  %v712 = vsub.f32 %v460, %v709
  %v713 = vsub.f32 %v463, %v709
  %v714 = vsub.f32 %v466, %v709
  %v715 = vsub.f32 %v469, %v709
  %v716 = vsub.f32 %v472, %v709
  %v717 = vsub.f32 %v475, %v709
  %v718 = vsub.f32 %v478, %v709
  %v719 = vsub.f32 %v481, %v709
  %v720 = vsub.f32 %v484, %v709
  %v721 = vsub.f32 %v487, %v709
  %v722 = vsub.f32 %v490, %v709
  %v723 = vsub.f32 %v493, %v709
  %v724 = vsub.f32 %v496, %v709
  %v725 = vsub.f32 %v499, %v709
  %v726 = vsub.f32 %v502, %v709
  %v727 = vsub.f32 %v505, %v709
  %v728 = vsub.f32 %v508, %v709
  %v729 = vsub.f32 %v511, %v709
  %v730 = vsub.f32 %v514, %v709
  %v731 = vsub.f32 %v517, %v709
  %v732 = vsub.f32 %v520, %v709
  %v733 = vsub.f32 %v523, %v709
  %v734 = vsub.f32 %v526, %v709
  %v735 = vsub.f32 %v529, %v709
  %v736 = vsub.f32 %v532, %v709
  %v737 = vsub.f32 %v535, %v709
  %v738 = vsub.f32 %v538, %v709
  %v739 = vsub.f32 %v541, %v709
  %v740 = vsub.f32 %v544, %v709
  %v741 = vsub.f32 %v547, %v709
  %v742 = vsub.f32 %v550, %v709
  %v743 = vsub.f32 %v553, %v709
  %v744 = vsub.f32 %v556, %v709
  %v745 = vsub.f32 %v559, %v709
  %v746 = vsub.f32 %v562, %v709
  %v747 = vsub.f32 %v565, %v709
  %v748 = vsub.f32 %v568, %v709
  %v749 = vsub.f32 %v571, %v709
  %v750 = vsub.f32 %v574, %v709
  %v751 = vsub.f32 %v577, %v709
  %v752 = vsub.f32 %v580, %v709
  %v753 = vsub.f32 %v583, %v709
  %v754 = vsub.f32 %v586, %v709
  %v755 = vsub.f32 %v589, %v709
  %v756 = vsub.f32 %v592, %v709
  %v757 = vsub.f32 %v595, %v709
  %v758 = vsub.f32 %v598, %v709
  %v759 = vsub.f32 %v601, %v709
  %v760 = vmul.f32 %v710, %v710
  %v761 = vmul.f32 %v711, %v711
  %v762 = vmul.f32 %v712, %v712
  %v763 = vmul.f32 %v713, %v713
  %v764 = vmul.f32 %v714, %v714
  %v765 = vmul.f32 %v715, %v715
  %v766 = vmul.f32 %v716, %v716
  %v767 = vmul.f32 %v717, %v717
  %v768 = vmul.f32 %v718, %v718
  %v769 = vmul.f32 %v719, %v719
  %v770 = vmul.f32 %v720, %v720
  %v771 = vmul.f32 %v721, %v721
  %v772 = vmul.f32 %v722, %v722
  %v773 = vmul.f32 %v723, %v723
  %v774 = vmul.f32 %v724, %v724
  %v775 = vmul.f32 %v725, %v725
  %v776 = vmul.f32 %v726, %v726
  %v777 = vmul.f32 %v727, %v727
  %v778 = vmul.f32 %v728, %v728
  %v779 = vmul.f32 %v729, %v729
  %v780 = vmul.f32 %v730, %v730
  %v781 = vmul.f32 %v731, %v731
  %v782 = vmul.f32 %v732, %v732
  %v783 = vmul.f32 %v733, %v733
  %v784 = vmul.f32 %v734, %v734
  %v785 = vmul.f32 %v735, %v735
  %v786 = vmul.f32 %v736, %v736
  %v787 = vmul.f32 %v737, %v737
  %v788 = vmul.f32 %v738, %v738
  %v789 = vmul.f32 %v739, %v739
  %v790 = vmul.f32 %v740, %v740
  %v791 = vmul.f32 %v741, %v741
  %v792 = vmul.f32 %v742, %v742
  %v793 = vmul.f32 %v743, %v743
  %v794 = vmul.f32 %v744, %v744
  %v795 = vmul.f32 %v745, %v745
  %v796 = vmul.f32 %v746, %v746
  %v797 = vmul.f32 %v747, %v747
  %v798 = vmul.f32 %v748, %v748
  %v799 = vmul.f32 %v749, %v749
  %v800 = vmul.f32 %v750, %v750
  %v801 = vmul.f32 %v751, %v751
  %v802 = vmul.f32 %v752, %v752
  %v803 = vmul.f32 %v753, %v753
  %v804 = vmul.f32 %v754, %v754
  %v805 = vmul.f32 %v755, %v755
  %v806 = vmul.f32 %v756, %v756
  %v807 = vmul.f32 %v757, %v757
  %v808 = vmul.f32 %v758, %v758
  %v809 = vmul.f32 %v759, %v759
  %v810 = vsel %vm603, %v760, 0.0
  %v811 = vsel %vm603, %v761, 0.0
  %v812 = vadd.f32 %v810, %v811
  %v813 = vsel %vm603, %v762, 0.0
  %v814 = vadd.f32 %v812, %v813
  %v815 = vsel %vm603, %v763, 0.0
  %v816 = vadd.f32 %v814, %v815
  %v817 = vsel %vm603, %v764, 0.0
  %v818 = vadd.f32 %v816, %v817
  %v819 = vsel %vm603, %v765, 0.0
  %v820 = vadd.f32 %v818, %v819
  %v821 = vsel %vm603, %v766, 0.0
  %v822 = vadd.f32 %v820, %v821
  %v823 = vsel %vm603, %v767, 0.0
  %v824 = vadd.f32 %v822, %v823
  %v825 = vsel %vm603, %v768, 0.0
  %v826 = vadd.f32 %v824, %v825
  %v827 = vsel %vm603, %v769, 0.0
  %v828 = vadd.f32 %v826, %v827
  %v829 = vsel %vm603, %v770, 0.0
  %v830 = vadd.f32 %v828, %v829
  %v831 = vsel %vm603, %v771, 0.0
  %v832 = vadd.f32 %v830, %v831
  %v833 = vsel %vm603, %v772, 0.0
  %v834 = vadd.f32 %v832, %v833
  %v835 = vsel %vm603, %v773, 0.0
  %v836 = vadd.f32 %v834, %v835
  %v837 = vsel %vm603, %v774, 0.0
  %v838 = vadd.f32 %v836, %v837
  %v839 = vsel %vm603, %v775, 0.0
  %v840 = vadd.f32 %v838, %v839
  %v841 = vsel %vm603, %v776, 0.0
  %v842 = vadd.f32 %v840, %v841
  %v843 = vsel %vm603, %v777, 0.0
  %v844 = vadd.f32 %v842, %v843
  %v845 = vsel %vm603, %v778, 0.0
  %v846 = vadd.f32 %v844, %v845
  %v847 = vsel %vm603, %v779, 0.0
  %v848 = vadd.f32 %v846, %v847
  %v849 = vsel %vm603, %v780, 0.0
  %v850 = vadd.f32 %v848, %v849
  %v851 = vsel %vm603, %v781, 0.0
  %v852 = vadd.f32 %v850, %v851
  %v853 = vsel %vm603, %v782, 0.0
  %v854 = vadd.f32 %v852, %v853
  %v855 = vsel %vm603, %v783, 0.0
  %v856 = vadd.f32 %v854, %v855
  %v857 = vsel %vm603, %v784, 0.0
  %v858 = vadd.f32 %v856, %v857
  %v859 = vsel %vm603, %v785, 0.0
  %v860 = vadd.f32 %v858, %v859
  %v861 = vsel %vm603, %v786, 0.0
  %v862 = vadd.f32 %v860, %v861
  %v863 = vsel %vm603, %v787, 0.0
  %v864 = vadd.f32 %v862, %v863
  %v865 = vsel %vm603, %v788, 0.0
  %v866 = vadd.f32 %v864, %v865
  %v867 = vsel %vm603, %v789, 0.0
  %v868 = vadd.f32 %v866, %v867
  %v869 = vsel %vm603, %v790, 0.0
  %v870 = vadd.f32 %v868, %v869
  %v871 = vsel %vm603, %v791, 0.0
  %v872 = vadd.f32 %v870, %v871
  %v873 = vsel %vm603, %v792, 0.0
  %v874 = vadd.f32 %v872, %v873
  %v875 = vsel %vm603, %v793, 0.0
  %v876 = vadd.f32 %v874, %v875
  %v877 = vsel %vm603, %v794, 0.0
  %v878 = vadd.f32 %v876, %v877
  %v879 = vsel %vm603, %v795, 0.0
  %v880 = vadd.f32 %v878, %v879
  %v881 = vsel %vm603, %v796, 0.0
  %v882 = vadd.f32 %v880, %v881
  %v883 = vsel %vm603, %v797, 0.0
  %v884 = vadd.f32 %v882, %v883
  %v885 = vsel %vm603, %v798, 0.0
  %v886 = vadd.f32 %v884, %v885
  %v887 = vsel %vm603, %v799, 0.0
  %v888 = vadd.f32 %v886, %v887
  %v889 = vsel %vm603, %v800, 0.0
  %v890 = vadd.f32 %v888, %v889
  %v891 = vsel %vm603, %v801, 0.0
  %v892 = vadd.f32 %v890, %v891
  %v893 = vsel %vm603, %v802, 0.0
  %v894 = vadd.f32 %v892, %v893
  %v895 = vsel %vm603, %v803, 0.0
  %v896 = vadd.f32 %v894, %v895
  %v897 = vsel %vm603, %v804, 0.0
  %v898 = vadd.f32 %v896, %v897
  %v899 = vsel %vm603, %v805, 0.0
  %v900 = vadd.f32 %v898, %v899
  %v901 = vsel %vm603, %v806, 0.0
  %v902 = vadd.f32 %v900, %v901
  %v903 = vsel %vm603, %v807, 0.0
  %v904 = vadd.f32 %v902, %v903
  %v905 = vsel %vm603, %v808, 0.0
  %v906 = vadd.f32 %v904, %v905
  %v907 = vsel %vm603, %v809, 0.0
  %v908 = vadd.f32 %v906, %v907
  %v909 = vrot.slane %v908, 4
  %v910 = vadd.f32 %v908, %v909
  %v911 = vrot.slane %v910, 2
  %v912 = vadd.f32 %v910, %v911
  %v913 = vrot.slane %v912, 1
  %v914 = vadd.f32 %v912, %v913
  %v915 = vmul.f32 %v914, 0.0025
  %v916 = vld [vmem:[%s3] sm:$0x1]
  %v917 = vadd.f32 %v915, 1e-05
  %v918 = vrsqrt.pop %v917
  %v919 = vmul.f32 %v918, %v917
  %v920 = vmul.f32 %v919, %v918
  %v921 = vmul.f32 0.5, %v920
  %v922 = vsub.f32 1.5, %v921
  %v923 = vmul.f32 %v918, %v922
  %vm924 = vweird.f32 %v917
  %vm925 = vweird.f32 %v918
  %vm926 = vmor %vm924, %vm925
  %v927 = vsel %vm926, %v918, %v923
  %v928 = vmul.f32 %v916, %v927
  %v930 = vperm.slane %v928, 0
  %v932 = vmul.f32 %v710, %v930
  %v933 = vmul.f32 %v711, %v930
  %v934 = vmul.f32 %v712, %v930
  %v935 = vmul.f32 %v713, %v930
  %v936 = vmul.f32 %v714, %v930
  %v937 = vmul.f32 %v715, %v930
  %v938 = vmul.f32 %v716, %v930
  %v939 = vmul.f32 %v717, %v930
  %v940 = vmul.f32 %v718, %v930
  %v941 = vmul.f32 %v719, %v930
  %v942 = vmul.f32 %v720, %v930
  %v943 = vmul.f32 %v721, %v930
  %v944 = vmul.f32 %v722, %v930
  %v945 = vmul.f32 %v723, %v930
  %v946 = vmul.f32 %v724, %v930
  %v947 = vmul.f32 %v725, %v930
  %v948 = vmul.f32 %v726, %v930
  %v949 = vmul.f32 %v727, %v930
  %v950 = vmul.f32 %v728, %v930
  %v951 = vmul.f32 %v729, %v930
  %v952 = vmul.f32 %v730, %v930
  %v953 = vmul.f32 %v731, %v930
  %v954 = vmul.f32 %v732, %v930
  %v955 = vmul.f32 %v733, %v930
  %v956 = vmul.f32 %v734, %v930
  %v957 = vmul.f32 %v735, %v930
  %v958 = vmul.f32 %v736, %v930
  %v959 = vmul.f32 %v737, %v930
  %v960 = vmul.f32 %v738, %v930
  %v961 = vmul.f32 %v739, %v930
  %v962 = vmul.f32 %v740, %v930
  %v963 = vmul.f32 %v741, %v930
  %v964 = vmul.f32 %v742, %v930
  %v965 = vmul.f32 %v743, %v930
  %v966 = vmul.f32 %v744, %v930
  %v967 = vmul.f32 %v745, %v930
  %v968 = vmul.f32 %v746, %v930
  %v969 = vmul.f32 %v747, %v930
  %v970 = vmul.f32 %v748, %v930
  %v971 = vmul.f32 %v749, %v930
  %v972 = vmul.f32 %v750, %v930
  %v973 = vmul.f32 %v751, %v930
  %v974 = vmul.f32 %v752, %v930
  %v975 = vmul.f32 %v753, %v930
  %v976 = vmul.f32 %v754, %v930
  %v977 = vmul.f32 %v755, %v930
  %v978 = vmul.f32 %v756, %v930
  %v979 = vmul.f32 %v757, %v930
  %v980 = vmul.f32 %v758, %v930
  %v981 = vmul.f32 %v759, %v930
  %v982 = vld [vmem:[%s4] sm:$0x1]
  %v984 = vperm.slane %v982, 0
  %v986 = vadd.f32 %v932, %v984
  %v987 = vadd.f32 %v933, %v984
  %v988 = vadd.f32 %v934, %v984
  %v989 = vadd.f32 %v935, %v984
  %v990 = vadd.f32 %v936, %v984
  %v991 = vadd.f32 %v937, %v984
  %v992 = vadd.f32 %v938, %v984
  %v993 = vadd.f32 %v939, %v984
  %v994 = vadd.f32 %v940, %v984
  %v995 = vadd.f32 %v941, %v984
  %v996 = vadd.f32 %v942, %v984
  %v997 = vadd.f32 %v943, %v984
  %v998 = vadd.f32 %v944, %v984
  %v999 = vadd.f32 %v945, %v984
  %v1000 = vadd.f32 %v946, %v984
  %v1001 = vadd.f32 %v947, %v984
  %v1002 = vadd.f32 %v948, %v984
  %v1003 = vadd.f32 %v949, %v984
  %v1004 = vadd.f32 %v950, %v984
  %v1005 = vadd.f32 %v951, %v984
  %v1006 = vadd.f32 %v952, %v984
  %v1007 = vadd.f32 %v953, %v984
  %v1008 = vadd.f32 %v954, %v984
  %v1009 = vadd.f32 %v955, %v984
  %v1010 = vadd.f32 %v956, %v984
  %v1011 = vadd.f32 %v957, %v984
  %v1012 = vadd.f32 %v958, %v984
  %v1013 = vadd.f32 %v959, %v984
  %v1014 = vadd.f32 %v960, %v984
  %v1015 = vadd.f32 %v961, %v984
  %v1016 = vadd.f32 %v962, %v984
  %v1017 = vadd.f32 %v963, %v984
  %v1018 = vadd.f32 %v964, %v984
  %v1019 = vadd.f32 %v965, %v984
  %v1020 = vadd.f32 %v966, %v984
  %v1021 = vadd.f32 %v967, %v984
  %v1022 = vadd.f32 %v968, %v984
  %v1023 = vadd.f32 %v969, %v984
  %v1024 = vadd.f32 %v970, %v984
  %v1025 = vadd.f32 %v971, %v984
  %v1026 = vadd.f32 %v972, %v984
  %v1027 = vadd.f32 %v973, %v984
  %v1028 = vadd.f32 %v974, %v984
  %v1029 = vadd.f32 %v975, %v984
  %v1030 = vadd.f32 %v976, %v984
  %v1031 = vadd.f32 %v977, %v984
  %v1032 = vadd.f32 %v978, %v984
  %v1033 = vadd.f32 %v979, %v984
  %v1034 = vadd.f32 %v980, %v984
  %v1035 = vadd.f32 %v981, %v984
  %v1036 = vmax.f32 %v986, 0.0
  %v1037 = vmax.f32 %v987, 0.0
  %v1038 = vmax.f32 %v988, 0.0
  %v1039 = vmax.f32 %v989, 0.0
  %v1040 = vmax.f32 %v990, 0.0
  %v1041 = vmax.f32 %v991, 0.0
  %v1042 = vmax.f32 %v992, 0.0
  %v1043 = vmax.f32 %v993, 0.0
  %v1044 = vmax.f32 %v994, 0.0
  %v1045 = vmax.f32 %v995, 0.0
  %v1046 = vmax.f32 %v996, 0.0
  %v1047 = vmax.f32 %v997, 0.0
  %v1048 = vmax.f32 %v998, 0.0
  %v1049 = vmax.f32 %v999, 0.0
  %v1050 = vmax.f32 %v1000, 0.0
  %v1051 = vmax.f32 %v1001, 0.0
  %v1052 = vmax.f32 %v1002, 0.0
  %v1053 = vmax.f32 %v1003, 0.0
  %v1054 = vmax.f32 %v1004, 0.0
  %v1055 = vmax.f32 %v1005, 0.0
  %v1056 = vmax.f32 %v1006, 0.0
  %v1057 = vmax.f32 %v1007, 0.0
  %v1058 = vmax.f32 %v1008, 0.0
  %v1059 = vmax.f32 %v1009, 0.0
  %v1060 = vmax.f32 %v1010, 0.0
  %v1061 = vmax.f32 %v1011, 0.0
  %v1062 = vmax.f32 %v1012, 0.0
  %v1063 = vmax.f32 %v1013, 0.0
  %v1064 = vmax.f32 %v1014, 0.0
  %v1065 = vmax.f32 %v1015, 0.0
  %v1066 = vmax.f32 %v1016, 0.0
  %v1067 = vmax.f32 %v1017, 0.0
  %v1068 = vmax.f32 %v1018, 0.0
  %v1069 = vmax.f32 %v1019, 0.0
  %v1070 = vmax.f32 %v1020, 0.0
  %v1071 = vmax.f32 %v1021, 0.0
  %v1072 = vmax.f32 %v1022, 0.0
  %v1073 = vmax.f32 %v1023, 0.0
  %v1074 = vmax.f32 %v1024, 0.0
  %v1075 = vmax.f32 %v1025, 0.0
  %v1076 = vmax.f32 %v1026, 0.0
  %v1077 = vmax.f32 %v1027, 0.0
  %v1078 = vmax.f32 %v1028, 0.0
  %v1079 = vmax.f32 %v1029, 0.0
  %v1080 = vmax.f32 %v1030, 0.0
  %v1081 = vmax.f32 %v1031, 0.0
  %v1082 = vmax.f32 %v1032, 0.0
  %v1083 = vmax.f32 %v1033, 0.0
  %v1084 = vmax.f32 %v1034, 0.0
  %v1085 = vmax.f32 %v1035, 0.0
  %v1086 = vld [vmem:[%s5] sm:$0xf]
  %v1087 = vld [vmem:[%s5 + $0x4] sm:$0xf]
  %v1088 = vld [vmem:[%s5 + $0x8] sm:$0xf]
  %v1089 = vld [vmem:[%s5 + $0xc] sm:$0xf]
  %v1090 = vld [vmem:[%s5 + $0x10] sm:$0xf]
  %v1091 = vld [vmem:[%s5 + $0x14] sm:$0xf]
  %v1092 = vld [vmem:[%s5 + $0x18] sm:$0xf]
  %v1093 = vld [vmem:[%s5 + $0x1c] sm:$0xf]
  %v1094 = vld [vmem:[%s6] sm:$0x1]
  %v1095 = vpack.c.bf16 %v1037, %v1036
  %v1096 = vpack.c.bf16 %v1039, %v1038
  %v1097 = vpack.c.bf16 %v1041, %v1040
  %v1098 = vpack.c.bf16 %v1043, %v1042
  %v1099 = vpack.c.bf16 %v1045, %v1044
  %v1100 = vpack.c.bf16 %v1047, %v1046
  %v1101 = vpack.c.bf16 %v1049, %v1048
  %v1102 = vpack.c.bf16 %v1051, %v1050
  %v1103 = vpack.c.bf16 %v1053, %v1052
  %v1104 = vpack.c.bf16 %v1055, %v1054
  %v1105 = vpack.c.bf16 %v1057, %v1056
  %v1106 = vpack.c.bf16 %v1059, %v1058
  %v1107 = vpack.c.bf16 %v1061, %v1060
  %v1108 = vpack.c.bf16 %v1063, %v1062
  %v1109 = vpack.c.bf16 %v1065, %v1064
  %v1110 = vpack.c.bf16 %v1067, %v1066
  %v1111 = vpack.c.bf16 %v1069, %v1068
  %v1112 = vpack.c.bf16 %v1071, %v1070
  %v1113 = vpack.c.bf16 %v1073, %v1072
  %v1114 = vpack.c.bf16 %v1075, %v1074
  %v1115 = vpack.c.bf16 %v1077, %v1076
  %v1116 = vpack.c.bf16 %v1079, %v1078
  %v1117 = vpack.c.bf16 %v1081, %v1080
  %v1118 = vpack.c.bf16 %v1083, %v1082
  %v1119 = vpack.c.bf16 %v1085, %v1084
  %v1121 = vperm.slane %v1094, 0
  %v1131 = vunpack.c.l.b16 %v1086
  %v1132 = vunpack.c.l.b16 %v1087
  %v1133 = vunpack.c.l.b16 %v1088
  %v1134 = vunpack.c.l.b16 %v1089
  %v1135 = vunpack.c.l.b16 %v1090
  %v1136 = vunpack.c.l.b16 %v1091
  %v1137 = vunpack.c.l.b16 %v1092
  %v1138 = vunpack.c.l.b16 %v1093
  %v1139 = vpack.c.b16 %v1132, %v1131
  %v1140 = vpack.c.b16 %v1134, %v1133
  %v1141 = vpack.c.b16 %v1136, %v1135
  %v1142 = vpack.c.b16 %v1138, %v1137
  %v1148 = vsel %vm603, %v1095, 0
  %v1151 = vsel %vm603, %v1096, 0
  %v1154 = vsel %vm603, %v1097, 0
  %v1157 = vsel %vm603, %v1098, 0
  %v1160 = vsel %vm603, %v1099, 0
  %v1163 = vsel %vm603, %v1100, 0
  %v1166 = vsel %vm603, %v1101, 0
  %v1169 = vsel %vm603, %v1102, 0
  %v1172 = vsel %vm603, %v1103, 0
  %v1175 = vsel %vm603, %v1104, 0
  %v1178 = vsel %vm603, %v1105, 0
  %v1181 = vsel %vm603, %v1106, 0
  %v1184 = vsel %vm603, %v1107, 0
  %v1187 = vsel %vm603, %v1108, 0
  %v1190 = vsel %vm603, %v1109, 0
  %v1193 = vsel %vm603, %v1110, 0
  %v1196 = vsel %vm603, %v1111, 0
  %v1199 = vsel %vm603, %v1112, 0
  %v1202 = vsel %vm603, %v1113, 0
  %v1205 = vsel %vm603, %v1114, 0
  %v1208 = vsel %vm603, %v1115, 0
  %v1211 = vsel %vm603, %v1116, 0
  %v1214 = vsel %vm603, %v1117, 0
  %v1217 = vsel %vm603, %v1118, 0
  %v1220 = vsel %vm603, %v1119, 0
  %1222 = vmatpush.bf16.msra.mxu0 0
  %1223 = vmatpush.bf16.msra.mxu0 0
  %1224 = vmatpush.bf16.msra.mxu0 0
  %1225 = vmatpush.bf16.msra.mxu0 0
  %1226 = vmatpush.bf16.msra.mxu0 %v1142
  %1227 = vmatpush.bf16.msra.mxu0 %v1141
  %1228 = vmatpush.bf16.msra.mxu0 %v1140
  %1229 = vmatpush.bf16.msra.mxu0 %v1139
  %1230 = vmatmul.bf16.gmra.mxu0 %v1148
  %v1231 = vpop.f32.mrf.mxu0
  %v1232 = vadd.f32 %v1121, %v1231
  %v1233 = vpop.f32.mrf.mxu0
  %v1234 = vadd.f32 %v1121, %v1233
  %1235 = vmatmul.bf16.gmra.mxu0 %v1151
  %v1236 = vpop.f32.mrf.mxu0
  %v1237 = vadd.f32 %v1121, %v1236
  %v1238 = vpop.f32.mrf.mxu0
  %v1239 = vadd.f32 %v1121, %v1238
  %1240 = vmatmul.bf16.gmra.mxu0 %v1154
  %v1241 = vpop.f32.mrf.mxu0
  %v1242 = vadd.f32 %v1121, %v1241
  %v1243 = vpop.f32.mrf.mxu0
  %v1244 = vadd.f32 %v1121, %v1243
  %1245 = vmatmul.bf16.gmra.mxu0 %v1157
  %v1246 = vpop.f32.mrf.mxu0
  %v1247 = vadd.f32 %v1121, %v1246
  %v1248 = vpop.f32.mrf.mxu0
  %v1249 = vadd.f32 %v1121, %v1248
  %1250 = vmatmul.bf16.gmra.mxu0 %v1160
  %v1251 = vpop.f32.mrf.mxu0
  %v1252 = vadd.f32 %v1121, %v1251
  %v1253 = vpop.f32.mrf.mxu0
  %v1254 = vadd.f32 %v1121, %v1253
  %1255 = vmatmul.bf16.gmra.mxu0 %v1163
  %v1256 = vpop.f32.mrf.mxu0
  %v1257 = vadd.f32 %v1121, %v1256
  %v1258 = vpop.f32.mrf.mxu0
  %v1259 = vadd.f32 %v1121, %v1258
  %1260 = vmatmul.bf16.gmra.mxu0 %v1166
  %v1261 = vpop.f32.mrf.mxu0
  %v1262 = vadd.f32 %v1121, %v1261
  %v1263 = vpop.f32.mrf.mxu0
  %v1264 = vadd.f32 %v1121, %v1263
  %1265 = vmatmul.bf16.gmra.mxu0 %v1169
  %v1266 = vpop.f32.mrf.mxu0
  %v1267 = vadd.f32 %v1121, %v1266
  %v1268 = vpop.f32.mrf.mxu0
  %v1269 = vadd.f32 %v1121, %v1268
  %1270 = vmatmul.bf16.gmra.mxu0 %v1172
  %v1271 = vpop.f32.mrf.mxu0
  %v1272 = vadd.f32 %v1121, %v1271
  %v1273 = vpop.f32.mrf.mxu0
  %v1274 = vadd.f32 %v1121, %v1273
  %1275 = vmatmul.bf16.gmra.mxu0 %v1175
  %v1276 = vpop.f32.mrf.mxu0
  %v1277 = vadd.f32 %v1121, %v1276
  %v1278 = vpop.f32.mrf.mxu0
  %v1279 = vadd.f32 %v1121, %v1278
  %1280 = vmatmul.bf16.gmra.mxu0 %v1178
  %v1281 = vpop.f32.mrf.mxu0
  %v1282 = vadd.f32 %v1121, %v1281
  %v1283 = vpop.f32.mrf.mxu0
  %v1284 = vadd.f32 %v1121, %v1283
  %1285 = vmatmul.bf16.gmra.mxu0 %v1181
  %v1286 = vpop.f32.mrf.mxu0
  %v1287 = vadd.f32 %v1121, %v1286
  %v1288 = vpop.f32.mrf.mxu0
  %v1289 = vadd.f32 %v1121, %v1288
  %1290 = vmatmul.bf16.gmra.mxu0 %v1184
  %v1291 = vpop.f32.mrf.mxu0
  %v1292 = vadd.f32 %v1121, %v1291
  %v1293 = vpop.f32.mrf.mxu0
  %v1294 = vadd.f32 %v1121, %v1293
  %1295 = vmatmul.bf16.gmra.mxu0 %v1187
  %v1296 = vpop.f32.mrf.mxu0
  %v1297 = vadd.f32 %v1121, %v1296
  %v1298 = vpop.f32.mrf.mxu0
  %v1299 = vadd.f32 %v1121, %v1298
  %1300 = vmatmul.bf16.gmra.mxu0 %v1190
  %v1301 = vpop.f32.mrf.mxu0
  %v1302 = vadd.f32 %v1121, %v1301
  %v1303 = vpop.f32.mrf.mxu0
  %v1304 = vadd.f32 %v1121, %v1303
  %1305 = vmatmul.bf16.gmra.mxu0 %v1193
  %v1306 = vpop.f32.mrf.mxu0
  %v1307 = vadd.f32 %v1121, %v1306
  %v1308 = vpop.f32.mrf.mxu0
  %v1309 = vadd.f32 %v1121, %v1308
  %1310 = vmatmul.bf16.gmra.mxu0 %v1196
  %v1311 = vpop.f32.mrf.mxu0
  %v1312 = vadd.f32 %v1121, %v1311
  %v1313 = vpop.f32.mrf.mxu0
  %v1314 = vadd.f32 %v1121, %v1313
  %1315 = vmatmul.bf16.gmra.mxu0 %v1199
  %v1316 = vpop.f32.mrf.mxu0
  %v1317 = vadd.f32 %v1121, %v1316
  %v1318 = vpop.f32.mrf.mxu0
  %v1319 = vadd.f32 %v1121, %v1318
  %1320 = vmatmul.bf16.gmra.mxu0 %v1202
  %v1321 = vpop.f32.mrf.mxu0
  %v1322 = vadd.f32 %v1121, %v1321
  %v1323 = vpop.f32.mrf.mxu0
  %v1324 = vadd.f32 %v1121, %v1323
  %1325 = vmatmul.bf16.gmra.mxu0 %v1205
  %v1326 = vpop.f32.mrf.mxu0
  %v1327 = vadd.f32 %v1121, %v1326
  %v1328 = vpop.f32.mrf.mxu0
  %v1329 = vadd.f32 %v1121, %v1328
  %1330 = vmatmul.bf16.gmra.mxu0 %v1208
  %v1331 = vpop.f32.mrf.mxu0
  %v1332 = vadd.f32 %v1121, %v1331
  %v1333 = vpop.f32.mrf.mxu0
  %v1334 = vadd.f32 %v1121, %v1333
  %1335 = vmatmul.bf16.gmra.mxu0 %v1211
  %v1336 = vpop.f32.mrf.mxu0
  %v1337 = vadd.f32 %v1121, %v1336
  %v1338 = vpop.f32.mrf.mxu0
  %v1339 = vadd.f32 %v1121, %v1338
  %1340 = vmatmul.bf16.gmra.mxu0 %v1214
  %v1341 = vpop.f32.mrf.mxu0
  %v1342 = vadd.f32 %v1121, %v1341
  %v1343 = vpop.f32.mrf.mxu0
  %v1344 = vadd.f32 %v1121, %v1343
  %1345 = vmatmul.bf16.gmra.mxu0 %v1217
  %v1346 = vpop.f32.mrf.mxu0
  %v1347 = vadd.f32 %v1121, %v1346
  %v1348 = vpop.f32.mrf.mxu0
  %v1349 = vadd.f32 %v1121, %v1348
  %1350 = vmatmul.bf16.gmra.mxu0 %v1220
  %v1351 = vpop.f32.mrf.mxu0
  %v1352 = vadd.f32 %v1121, %v1351
  %v1353 = vpop.f32.mrf.mxu0
  %v1354 = vadd.f32 %v1121, %v1353
  %1355 = vdwg.mxu0
  %v1356 = vsel %vm603, %v1232, 0.0
  %v1357 = vsel %vm603, %v1234, 0.0
  %v1358 = vadd.f32 %v1356, %v1357
  %v1359 = vsel %vm603, %v1237, 0.0
  %v1360 = vadd.f32 %v1358, %v1359
  %v1361 = vsel %vm603, %v1239, 0.0
  %v1362 = vadd.f32 %v1360, %v1361
  %v1363 = vsel %vm603, %v1242, 0.0
  %v1364 = vadd.f32 %v1362, %v1363
  %v1365 = vsel %vm603, %v1244, 0.0
  %v1366 = vadd.f32 %v1364, %v1365
  %v1367 = vsel %vm603, %v1247, 0.0
  %v1368 = vadd.f32 %v1366, %v1367
  %v1369 = vsel %vm603, %v1249, 0.0
  %v1370 = vadd.f32 %v1368, %v1369
  %v1371 = vsel %vm603, %v1252, 0.0
  %v1372 = vadd.f32 %v1370, %v1371
  %v1373 = vsel %vm603, %v1254, 0.0
  %v1374 = vadd.f32 %v1372, %v1373
  %v1375 = vsel %vm603, %v1257, 0.0
  %v1376 = vadd.f32 %v1374, %v1375
  %v1377 = vsel %vm603, %v1259, 0.0
  %v1378 = vadd.f32 %v1376, %v1377
  %v1379 = vsel %vm603, %v1262, 0.0
  %v1380 = vadd.f32 %v1378, %v1379
  %v1381 = vsel %vm603, %v1264, 0.0
  %v1382 = vadd.f32 %v1380, %v1381
  %v1383 = vsel %vm603, %v1267, 0.0
  %v1384 = vadd.f32 %v1382, %v1383
  %v1385 = vsel %vm603, %v1269, 0.0
  %v1386 = vadd.f32 %v1384, %v1385
  %v1387 = vsel %vm603, %v1272, 0.0
  %v1388 = vadd.f32 %v1386, %v1387
  %v1389 = vsel %vm603, %v1274, 0.0
  %v1390 = vadd.f32 %v1388, %v1389
  %v1391 = vsel %vm603, %v1277, 0.0
  %v1392 = vadd.f32 %v1390, %v1391
  %v1393 = vsel %vm603, %v1279, 0.0
  %v1394 = vadd.f32 %v1392, %v1393
  %v1395 = vsel %vm603, %v1282, 0.0
  %v1396 = vadd.f32 %v1394, %v1395
  %v1397 = vsel %vm603, %v1284, 0.0
  %v1398 = vadd.f32 %v1396, %v1397
  %v1399 = vsel %vm603, %v1287, 0.0
  %v1400 = vadd.f32 %v1398, %v1399
  %v1401 = vsel %vm603, %v1289, 0.0
  %v1402 = vadd.f32 %v1400, %v1401
  %v1403 = vsel %vm603, %v1292, 0.0
  %v1404 = vadd.f32 %v1402, %v1403
  %v1405 = vsel %vm603, %v1294, 0.0
  %v1406 = vadd.f32 %v1404, %v1405
  %v1407 = vsel %vm603, %v1297, 0.0
  %v1408 = vadd.f32 %v1406, %v1407
  %v1409 = vsel %vm603, %v1299, 0.0
  %v1410 = vadd.f32 %v1408, %v1409
  %v1411 = vsel %vm603, %v1302, 0.0
  %v1412 = vadd.f32 %v1410, %v1411
  %v1413 = vsel %vm603, %v1304, 0.0
  %v1414 = vadd.f32 %v1412, %v1413
  %v1415 = vsel %vm603, %v1307, 0.0
  %v1416 = vadd.f32 %v1414, %v1415
  %v1417 = vsel %vm603, %v1309, 0.0
  %v1418 = vadd.f32 %v1416, %v1417
  %v1419 = vsel %vm603, %v1312, 0.0
  %v1420 = vadd.f32 %v1418, %v1419
  %v1421 = vsel %vm603, %v1314, 0.0
  %v1422 = vadd.f32 %v1420, %v1421
  %v1423 = vsel %vm603, %v1317, 0.0
  %v1424 = vadd.f32 %v1422, %v1423
  %v1425 = vsel %vm603, %v1319, 0.0
  %v1426 = vadd.f32 %v1424, %v1425
  %v1427 = vsel %vm603, %v1322, 0.0
  %v1428 = vadd.f32 %v1426, %v1427
  %v1429 = vsel %vm603, %v1324, 0.0
  %v1430 = vadd.f32 %v1428, %v1429
  %v1431 = vsel %vm603, %v1327, 0.0
  %v1432 = vadd.f32 %v1430, %v1431
  %v1433 = vsel %vm603, %v1329, 0.0
  %v1434 = vadd.f32 %v1432, %v1433
  %v1435 = vsel %vm603, %v1332, 0.0
  %v1436 = vadd.f32 %v1434, %v1435
  %v1437 = vsel %vm603, %v1334, 0.0
  %v1438 = vadd.f32 %v1436, %v1437
  %v1439 = vsel %vm603, %v1337, 0.0
  %v1440 = vadd.f32 %v1438, %v1439
  %v1441 = vsel %vm603, %v1339, 0.0
  %v1442 = vadd.f32 %v1440, %v1441
  %v1443 = vsel %vm603, %v1342, 0.0
  %v1444 = vadd.f32 %v1442, %v1443
  %v1445 = vsel %vm603, %v1344, 0.0
  %v1446 = vadd.f32 %v1444, %v1445
  %v1447 = vsel %vm603, %v1347, 0.0
  %v1448 = vadd.f32 %v1446, %v1447
  %v1449 = vsel %vm603, %v1349, 0.0
  %v1450 = vadd.f32 %v1448, %v1449
  %v1451 = vsel %vm603, %v1352, 0.0
  %v1452 = vadd.f32 %v1450, %v1451
  %v1453 = vsel %vm603, %v1354, 0.0
  %v1454 = vadd.f32 %v1452, %v1453
  %v1455 = vrot.slane %v1454, 4
  %v1456 = vadd.f32 %v1454, %v1455
  %v1457 = vrot.slane %v1456, 2
  %v1458 = vadd.f32 %v1456, %v1457
  %v1459 = vrot.slane %v1458, 1
  %v1460 = vadd.f32 %v1458, %v1459
  %v1461 = vmul.f32 %v1460, 0.0025
  %v1462 = vsub.f32 %v1232, %v1461
  %v1463 = vsub.f32 %v1234, %v1461
  %v1464 = vsub.f32 %v1237, %v1461
  %v1465 = vsub.f32 %v1239, %v1461
  %v1466 = vsub.f32 %v1242, %v1461
  %v1467 = vsub.f32 %v1244, %v1461
  %v1468 = vsub.f32 %v1247, %v1461
  %v1469 = vsub.f32 %v1249, %v1461
  %v1470 = vsub.f32 %v1252, %v1461
  %v1471 = vsub.f32 %v1254, %v1461
  %v1472 = vsub.f32 %v1257, %v1461
  %v1473 = vsub.f32 %v1259, %v1461
  %v1474 = vsub.f32 %v1262, %v1461
  %v1475 = vsub.f32 %v1264, %v1461
  %v1476 = vsub.f32 %v1267, %v1461
  %v1477 = vsub.f32 %v1269, %v1461
  %v1478 = vsub.f32 %v1272, %v1461
  %v1479 = vsub.f32 %v1274, %v1461
  %v1480 = vsub.f32 %v1277, %v1461
  %v1481 = vsub.f32 %v1279, %v1461
  %v1482 = vsub.f32 %v1282, %v1461
  %v1483 = vsub.f32 %v1284, %v1461
  %v1484 = vsub.f32 %v1287, %v1461
  %v1485 = vsub.f32 %v1289, %v1461
  %v1486 = vsub.f32 %v1292, %v1461
  %v1487 = vsub.f32 %v1294, %v1461
  %v1488 = vsub.f32 %v1297, %v1461
  %v1489 = vsub.f32 %v1299, %v1461
  %v1490 = vsub.f32 %v1302, %v1461
  %v1491 = vsub.f32 %v1304, %v1461
  %v1492 = vsub.f32 %v1307, %v1461
  %v1493 = vsub.f32 %v1309, %v1461
  %v1494 = vsub.f32 %v1312, %v1461
  %v1495 = vsub.f32 %v1314, %v1461
  %v1496 = vsub.f32 %v1317, %v1461
  %v1497 = vsub.f32 %v1319, %v1461
  %v1498 = vsub.f32 %v1322, %v1461
  %v1499 = vsub.f32 %v1324, %v1461
  %v1500 = vsub.f32 %v1327, %v1461
  %v1501 = vsub.f32 %v1329, %v1461
  %v1502 = vsub.f32 %v1332, %v1461
  %v1503 = vsub.f32 %v1334, %v1461
  %v1504 = vsub.f32 %v1337, %v1461
  %v1505 = vsub.f32 %v1339, %v1461
  %v1506 = vsub.f32 %v1342, %v1461
  %v1507 = vsub.f32 %v1344, %v1461
  %v1508 = vsub.f32 %v1347, %v1461
  %v1509 = vsub.f32 %v1349, %v1461
  %v1510 = vsub.f32 %v1352, %v1461
  %v1511 = vsub.f32 %v1354, %v1461
  %v1512 = vmul.f32 %v1462, %v1462
  %v1513 = vmul.f32 %v1463, %v1463
  %v1514 = vmul.f32 %v1464, %v1464
  %v1515 = vmul.f32 %v1465, %v1465
  %v1516 = vmul.f32 %v1466, %v1466
  %v1517 = vmul.f32 %v1467, %v1467
  %v1518 = vmul.f32 %v1468, %v1468
  %v1519 = vmul.f32 %v1469, %v1469
  %v1520 = vmul.f32 %v1470, %v1470
  %v1521 = vmul.f32 %v1471, %v1471
  %v1522 = vmul.f32 %v1472, %v1472
  %v1523 = vmul.f32 %v1473, %v1473
  %v1524 = vmul.f32 %v1474, %v1474
  %v1525 = vmul.f32 %v1475, %v1475
  %v1526 = vmul.f32 %v1476, %v1476
  %v1527 = vmul.f32 %v1477, %v1477
  %v1528 = vmul.f32 %v1478, %v1478
  %v1529 = vmul.f32 %v1479, %v1479
  %v1530 = vmul.f32 %v1480, %v1480
  %v1531 = vmul.f32 %v1481, %v1481
  %v1532 = vmul.f32 %v1482, %v1482
  %v1533 = vmul.f32 %v1483, %v1483
  %v1534 = vmul.f32 %v1484, %v1484
  %v1535 = vmul.f32 %v1485, %v1485
  %v1536 = vmul.f32 %v1486, %v1486
  %v1537 = vmul.f32 %v1487, %v1487
  %v1538 = vmul.f32 %v1488, %v1488
  %v1539 = vmul.f32 %v1489, %v1489
  %v1540 = vmul.f32 %v1490, %v1490
  %v1541 = vmul.f32 %v1491, %v1491
  %v1542 = vmul.f32 %v1492, %v1492
  %v1543 = vmul.f32 %v1493, %v1493
  %v1544 = vmul.f32 %v1494, %v1494
  %v1545 = vmul.f32 %v1495, %v1495
  %v1546 = vmul.f32 %v1496, %v1496
  %v1547 = vmul.f32 %v1497, %v1497
  %v1548 = vmul.f32 %v1498, %v1498
  %v1549 = vmul.f32 %v1499, %v1499
  %v1550 = vmul.f32 %v1500, %v1500
  %v1551 = vmul.f32 %v1501, %v1501
  %v1552 = vmul.f32 %v1502, %v1502
  %v1553 = vmul.f32 %v1503, %v1503
  %v1554 = vmul.f32 %v1504, %v1504
  %v1555 = vmul.f32 %v1505, %v1505
  %v1556 = vmul.f32 %v1506, %v1506
  %v1557 = vmul.f32 %v1507, %v1507
  %v1558 = vmul.f32 %v1508, %v1508
  %v1559 = vmul.f32 %v1509, %v1509
  %v1560 = vmul.f32 %v1510, %v1510
  %v1561 = vmul.f32 %v1511, %v1511
  %v1562 = vsel %vm603, %v1512, 0.0
  %v1563 = vsel %vm603, %v1513, 0.0
  %v1564 = vadd.f32 %v1562, %v1563
  %v1565 = vsel %vm603, %v1514, 0.0
  %v1566 = vadd.f32 %v1564, %v1565
  %v1567 = vsel %vm603, %v1515, 0.0
  %v1568 = vadd.f32 %v1566, %v1567
  %v1569 = vsel %vm603, %v1516, 0.0
  %v1570 = vadd.f32 %v1568, %v1569
  %v1571 = vsel %vm603, %v1517, 0.0
  %v1572 = vadd.f32 %v1570, %v1571
  %v1573 = vsel %vm603, %v1518, 0.0
  %v1574 = vadd.f32 %v1572, %v1573
  %v1575 = vsel %vm603, %v1519, 0.0
  %v1576 = vadd.f32 %v1574, %v1575
  %v1577 = vsel %vm603, %v1520, 0.0
  %v1578 = vadd.f32 %v1576, %v1577
  %v1579 = vsel %vm603, %v1521, 0.0
  %v1580 = vadd.f32 %v1578, %v1579
  %v1581 = vsel %vm603, %v1522, 0.0
  %v1582 = vadd.f32 %v1580, %v1581
  %v1583 = vsel %vm603, %v1523, 0.0
  %v1584 = vadd.f32 %v1582, %v1583
  %v1585 = vsel %vm603, %v1524, 0.0
  %v1586 = vadd.f32 %v1584, %v1585
  %v1587 = vsel %vm603, %v1525, 0.0
  %v1588 = vadd.f32 %v1586, %v1587
  %v1589 = vsel %vm603, %v1526, 0.0
  %v1590 = vadd.f32 %v1588, %v1589
  %v1591 = vsel %vm603, %v1527, 0.0
  %v1592 = vadd.f32 %v1590, %v1591
  %v1593 = vsel %vm603, %v1528, 0.0
  %v1594 = vadd.f32 %v1592, %v1593
  %v1595 = vsel %vm603, %v1529, 0.0
  %v1596 = vadd.f32 %v1594, %v1595
  %v1597 = vsel %vm603, %v1530, 0.0
  %v1598 = vadd.f32 %v1596, %v1597
  %v1599 = vsel %vm603, %v1531, 0.0
  %v1600 = vadd.f32 %v1598, %v1599
  %v1601 = vsel %vm603, %v1532, 0.0
  %v1602 = vadd.f32 %v1600, %v1601
  %v1603 = vsel %vm603, %v1533, 0.0
  %v1604 = vadd.f32 %v1602, %v1603
  %v1605 = vsel %vm603, %v1534, 0.0
  %v1606 = vadd.f32 %v1604, %v1605
  %v1607 = vsel %vm603, %v1535, 0.0
  %v1608 = vadd.f32 %v1606, %v1607
  %v1609 = vsel %vm603, %v1536, 0.0
  %v1610 = vadd.f32 %v1608, %v1609
  %v1611 = vsel %vm603, %v1537, 0.0
  %v1612 = vadd.f32 %v1610, %v1611
  %v1613 = vsel %vm603, %v1538, 0.0
  %v1614 = vadd.f32 %v1612, %v1613
  %v1615 = vsel %vm603, %v1539, 0.0
  %v1616 = vadd.f32 %v1614, %v1615
  %v1617 = vsel %vm603, %v1540, 0.0
  %v1618 = vadd.f32 %v1616, %v1617
  %v1619 = vsel %vm603, %v1541, 0.0
  %v1620 = vadd.f32 %v1618, %v1619
  %v1621 = vsel %vm603, %v1542, 0.0
  %v1622 = vadd.f32 %v1620, %v1621
  %v1623 = vsel %vm603, %v1543, 0.0
  %v1624 = vadd.f32 %v1622, %v1623
  %v1625 = vsel %vm603, %v1544, 0.0
  %v1626 = vadd.f32 %v1624, %v1625
  %v1627 = vsel %vm603, %v1545, 0.0
  %v1628 = vadd.f32 %v1626, %v1627
  %v1629 = vsel %vm603, %v1546, 0.0
  %v1630 = vadd.f32 %v1628, %v1629
  %v1631 = vsel %vm603, %v1547, 0.0
  %v1632 = vadd.f32 %v1630, %v1631
  %v1633 = vsel %vm603, %v1548, 0.0
  %v1634 = vadd.f32 %v1632, %v1633
  %v1635 = vsel %vm603, %v1549, 0.0
  %v1636 = vadd.f32 %v1634, %v1635
  %v1637 = vsel %vm603, %v1550, 0.0
  %v1638 = vadd.f32 %v1636, %v1637
  %v1639 = vsel %vm603, %v1551, 0.0
  %v1640 = vadd.f32 %v1638, %v1639
  %v1641 = vsel %vm603, %v1552, 0.0
  %v1642 = vadd.f32 %v1640, %v1641
  %v1643 = vsel %vm603, %v1553, 0.0
  %v1644 = vadd.f32 %v1642, %v1643
  %v1645 = vsel %vm603, %v1554, 0.0
  %v1646 = vadd.f32 %v1644, %v1645
  %v1647 = vsel %vm603, %v1555, 0.0
  %v1648 = vadd.f32 %v1646, %v1647
  %v1649 = vsel %vm603, %v1556, 0.0
  %v1650 = vadd.f32 %v1648, %v1649
  %v1651 = vsel %vm603, %v1557, 0.0
  %v1652 = vadd.f32 %v1650, %v1651
  %v1653 = vsel %vm603, %v1558, 0.0
  %v1654 = vadd.f32 %v1652, %v1653
  %v1655 = vsel %vm603, %v1559, 0.0
  %v1656 = vadd.f32 %v1654, %v1655
  %v1657 = vsel %vm603, %v1560, 0.0
  %v1658 = vadd.f32 %v1656, %v1657
  %v1659 = vsel %vm603, %v1561, 0.0
  %v1660 = vadd.f32 %v1658, %v1659
  %v1661 = vrot.slane %v1660, 4
  %v1662 = vadd.f32 %v1660, %v1661
  %v1663 = vrot.slane %v1662, 2
  %v1664 = vadd.f32 %v1662, %v1663
  %v1665 = vrot.slane %v1664, 1
  %v1666 = vadd.f32 %v1664, %v1665
  %v1667 = vmul.f32 %v1666, 0.0025
  %v1668 = vld [vmem:[%s7] sm:$0x1]
  %v1669 = vadd.f32 %v1667, 1e-05
  %v1670 = vrsqrt.pop %v1669
  %v1671 = vmul.f32 %v1670, %v1669
  %v1672 = vmul.f32 %v1671, %v1670
  %v1673 = vmul.f32 0.5, %v1672
  %v1674 = vsub.f32 1.5, %v1673
  %v1675 = vmul.f32 %v1670, %v1674
  %vm1676 = vweird.f32 %v1669
  %vm1677 = vweird.f32 %v1670
  %vm1678 = vmor %vm1676, %vm1677
  %v1679 = vsel %vm1678, %v1670, %v1675
  %v1680 = vmul.f32 %v1668, %v1679
  %v1682 = vperm.slane %v1680, 0
  %v1684 = vmul.f32 %v1462, %v1682
  %v1685 = vmul.f32 %v1463, %v1682
  %v1686 = vmul.f32 %v1464, %v1682
  %v1687 = vmul.f32 %v1465, %v1682
  %v1688 = vmul.f32 %v1466, %v1682
  %v1689 = vmul.f32 %v1467, %v1682
  %v1690 = vmul.f32 %v1468, %v1682
  %v1691 = vmul.f32 %v1469, %v1682
  %v1692 = vmul.f32 %v1470, %v1682
  %v1693 = vmul.f32 %v1471, %v1682
  %v1694 = vmul.f32 %v1472, %v1682
  %v1695 = vmul.f32 %v1473, %v1682
  %v1696 = vmul.f32 %v1474, %v1682
  %v1697 = vmul.f32 %v1475, %v1682
  %v1698 = vmul.f32 %v1476, %v1682
  %v1699 = vmul.f32 %v1477, %v1682
  %v1700 = vmul.f32 %v1478, %v1682
  %v1701 = vmul.f32 %v1479, %v1682
  %v1702 = vmul.f32 %v1480, %v1682
  %v1703 = vmul.f32 %v1481, %v1682
  %v1704 = vmul.f32 %v1482, %v1682
  %v1705 = vmul.f32 %v1483, %v1682
  %v1706 = vmul.f32 %v1484, %v1682
  %v1707 = vmul.f32 %v1485, %v1682
  %v1708 = vmul.f32 %v1486, %v1682
  %v1709 = vmul.f32 %v1487, %v1682
  %v1710 = vmul.f32 %v1488, %v1682
  %v1711 = vmul.f32 %v1489, %v1682
  %v1712 = vmul.f32 %v1490, %v1682
  %v1713 = vmul.f32 %v1491, %v1682
  %v1714 = vmul.f32 %v1492, %v1682
  %v1715 = vmul.f32 %v1493, %v1682
  %v1716 = vmul.f32 %v1494, %v1682
  %v1717 = vmul.f32 %v1495, %v1682
  %v1718 = vmul.f32 %v1496, %v1682
  %v1719 = vmul.f32 %v1497, %v1682
  %v1720 = vmul.f32 %v1498, %v1682
  %v1721 = vmul.f32 %v1499, %v1682
  %v1722 = vmul.f32 %v1500, %v1682
  %v1723 = vmul.f32 %v1501, %v1682
  %v1724 = vmul.f32 %v1502, %v1682
  %v1725 = vmul.f32 %v1503, %v1682
  %v1726 = vmul.f32 %v1504, %v1682
  %v1727 = vmul.f32 %v1505, %v1682
  %v1728 = vmul.f32 %v1506, %v1682
  %v1729 = vmul.f32 %v1507, %v1682
  %v1730 = vmul.f32 %v1508, %v1682
  %v1731 = vmul.f32 %v1509, %v1682
  %v1732 = vmul.f32 %v1510, %v1682
  %v1733 = vmul.f32 %v1511, %v1682
  %v1734 = vld [vmem:[%s8] sm:$0x1]
  %v1736 = vperm.slane %v1734, 0
  %v1738 = vadd.f32 %v1684, %v1736
  %v1739 = vadd.f32 %v1685, %v1736
  %v1740 = vadd.f32 %v1686, %v1736
  %v1741 = vadd.f32 %v1687, %v1736
  %v1742 = vadd.f32 %v1688, %v1736
  %v1743 = vadd.f32 %v1689, %v1736
  %v1744 = vadd.f32 %v1690, %v1736
  %v1745 = vadd.f32 %v1691, %v1736
  %v1746 = vadd.f32 %v1692, %v1736
  %v1747 = vadd.f32 %v1693, %v1736
  %v1748 = vadd.f32 %v1694, %v1736
  %v1749 = vadd.f32 %v1695, %v1736
  %v1750 = vadd.f32 %v1696, %v1736
  %v1751 = vadd.f32 %v1697, %v1736
  %v1752 = vadd.f32 %v1698, %v1736
  %v1753 = vadd.f32 %v1699, %v1736
  %v1754 = vadd.f32 %v1700, %v1736
  %v1755 = vadd.f32 %v1701, %v1736
  %v1756 = vadd.f32 %v1702, %v1736
  %v1757 = vadd.f32 %v1703, %v1736
  %v1758 = vadd.f32 %v1704, %v1736
  %v1759 = vadd.f32 %v1705, %v1736
  %v1760 = vadd.f32 %v1706, %v1736
  %v1761 = vadd.f32 %v1707, %v1736
  %v1762 = vadd.f32 %v1708, %v1736
  %v1763 = vadd.f32 %v1709, %v1736
  %v1764 = vadd.f32 %v1710, %v1736
  %v1765 = vadd.f32 %v1711, %v1736
  %v1766 = vadd.f32 %v1712, %v1736
  %v1767 = vadd.f32 %v1713, %v1736
  %v1768 = vadd.f32 %v1714, %v1736
  %v1769 = vadd.f32 %v1715, %v1736
  %v1770 = vadd.f32 %v1716, %v1736
  %v1771 = vadd.f32 %v1717, %v1736
  %v1772 = vadd.f32 %v1718, %v1736
  %v1773 = vadd.f32 %v1719, %v1736
  %v1774 = vadd.f32 %v1720, %v1736
  %v1775 = vadd.f32 %v1721, %v1736
  %v1776 = vadd.f32 %v1722, %v1736
  %v1777 = vadd.f32 %v1723, %v1736
  %v1778 = vadd.f32 %v1724, %v1736
  %v1779 = vadd.f32 %v1725, %v1736
  %v1780 = vadd.f32 %v1726, %v1736
  %v1781 = vadd.f32 %v1727, %v1736
  %v1782 = vadd.f32 %v1728, %v1736
  %v1783 = vadd.f32 %v1729, %v1736
  %v1784 = vadd.f32 %v1730, %v1736
  %v1785 = vadd.f32 %v1731, %v1736
  %v1786 = vadd.f32 %v1732, %v1736
  %v1787 = vadd.f32 %v1733, %v1736
  %v1788 = vmax.f32 %v1738, 0.0
  %v1789 = vmax.f32 %v1739, 0.0
  %v1790 = vmax.f32 %v1740, 0.0
  %v1791 = vmax.f32 %v1741, 0.0
  %v1792 = vmax.f32 %v1742, 0.0
  %v1793 = vmax.f32 %v1743, 0.0
  %v1794 = vmax.f32 %v1744, 0.0
  %v1795 = vmax.f32 %v1745, 0.0
  %v1796 = vmax.f32 %v1746, 0.0
  %v1797 = vmax.f32 %v1747, 0.0
  %v1798 = vmax.f32 %v1748, 0.0
  %v1799 = vmax.f32 %v1749, 0.0
  %v1800 = vmax.f32 %v1750, 0.0
  %v1801 = vmax.f32 %v1751, 0.0
  %v1802 = vmax.f32 %v1752, 0.0
  %v1803 = vmax.f32 %v1753, 0.0
  %v1804 = vmax.f32 %v1754, 0.0
  %v1805 = vmax.f32 %v1755, 0.0
  %v1806 = vmax.f32 %v1756, 0.0
  %v1807 = vmax.f32 %v1757, 0.0
  %v1808 = vmax.f32 %v1758, 0.0
  %v1809 = vmax.f32 %v1759, 0.0
  %v1810 = vmax.f32 %v1760, 0.0
  %v1811 = vmax.f32 %v1761, 0.0
  %v1812 = vmax.f32 %v1762, 0.0
  %v1813 = vmax.f32 %v1763, 0.0
  %v1814 = vmax.f32 %v1764, 0.0
  %v1815 = vmax.f32 %v1765, 0.0
  %v1816 = vmax.f32 %v1766, 0.0
  %v1817 = vmax.f32 %v1767, 0.0
  %v1818 = vmax.f32 %v1768, 0.0
  %v1819 = vmax.f32 %v1769, 0.0
  %v1820 = vmax.f32 %v1770, 0.0
  %v1821 = vmax.f32 %v1771, 0.0
  %v1822 = vmax.f32 %v1772, 0.0
  %v1823 = vmax.f32 %v1773, 0.0
  %v1824 = vmax.f32 %v1774, 0.0
  %v1825 = vmax.f32 %v1775, 0.0
  %v1826 = vmax.f32 %v1776, 0.0
  %v1827 = vmax.f32 %v1777, 0.0
  %v1828 = vmax.f32 %v1778, 0.0
  %v1829 = vmax.f32 %v1779, 0.0
  %v1830 = vmax.f32 %v1780, 0.0
  %v1831 = vmax.f32 %v1781, 0.0
  %v1832 = vmax.f32 %v1782, 0.0
  %v1833 = vmax.f32 %v1783, 0.0
  %v1834 = vmax.f32 %v1784, 0.0
  %v1835 = vmax.f32 %v1785, 0.0
  %v1836 = vmax.f32 %v1786, 0.0
  %v1837 = vmax.f32 %v1787, 0.0
  %v1838 = vld [vmem:[%s9] sm:$0xf]
  %v1839 = vld [vmem:[%s9 + $0x4] sm:$0xf]
  %v1840 = vld [vmem:[%s9 + $0x8] sm:$0xf]
  %v1841 = vld [vmem:[%s9 + $0xc] sm:$0xf]
  %v1842 = vld [vmem:[%s9 + $0x10] sm:$0xf]
  %v1843 = vld [vmem:[%s9 + $0x14] sm:$0xf]
  %v1844 = vld [vmem:[%s9 + $0x18] sm:$0xf]
  %v1845 = vld [vmem:[%s9 + $0x1c] sm:$0xf]
  %v1846 = vld [vmem:[%s10] sm:$0x1]
  %v1847 = vpack.c.bf16 %v1789, %v1788
  %v1848 = vpack.c.bf16 %v1791, %v1790
  %v1849 = vpack.c.bf16 %v1793, %v1792
  %v1850 = vpack.c.bf16 %v1795, %v1794
  %v1851 = vpack.c.bf16 %v1797, %v1796
  %v1852 = vpack.c.bf16 %v1799, %v1798
  %v1853 = vpack.c.bf16 %v1801, %v1800
  %v1854 = vpack.c.bf16 %v1803, %v1802
  %v1855 = vpack.c.bf16 %v1805, %v1804
  %v1856 = vpack.c.bf16 %v1807, %v1806
  %v1857 = vpack.c.bf16 %v1809, %v1808
  %v1858 = vpack.c.bf16 %v1811, %v1810
  %v1859 = vpack.c.bf16 %v1813, %v1812
  %v1860 = vpack.c.bf16 %v1815, %v1814
  %v1861 = vpack.c.bf16 %v1817, %v1816
  %v1862 = vpack.c.bf16 %v1819, %v1818
  %v1863 = vpack.c.bf16 %v1821, %v1820
  %v1864 = vpack.c.bf16 %v1823, %v1822
  %v1865 = vpack.c.bf16 %v1825, %v1824
  %v1866 = vpack.c.bf16 %v1827, %v1826
  %v1867 = vpack.c.bf16 %v1829, %v1828
  %v1868 = vpack.c.bf16 %v1831, %v1830
  %v1869 = vpack.c.bf16 %v1833, %v1832
  %v1870 = vpack.c.bf16 %v1835, %v1834
  %v1871 = vpack.c.bf16 %v1837, %v1836
  %v1873 = vperm.slane %v1846, 0
  %v1883 = vunpack.c.l.b16 %v1838
  %v1884 = vunpack.c.l.b16 %v1839
  %v1885 = vunpack.c.l.b16 %v1840
  %v1886 = vunpack.c.l.b16 %v1841
  %v1887 = vunpack.c.l.b16 %v1842
  %v1888 = vunpack.c.l.b16 %v1843
  %v1889 = vunpack.c.l.b16 %v1844
  %v1890 = vunpack.c.l.b16 %v1845
  %v1891 = vpack.c.b16 %v1884, %v1883
  %v1892 = vpack.c.b16 %v1886, %v1885
  %v1893 = vpack.c.b16 %v1888, %v1887
  %v1894 = vpack.c.b16 %v1890, %v1889
  %v1900 = vsel %vm603, %v1847, 0
  %v1903 = vsel %vm603, %v1848, 0
  %v1906 = vsel %vm603, %v1849, 0
  %v1909 = vsel %vm603, %v1850, 0
  %v1912 = vsel %vm603, %v1851, 0
  %v1915 = vsel %vm603, %v1852, 0
  %v1918 = vsel %vm603, %v1853, 0
  %v1921 = vsel %vm603, %v1854, 0
  %v1924 = vsel %vm603, %v1855, 0
  %v1927 = vsel %vm603, %v1856, 0
  %v1930 = vsel %vm603, %v1857, 0
  %v1933 = vsel %vm603, %v1858, 0
  %v1936 = vsel %vm603, %v1859, 0
  %v1939 = vsel %vm603, %v1860, 0
  %v1942 = vsel %vm603, %v1861, 0
  %v1945 = vsel %vm603, %v1862, 0
  %v1948 = vsel %vm603, %v1863, 0
  %v1951 = vsel %vm603, %v1864, 0
  %v1954 = vsel %vm603, %v1865, 0
  %v1957 = vsel %vm603, %v1866, 0
  %v1960 = vsel %vm603, %v1867, 0
  %v1963 = vsel %vm603, %v1868, 0
  %v1966 = vsel %vm603, %v1869, 0
  %v1969 = vsel %vm603, %v1870, 0
  %v1972 = vsel %vm603, %v1871, 0
  %1974 = vmatpush.bf16.msra.mxu0 0
  %1975 = vmatpush.bf16.msra.mxu0 0
  %1976 = vmatpush.bf16.msra.mxu0 0
  %1977 = vmatpush.bf16.msra.mxu0 0
  %1978 = vmatpush.bf16.msra.mxu0 %v1894
  %1979 = vmatpush.bf16.msra.mxu0 %v1893
  %1980 = vmatpush.bf16.msra.mxu0 %v1892
  %1981 = vmatpush.bf16.msra.mxu0 %v1891
  %1982 = vmatmul.bf16.gmra.mxu0 %v1900
  %v1983 = vpop.f32.mrf.mxu0
  %v1984 = vadd.f32 %v1873, %v1983
  %v1985 = vpop.f32.mrf.mxu0
  %v1986 = vadd.f32 %v1873, %v1985
  %1987 = vmatmul.bf16.gmra.mxu0 %v1903
  %v1988 = vpop.f32.mrf.mxu0
  %v1989 = vadd.f32 %v1873, %v1988
  %v1990 = vpop.f32.mrf.mxu0
  %v1991 = vadd.f32 %v1873, %v1990
  %1992 = vmatmul.bf16.gmra.mxu0 %v1906
  %v1993 = vpop.f32.mrf.mxu0
  %v1994 = vadd.f32 %v1873, %v1993
  %v1995 = vpop.f32.mrf.mxu0
  %v1996 = vadd.f32 %v1873, %v1995
  %1997 = vmatmul.bf16.gmra.mxu0 %v1909
  %v1998 = vpop.f32.mrf.mxu0
  %v1999 = vadd.f32 %v1873, %v1998
  %v2000 = vpop.f32.mrf.mxu0
  %v2001 = vadd.f32 %v1873, %v2000
  %2002 = vmatmul.bf16.gmra.mxu0 %v1912
  %v2003 = vpop.f32.mrf.mxu0
  %v2004 = vadd.f32 %v1873, %v2003
  %v2005 = vpop.f32.mrf.mxu0
  %v2006 = vadd.f32 %v1873, %v2005
  %2007 = vmatmul.bf16.gmra.mxu0 %v1915
  %v2008 = vpop.f32.mrf.mxu0
  %v2009 = vadd.f32 %v1873, %v2008
  %v2010 = vpop.f32.mrf.mxu0
  %v2011 = vadd.f32 %v1873, %v2010
  %2012 = vmatmul.bf16.gmra.mxu0 %v1918
  %v2013 = vpop.f32.mrf.mxu0
  %v2014 = vadd.f32 %v1873, %v2013
  %v2015 = vpop.f32.mrf.mxu0
  %v2016 = vadd.f32 %v1873, %v2015
  %2017 = vmatmul.bf16.gmra.mxu0 %v1921
  %v2018 = vpop.f32.mrf.mxu0
  %v2019 = vadd.f32 %v1873, %v2018
  %v2020 = vpop.f32.mrf.mxu0
  %v2021 = vadd.f32 %v1873, %v2020
  %2022 = vmatmul.bf16.gmra.mxu0 %v1924
  %v2023 = vpop.f32.mrf.mxu0
  %v2024 = vadd.f32 %v1873, %v2023
  %v2025 = vpop.f32.mrf.mxu0
  %v2026 = vadd.f32 %v1873, %v2025
  %2027 = vmatmul.bf16.gmra.mxu0 %v1927
  %v2028 = vpop.f32.mrf.mxu0
  %v2029 = vadd.f32 %v1873, %v2028
  %v2030 = vpop.f32.mrf.mxu0
  %v2031 = vadd.f32 %v1873, %v2030
  %2032 = vmatmul.bf16.gmra.mxu0 %v1930
  %v2033 = vpop.f32.mrf.mxu0
  %v2034 = vadd.f32 %v1873, %v2033
  %v2035 = vpop.f32.mrf.mxu0
  %v2036 = vadd.f32 %v1873, %v2035
  %2037 = vmatmul.bf16.gmra.mxu0 %v1933
  %v2038 = vpop.f32.mrf.mxu0
  %v2039 = vadd.f32 %v1873, %v2038
  %v2040 = vpop.f32.mrf.mxu0
  %v2041 = vadd.f32 %v1873, %v2040
  %2042 = vmatmul.bf16.gmra.mxu0 %v1936
  %v2043 = vpop.f32.mrf.mxu0
  %v2044 = vadd.f32 %v1873, %v2043
  %v2045 = vpop.f32.mrf.mxu0
  %v2046 = vadd.f32 %v1873, %v2045
  %2047 = vmatmul.bf16.gmra.mxu0 %v1939
  %v2048 = vpop.f32.mrf.mxu0
  %v2049 = vadd.f32 %v1873, %v2048
  %v2050 = vpop.f32.mrf.mxu0
  %v2051 = vadd.f32 %v1873, %v2050
  %2052 = vmatmul.bf16.gmra.mxu0 %v1942
  %v2053 = vpop.f32.mrf.mxu0
  %v2054 = vadd.f32 %v1873, %v2053
  %v2055 = vpop.f32.mrf.mxu0
  %v2056 = vadd.f32 %v1873, %v2055
  %2057 = vmatmul.bf16.gmra.mxu0 %v1945
  %v2058 = vpop.f32.mrf.mxu0
  %v2059 = vadd.f32 %v1873, %v2058
  %v2060 = vpop.f32.mrf.mxu0
  %v2061 = vadd.f32 %v1873, %v2060
  %2062 = vmatmul.bf16.gmra.mxu0 %v1948
  %v2063 = vpop.f32.mrf.mxu0
  %v2064 = vadd.f32 %v1873, %v2063
  %v2065 = vpop.f32.mrf.mxu0
  %v2066 = vadd.f32 %v1873, %v2065
  %2067 = vmatmul.bf16.gmra.mxu0 %v1951
  %v2068 = vpop.f32.mrf.mxu0
  %v2069 = vadd.f32 %v1873, %v2068
  %v2070 = vpop.f32.mrf.mxu0
  %v2071 = vadd.f32 %v1873, %v2070
  %2072 = vmatmul.bf16.gmra.mxu0 %v1954
  %v2073 = vpop.f32.mrf.mxu0
  %v2074 = vadd.f32 %v1873, %v2073
  %v2075 = vpop.f32.mrf.mxu0
  %v2076 = vadd.f32 %v1873, %v2075
  %2077 = vmatmul.bf16.gmra.mxu0 %v1957
  %v2078 = vpop.f32.mrf.mxu0
  %v2079 = vadd.f32 %v1873, %v2078
  %v2080 = vpop.f32.mrf.mxu0
  %v2081 = vadd.f32 %v1873, %v2080
  %2082 = vmatmul.bf16.gmra.mxu0 %v1960
  %v2083 = vpop.f32.mrf.mxu0
  %v2084 = vadd.f32 %v1873, %v2083
  %v2085 = vpop.f32.mrf.mxu0
  %v2086 = vadd.f32 %v1873, %v2085
  %2087 = vmatmul.bf16.gmra.mxu0 %v1963
  %v2088 = vpop.f32.mrf.mxu0
  %v2089 = vadd.f32 %v1873, %v2088
  %v2090 = vpop.f32.mrf.mxu0
  %v2091 = vadd.f32 %v1873, %v2090
  %2092 = vmatmul.bf16.gmra.mxu0 %v1966
  %v2093 = vpop.f32.mrf.mxu0
  %v2094 = vadd.f32 %v1873, %v2093
  %v2095 = vpop.f32.mrf.mxu0
  %v2096 = vadd.f32 %v1873, %v2095
  %2097 = vmatmul.bf16.gmra.mxu0 %v1969
  %v2098 = vpop.f32.mrf.mxu0
  %v2099 = vadd.f32 %v1873, %v2098
  %v2100 = vpop.f32.mrf.mxu0
  %v2101 = vadd.f32 %v1873, %v2100
  %2102 = vmatmul.bf16.gmra.mxu0 %v1972
  %v2103 = vpop.f32.mrf.mxu0
  %v2104 = vadd.f32 %v1873, %v2103
  %v2105 = vpop.f32.mrf.mxu0
  %v2106 = vadd.f32 %v1873, %v2105
  %2107 = vdwg.mxu0
  %v2108 = vadd.f32 %v1984, %v1986
  %v2109 = vadd.f32 %v2108, %v1989
  %v2110 = vadd.f32 %v2109, %v1991
  %v2111 = vadd.f32 %v2110, %v1994
  %v2112 = vadd.f32 %v2111, %v1996
  %v2113 = vadd.f32 %v2112, %v1999
  %v2114 = vadd.f32 %v2113, %v2001
  %v2115 = vadd.f32 %v2114, %v2004
  %v2116 = vadd.f32 %v2115, %v2006
  %v2117 = vadd.f32 %v2116, %v2009
  %v2118 = vadd.f32 %v2117, %v2011
  %v2119 = vadd.f32 %v2118, %v2014
  %v2120 = vadd.f32 %v2119, %v2016
  %v2121 = vadd.f32 %v2120, %v2019
  %v2122 = vadd.f32 %v2121, %v2021
  %v2123 = vadd.f32 %v2122, %v2024
  %v2124 = vadd.f32 %v2123, %v2026
  %v2125 = vadd.f32 %v2124, %v2029
  %v2126 = vadd.f32 %v2125, %v2031
  %v2127 = vadd.f32 %v2126, %v2034
  %v2128 = vadd.f32 %v2127, %v2036
  %v2129 = vadd.f32 %v2128, %v2039
  %v2130 = vadd.f32 %v2129, %v2041
  %v2131 = vadd.f32 %v2130, %v2044
  %v2132 = vadd.f32 %v2131, %v2046
  %v2133 = vadd.f32 %v2132, %v2049
  %v2134 = vadd.f32 %v2133, %v2051
  %v2135 = vadd.f32 %v2134, %v2054
  %v2136 = vadd.f32 %v2135, %v2056
  %v2137 = vadd.f32 %v2136, %v2059
  %v2138 = vadd.f32 %v2137, %v2061
  %v2139 = vadd.f32 %v2138, %v2064
  %v2140 = vadd.f32 %v2139, %v2066
  %v2141 = vadd.f32 %v2140, %v2069
  %v2142 = vadd.f32 %v2141, %v2071
  %v2143 = vadd.f32 %v2142, %v2074
  %v2144 = vadd.f32 %v2143, %v2076
  %v2145 = vadd.f32 %v2144, %v2079
  %v2146 = vadd.f32 %v2145, %v2081
  %v2147 = vadd.f32 %v2146, %v2084
  %v2148 = vadd.f32 %v2147, %v2086
  %v2149 = vadd.f32 %v2148, %v2089
  %v2150 = vadd.f32 %v2149, %v2091
  %v2151 = vadd.f32 %v2150, %v2094
  %v2152 = vadd.f32 %v2151, %v2096
  %v2153 = vadd.f32 %v2152, %v2099
  %v2154 = vadd.f32 %v2153, %v2101
  %v2155 = vadd.f32 %v2154, %v2104
  %v2156 = vadd.f32 %v2155, %v2106
  %v2157 = vrot.slane %v2156, 4
  %v2158 = vadd.f32 %v2156, %v2157
  %v2159 = vrot.slane %v2158, 2
  %v2160 = vadd.f32 %v2158, %v2159
  %v2161 = vrot.slane %v2160, 1
  %v2162 = vadd.f32 %v2160, %v2161
  %v2163 = vmul.f32 %v2162, 0.0025
  %v2164 = vsub.f32 %v1984, %v2163
  %v2165 = vsub.f32 %v1986, %v2163
  %v2166 = vsub.f32 %v1989, %v2163
  %v2167 = vsub.f32 %v1991, %v2163
  %v2168 = vsub.f32 %v1994, %v2163
  %v2169 = vsub.f32 %v1996, %v2163
  %v2170 = vsub.f32 %v1999, %v2163
  %v2171 = vsub.f32 %v2001, %v2163
  %v2172 = vsub.f32 %v2004, %v2163
  %v2173 = vsub.f32 %v2006, %v2163
  %v2174 = vsub.f32 %v2009, %v2163
  %v2175 = vsub.f32 %v2011, %v2163
  %v2176 = vsub.f32 %v2014, %v2163
  %v2177 = vsub.f32 %v2016, %v2163
  %v2178 = vsub.f32 %v2019, %v2163
  %v2179 = vsub.f32 %v2021, %v2163
  %v2180 = vsub.f32 %v2024, %v2163
  %v2181 = vsub.f32 %v2026, %v2163
  %v2182 = vsub.f32 %v2029, %v2163
  %v2183 = vsub.f32 %v2031, %v2163
  %v2184 = vsub.f32 %v2034, %v2163
  %v2185 = vsub.f32 %v2036, %v2163
  %v2186 = vsub.f32 %v2039, %v2163
  %v2187 = vsub.f32 %v2041, %v2163
  %v2188 = vsub.f32 %v2044, %v2163
  %v2189 = vsub.f32 %v2046, %v2163
  %v2190 = vsub.f32 %v2049, %v2163
  %v2191 = vsub.f32 %v2051, %v2163
  %v2192 = vsub.f32 %v2054, %v2163
  %v2193 = vsub.f32 %v2056, %v2163
  %v2194 = vsub.f32 %v2059, %v2163
  %v2195 = vsub.f32 %v2061, %v2163
  %v2196 = vsub.f32 %v2064, %v2163
  %v2197 = vsub.f32 %v2066, %v2163
  %v2198 = vsub.f32 %v2069, %v2163
  %v2199 = vsub.f32 %v2071, %v2163
  %v2200 = vsub.f32 %v2074, %v2163
  %v2201 = vsub.f32 %v2076, %v2163
  %v2202 = vsub.f32 %v2079, %v2163
  %v2203 = vsub.f32 %v2081, %v2163
  %v2204 = vsub.f32 %v2084, %v2163
  %v2205 = vsub.f32 %v2086, %v2163
  %v2206 = vsub.f32 %v2089, %v2163
  %v2207 = vsub.f32 %v2091, %v2163
  %v2208 = vsub.f32 %v2094, %v2163
  %v2209 = vsub.f32 %v2096, %v2163
  %v2210 = vsub.f32 %v2099, %v2163
  %v2211 = vsub.f32 %v2101, %v2163
  %v2212 = vsub.f32 %v2104, %v2163
  %v2213 = vsub.f32 %v2106, %v2163
  %v2214 = vmul.f32 %v2164, %v2164
  %v2215 = vmul.f32 %v2165, %v2165
  %v2216 = vmul.f32 %v2166, %v2166
  %v2217 = vmul.f32 %v2167, %v2167
  %v2218 = vmul.f32 %v2168, %v2168
  %v2219 = vmul.f32 %v2169, %v2169
  %v2220 = vmul.f32 %v2170, %v2170
  %v2221 = vmul.f32 %v2171, %v2171
  %v2222 = vmul.f32 %v2172, %v2172
  %v2223 = vmul.f32 %v2173, %v2173
  %v2224 = vmul.f32 %v2174, %v2174
  %v2225 = vmul.f32 %v2175, %v2175
  %v2226 = vmul.f32 %v2176, %v2176
  %v2227 = vmul.f32 %v2177, %v2177
  %v2228 = vmul.f32 %v2178, %v2178
  %v2229 = vmul.f32 %v2179, %v2179
  %v2230 = vmul.f32 %v2180, %v2180
  %v2231 = vmul.f32 %v2181, %v2181
  %v2232 = vmul.f32 %v2182, %v2182
  %v2233 = vmul.f32 %v2183, %v2183
  %v2234 = vmul.f32 %v2184, %v2184
  %v2235 = vmul.f32 %v2185, %v2185
  %v2236 = vmul.f32 %v2186, %v2186
  %v2237 = vmul.f32 %v2187, %v2187
  %v2238 = vmul.f32 %v2188, %v2188
  %v2239 = vmul.f32 %v2189, %v2189
  %v2240 = vmul.f32 %v2190, %v2190
  %v2241 = vmul.f32 %v2191, %v2191
  %v2242 = vmul.f32 %v2192, %v2192
  %v2243 = vmul.f32 %v2193, %v2193
  %v2244 = vmul.f32 %v2194, %v2194
  %v2245 = vmul.f32 %v2195, %v2195
  %v2246 = vmul.f32 %v2196, %v2196
  %v2247 = vmul.f32 %v2197, %v2197
  %v2248 = vmul.f32 %v2198, %v2198
  %v2249 = vmul.f32 %v2199, %v2199
  %v2250 = vmul.f32 %v2200, %v2200
  %v2251 = vmul.f32 %v2201, %v2201
  %v2252 = vmul.f32 %v2202, %v2202
  %v2253 = vmul.f32 %v2203, %v2203
  %v2254 = vmul.f32 %v2204, %v2204
  %v2255 = vmul.f32 %v2205, %v2205
  %v2256 = vmul.f32 %v2206, %v2206
  %v2257 = vmul.f32 %v2207, %v2207
  %v2258 = vmul.f32 %v2208, %v2208
  %v2259 = vmul.f32 %v2209, %v2209
  %v2260 = vmul.f32 %v2210, %v2210
  %v2261 = vmul.f32 %v2211, %v2211
  %v2262 = vmul.f32 %v2212, %v2212
  %v2263 = vmul.f32 %v2213, %v2213
  %v2264 = vadd.f32 %v2214, %v2215
  %v2265 = vadd.f32 %v2264, %v2216
  %v2266 = vadd.f32 %v2265, %v2217
  %v2267 = vadd.f32 %v2266, %v2218
  %v2268 = vadd.f32 %v2267, %v2219
  %v2269 = vadd.f32 %v2268, %v2220
  %v2270 = vadd.f32 %v2269, %v2221
  %v2271 = vadd.f32 %v2270, %v2222
  %v2272 = vadd.f32 %v2271, %v2223
  %v2273 = vadd.f32 %v2272, %v2224
  %v2274 = vadd.f32 %v2273, %v2225
  %v2275 = vadd.f32 %v2274, %v2226
  %v2276 = vadd.f32 %v2275, %v2227
  %v2277 = vadd.f32 %v2276, %v2228
  %v2278 = vadd.f32 %v2277, %v2229
  %v2279 = vadd.f32 %v2278, %v2230
  %v2280 = vadd.f32 %v2279, %v2231
  %v2281 = vadd.f32 %v2280, %v2232
  %v2282 = vadd.f32 %v2281, %v2233
  %v2283 = vadd.f32 %v2282, %v2234
  %v2284 = vadd.f32 %v2283, %v2235
  %v2285 = vadd.f32 %v2284, %v2236
  %v2286 = vadd.f32 %v2285, %v2237
  %v2287 = vadd.f32 %v2286, %v2238
  %v2288 = vadd.f32 %v2287, %v2239
  %v2289 = vadd.f32 %v2288, %v2240
  %v2290 = vadd.f32 %v2289, %v2241
  %v2291 = vadd.f32 %v2290, %v2242
  %v2292 = vadd.f32 %v2291, %v2243
  %v2293 = vadd.f32 %v2292, %v2244
  %v2294 = vadd.f32 %v2293, %v2245
  %v2295 = vadd.f32 %v2294, %v2246
  %v2296 = vadd.f32 %v2295, %v2247
  %v2297 = vadd.f32 %v2296, %v2248
  %v2298 = vadd.f32 %v2297, %v2249
  %v2299 = vadd.f32 %v2298, %v2250
  %v2300 = vadd.f32 %v2299, %v2251
  %v2301 = vadd.f32 %v2300, %v2252
  %v2302 = vadd.f32 %v2301, %v2253
  %v2303 = vadd.f32 %v2302, %v2254
  %v2304 = vadd.f32 %v2303, %v2255
  %v2305 = vadd.f32 %v2304, %v2256
  %v2306 = vadd.f32 %v2305, %v2257
  %v2307 = vadd.f32 %v2306, %v2258
  %v2308 = vadd.f32 %v2307, %v2259
  %v2309 = vadd.f32 %v2308, %v2260
  %v2310 = vadd.f32 %v2309, %v2261
  %v2311 = vadd.f32 %v2310, %v2262
  %v2312 = vadd.f32 %v2311, %v2263
  %v2313 = vrot.slane %v2312, 4
  %v2314 = vadd.f32 %v2312, %v2313
  %v2315 = vrot.slane %v2314, 2
  %v2316 = vadd.f32 %v2314, %v2315
  %v2317 = vrot.slane %v2316, 1
  %v2318 = vadd.f32 %v2316, %v2317
  %v2319 = vmul.f32 %v2318, 0.0025
  %v2320 = vld [vmem:[%s11] sm:$0x1]
  %v2321 = vadd.f32 %v2319, 1e-05
  %v2322 = vrsqrt.pop %v2321
  %v2323 = vmul.f32 %v2322, %v2321
  %v2324 = vmul.f32 %v2323, %v2322
  %v2325 = vmul.f32 0.5, %v2324
  %v2326 = vsub.f32 1.5, %v2325
  %v2327 = vmul.f32 %v2322, %v2326
  %vm2328 = vweird.f32 %v2321
  %vm2329 = vweird.f32 %v2322
  %vm2330 = vmor %vm2328, %vm2329
  %v2331 = vsel %vm2330, %v2322, %v2327
  %v2332 = vmul.f32 %v2320, %v2331
  %v2334 = vperm.slane %v2332, 0
  %v2336 = vmul.f32 %v2164, %v2334
  %v2337 = vmul.f32 %v2165, %v2334
  %v2338 = vmul.f32 %v2166, %v2334
  %v2339 = vmul.f32 %v2167, %v2334
  %v2340 = vmul.f32 %v2168, %v2334
  %v2341 = vmul.f32 %v2169, %v2334
  %v2342 = vmul.f32 %v2170, %v2334
  %v2343 = vmul.f32 %v2171, %v2334
  %v2344 = vmul.f32 %v2172, %v2334
  %v2345 = vmul.f32 %v2173, %v2334
  %v2346 = vmul.f32 %v2174, %v2334
  %v2347 = vmul.f32 %v2175, %v2334
  %v2348 = vmul.f32 %v2176, %v2334
  %v2349 = vmul.f32 %v2177, %v2334
  %v2350 = vmul.f32 %v2178, %v2334
  %v2351 = vmul.f32 %v2179, %v2334
  %v2352 = vmul.f32 %v2180, %v2334
  %v2353 = vmul.f32 %v2181, %v2334
  %v2354 = vmul.f32 %v2182, %v2334
  %v2355 = vmul.f32 %v2183, %v2334
  %v2356 = vmul.f32 %v2184, %v2334
  %v2357 = vmul.f32 %v2185, %v2334
  %v2358 = vmul.f32 %v2186, %v2334
  %v2359 = vmul.f32 %v2187, %v2334
  %v2360 = vmul.f32 %v2188, %v2334
  %v2361 = vmul.f32 %v2189, %v2334
  %v2362 = vmul.f32 %v2190, %v2334
  %v2363 = vmul.f32 %v2191, %v2334
  %v2364 = vmul.f32 %v2192, %v2334
  %v2365 = vmul.f32 %v2193, %v2334
  %v2366 = vmul.f32 %v2194, %v2334
  %v2367 = vmul.f32 %v2195, %v2334
  %v2368 = vmul.f32 %v2196, %v2334
  %v2369 = vmul.f32 %v2197, %v2334
  %v2370 = vmul.f32 %v2198, %v2334
  %v2371 = vmul.f32 %v2199, %v2334
  %v2372 = vmul.f32 %v2200, %v2334
  %v2373 = vmul.f32 %v2201, %v2334
  %v2374 = vmul.f32 %v2202, %v2334
  %v2375 = vmul.f32 %v2203, %v2334
  %v2376 = vmul.f32 %v2204, %v2334
  %v2377 = vmul.f32 %v2205, %v2334
  %v2378 = vmul.f32 %v2206, %v2334
  %v2379 = vmul.f32 %v2207, %v2334
  %v2380 = vmul.f32 %v2208, %v2334
  %v2381 = vmul.f32 %v2209, %v2334
  %v2382 = vmul.f32 %v2210, %v2334
  %v2383 = vmul.f32 %v2211, %v2334
  %v2384 = vmul.f32 %v2212, %v2334
  %v2385 = vmul.f32 %v2213, %v2334
  %v2386 = vld [vmem:[%s12] sm:$0x1]
  %v2388 = vperm.slane %v2386, 0
  %v2390 = vadd.f32 %v2336, %v2388
  %v2391 = vadd.f32 %v2337, %v2388
  %v2392 = vadd.f32 %v2338, %v2388
  %v2393 = vadd.f32 %v2339, %v2388
  %v2394 = vadd.f32 %v2340, %v2388
  %v2395 = vadd.f32 %v2341, %v2388
  %v2396 = vadd.f32 %v2342, %v2388
  %v2397 = vadd.f32 %v2343, %v2388
  %v2398 = vadd.f32 %v2344, %v2388
  %v2399 = vadd.f32 %v2345, %v2388
  %v2400 = vadd.f32 %v2346, %v2388
  %v2401 = vadd.f32 %v2347, %v2388
  %v2402 = vadd.f32 %v2348, %v2388
  %v2403 = vadd.f32 %v2349, %v2388
  %v2404 = vadd.f32 %v2350, %v2388
  %v2405 = vadd.f32 %v2351, %v2388
  %v2406 = vadd.f32 %v2352, %v2388
  %v2407 = vadd.f32 %v2353, %v2388
  %v2408 = vadd.f32 %v2354, %v2388
  %v2409 = vadd.f32 %v2355, %v2388
  %v2410 = vadd.f32 %v2356, %v2388
  %v2411 = vadd.f32 %v2357, %v2388
  %v2412 = vadd.f32 %v2358, %v2388
  %v2413 = vadd.f32 %v2359, %v2388
  %v2414 = vadd.f32 %v2360, %v2388
  %v2415 = vadd.f32 %v2361, %v2388
  %v2416 = vadd.f32 %v2362, %v2388
  %v2417 = vadd.f32 %v2363, %v2388
  %v2418 = vadd.f32 %v2364, %v2388
  %v2419 = vadd.f32 %v2365, %v2388
  %v2420 = vadd.f32 %v2366, %v2388
  %v2421 = vadd.f32 %v2367, %v2388
  %v2422 = vadd.f32 %v2368, %v2388
  %v2423 = vadd.f32 %v2369, %v2388
  %v2424 = vadd.f32 %v2370, %v2388
  %v2425 = vadd.f32 %v2371, %v2388
  %v2426 = vadd.f32 %v2372, %v2388
  %v2427 = vadd.f32 %v2373, %v2388
  %v2428 = vadd.f32 %v2374, %v2388
  %v2429 = vadd.f32 %v2375, %v2388
  %v2430 = vadd.f32 %v2376, %v2388
  %v2431 = vadd.f32 %v2377, %v2388
  %v2432 = vadd.f32 %v2378, %v2388
  %v2433 = vadd.f32 %v2379, %v2388
  %v2434 = vadd.f32 %v2380, %v2388
  %v2435 = vadd.f32 %v2381, %v2388
  %v2436 = vadd.f32 %v2382, %v2388
  %v2437 = vadd.f32 %v2383, %v2388
  %v2438 = vadd.f32 %v2384, %v2388
  %v2439 = vadd.f32 %v2385, %v2388
  %v2440 = vmax.f32 %v2390, 0.0
  %v2441 = vmax.f32 %v2391, 0.0
  %v2442 = vmax.f32 %v2392, 0.0
  %v2443 = vmax.f32 %v2393, 0.0
  %v2444 = vmax.f32 %v2394, 0.0
  %v2445 = vmax.f32 %v2395, 0.0
  %v2446 = vmax.f32 %v2396, 0.0
  %v2447 = vmax.f32 %v2397, 0.0
  %v2448 = vmax.f32 %v2398, 0.0
  %v2449 = vmax.f32 %v2399, 0.0
  %v2450 = vmax.f32 %v2400, 0.0
  %v2451 = vmax.f32 %v2401, 0.0
  %v2452 = vmax.f32 %v2402, 0.0
  %v2453 = vmax.f32 %v2403, 0.0
  %v2454 = vmax.f32 %v2404, 0.0
  %v2455 = vmax.f32 %v2405, 0.0
  %v2456 = vmax.f32 %v2406, 0.0
  %v2457 = vmax.f32 %v2407, 0.0
  %v2458 = vmax.f32 %v2408, 0.0
  %v2459 = vmax.f32 %v2409, 0.0
  %v2460 = vmax.f32 %v2410, 0.0
  %v2461 = vmax.f32 %v2411, 0.0
  %v2462 = vmax.f32 %v2412, 0.0
  %v2463 = vmax.f32 %v2413, 0.0
  %v2464 = vmax.f32 %v2414, 0.0
  %v2465 = vmax.f32 %v2415, 0.0
  %v2466 = vmax.f32 %v2416, 0.0
  %v2467 = vmax.f32 %v2417, 0.0
  %v2468 = vmax.f32 %v2418, 0.0
  %v2469 = vmax.f32 %v2419, 0.0
  %v2470 = vmax.f32 %v2420, 0.0
  %v2471 = vmax.f32 %v2421, 0.0
  %v2472 = vmax.f32 %v2422, 0.0
  %v2473 = vmax.f32 %v2423, 0.0
  %v2474 = vmax.f32 %v2424, 0.0
  %v2475 = vmax.f32 %v2425, 0.0
  %v2476 = vmax.f32 %v2426, 0.0
  %v2477 = vmax.f32 %v2427, 0.0
  %v2478 = vmax.f32 %v2428, 0.0
  %v2479 = vmax.f32 %v2429, 0.0
  %v2480 = vmax.f32 %v2430, 0.0
  %v2481 = vmax.f32 %v2431, 0.0
  %v2482 = vmax.f32 %v2432, 0.0
  %v2483 = vmax.f32 %v2433, 0.0
  %v2484 = vmax.f32 %v2434, 0.0
  %v2485 = vmax.f32 %v2435, 0.0
  %v2486 = vmax.f32 %v2436, 0.0
  %v2487 = vmax.f32 %v2437, 0.0
  %v2488 = vmax.f32 %v2438, 0.0
  %v2489 = vmax.f32 %v2439, 0.0
  %s2490 = smul.u32 4, 16
  %s2491 = smul.u32 %s2490, 8
  %s2492 = sshll.u32 %s2491, 4
  %2493 = dma.done [#allocation6], %s2492
  %v2494 = vld [vmem:[#allocation2] sm:$0xff]
  %v2495 = vld [vmem:[#allocation2 + $0x8] sm:$0xff]
  %v2496 = vld [vmem:[#allocation2 + $0x10] sm:$0xff]
  %v2497 = vld [vmem:[#allocation2 + $0x18] sm:$0xff]
  %v2498 = vld [vmem:[#allocation2 + $0x20] sm:$0xff]
  %v2499 = vld [vmem:[#allocation2 + $0x28] sm:$0xff]
  %v2500 = vld [vmem:[#allocation2 + $0x30] sm:$0xff]
  %v2501 = vld [vmem:[#allocation2 + $0x38] sm:$0xff]
  %v2502 = vld [vmem:[#allocation2 + $0x40] sm:$0xff]
  %v2503 = vld [vmem:[#allocation2 + $0x48] sm:$0xff]
  %v2504 = vld [vmem:[#allocation2 + $0x50] sm:$0xff]
  %v2505 = vld [vmem:[#allocation2 + $0x58] sm:$0xff]
  %v2506 = vld [vmem:[#allocation2 + $0x60] sm:$0xff]
  %v2507 = vld [vmem:[#allocation2 + $0x68] sm:$0xff]
  %v2508 = vld [vmem:[#allocation2 + $0x70] sm:$0xff]
  %v2509 = vld [vmem:[#allocation2 + $0x78] sm:$0xff]
  %v2510 = vld [vmem:[#allocation2 + $0x80] sm:$0xff]
  %v2511 = vld [vmem:[#allocation2 + $0x88] sm:$0xff]
  %v2512 = vld [vmem:[#allocation2 + $0x90] sm:$0xff]
  %v2513 = vld [vmem:[#allocation2 + $0x98] sm:$0xff]
  %v2514 = vld [vmem:[#allocation2 + $0xa0] sm:$0xff]
  %v2515 = vld [vmem:[#allocation2 + $0xa8] sm:$0xff]
  %v2516 = vld [vmem:[#allocation2 + $0xb0] sm:$0xff]
  %v2517 = vld [vmem:[#allocation2 + $0xb8] sm:$0xff]
  %v2518 = vld [vmem:[#allocation2 + $0xc0] sm:$0xff]
  %v2519 = vld [vmem:[#allocation2 + $0xc8] sm:$0xff]
  %v2520 = vld [vmem:[#allocation2 + $0xd0] sm:$0xff]
  %v2521 = vld [vmem:[#allocation2 + $0xd8] sm:$0xff]
  %v2522 = vld [vmem:[#allocation2 + $0xe0] sm:$0xff]
  %v2523 = vld [vmem:[#allocation2 + $0xe8] sm:$0xff]
  %v2524 = vld [vmem:[#allocation2 + $0xf0] sm:$0xff]
  %v2525 = vld [vmem:[#allocation2 + $0xf8] sm:$0xff]
  %v2526 = vld [vmem:[#allocation2 + $0x100] sm:$0xff]
  %v2527 = vld [vmem:[#allocation2 + $0x108] sm:$0xff]
  %v2528 = vld [vmem:[#allocation2 + $0x110] sm:$0xff]
  %v2529 = vld [vmem:[#allocation2 + $0x118] sm:$0xff]
  %v2530 = vld [vmem:[#allocation2 + $0x120] sm:$0xff]
  %v2531 = vld [vmem:[#allocation2 + $0x128] sm:$0xff]
  %v2532 = vld [vmem:[#allocation2 + $0x130] sm:$0xff]
  %v2533 = vld [vmem:[#allocation2 + $0x138] sm:$0xff]
  %v2534 = vld [vmem:[#allocation2 + $0x140] sm:$0xff]
  %v2535 = vld [vmem:[#allocation2 + $0x148] sm:$0xff]
  %v2536 = vld [vmem:[#allocation2 + $0x150] sm:$0xff]
  %v2537 = vld [vmem:[#allocation2 + $0x158] sm:$0xff]
  %v2538 = vld [vmem:[#allocation2 + $0x160] sm:$0xff]
  %v2539 = vld [vmem:[#allocation2 + $0x168] sm:$0xff]
  %v2540 = vld [vmem:[#allocation2 + $0x170] sm:$0xff]
  %v2541 = vld [vmem:[#allocation2 + $0x178] sm:$0xff]
  %v2542 = vld [vmem:[#allocation2 + $0x180] sm:$0xff]
  %v2543 = vld [vmem:[#allocation2 + $0x188] sm:$0xff]
  %v2544 = vld [vmem:[#allocation2 + $0x190] sm:$0xff]
  %v2545 = vld [vmem:[#allocation2 + $0x198] sm:$0xff]
  %v2546 = vld [vmem:[#allocation2 + $0x1a0] sm:$0xff]
  %v2547 = vld [vmem:[#allocation2 + $0x1a8] sm:$0xff]
  %v2548 = vld [vmem:[#allocation2 + $0x1b0] sm:$0xff]
  %v2549 = vld [vmem:[#allocation2 + $0x1b8] sm:$0xff]
  %v2550 = vld [vmem:[#allocation2 + $0x1c0] sm:$0xff]
  %v2551 = vld [vmem:[#allocation2 + $0x1c8] sm:$0xff]
  %v2552 = vld [vmem:[#allocation2 + $0x1d0] sm:$0xff]
  %v2553 = vld [vmem:[#allocation2 + $0x1d8] sm:$0xff]
  %v2554 = vld [vmem:[#allocation2 + $0x1e0] sm:$0xff]
  %v2555 = vld [vmem:[#allocation2 + $0x1e8] sm:$0xff]
  %v2556 = vld [vmem:[#allocation2 + $0x1f0] sm:$0xff]
  %v2557 = vld [vmem:[#allocation2 + $0x1f8] sm:$0xff]
  %v2558 = vld [vmem:[%s13] sm:$0xff]
  %v2559 = vpack.c.bf16 %v2441, %v2440
  %v2560 = vpack.c.bf16 %v2443, %v2442
  %v2561 = vpack.c.bf16 %v2445, %v2444
  %v2562 = vpack.c.bf16 %v2447, %v2446
  %v2563 = vpack.c.bf16 %v2449, %v2448
  %v2564 = vpack.c.bf16 %v2451, %v2450
  %v2565 = vpack.c.bf16 %v2453, %v2452
  %v2566 = vpack.c.bf16 %v2455, %v2454
  %v2567 = vpack.c.bf16 %v2457, %v2456
  %v2568 = vpack.c.bf16 %v2459, %v2458
  %v2569 = vpack.c.bf16 %v2461, %v2460
  %v2570 = vpack.c.bf16 %v2463, %v2462
  %v2571 = vpack.c.bf16 %v2465, %v2464
  %v2572 = vpack.c.bf16 %v2467, %v2466
  %v2573 = vpack.c.bf16 %v2469, %v2468
  %v2574 = vpack.c.bf16 %v2471, %v2470
  %v2575 = vpack.c.bf16 %v2473, %v2472
  %v2576 = vpack.c.bf16 %v2475, %v2474
  %v2577 = vpack.c.bf16 %v2477, %v2476
  %v2578 = vpack.c.bf16 %v2479, %v2478
  %v2579 = vpack.c.bf16 %v2481, %v2480
  %v2580 = vpack.c.bf16 %v2483, %v2482
  %v2581 = vpack.c.bf16 %v2485, %v2484
  %v2582 = vpack.c.bf16 %v2487, %v2486
  %v2583 = vpack.c.bf16 %v2489, %v2488
  %v2585 = vperm.slane %v2558, 0
  %v2586 = vperm.slane %v2558, 1
  %v2587 = vperm.slane %v2558, 2
  %v2588 = vperm.slane %v2558, 3
  %v2589 = vperm.slane %v2558, 4
  %v2590 = vperm.slane %v2558, 5
  %v2591 = vperm.slane %v2558, 6
  %v2592 = vperm.slane %v2558, 7
  %v2665 = vunpack.c.l.b16 %v2494
  %v2666 = vunpack.c.h.b16 %v2494
  %v2667 = vunpack.c.l.b16 %v2495
  %v2668 = vunpack.c.h.b16 %v2495
  %v2669 = vunpack.c.l.b16 %v2496
  %v2670 = vunpack.c.h.b16 %v2496
  %v2671 = vunpack.c.l.b16 %v2497
  %v2672 = vunpack.c.h.b16 %v2497
  %v2673 = vunpack.c.l.b16 %v2498
  %v2674 = vunpack.c.h.b16 %v2498
  %v2675 = vunpack.c.l.b16 %v2499
  %v2676 = vunpack.c.h.b16 %v2499
  %v2677 = vunpack.c.l.b16 %v2500
  %v2678 = vunpack.c.h.b16 %v2500
  %v2679 = vunpack.c.l.b16 %v2501
  %v2680 = vunpack.c.h.b16 %v2501
  %v2681 = vunpack.c.l.b16 %v2502
  %v2682 = vunpack.c.h.b16 %v2502
  %v2683 = vunpack.c.l.b16 %v2503
  %v2684 = vunpack.c.h.b16 %v2503
  %v2685 = vunpack.c.l.b16 %v2504
  %v2686 = vunpack.c.h.b16 %v2504
  %v2687 = vunpack.c.l.b16 %v2505
  %v2688 = vunpack.c.h.b16 %v2505
  %v2689 = vunpack.c.l.b16 %v2506
  %v2690 = vunpack.c.h.b16 %v2506
  %v2691 = vunpack.c.l.b16 %v2507
  %v2692 = vunpack.c.h.b16 %v2507
  %v2693 = vunpack.c.l.b16 %v2508
  %v2694 = vunpack.c.h.b16 %v2508
  %v2695 = vunpack.c.l.b16 %v2509
  %v2696 = vunpack.c.h.b16 %v2509
  %v2697 = vunpack.c.l.b16 %v2510
  %v2698 = vunpack.c.h.b16 %v2510
  %v2699 = vunpack.c.l.b16 %v2511
  %v2700 = vunpack.c.h.b16 %v2511
  %v2701 = vunpack.c.l.b16 %v2512
  %v2702 = vunpack.c.h.b16 %v2512
  %v2703 = vunpack.c.l.b16 %v2513
  %v2704 = vunpack.c.h.b16 %v2513
  %v2705 = vunpack.c.l.b16 %v2514
  %v2706 = vunpack.c.h.b16 %v2514
  %v2707 = vunpack.c.l.b16 %v2515
  %v2708 = vunpack.c.h.b16 %v2515
  %v2709 = vunpack.c.l.b16 %v2516
  %v2710 = vunpack.c.h.b16 %v2516
  %v2711 = vunpack.c.l.b16 %v2517
  %v2712 = vunpack.c.h.b16 %v2517
  %v2713 = vunpack.c.l.b16 %v2518
  %v2714 = vunpack.c.h.b16 %v2518
  %v2715 = vunpack.c.l.b16 %v2519
  %v2716 = vunpack.c.h.b16 %v2519
  %v2717 = vunpack.c.l.b16 %v2520
  %v2718 = vunpack.c.h.b16 %v2520
  %v2719 = vunpack.c.l.b16 %v2521
  %v2720 = vunpack.c.h.b16 %v2521
  %v2721 = vunpack.c.l.b16 %v2522
  %v2722 = vunpack.c.h.b16 %v2522
  %v2723 = vunpack.c.l.b16 %v2523
  %v2724 = vunpack.c.h.b16 %v2523
  %v2725 = vunpack.c.l.b16 %v2524
  %v2726 = vunpack.c.h.b16 %v2524
  %v2727 = vunpack.c.l.b16 %v2525
  %v2728 = vunpack.c.h.b16 %v2525
  %v2729 = vunpack.c.l.b16 %v2526
  %v2730 = vunpack.c.h.b16 %v2526
  %v2731 = vunpack.c.l.b16 %v2527
  %v2732 = vunpack.c.h.b16 %v2527
  %v2733 = vunpack.c.l.b16 %v2528
  %v2734 = vunpack.c.h.b16 %v2528
  %v2735 = vunpack.c.l.b16 %v2529
  %v2736 = vunpack.c.h.b16 %v2529
  %v2737 = vunpack.c.l.b16 %v2530
  %v2738 = vunpack.c.h.b16 %v2530
  %v2739 = vunpack.c.l.b16 %v2531
  %v2740 = vunpack.c.h.b16 %v2531
  %v2741 = vunpack.c.l.b16 %v2532
  %v2742 = vunpack.c.h.b16 %v2532
  %v2743 = vunpack.c.l.b16 %v2533
  %v2744 = vunpack.c.h.b16 %v2533
  %v2745 = vunpack.c.l.b16 %v2534
  %v2746 = vunpack.c.h.b16 %v2534
  %v2747 = vunpack.c.l.b16 %v2535
  %v2748 = vunpack.c.h.b16 %v2535
  %v2749 = vunpack.c.l.b16 %v2536
  %v2750 = vunpack.c.h.b16 %v2536
  %v2751 = vunpack.c.l.b16 %v2537
  %v2752 = vunpack.c.h.b16 %v2537
  %v2753 = vunpack.c.l.b16 %v2538
  %v2754 = vunpack.c.h.b16 %v2538
  %v2755 = vunpack.c.l.b16 %v2539
  %v2756 = vunpack.c.h.b16 %v2539
  %v2757 = vunpack.c.l.b16 %v2540
  %v2758 = vunpack.c.h.b16 %v2540
  %v2759 = vunpack.c.l.b16 %v2541
  %v2760 = vunpack.c.h.b16 %v2541
  %v2761 = vunpack.c.l.b16 %v2542
  %v2762 = vunpack.c.h.b16 %v2542
  %v2763 = vunpack.c.l.b16 %v2543
  %v2764 = vunpack.c.h.b16 %v2543
  %v2765 = vunpack.c.l.b16 %v2544
  %v2766 = vunpack.c.h.b16 %v2544
  %v2767 = vunpack.c.l.b16 %v2545
  %v2768 = vunpack.c.h.b16 %v2545
  %v2769 = vunpack.c.l.b16 %v2546
  %v2770 = vunpack.c.h.b16 %v2546
  %v2771 = vunpack.c.l.b16 %v2547
  %v2772 = vunpack.c.h.b16 %v2547
  %v2773 = vunpack.c.l.b16 %v2548
  %v2774 = vunpack.c.h.b16 %v2548
  %v2775 = vunpack.c.l.b16 %v2549
  %v2776 = vunpack.c.h.b16 %v2549
  %v2777 = vunpack.c.l.b16 %v2550
  %v2778 = vunpack.c.h.b16 %v2550
  %v2779 = vunpack.c.l.b16 %v2551
  %v2780 = vunpack.c.h.b16 %v2551
  %v2781 = vunpack.c.l.b16 %v2552
  %v2782 = vunpack.c.h.b16 %v2552
  %v2783 = vunpack.c.l.b16 %v2553
  %v2784 = vunpack.c.h.b16 %v2553
  %v2785 = vunpack.c.l.b16 %v2554
  %v2786 = vunpack.c.h.b16 %v2554
  %v2787 = vunpack.c.l.b16 %v2555
  %v2788 = vunpack.c.h.b16 %v2555
  %v2789 = vunpack.c.l.b16 %v2556
  %v2790 = vunpack.c.h.b16 %v2556
  %v2791 = vunpack.c.l.b16 %v2557
  %v2792 = vunpack.c.h.b16 %v2557
  %v2793 = vpack.c.b16 %v2673, %v2665
  %v2794 = vpack.c.b16 %v2674, %v2666
  %v2795 = vpack.c.b16 %v2675, %v2667
  %v2796 = vpack.c.b16 %v2676, %v2668
  %v2797 = vpack.c.b16 %v2677, %v2669
  %v2798 = vpack.c.b16 %v2678, %v2670
  %v2799 = vpack.c.b16 %v2679, %v2671
  %v2800 = vpack.c.b16 %v2680, %v2672
  %v2801 = vpack.c.b16 %v2689, %v2681
  %v2802 = vpack.c.b16 %v2690, %v2682
  %v2803 = vpack.c.b16 %v2691, %v2683
  %v2804 = vpack.c.b16 %v2692, %v2684
  %v2805 = vpack.c.b16 %v2693, %v2685
  %v2806 = vpack.c.b16 %v2694, %v2686
  %v2807 = vpack.c.b16 %v2695, %v2687
  %v2808 = vpack.c.b16 %v2696, %v2688
  %v2809 = vpack.c.b16 %v2705, %v2697
  %v2810 = vpack.c.b16 %v2706, %v2698
  %v2811 = vpack.c.b16 %v2707, %v2699
  %v2812 = vpack.c.b16 %v2708, %v2700
  %v2813 = vpack.c.b16 %v2709, %v2701
  %v2814 = vpack.c.b16 %v2710, %v2702
  %v2815 = vpack.c.b16 %v2711, %v2703
  %v2816 = vpack.c.b16 %v2712, %v2704
  %v2817 = vpack.c.b16 %v2721, %v2713
  %v2818 = vpack.c.b16 %v2722, %v2714
  %v2819 = vpack.c.b16 %v2723, %v2715
  %v2820 = vpack.c.b16 %v2724, %v2716
  %v2821 = vpack.c.b16 %v2725, %v2717
  %v2822 = vpack.c.b16 %v2726, %v2718
  %v2823 = vpack.c.b16 %v2727, %v2719
  %v2824 = vpack.c.b16 %v2728, %v2720
  %v2825 = vpack.c.b16 %v2737, %v2729
  %v2826 = vpack.c.b16 %v2738, %v2730
  %v2827 = vpack.c.b16 %v2739, %v2731
  %v2828 = vpack.c.b16 %v2740, %v2732
  %v2829 = vpack.c.b16 %v2741, %v2733
  %v2830 = vpack.c.b16 %v2742, %v2734
  %v2831 = vpack.c.b16 %v2743, %v2735
  %v2832 = vpack.c.b16 %v2744, %v2736
  %v2833 = vpack.c.b16 %v2753, %v2745
  %v2834 = vpack.c.b16 %v2754, %v2746
  %v2835 = vpack.c.b16 %v2755, %v2747
  %v2836 = vpack.c.b16 %v2756, %v2748
  %v2837 = vpack.c.b16 %v2757, %v2749
  %v2838 = vpack.c.b16 %v2758, %v2750
  %v2839 = vpack.c.b16 %v2759, %v2751
  %v2840 = vpack.c.b16 %v2760, %v2752
  %v2841 = vpack.c.b16 %v2769, %v2761
  %v2842 = vpack.c.b16 %v2770, %v2762
  %v2843 = vpack.c.b16 %v2771, %v2763
  %v2844 = vpack.c.b16 %v2772, %v2764
  %v2845 = vpack.c.b16 %v2773, %v2765
  %v2846 = vpack.c.b16 %v2774, %v2766
  %v2847 = vpack.c.b16 %v2775, %v2767
  %v2848 = vpack.c.b16 %v2776, %v2768
  %v2849 = vpack.c.b16 %v2785, %v2777
  %v2850 = vpack.c.b16 %v2786, %v2778
  %v2851 = vpack.c.b16 %v2787, %v2779
  %v2852 = vpack.c.b16 %v2788, %v2780
  %v2853 = vpack.c.b16 %v2789, %v2781
  %v2854 = vpack.c.b16 %v2790, %v2782
  %v2855 = vpack.c.b16 %v2791, %v2783
  %v2856 = vpack.c.b16 %v2792, %v2784
  %2921 = vmatpush.bf16.msra.mxu0 %v2849
  %2922 = vmatpush.bf16.msra.mxu0 %v2841
  %2923 = vmatpush.bf16.msra.mxu0 %v2833
  %2924 = vmatpush.bf16.msra.mxu0 %v2825
  %2925 = vmatpush.bf16.msra.mxu0 %v2817
  %2926 = vmatpush.bf16.msra.mxu0 %v2809
  %2927 = vmatpush.bf16.msra.mxu0 %v2801
  %2928 = vmatpush.bf16.msra.mxu0 %v2793
  %2929 = vmatmul.bf16.gmra.mxu0 %v2559
  %v2930 = vpop.f32.mrf.mxu0
  %v2931 = vadd.f32 %v2585, %v2930
  %v2932 = vpop.f32.mrf.mxu0
  %v2933 = vadd.f32 %v2585, %v2932
  %2934 = vmatmul.bf16.gmra.mxu0 %v2560
  %v2935 = vpop.f32.mrf.mxu0
  %v2936 = vadd.f32 %v2585, %v2935
  %v2937 = vpop.f32.mrf.mxu0
  %v2938 = vadd.f32 %v2585, %v2937
  %2939 = vmatmul.bf16.gmra.mxu0 %v2561
  %v2940 = vpop.f32.mrf.mxu0
  %v2941 = vadd.f32 %v2585, %v2940
  %v2942 = vpop.f32.mrf.mxu0
  %v2943 = vadd.f32 %v2585, %v2942
  %2944 = vmatmul.bf16.gmra.mxu0 %v2562
  %v2945 = vpop.f32.mrf.mxu0
  %v2946 = vadd.f32 %v2585, %v2945
  %v2947 = vpop.f32.mrf.mxu0
  %v2948 = vadd.f32 %v2585, %v2947
  %2949 = vmatmul.bf16.gmra.mxu0 %v2563
  %v2950 = vpop.f32.mrf.mxu0
  %v2951 = vadd.f32 %v2585, %v2950
  %v2952 = vpop.f32.mrf.mxu0
  %v2953 = vadd.f32 %v2585, %v2952
  %2954 = vmatmul.bf16.gmra.mxu0 %v2564
  %v2955 = vpop.f32.mrf.mxu0
  %v2956 = vadd.f32 %v2585, %v2955
  %v2957 = vpop.f32.mrf.mxu0
  %v2958 = vadd.f32 %v2585, %v2957
  %2959 = vmatmul.bf16.gmra.mxu0 %v2565
  %v2960 = vpop.f32.mrf.mxu0
  %v2961 = vadd.f32 %v2585, %v2960
  %v2962 = vpop.f32.mrf.mxu0
  %v2963 = vadd.f32 %v2585, %v2962
  %2964 = vmatmul.bf16.gmra.mxu0 %v2566
  %v2965 = vpop.f32.mrf.mxu0
  %v2966 = vadd.f32 %v2585, %v2965
  %v2967 = vpop.f32.mrf.mxu0
  %v2968 = vadd.f32 %v2585, %v2967
  %2969 = vmatmul.bf16.gmra.mxu0 %v2567
  %v2970 = vpop.f32.mrf.mxu0
  %v2971 = vadd.f32 %v2585, %v2970
  %v2972 = vpop.f32.mrf.mxu0
  %v2973 = vadd.f32 %v2585, %v2972
  %2974 = vmatmul.bf16.gmra.mxu0 %v2568
  %v2975 = vpop.f32.mrf.mxu0
  %v2976 = vadd.f32 %v2585, %v2975
  %v2977 = vpop.f32.mrf.mxu0
  %v2978 = vadd.f32 %v2585, %v2977
  %2979 = vmatmul.bf16.gmra.mxu0 %v2569
  %v2980 = vpop.f32.mrf.mxu0
  %v2981 = vadd.f32 %v2585, %v2980
  %v2982 = vpop.f32.mrf.mxu0
  %v2983 = vadd.f32 %v2585, %v2982
  %2984 = vmatmul.bf16.gmra.mxu0 %v2570
  %v2985 = vpop.f32.mrf.mxu0
  %v2986 = vadd.f32 %v2585, %v2985
  %v2987 = vpop.f32.mrf.mxu0
  %v2988 = vadd.f32 %v2585, %v2987
  %2989 = vmatmul.bf16.gmra.mxu0 %v2571
  %v2990 = vpop.f32.mrf.mxu0
  %v2991 = vadd.f32 %v2585, %v2990
  %v2992 = vpop.f32.mrf.mxu0
  %v2993 = vadd.f32 %v2585, %v2992
  %2994 = vmatmul.bf16.gmra.mxu0 %v2572
  %v2995 = vpop.f32.mrf.mxu0
  %v2996 = vadd.f32 %v2585, %v2995
  %v2997 = vpop.f32.mrf.mxu0
  %v2998 = vadd.f32 %v2585, %v2997
  %2999 = vmatmul.bf16.gmra.mxu0 %v2573
  %v3000 = vpop.f32.mrf.mxu0
  %v3001 = vadd.f32 %v2585, %v3000
  %v3002 = vpop.f32.mrf.mxu0
  %v3003 = vadd.f32 %v2585, %v3002
  %3004 = vmatmul.bf16.gmra.mxu0 %v2574
  %v3005 = vpop.f32.mrf.mxu0
  %v3006 = vadd.f32 %v2585, %v3005
  %v3007 = vpop.f32.mrf.mxu0
  %v3008 = vadd.f32 %v2585, %v3007
  %3009 = vmatmul.bf16.gmra.mxu0 %v2575
  %v3010 = vpop.f32.mrf.mxu0
  %v3011 = vadd.f32 %v2585, %v3010
  %v3012 = vpop.f32.mrf.mxu0
  %v3013 = vadd.f32 %v2585, %v3012
  %3014 = vmatmul.bf16.gmra.mxu0 %v2576
  %v3015 = vpop.f32.mrf.mxu0
  %v3016 = vadd.f32 %v2585, %v3015
  %v3017 = vpop.f32.mrf.mxu0
  %v3018 = vadd.f32 %v2585, %v3017
  %3019 = vmatmul.bf16.gmra.mxu0 %v2577
  %v3020 = vpop.f32.mrf.mxu0
  %v3021 = vadd.f32 %v2585, %v3020
  %v3022 = vpop.f32.mrf.mxu0
  %v3023 = vadd.f32 %v2585, %v3022
  %3024 = vmatmul.bf16.gmra.mxu0 %v2578
  %v3025 = vpop.f32.mrf.mxu0
  %v3026 = vadd.f32 %v2585, %v3025
  %v3027 = vpop.f32.mrf.mxu0
  %v3028 = vadd.f32 %v2585, %v3027
  %3029 = vmatmul.bf16.gmra.mxu0 %v2579
  %v3030 = vpop.f32.mrf.mxu0
  %v3031 = vadd.f32 %v2585, %v3030
  %v3032 = vpop.f32.mrf.mxu0
  %v3033 = vadd.f32 %v2585, %v3032
  %3034 = vmatmul.bf16.gmra.mxu0 %v2580
  %v3035 = vpop.f32.mrf.mxu0
  %v3036 = vadd.f32 %v2585, %v3035
  %v3037 = vpop.f32.mrf.mxu0
  %v3038 = vadd.f32 %v2585, %v3037
  %3039 = vmatmul.bf16.gmra.mxu0 %v2581
  %v3040 = vpop.f32.mrf.mxu0
  %v3041 = vadd.f32 %v2585, %v3040
  %v3042 = vpop.f32.mrf.mxu0
  %v3043 = vadd.f32 %v2585, %v3042
  %3044 = vmatmul.bf16.gmra.mxu0 %v2582
  %v3045 = vpop.f32.mrf.mxu0
  %v3046 = vadd.f32 %v2585, %v3045
  %v3047 = vpop.f32.mrf.mxu0
  %v3048 = vadd.f32 %v2585, %v3047
  %3049 = vmatmul.bf16.gmra.mxu0 %v2583
  %v3050 = vpop.f32.mrf.mxu0
  %v3051 = vadd.f32 %v2585, %v3050
  %v3052 = vpop.f32.mrf.mxu0
  %v3053 = vadd.f32 %v2585, %v3052
  %3054 = vdwg.mxu0
  %3055 = vmatpush.bf16.msra.mxu0 %v2850
  %3056 = vmatpush.bf16.msra.mxu0 %v2842
  %3057 = vmatpush.bf16.msra.mxu0 %v2834
  %3058 = vmatpush.bf16.msra.mxu0 %v2826
  %3059 = vmatpush.bf16.msra.mxu0 %v2818
  %3060 = vmatpush.bf16.msra.mxu0 %v2810
  %3061 = vmatpush.bf16.msra.mxu0 %v2802
  %3062 = vmatpush.bf16.msra.mxu0 %v2794
  %3063 = vmatmul.bf16.gmra.mxu0 %v2559
  %v3064 = vpop.f32.mrf.mxu0
  %v3065 = vadd.f32 %v2586, %v3064
  %v3066 = vpop.f32.mrf.mxu0
  %v3067 = vadd.f32 %v2586, %v3066
  %3068 = vmatmul.bf16.gmra.mxu0 %v2560
  %v3069 = vpop.f32.mrf.mxu0
  %v3070 = vadd.f32 %v2586, %v3069
  %v3071 = vpop.f32.mrf.mxu0
  %v3072 = vadd.f32 %v2586, %v3071
  %3073 = vmatmul.bf16.gmra.mxu0 %v2561
  %v3074 = vpop.f32.mrf.mxu0
  %v3075 = vadd.f32 %v2586, %v3074
  %v3076 = vpop.f32.mrf.mxu0
  %v3077 = vadd.f32 %v2586, %v3076
  %3078 = vmatmul.bf16.gmra.mxu0 %v2562
  %v3079 = vpop.f32.mrf.mxu0
  %v3080 = vadd.f32 %v2586, %v3079
  %v3081 = vpop.f32.mrf.mxu0
  %v3082 = vadd.f32 %v2586, %v3081
  %3083 = vmatmul.bf16.gmra.mxu0 %v2563
  %v3084 = vpop.f32.mrf.mxu0
  %v3085 = vadd.f32 %v2586, %v3084
  %v3086 = vpop.f32.mrf.mxu0
  %v3087 = vadd.f32 %v2586, %v3086
  %3088 = vmatmul.bf16.gmra.mxu0 %v2564
  %v3089 = vpop.f32.mrf.mxu0
  %v3090 = vadd.f32 %v2586, %v3089
  %v3091 = vpop.f32.mrf.mxu0
  %v3092 = vadd.f32 %v2586, %v3091
  %3093 = vmatmul.bf16.gmra.mxu0 %v2565
  %v3094 = vpop.f32.mrf.mxu0
  %v3095 = vadd.f32 %v2586, %v3094
  %v3096 = vpop.f32.mrf.mxu0
  %v3097 = vadd.f32 %v2586, %v3096
  %3098 = vmatmul.bf16.gmra.mxu0 %v2566
  %v3099 = vpop.f32.mrf.mxu0
  %v3100 = vadd.f32 %v2586, %v3099
  %v3101 = vpop.f32.mrf.mxu0
  %v3102 = vadd.f32 %v2586, %v3101
  %3103 = vmatmul.bf16.gmra.mxu0 %v2567
  %v3104 = vpop.f32.mrf.mxu0
  %v3105 = vadd.f32 %v2586, %v3104
  %v3106 = vpop.f32.mrf.mxu0
  %v3107 = vadd.f32 %v2586, %v3106
  %3108 = vmatmul.bf16.gmra.mxu0 %v2568
  %v3109 = vpop.f32.mrf.mxu0
  %v3110 = vadd.f32 %v2586, %v3109
  %v3111 = vpop.f32.mrf.mxu0
  %v3112 = vadd.f32 %v2586, %v3111
  %3113 = vmatmul.bf16.gmra.mxu0 %v2569
  %v3114 = vpop.f32.mrf.mxu0
  %v3115 = vadd.f32 %v2586, %v3114
  %v3116 = vpop.f32.mrf.mxu0
  %v3117 = vadd.f32 %v2586, %v3116
  %3118 = vmatmul.bf16.gmra.mxu0 %v2570
  %v3119 = vpop.f32.mrf.mxu0
  %v3120 = vadd.f32 %v2586, %v3119
  %v3121 = vpop.f32.mrf.mxu0
  %v3122 = vadd.f32 %v2586, %v3121
  %3123 = vmatmul.bf16.gmra.mxu0 %v2571
  %v3124 = vpop.f32.mrf.mxu0
  %v3125 = vadd.f32 %v2586, %v3124
  %v3126 = vpop.f32.mrf.mxu0
  %v3127 = vadd.f32 %v2586, %v3126
  %3128 = vmatmul.bf16.gmra.mxu0 %v2572
  %v3129 = vpop.f32.mrf.mxu0
  %v3130 = vadd.f32 %v2586, %v3129
  %v3131 = vpop.f32.mrf.mxu0
  %v3132 = vadd.f32 %v2586, %v3131
  %3133 = vmatmul.bf16.gmra.mxu0 %v2573
  %v3134 = vpop.f32.mrf.mxu0
  %v3135 = vadd.f32 %v2586, %v3134
  %v3136 = vpop.f32.mrf.mxu0
  %v3137 = vadd.f32 %v2586, %v3136
  %3138 = vmatmul.bf16.gmra.mxu0 %v2574
  %v3139 = vpop.f32.mrf.mxu0
  %v3140 = vadd.f32 %v2586, %v3139
  %v3141 = vpop.f32.mrf.mxu0
  %v3142 = vadd.f32 %v2586, %v3141
  %3143 = vmatmul.bf16.gmra.mxu0 %v2575
  %v3144 = vpop.f32.mrf.mxu0
  %v3145 = vadd.f32 %v2586, %v3144
  %v3146 = vpop.f32.mrf.mxu0
  %v3147 = vadd.f32 %v2586, %v3146
  %3148 = vmatmul.bf16.gmra.mxu0 %v2576
  %v3149 = vpop.f32.mrf.mxu0
  %v3150 = vadd.f32 %v2586, %v3149
  %v3151 = vpop.f32.mrf.mxu0
  %v3152 = vadd.f32 %v2586, %v3151
  %3153 = vmatmul.bf16.gmra.mxu0 %v2577
  %v3154 = vpop.f32.mrf.mxu0
  %v3155 = vadd.f32 %v2586, %v3154
  %v3156 = vpop.f32.mrf.mxu0
  %v3157 = vadd.f32 %v2586, %v3156
  %3158 = vmatmul.bf16.gmra.mxu0 %v2578
  %v3159 = vpop.f32.mrf.mxu0
  %v3160 = vadd.f32 %v2586, %v3159
  %v3161 = vpop.f32.mrf.mxu0
  %v3162 = vadd.f32 %v2586, %v3161
  %3163 = vmatmul.bf16.gmra.mxu0 %v2579
  %v3164 = vpop.f32.mrf.mxu0
  %v3165 = vadd.f32 %v2586, %v3164
  %v3166 = vpop.f32.mrf.mxu0
  %v3167 = vadd.f32 %v2586, %v3166
  %3168 = vmatmul.bf16.gmra.mxu0 %v2580
  %v3169 = vpop.f32.mrf.mxu0
  %v3170 = vadd.f32 %v2586, %v3169
  %v3171 = vpop.f32.mrf.mxu0
  %v3172 = vadd.f32 %v2586, %v3171
  %3173 = vmatmul.bf16.gmra.mxu0 %v2581
  %v3174 = vpop.f32.mrf.mxu0
  %v3175 = vadd.f32 %v2586, %v3174
  %v3176 = vpop.f32.mrf.mxu0
  %v3177 = vadd.f32 %v2586, %v3176
  %3178 = vmatmul.bf16.gmra.mxu0 %v2582
  %v3179 = vpop.f32.mrf.mxu0
  %v3180 = vadd.f32 %v2586, %v3179
  %v3181 = vpop.f32.mrf.mxu0
  %v3182 = vadd.f32 %v2586, %v3181
  %3183 = vmatmul.bf16.gmra.mxu0 %v2583
  %v3184 = vpop.f32.mrf.mxu0
  %v3185 = vadd.f32 %v2586, %v3184
  %v3186 = vpop.f32.mrf.mxu0
  %v3187 = vadd.f32 %v2586, %v3186
  %3188 = vdwg.mxu0
  %3189 = vmatpush.bf16.msra.mxu0 %v2851
  %3190 = vmatpush.bf16.msra.mxu0 %v2843
  %3191 = vmatpush.bf16.msra.mxu0 %v2835
  %3192 = vmatpush.bf16.msra.mxu0 %v2827
  %3193 = vmatpush.bf16.msra.mxu0 %v2819
  %3194 = vmatpush.bf16.msra.mxu0 %v2811
  %3195 = vmatpush.bf16.msra.mxu0 %v2803
  %3196 = vmatpush.bf16.msra.mxu0 %v2795
  %3197 = vmatmul.bf16.gmra.mxu0 %v2559
  %v3198 = vpop.f32.mrf.mxu0
  %v3199 = vadd.f32 %v2587, %v3198
  %v3200 = vpop.f32.mrf.mxu0
  %v3201 = vadd.f32 %v2587, %v3200
  %3202 = vmatmul.bf16.gmra.mxu0 %v2560
  %v3203 = vpop.f32.mrf.mxu0
  %v3204 = vadd.f32 %v2587, %v3203
  %v3205 = vpop.f32.mrf.mxu0
  %v3206 = vadd.f32 %v2587, %v3205
  %3207 = vmatmul.bf16.gmra.mxu0 %v2561
  %v3208 = vpop.f32.mrf.mxu0
  %v3209 = vadd.f32 %v2587, %v3208
  %v3210 = vpop.f32.mrf.mxu0
  %v3211 = vadd.f32 %v2587, %v3210
  %3212 = vmatmul.bf16.gmra.mxu0 %v2562
  %v3213 = vpop.f32.mrf.mxu0
  %v3214 = vadd.f32 %v2587, %v3213
  %v3215 = vpop.f32.mrf.mxu0
  %v3216 = vadd.f32 %v2587, %v3215
  %3217 = vmatmul.bf16.gmra.mxu0 %v2563
  %v3218 = vpop.f32.mrf.mxu0
  %v3219 = vadd.f32 %v2587, %v3218
  %v3220 = vpop.f32.mrf.mxu0
  %v3221 = vadd.f32 %v2587, %v3220
  %3222 = vmatmul.bf16.gmra.mxu0 %v2564
  %v3223 = vpop.f32.mrf.mxu0
  %v3224 = vadd.f32 %v2587, %v3223
  %v3225 = vpop.f32.mrf.mxu0
  %v3226 = vadd.f32 %v2587, %v3225
  %3227 = vmatmul.bf16.gmra.mxu0 %v2565
  %v3228 = vpop.f32.mrf.mxu0
  %v3229 = vadd.f32 %v2587, %v3228
  %v3230 = vpop.f32.mrf.mxu0
  %v3231 = vadd.f32 %v2587, %v3230
  %3232 = vmatmul.bf16.gmra.mxu0 %v2566
  %v3233 = vpop.f32.mrf.mxu0
  %v3234 = vadd.f32 %v2587, %v3233
  %v3235 = vpop.f32.mrf.mxu0
  %v3236 = vadd.f32 %v2587, %v3235
  %3237 = vmatmul.bf16.gmra.mxu0 %v2567
  %v3238 = vpop.f32.mrf.mxu0
  %v3239 = vadd.f32 %v2587, %v3238
  %v3240 = vpop.f32.mrf.mxu0
  %v3241 = vadd.f32 %v2587, %v3240
  %3242 = vmatmul.bf16.gmra.mxu0 %v2568
  %v3243 = vpop.f32.mrf.mxu0
  %v3244 = vadd.f32 %v2587, %v3243
  %v3245 = vpop.f32.mrf.mxu0
  %v3246 = vadd.f32 %v2587, %v3245
  %3247 = vmatmul.bf16.gmra.mxu0 %v2569
  %v3248 = vpop.f32.mrf.mxu0
  %v3249 = vadd.f32 %v2587, %v3248
  %v3250 = vpop.f32.mrf.mxu0
  %v3251 = vadd.f32 %v2587, %v3250
  %3252 = vmatmul.bf16.gmra.mxu0 %v2570
  %v3253 = vpop.f32.mrf.mxu0
  %v3254 = vadd.f32 %v2587, %v3253
  %v3255 = vpop.f32.mrf.mxu0
  %v3256 = vadd.f32 %v2587, %v3255
  %3257 = vmatmul.bf16.gmra.mxu0 %v2571
  %v3258 = vpop.f32.mrf.mxu0
  %v3259 = vadd.f32 %v2587, %v3258
  %v3260 = vpop.f32.mrf.mxu0
  %v3261 = vadd.f32 %v2587, %v3260
  %3262 = vmatmul.bf16.gmra.mxu0 %v2572
  %v3263 = vpop.f32.mrf.mxu0
  %v3264 = vadd.f32 %v2587, %v3263
  %v3265 = vpop.f32.mrf.mxu0
  %v3266 = vadd.f32 %v2587, %v3265
  %3267 = vmatmul.bf16.gmra.mxu0 %v2573
  %v3268 = vpop.f32.mrf.mxu0
  %v3269 = vadd.f32 %v2587, %v3268
  %v3270 = vpop.f32.mrf.mxu0
  %v3271 = vadd.f32 %v2587, %v3270
  %3272 = vmatmul.bf16.gmra.mxu0 %v2574
  %v3273 = vpop.f32.mrf.mxu0
  %v3274 = vadd.f32 %v2587, %v3273
  %v3275 = vpop.f32.mrf.mxu0
  %v3276 = vadd.f32 %v2587, %v3275
  %3277 = vmatmul.bf16.gmra.mxu0 %v2575
  %v3278 = vpop.f32.mrf.mxu0
  %v3279 = vadd.f32 %v2587, %v3278
  %v3280 = vpop.f32.mrf.mxu0
  %v3281 = vadd.f32 %v2587, %v3280
  %3282 = vmatmul.bf16.gmra.mxu0 %v2576
  %v3283 = vpop.f32.mrf.mxu0
  %v3284 = vadd.f32 %v2587, %v3283
  %v3285 = vpop.f32.mrf.mxu0
  %v3286 = vadd.f32 %v2587, %v3285
  %3287 = vmatmul.bf16.gmra.mxu0 %v2577
  %v3288 = vpop.f32.mrf.mxu0
  %v3289 = vadd.f32 %v2587, %v3288
  %v3290 = vpop.f32.mrf.mxu0
  %v3291 = vadd.f32 %v2587, %v3290
  %3292 = vmatmul.bf16.gmra.mxu0 %v2578
  %v3293 = vpop.f32.mrf.mxu0
  %v3294 = vadd.f32 %v2587, %v3293
  %v3295 = vpop.f32.mrf.mxu0
  %v3296 = vadd.f32 %v2587, %v3295
  %3297 = vmatmul.bf16.gmra.mxu0 %v2579
  %v3298 = vpop.f32.mrf.mxu0
  %v3299 = vadd.f32 %v2587, %v3298
  %v3300 = vpop.f32.mrf.mxu0
  %v3301 = vadd.f32 %v2587, %v3300
  %3302 = vmatmul.bf16.gmra.mxu0 %v2580
  %v3303 = vpop.f32.mrf.mxu0
  %v3304 = vadd.f32 %v2587, %v3303
  %v3305 = vpop.f32.mrf.mxu0
  %v3306 = vadd.f32 %v2587, %v3305
  %3307 = vmatmul.bf16.gmra.mxu0 %v2581
  %v3308 = vpop.f32.mrf.mxu0
  %v3309 = vadd.f32 %v2587, %v3308
  %v3310 = vpop.f32.mrf.mxu0
  %v3311 = vadd.f32 %v2587, %v3310
  %3312 = vmatmul.bf16.gmra.mxu0 %v2582
  %v3313 = vpop.f32.mrf.mxu0
  %v3314 = vadd.f32 %v2587, %v3313
  %v3315 = vpop.f32.mrf.mxu0
  %v3316 = vadd.f32 %v2587, %v3315
  %3317 = vmatmul.bf16.gmra.mxu0 %v2583
  %v3318 = vpop.f32.mrf.mxu0
  %v3319 = vadd.f32 %v2587, %v3318
  %v3320 = vpop.f32.mrf.mxu0
  %v3321 = vadd.f32 %v2587, %v3320
  %3322 = vdwg.mxu0
  %3323 = vmatpush.bf16.msra.mxu0 %v2852
  %3324 = vmatpush.bf16.msra.mxu0 %v2844
  %3325 = vmatpush.bf16.msra.mxu0 %v2836
  %3326 = vmatpush.bf16.msra.mxu0 %v2828
  %3327 = vmatpush.bf16.msra.mxu0 %v2820
  %3328 = vmatpush.bf16.msra.mxu0 %v2812
  %3329 = vmatpush.bf16.msra.mxu0 %v2804
  %3330 = vmatpush.bf16.msra.mxu0 %v2796
  %3331 = vmatmul.bf16.gmra.mxu0 %v2559
  %v3332 = vpop.f32.mrf.mxu0
  %v3333 = vadd.f32 %v2588, %v3332
  %v3334 = vpop.f32.mrf.mxu0
  %v3335 = vadd.f32 %v2588, %v3334
  %3336 = vmatmul.bf16.gmra.mxu0 %v2560
  %v3337 = vpop.f32.mrf.mxu0
  %v3338 = vadd.f32 %v2588, %v3337
  %v3339 = vpop.f32.mrf.mxu0
  %v3340 = vadd.f32 %v2588, %v3339
  %3341 = vmatmul.bf16.gmra.mxu0 %v2561
  %v3342 = vpop.f32.mrf.mxu0
  %v3343 = vadd.f32 %v2588, %v3342
  %v3344 = vpop.f32.mrf.mxu0
  %v3345 = vadd.f32 %v2588, %v3344
  %3346 = vmatmul.bf16.gmra.mxu0 %v2562
  %v3347 = vpop.f32.mrf.mxu0
  %v3348 = vadd.f32 %v2588, %v3347
  %v3349 = vpop.f32.mrf.mxu0
  %v3350 = vadd.f32 %v2588, %v3349
  %3351 = vmatmul.bf16.gmra.mxu0 %v2563
  %v3352 = vpop.f32.mrf.mxu0
  %v3353 = vadd.f32 %v2588, %v3352
  %v3354 = vpop.f32.mrf.mxu0
  %v3355 = vadd.f32 %v2588, %v3354
  %3356 = vmatmul.bf16.gmra.mxu0 %v2564
  %v3357 = vpop.f32.mrf.mxu0
  %v3358 = vadd.f32 %v2588, %v3357
  %v3359 = vpop.f32.mrf.mxu0
  %v3360 = vadd.f32 %v2588, %v3359
  %3361 = vmatmul.bf16.gmra.mxu0 %v2565
  %v3362 = vpop.f32.mrf.mxu0
  %v3363 = vadd.f32 %v2588, %v3362
  %v3364 = vpop.f32.mrf.mxu0
  %v3365 = vadd.f32 %v2588, %v3364
  %3366 = vmatmul.bf16.gmra.mxu0 %v2566
  %v3367 = vpop.f32.mrf.mxu0
  %v3368 = vadd.f32 %v2588, %v3367
  %v3369 = vpop.f32.mrf.mxu0
  %v3370 = vadd.f32 %v2588, %v3369
  %3371 = vmatmul.bf16.gmra.mxu0 %v2567
  %v3372 = vpop.f32.mrf.mxu0
  %v3373 = vadd.f32 %v2588, %v3372
  %v3374 = vpop.f32.mrf.mxu0
  %v3375 = vadd.f32 %v2588, %v3374
  %3376 = vmatmul.bf16.gmra.mxu0 %v2568
  %v3377 = vpop.f32.mrf.mxu0
  %v3378 = vadd.f32 %v2588, %v3377
  %v3379 = vpop.f32.mrf.mxu0
  %v3380 = vadd.f32 %v2588, %v3379
  %3381 = vmatmul.bf16.gmra.mxu0 %v2569
  %v3382 = vpop.f32.mrf.mxu0
  %v3383 = vadd.f32 %v2588, %v3382
  %v3384 = vpop.f32.mrf.mxu0
  %v3385 = vadd.f32 %v2588, %v3384
  %3386 = vmatmul.bf16.gmra.mxu0 %v2570
  %v3387 = vpop.f32.mrf.mxu0
  %v3388 = vadd.f32 %v2588, %v3387
  %v3389 = vpop.f32.mrf.mxu0
  %v3390 = vadd.f32 %v2588, %v3389
  %3391 = vmatmul.bf16.gmra.mxu0 %v2571
  %v3392 = vpop.f32.mrf.mxu0
  %v3393 = vadd.f32 %v2588, %v3392
  %v3394 = vpop.f32.mrf.mxu0
  %v3395 = vadd.f32 %v2588, %v3394
  %3396 = vmatmul.bf16.gmra.mxu0 %v2572
  %v3397 = vpop.f32.mrf.mxu0
  %v3398 = vadd.f32 %v2588, %v3397
  %v3399 = vpop.f32.mrf.mxu0
  %v3400 = vadd.f32 %v2588, %v3399
  %3401 = vmatmul.bf16.gmra.mxu0 %v2573
  %v3402 = vpop.f32.mrf.mxu0
  %v3403 = vadd.f32 %v2588, %v3402
  %v3404 = vpop.f32.mrf.mxu0
  %v3405 = vadd.f32 %v2588, %v3404
  %3406 = vmatmul.bf16.gmra.mxu0 %v2574
  %v3407 = vpop.f32.mrf.mxu0
  %v3408 = vadd.f32 %v2588, %v3407
  %v3409 = vpop.f32.mrf.mxu0
  %v3410 = vadd.f32 %v2588, %v3409
  %3411 = vmatmul.bf16.gmra.mxu0 %v2575
  %v3412 = vpop.f32.mrf.mxu0
  %v3413 = vadd.f32 %v2588, %v3412
  %v3414 = vpop.f32.mrf.mxu0
  %v3415 = vadd.f32 %v2588, %v3414
  %3416 = vmatmul.bf16.gmra.mxu0 %v2576
  %v3417 = vpop.f32.mrf.mxu0
  %v3418 = vadd.f32 %v2588, %v3417
  %v3419 = vpop.f32.mrf.mxu0
  %v3420 = vadd.f32 %v2588, %v3419
  %3421 = vmatmul.bf16.gmra.mxu0 %v2577
  %v3422 = vpop.f32.mrf.mxu0
  %v3423 = vadd.f32 %v2588, %v3422
  %v3424 = vpop.f32.mrf.mxu0
  %v3425 = vadd.f32 %v2588, %v3424
  %3426 = vmatmul.bf16.gmra.mxu0 %v2578
  %v3427 = vpop.f32.mrf.mxu0
  %v3428 = vadd.f32 %v2588, %v3427
  %v3429 = vpop.f32.mrf.mxu0
  %v3430 = vadd.f32 %v2588, %v3429
  %3431 = vmatmul.bf16.gmra.mxu0 %v2579
  %v3432 = vpop.f32.mrf.mxu0
  %v3433 = vadd.f32 %v2588, %v3432
  %v3434 = vpop.f32.mrf.mxu0
  %v3435 = vadd.f32 %v2588, %v3434
  %3436 = vmatmul.bf16.gmra.mxu0 %v2580
  %v3437 = vpop.f32.mrf.mxu0
  %v3438 = vadd.f32 %v2588, %v3437
  %v3439 = vpop.f32.mrf.mxu0
  %v3440 = vadd.f32 %v2588, %v3439
  %3441 = vmatmul.bf16.gmra.mxu0 %v2581
  %v3442 = vpop.f32.mrf.mxu0
  %v3443 = vadd.f32 %v2588, %v3442
  %v3444 = vpop.f32.mrf.mxu0
  %v3445 = vadd.f32 %v2588, %v3444
  %3446 = vmatmul.bf16.gmra.mxu0 %v2582
  %v3447 = vpop.f32.mrf.mxu0
  %v3448 = vadd.f32 %v2588, %v3447
  %v3449 = vpop.f32.mrf.mxu0
  %v3450 = vadd.f32 %v2588, %v3449
  %3451 = vmatmul.bf16.gmra.mxu0 %v2583
  %v3452 = vpop.f32.mrf.mxu0
  %v3453 = vadd.f32 %v2588, %v3452
  %v3454 = vpop.f32.mrf.mxu0
  %v3455 = vadd.f32 %v2588, %v3454
  %3456 = vdwg.mxu0
  %3457 = vmatpush.bf16.msra.mxu0 %v2853
  %3458 = vmatpush.bf16.msra.mxu0 %v2845
  %3459 = vmatpush.bf16.msra.mxu0 %v2837
  %3460 = vmatpush.bf16.msra.mxu0 %v2829
  %3461 = vmatpush.bf16.msra.mxu0 %v2821
  %3462 = vmatpush.bf16.msra.mxu0 %v2813
  %3463 = vmatpush.bf16.msra.mxu0 %v2805
  %3464 = vmatpush.bf16.msra.mxu0 %v2797
  %3465 = vmatmul.bf16.gmra.mxu0 %v2559
  %v3466 = vpop.f32.mrf.mxu0
  %v3467 = vadd.f32 %v2589, %v3466
  %v3468 = vpop.f32.mrf.mxu0
  %v3469 = vadd.f32 %v2589, %v3468
  %3470 = vmatmul.bf16.gmra.mxu0 %v2560
  %v3471 = vpop.f32.mrf.mxu0
  %v3472 = vadd.f32 %v2589, %v3471
  %v3473 = vpop.f32.mrf.mxu0
  %v3474 = vadd.f32 %v2589, %v3473
  %3475 = vmatmul.bf16.gmra.mxu0 %v2561
  %v3476 = vpop.f32.mrf.mxu0
  %v3477 = vadd.f32 %v2589, %v3476
  %v3478 = vpop.f32.mrf.mxu0
  %v3479 = vadd.f32 %v2589, %v3478
  %3480 = vmatmul.bf16.gmra.mxu0 %v2562
  %v3481 = vpop.f32.mrf.mxu0
  %v3482 = vadd.f32 %v2589, %v3481
  %v3483 = vpop.f32.mrf.mxu0
  %v3484 = vadd.f32 %v2589, %v3483
  %3485 = vmatmul.bf16.gmra.mxu0 %v2563
  %v3486 = vpop.f32.mrf.mxu0
  %v3487 = vadd.f32 %v2589, %v3486
  %v3488 = vpop.f32.mrf.mxu0
  %v3489 = vadd.f32 %v2589, %v3488
  %3490 = vmatmul.bf16.gmra.mxu0 %v2564
  %v3491 = vpop.f32.mrf.mxu0
  %v3492 = vadd.f32 %v2589, %v3491
  %v3493 = vpop.f32.mrf.mxu0
  %v3494 = vadd.f32 %v2589, %v3493
  %3495 = vmatmul.bf16.gmra.mxu0 %v2565
  %v3496 = vpop.f32.mrf.mxu0
  %v3497 = vadd.f32 %v2589, %v3496
  %v3498 = vpop.f32.mrf.mxu0
  %v3499 = vadd.f32 %v2589, %v3498
  %3500 = vmatmul.bf16.gmra.mxu0 %v2566
  %v3501 = vpop.f32.mrf.mxu0
  %v3502 = vadd.f32 %v2589, %v3501
  %v3503 = vpop.f32.mrf.mxu0
  %v3504 = vadd.f32 %v2589, %v3503
  %3505 = vmatmul.bf16.gmra.mxu0 %v2567
  %v3506 = vpop.f32.mrf.mxu0
  %v3507 = vadd.f32 %v2589, %v3506
  %v3508 = vpop.f32.mrf.mxu0
  %v3509 = vadd.f32 %v2589, %v3508
  %3510 = vmatmul.bf16.gmra.mxu0 %v2568
  %v3511 = vpop.f32.mrf.mxu0
  %v3512 = vadd.f32 %v2589, %v3511
  %v3513 = vpop.f32.mrf.mxu0
  %v3514 = vadd.f32 %v2589, %v3513
  %3515 = vmatmul.bf16.gmra.mxu0 %v2569
  %v3516 = vpop.f32.mrf.mxu0
  %v3517 = vadd.f32 %v2589, %v3516
  %v3518 = vpop.f32.mrf.mxu0
  %v3519 = vadd.f32 %v2589, %v3518
  %3520 = vmatmul.bf16.gmra.mxu0 %v2570
  %v3521 = vpop.f32.mrf.mxu0
  %v3522 = vadd.f32 %v2589, %v3521
  %v3523 = vpop.f32.mrf.mxu0
  %v3524 = vadd.f32 %v2589, %v3523
  %3525 = vmatmul.bf16.gmra.mxu0 %v2571
  %v3526 = vpop.f32.mrf.mxu0
  %v3527 = vadd.f32 %v2589, %v3526
  %v3528 = vpop.f32.mrf.mxu0
  %v3529 = vadd.f32 %v2589, %v3528
  %3530 = vmatmul.bf16.gmra.mxu0 %v2572
  %v3531 = vpop.f32.mrf.mxu0
  %v3532 = vadd.f32 %v2589, %v3531
  %v3533 = vpop.f32.mrf.mxu0
  %v3534 = vadd.f32 %v2589, %v3533
  %3535 = vmatmul.bf16.gmra.mxu0 %v2573
  %v3536 = vpop.f32.mrf.mxu0
  %v3537 = vadd.f32 %v2589, %v3536
  %v3538 = vpop.f32.mrf.mxu0
  %v3539 = vadd.f32 %v2589, %v3538
  %3540 = vmatmul.bf16.gmra.mxu0 %v2574
  %v3541 = vpop.f32.mrf.mxu0
  %v3542 = vadd.f32 %v2589, %v3541
  %v3543 = vpop.f32.mrf.mxu0
  %v3544 = vadd.f32 %v2589, %v3543
  %3545 = vmatmul.bf16.gmra.mxu0 %v2575
  %v3546 = vpop.f32.mrf.mxu0
  %v3547 = vadd.f32 %v2589, %v3546
  %v3548 = vpop.f32.mrf.mxu0
  %v3549 = vadd.f32 %v2589, %v3548
  %3550 = vmatmul.bf16.gmra.mxu0 %v2576
  %v3551 = vpop.f32.mrf.mxu0
  %v3552 = vadd.f32 %v2589, %v3551
  %v3553 = vpop.f32.mrf.mxu0
  %v3554 = vadd.f32 %v2589, %v3553
  %3555 = vmatmul.bf16.gmra.mxu0 %v2577
  %v3556 = vpop.f32.mrf.mxu0
  %v3557 = vadd.f32 %v2589, %v3556
  %v3558 = vpop.f32.mrf.mxu0
  %v3559 = vadd.f32 %v2589, %v3558
  %3560 = vmatmul.bf16.gmra.mxu0 %v2578
  %v3561 = vpop.f32.mrf.mxu0
  %v3562 = vadd.f32 %v2589, %v3561
  %v3563 = vpop.f32.mrf.mxu0
  %v3564 = vadd.f32 %v2589, %v3563
  %3565 = vmatmul.bf16.gmra.mxu0 %v2579
  %v3566 = vpop.f32.mrf.mxu0
  %v3567 = vadd.f32 %v2589, %v3566
  %v3568 = vpop.f32.mrf.mxu0
  %v3569 = vadd.f32 %v2589, %v3568
  %3570 = vmatmul.bf16.gmra.mxu0 %v2580
  %v3571 = vpop.f32.mrf.mxu0
  %v3572 = vadd.f32 %v2589, %v3571
  %v3573 = vpop.f32.mrf.mxu0
  %v3574 = vadd.f32 %v2589, %v3573
  %3575 = vmatmul.bf16.gmra.mxu0 %v2581
  %v3576 = vpop.f32.mrf.mxu0
  %v3577 = vadd.f32 %v2589, %v3576
  %v3578 = vpop.f32.mrf.mxu0
  %v3579 = vadd.f32 %v2589, %v3578
  %3580 = vmatmul.bf16.gmra.mxu0 %v2582
  %v3581 = vpop.f32.mrf.mxu0
  %v3582 = vadd.f32 %v2589, %v3581
  %v3583 = vpop.f32.mrf.mxu0
  %v3584 = vadd.f32 %v2589, %v3583
  %3585 = vmatmul.bf16.gmra.mxu0 %v2583
  %v3586 = vpop.f32.mrf.mxu0
  %v3587 = vadd.f32 %v2589, %v3586
  %v3588 = vpop.f32.mrf.mxu0
  %v3589 = vadd.f32 %v2589, %v3588
  %3590 = vdwg.mxu0
  %3591 = vmatpush.bf16.msra.mxu0 %v2854
  %3592 = vmatpush.bf16.msra.mxu0 %v2846
  %3593 = vmatpush.bf16.msra.mxu0 %v2838
  %3594 = vmatpush.bf16.msra.mxu0 %v2830
  %3595 = vmatpush.bf16.msra.mxu0 %v2822
  %3596 = vmatpush.bf16.msra.mxu0 %v2814
  %3597 = vmatpush.bf16.msra.mxu0 %v2806
  %3598 = vmatpush.bf16.msra.mxu0 %v2798
  %3599 = vmatmul.bf16.gmra.mxu0 %v2559
  %v3600 = vpop.f32.mrf.mxu0
  %v3601 = vadd.f32 %v2590, %v3600
  %v3602 = vpop.f32.mrf.mxu0
  %v3603 = vadd.f32 %v2590, %v3602
  %3604 = vmatmul.bf16.gmra.mxu0 %v2560
  %v3605 = vpop.f32.mrf.mxu0
  %v3606 = vadd.f32 %v2590, %v3605
  %v3607 = vpop.f32.mrf.mxu0
  %v3608 = vadd.f32 %v2590, %v3607
  %3609 = vmatmul.bf16.gmra.mxu0 %v2561
  %v3610 = vpop.f32.mrf.mxu0
  %v3611 = vadd.f32 %v2590, %v3610
  %v3612 = vpop.f32.mrf.mxu0
  %v3613 = vadd.f32 %v2590, %v3612
  %3614 = vmatmul.bf16.gmra.mxu0 %v2562
  %v3615 = vpop.f32.mrf.mxu0
  %v3616 = vadd.f32 %v2590, %v3615
  %v3617 = vpop.f32.mrf.mxu0
  %v3618 = vadd.f32 %v2590, %v3617
  %3619 = vmatmul.bf16.gmra.mxu0 %v2563
  %v3620 = vpop.f32.mrf.mxu0
  %v3621 = vadd.f32 %v2590, %v3620
  %v3622 = vpop.f32.mrf.mxu0
  %v3623 = vadd.f32 %v2590, %v3622
  %3624 = vmatmul.bf16.gmra.mxu0 %v2564
  %v3625 = vpop.f32.mrf.mxu0
  %v3626 = vadd.f32 %v2590, %v3625
  %v3627 = vpop.f32.mrf.mxu0
  %v3628 = vadd.f32 %v2590, %v3627
  %3629 = vmatmul.bf16.gmra.mxu0 %v2565
  %v3630 = vpop.f32.mrf.mxu0
  %v3631 = vadd.f32 %v2590, %v3630
  %v3632 = vpop.f32.mrf.mxu0
  %v3633 = vadd.f32 %v2590, %v3632
  %3634 = vmatmul.bf16.gmra.mxu0 %v2566
  %v3635 = vpop.f32.mrf.mxu0
  %v3636 = vadd.f32 %v2590, %v3635
  %v3637 = vpop.f32.mrf.mxu0
  %v3638 = vadd.f32 %v2590, %v3637
  %3639 = vmatmul.bf16.gmra.mxu0 %v2567
  %v3640 = vpop.f32.mrf.mxu0
  %v3641 = vadd.f32 %v2590, %v3640
  %v3642 = vpop.f32.mrf.mxu0
  %v3643 = vadd.f32 %v2590, %v3642
  %3644 = vmatmul.bf16.gmra.mxu0 %v2568
  %v3645 = vpop.f32.mrf.mxu0
  %v3646 = vadd.f32 %v2590, %v3645
  %v3647 = vpop.f32.mrf.mxu0
  %v3648 = vadd.f32 %v2590, %v3647
  %3649 = vmatmul.bf16.gmra.mxu0 %v2569
  %v3650 = vpop.f32.mrf.mxu0
  %v3651 = vadd.f32 %v2590, %v3650
  %v3652 = vpop.f32.mrf.mxu0
  %v3653 = vadd.f32 %v2590, %v3652
  %3654 = vmatmul.bf16.gmra.mxu0 %v2570
  %v3655 = vpop.f32.mrf.mxu0
  %v3656 = vadd.f32 %v2590, %v3655
  %v3657 = vpop.f32.mrf.mxu0
  %v3658 = vadd.f32 %v2590, %v3657
  %3659 = vmatmul.bf16.gmra.mxu0 %v2571
  %v3660 = vpop.f32.mrf.mxu0
  %v3661 = vadd.f32 %v2590, %v3660
  %v3662 = vpop.f32.mrf.mxu0
  %v3663 = vadd.f32 %v2590, %v3662
  %3664 = vmatmul.bf16.gmra.mxu0 %v2572
  %v3665 = vpop.f32.mrf.mxu0
  %v3666 = vadd.f32 %v2590, %v3665
  %v3667 = vpop.f32.mrf.mxu0
  %v3668 = vadd.f32 %v2590, %v3667
  %3669 = vmatmul.bf16.gmra.mxu0 %v2573
  %v3670 = vpop.f32.mrf.mxu0
  %v3671 = vadd.f32 %v2590, %v3670
  %v3672 = vpop.f32.mrf.mxu0
  %v3673 = vadd.f32 %v2590, %v3672
  %3674 = vmatmul.bf16.gmra.mxu0 %v2574
  %v3675 = vpop.f32.mrf.mxu0
  %v3676 = vadd.f32 %v2590, %v3675
  %v3677 = vpop.f32.mrf.mxu0
  %v3678 = vadd.f32 %v2590, %v3677
  %3679 = vmatmul.bf16.gmra.mxu0 %v2575
  %v3680 = vpop.f32.mrf.mxu0
  %v3681 = vadd.f32 %v2590, %v3680
  %v3682 = vpop.f32.mrf.mxu0
  %v3683 = vadd.f32 %v2590, %v3682
  %3684 = vmatmul.bf16.gmra.mxu0 %v2576
  %v3685 = vpop.f32.mrf.mxu0
  %v3686 = vadd.f32 %v2590, %v3685
  %v3687 = vpop.f32.mrf.mxu0
  %v3688 = vadd.f32 %v2590, %v3687
  %3689 = vmatmul.bf16.gmra.mxu0 %v2577
  %v3690 = vpop.f32.mrf.mxu0
  %v3691 = vadd.f32 %v2590, %v3690
  %v3692 = vpop.f32.mrf.mxu0
  %v3693 = vadd.f32 %v2590, %v3692
  %3694 = vmatmul.bf16.gmra.mxu0 %v2578
  %v3695 = vpop.f32.mrf.mxu0
  %v3696 = vadd.f32 %v2590, %v3695
  %v3697 = vpop.f32.mrf.mxu0
  %v3698 = vadd.f32 %v2590, %v3697
  %3699 = vmatmul.bf16.gmra.mxu0 %v2579
  %v3700 = vpop.f32.mrf.mxu0
  %v3701 = vadd.f32 %v2590, %v3700
  %v3702 = vpop.f32.mrf.mxu0
  %v3703 = vadd.f32 %v2590, %v3702
  %3704 = vmatmul.bf16.gmra.mxu0 %v2580
  %v3705 = vpop.f32.mrf.mxu0
  %v3706 = vadd.f32 %v2590, %v3705
  %v3707 = vpop.f32.mrf.mxu0
  %v3708 = vadd.f32 %v2590, %v3707
  %3709 = vmatmul.bf16.gmra.mxu0 %v2581
  %v3710 = vpop.f32.mrf.mxu0
  %v3711 = vadd.f32 %v2590, %v3710
  %v3712 = vpop.f32.mrf.mxu0
  %v3713 = vadd.f32 %v2590, %v3712
  %3714 = vmatmul.bf16.gmra.mxu0 %v2582
  %v3715 = vpop.f32.mrf.mxu0
  %v3716 = vadd.f32 %v2590, %v3715
  %v3717 = vpop.f32.mrf.mxu0
  %v3718 = vadd.f32 %v2590, %v3717
  %3719 = vmatmul.bf16.gmra.mxu0 %v2583
  %v3720 = vpop.f32.mrf.mxu0
  %v3721 = vadd.f32 %v2590, %v3720
  %v3722 = vpop.f32.mrf.mxu0
  %v3723 = vadd.f32 %v2590, %v3722
  %3724 = vdwg.mxu0
  %3725 = vmatpush.bf16.msra.mxu0 %v2855
  %3726 = vmatpush.bf16.msra.mxu0 %v2847
  %3727 = vmatpush.bf16.msra.mxu0 %v2839
  %3728 = vmatpush.bf16.msra.mxu0 %v2831
  %3729 = vmatpush.bf16.msra.mxu0 %v2823
  %3730 = vmatpush.bf16.msra.mxu0 %v2815
  %3731 = vmatpush.bf16.msra.mxu0 %v2807
  %3732 = vmatpush.bf16.msra.mxu0 %v2799
  %3733 = vmatmul.bf16.gmra.mxu0 %v2559
  %v3734 = vpop.f32.mrf.mxu0
  %v3735 = vadd.f32 %v2591, %v3734
  %v3736 = vpop.f32.mrf.mxu0
  %v3737 = vadd.f32 %v2591, %v3736
  %3738 = vmatmul.bf16.gmra.mxu0 %v2560
  %v3739 = vpop.f32.mrf.mxu0
  %v3740 = vadd.f32 %v2591, %v3739
  %v3741 = vpop.f32.mrf.mxu0
  %v3742 = vadd.f32 %v2591, %v3741
  %3743 = vmatmul.bf16.gmra.mxu0 %v2561
  %v3744 = vpop.f32.mrf.mxu0
  %v3745 = vadd.f32 %v2591, %v3744
  %v3746 = vpop.f32.mrf.mxu0
  %v3747 = vadd.f32 %v2591, %v3746
  %3748 = vmatmul.bf16.gmra.mxu0 %v2562
  %v3749 = vpop.f32.mrf.mxu0
  %v3750 = vadd.f32 %v2591, %v3749
  %v3751 = vpop.f32.mrf.mxu0
  %v3752 = vadd.f32 %v2591, %v3751
  %3753 = vmatmul.bf16.gmra.mxu0 %v2563
  %v3754 = vpop.f32.mrf.mxu0
  %v3755 = vadd.f32 %v2591, %v3754
  %v3756 = vpop.f32.mrf.mxu0
  %v3757 = vadd.f32 %v2591, %v3756
  %3758 = vmatmul.bf16.gmra.mxu0 %v2564
  %v3759 = vpop.f32.mrf.mxu0
  %v3760 = vadd.f32 %v2591, %v3759
  %v3761 = vpop.f32.mrf.mxu0
  %v3762 = vadd.f32 %v2591, %v3761
  %3763 = vmatmul.bf16.gmra.mxu0 %v2565
  %v3764 = vpop.f32.mrf.mxu0
  %v3765 = vadd.f32 %v2591, %v3764
  %v3766 = vpop.f32.mrf.mxu0
  %v3767 = vadd.f32 %v2591, %v3766
  %3768 = vmatmul.bf16.gmra.mxu0 %v2566
  %v3769 = vpop.f32.mrf.mxu0
  %v3770 = vadd.f32 %v2591, %v3769
  %v3771 = vpop.f32.mrf.mxu0
  %v3772 = vadd.f32 %v2591, %v3771
  %3773 = vmatmul.bf16.gmra.mxu0 %v2567
  %v3774 = vpop.f32.mrf.mxu0
  %v3775 = vadd.f32 %v2591, %v3774
  %v3776 = vpop.f32.mrf.mxu0
  %v3777 = vadd.f32 %v2591, %v3776
  %3778 = vmatmul.bf16.gmra.mxu0 %v2568
  %v3779 = vpop.f32.mrf.mxu0
  %v3780 = vadd.f32 %v2591, %v3779
  %v3781 = vpop.f32.mrf.mxu0
  %v3782 = vadd.f32 %v2591, %v3781
  %3783 = vmatmul.bf16.gmra.mxu0 %v2569
  %v3784 = vpop.f32.mrf.mxu0
  %v3785 = vadd.f32 %v2591, %v3784
  %v3786 = vpop.f32.mrf.mxu0
  %v3787 = vadd.f32 %v2591, %v3786
  %3788 = vmatmul.bf16.gmra.mxu0 %v2570
  %v3789 = vpop.f32.mrf.mxu0
  %v3790 = vadd.f32 %v2591, %v3789
  %v3791 = vpop.f32.mrf.mxu0
  %v3792 = vadd.f32 %v2591, %v3791
  %3793 = vmatmul.bf16.gmra.mxu0 %v2571
  %v3794 = vpop.f32.mrf.mxu0
  %v3795 = vadd.f32 %v2591, %v3794
  %v3796 = vpop.f32.mrf.mxu0
  %v3797 = vadd.f32 %v2591, %v3796
  %3798 = vmatmul.bf16.gmra.mxu0 %v2572
  %v3799 = vpop.f32.mrf.mxu0
  %v3800 = vadd.f32 %v2591, %v3799
  %v3801 = vpop.f32.mrf.mxu0
  %v3802 = vadd.f32 %v2591, %v3801
  %3803 = vmatmul.bf16.gmra.mxu0 %v2573
  %v3804 = vpop.f32.mrf.mxu0
  %v3805 = vadd.f32 %v2591, %v3804
  %v3806 = vpop.f32.mrf.mxu0
  %v3807 = vadd.f32 %v2591, %v3806
  %3808 = vmatmul.bf16.gmra.mxu0 %v2574
  %v3809 = vpop.f32.mrf.mxu0
  %v3810 = vadd.f32 %v2591, %v3809
  %v3811 = vpop.f32.mrf.mxu0
  %v3812 = vadd.f32 %v2591, %v3811
  %3813 = vmatmul.bf16.gmra.mxu0 %v2575
  %v3814 = vpop.f32.mrf.mxu0
  %v3815 = vadd.f32 %v2591, %v3814
  %v3816 = vpop.f32.mrf.mxu0
  %v3817 = vadd.f32 %v2591, %v3816
  %3818 = vmatmul.bf16.gmra.mxu0 %v2576
  %v3819 = vpop.f32.mrf.mxu0
  %v3820 = vadd.f32 %v2591, %v3819
  %v3821 = vpop.f32.mrf.mxu0
  %v3822 = vadd.f32 %v2591, %v3821
  %3823 = vmatmul.bf16.gmra.mxu0 %v2577
  %v3824 = vpop.f32.mrf.mxu0
  %v3825 = vadd.f32 %v2591, %v3824
  %v3826 = vpop.f32.mrf.mxu0
  %v3827 = vadd.f32 %v2591, %v3826
  %3828 = vmatmul.bf16.gmra.mxu0 %v2578
  %v3829 = vpop.f32.mrf.mxu0
  %v3830 = vadd.f32 %v2591, %v3829
  %v3831 = vpop.f32.mrf.mxu0
  %v3832 = vadd.f32 %v2591, %v3831
  %3833 = vmatmul.bf16.gmra.mxu0 %v2579
  %v3834 = vpop.f32.mrf.mxu0
  %v3835 = vadd.f32 %v2591, %v3834
  %v3836 = vpop.f32.mrf.mxu0
  %v3837 = vadd.f32 %v2591, %v3836
  %3838 = vmatmul.bf16.gmra.mxu0 %v2580
  %v3839 = vpop.f32.mrf.mxu0
  %v3840 = vadd.f32 %v2591, %v3839
  %v3841 = vpop.f32.mrf.mxu0
  %v3842 = vadd.f32 %v2591, %v3841
  %3843 = vmatmul.bf16.gmra.mxu0 %v2581
  %v3844 = vpop.f32.mrf.mxu0
  %v3845 = vadd.f32 %v2591, %v3844
  %v3846 = vpop.f32.mrf.mxu0
  %v3847 = vadd.f32 %v2591, %v3846
  %3848 = vmatmul.bf16.gmra.mxu0 %v2582
  %v3849 = vpop.f32.mrf.mxu0
  %v3850 = vadd.f32 %v2591, %v3849
  %v3851 = vpop.f32.mrf.mxu0
  %v3852 = vadd.f32 %v2591, %v3851
  %3853 = vmatmul.bf16.gmra.mxu0 %v2583
  %v3854 = vpop.f32.mrf.mxu0
  %v3855 = vadd.f32 %v2591, %v3854
  %v3856 = vpop.f32.mrf.mxu0
  %v3857 = vadd.f32 %v2591, %v3856
  %3858 = vdwg.mxu0
  %3859 = vmatpush.bf16.msra.mxu0 %v2856
  %3860 = vmatpush.bf16.msra.mxu0 %v2848
  %3861 = vmatpush.bf16.msra.mxu0 %v2840
  %3862 = vmatpush.bf16.msra.mxu0 %v2832
  %3863 = vmatpush.bf16.msra.mxu0 %v2824
  %3864 = vmatpush.bf16.msra.mxu0 %v2816
  %3865 = vmatpush.bf16.msra.mxu0 %v2808
  %3866 = vmatpush.bf16.msra.mxu0 %v2800
  %3867 = vmatmul.bf16.gmra.mxu0 %v2559
  %v3868 = vpop.f32.mrf.mxu0
  %v3869 = vadd.f32 %v2592, %v3868
  %v3870 = vpop.f32.mrf.mxu0
  %v3871 = vadd.f32 %v2592, %v3870
  %3872 = vmatmul.bf16.gmra.mxu0 %v2560
  %v3873 = vpop.f32.mrf.mxu0
  %v3874 = vadd.f32 %v2592, %v3873
  %v3875 = vpop.f32.mrf.mxu0
  %v3876 = vadd.f32 %v2592, %v3875
  %3877 = vmatmul.bf16.gmra.mxu0 %v2561
  %v3878 = vpop.f32.mrf.mxu0
  %v3879 = vadd.f32 %v2592, %v3878
  %v3880 = vpop.f32.mrf.mxu0
  %v3881 = vadd.f32 %v2592, %v3880
  %3882 = vmatmul.bf16.gmra.mxu0 %v2562
  %v3883 = vpop.f32.mrf.mxu0
  %v3884 = vadd.f32 %v2592, %v3883
  %v3885 = vpop.f32.mrf.mxu0
  %v3886 = vadd.f32 %v2592, %v3885
  %3887 = vmatmul.bf16.gmra.mxu0 %v2563
  %v3888 = vpop.f32.mrf.mxu0
  %v3889 = vadd.f32 %v2592, %v3888
  %v3890 = vpop.f32.mrf.mxu0
  %v3891 = vadd.f32 %v2592, %v3890
  %3892 = vmatmul.bf16.gmra.mxu0 %v2564
  %v3893 = vpop.f32.mrf.mxu0
  %v3894 = vadd.f32 %v2592, %v3893
  %v3895 = vpop.f32.mrf.mxu0
  %v3896 = vadd.f32 %v2592, %v3895
  %3897 = vmatmul.bf16.gmra.mxu0 %v2565
  %v3898 = vpop.f32.mrf.mxu0
  %v3899 = vadd.f32 %v2592, %v3898
  %v3900 = vpop.f32.mrf.mxu0
  %v3901 = vadd.f32 %v2592, %v3900
  %3902 = vmatmul.bf16.gmra.mxu0 %v2566
  %v3903 = vpop.f32.mrf.mxu0
  %v3904 = vadd.f32 %v2592, %v3903
  %v3905 = vpop.f32.mrf.mxu0
  %v3906 = vadd.f32 %v2592, %v3905
  %3907 = vmatmul.bf16.gmra.mxu0 %v2567
  %v3908 = vpop.f32.mrf.mxu0
  %v3909 = vadd.f32 %v2592, %v3908
  %v3910 = vpop.f32.mrf.mxu0
  %v3911 = vadd.f32 %v2592, %v3910
  %3912 = vmatmul.bf16.gmra.mxu0 %v2568
  %v3913 = vpop.f32.mrf.mxu0
  %v3914 = vadd.f32 %v2592, %v3913
  %v3915 = vpop.f32.mrf.mxu0
  %v3916 = vadd.f32 %v2592, %v3915
  %3917 = vmatmul.bf16.gmra.mxu0 %v2569
  %v3918 = vpop.f32.mrf.mxu0
  %v3919 = vadd.f32 %v2592, %v3918
  %v3920 = vpop.f32.mrf.mxu0
  %v3921 = vadd.f32 %v2592, %v3920
  %3922 = vmatmul.bf16.gmra.mxu0 %v2570
  %v3923 = vpop.f32.mrf.mxu0
  %v3924 = vadd.f32 %v2592, %v3923
  %v3925 = vpop.f32.mrf.mxu0
  %v3926 = vadd.f32 %v2592, %v3925
  %3927 = vmatmul.bf16.gmra.mxu0 %v2571
  %v3928 = vpop.f32.mrf.mxu0
  %v3929 = vadd.f32 %v2592, %v3928
  %v3930 = vpop.f32.mrf.mxu0
  %v3931 = vadd.f32 %v2592, %v3930
  %3932 = vmatmul.bf16.gmra.mxu0 %v2572
  %v3933 = vpop.f32.mrf.mxu0
  %v3934 = vadd.f32 %v2592, %v3933
  %v3935 = vpop.f32.mrf.mxu0
  %v3936 = vadd.f32 %v2592, %v3935
  %3937 = vmatmul.bf16.gmra.mxu0 %v2573
  %v3938 = vpop.f32.mrf.mxu0
  %v3939 = vadd.f32 %v2592, %v3938
  %v3940 = vpop.f32.mrf.mxu0
  %v3941 = vadd.f32 %v2592, %v3940
  %3942 = vmatmul.bf16.gmra.mxu0 %v2574
  %v3943 = vpop.f32.mrf.mxu0
  %v3944 = vadd.f32 %v2592, %v3943
  %v3945 = vpop.f32.mrf.mxu0
  %v3946 = vadd.f32 %v2592, %v3945
  %3947 = vmatmul.bf16.gmra.mxu0 %v2575
  %v3948 = vpop.f32.mrf.mxu0
  %v3949 = vadd.f32 %v2592, %v3948
  %v3950 = vpop.f32.mrf.mxu0
  %v3951 = vadd.f32 %v2592, %v3950
  %3952 = vmatmul.bf16.gmra.mxu0 %v2576
  %v3953 = vpop.f32.mrf.mxu0
  %v3954 = vadd.f32 %v2592, %v3953
  %v3955 = vpop.f32.mrf.mxu0
  %v3956 = vadd.f32 %v2592, %v3955
  %3957 = vmatmul.bf16.gmra.mxu0 %v2577
  %v3958 = vpop.f32.mrf.mxu0
  %v3959 = vadd.f32 %v2592, %v3958
  %v3960 = vpop.f32.mrf.mxu0
  %v3961 = vadd.f32 %v2592, %v3960
  %3962 = vmatmul.bf16.gmra.mxu0 %v2578
  %v3963 = vpop.f32.mrf.mxu0
  %v3964 = vadd.f32 %v2592, %v3963
  %v3965 = vpop.f32.mrf.mxu0
  %v3966 = vadd.f32 %v2592, %v3965
  %3967 = vmatmul.bf16.gmra.mxu0 %v2579
  %v3968 = vpop.f32.mrf.mxu0
  %v3969 = vadd.f32 %v2592, %v3968
  %v3970 = vpop.f32.mrf.mxu0
  %v3971 = vadd.f32 %v2592, %v3970
  %3972 = vmatmul.bf16.gmra.mxu0 %v2580
  %v3973 = vpop.f32.mrf.mxu0
  %v3974 = vadd.f32 %v2592, %v3973
  %v3975 = vpop.f32.mrf.mxu0
  %v3976 = vadd.f32 %v2592, %v3975
  %3977 = vmatmul.bf16.gmra.mxu0 %v2581
  %v3978 = vpop.f32.mrf.mxu0
  %v3979 = vadd.f32 %v2592, %v3978
  %v3980 = vpop.f32.mrf.mxu0
  %v3981 = vadd.f32 %v2592, %v3980
  %3982 = vmatmul.bf16.gmra.mxu0 %v2582
  %v3983 = vpop.f32.mrf.mxu0
  %v3984 = vadd.f32 %v2592, %v3983
  %v3985 = vpop.f32.mrf.mxu0
  %v3986 = vadd.f32 %v2592, %v3985
  %3987 = vmatmul.bf16.gmra.mxu0 %v2583
  %v3988 = vpop.f32.mrf.mxu0
  %v3989 = vadd.f32 %v2592, %v3988
  %v3990 = vpop.f32.mrf.mxu0
  %v3991 = vadd.f32 %v2592, %v3990
  %3992 = vdwg.mxu0
  %v3993 = vmax.f32 %v2931, %v2933
  %v3994 = vmax.f32 %v3993, %v2936
  %v3995 = vmax.f32 %v3994, %v2938
  %v3996 = vmax.f32 %v3995, %v2941
  %v3997 = vmax.f32 %v3996, %v2943
  %v3998 = vmax.f32 %v3997, %v2946
  %v3999 = vmax.f32 %v3998, %v2948
  %v4000 = vmax.f32 %v3999, %v2951
  %v4001 = vmax.f32 %v4000, %v2953
  %v4002 = vmax.f32 %v4001, %v2956
  %v4003 = vmax.f32 %v4002, %v2958
  %v4004 = vmax.f32 %v4003, %v2961
  %v4005 = vmax.f32 %v4004, %v2963
  %v4006 = vmax.f32 %v4005, %v2966
  %v4007 = vmax.f32 %v4006, %v2968
  %v4008 = vmax.f32 %v4007, %v2971
  %v4009 = vmax.f32 %v4008, %v2973
  %v4010 = vmax.f32 %v4009, %v2976
  %v4011 = vmax.f32 %v4010, %v2978
  %v4012 = vmax.f32 %v4011, %v2981
  %v4013 = vmax.f32 %v4012, %v2983
  %v4014 = vmax.f32 %v4013, %v2986
  %v4015 = vmax.f32 %v4014, %v2988
  %v4016 = vmax.f32 %v4015, %v2991
  %v4017 = vrot.slane %v4016, 4
  %v4018 = vmax.f32 %v4016, %v4017
  %v4019 = vrot.slane %v4018, 2
  %v4020 = vmax.f32 %v4018, %v4019
  %v4021 = vrot.slane %v4020, 1
  %v4022 = vmax.f32 %v4020, %v4021
  %v4023 = vmax.f32 %v3065, %v3067
  %v4024 = vmax.f32 %v4023, %v3070
  %v4025 = vmax.f32 %v4024, %v3072
  %v4026 = vmax.f32 %v4025, %v3075
  %v4027 = vmax.f32 %v4026, %v3077
  %v4028 = vmax.f32 %v4027, %v3080
  %v4029 = vmax.f32 %v4028, %v3082
  %v4030 = vmax.f32 %v4029, %v3085
  %v4031 = vmax.f32 %v4030, %v3087
  %v4032 = vmax.f32 %v4031, %v3090
  %v4033 = vmax.f32 %v4032, %v3092
  %v4034 = vmax.f32 %v4033, %v3095
  %v4035 = vmax.f32 %v4034, %v3097
  %v4036 = vmax.f32 %v4035, %v3100
  %v4037 = vmax.f32 %v4036, %v3102
  %v4038 = vmax.f32 %v4037, %v3105
  %v4039 = vmax.f32 %v4038, %v3107
  %v4040 = vmax.f32 %v4039, %v3110
  %v4041 = vmax.f32 %v4040, %v3112
  %v4042 = vmax.f32 %v4041, %v3115
  %v4043 = vmax.f32 %v4042, %v3117
  %v4044 = vmax.f32 %v4043, %v3120
  %v4045 = vmax.f32 %v4044, %v3122
  %v4046 = vmax.f32 %v4045, %v3125
  %v4047 = vrot.slane %v4046, 4
  %v4048 = vmax.f32 %v4046, %v4047
  %v4049 = vrot.slane %v4048, 2
  %v4050 = vmax.f32 %v4048, %v4049
  %v4051 = vrot.slane %v4050, 1
  %v4052 = vmax.f32 %v4050, %v4051
  %v4053 = vmax.f32 %v3199, %v3201
  %v4054 = vmax.f32 %v4053, %v3204
  %v4055 = vmax.f32 %v4054, %v3206
  %v4056 = vmax.f32 %v4055, %v3209
  %v4057 = vmax.f32 %v4056, %v3211
  %v4058 = vmax.f32 %v4057, %v3214
  %v4059 = vmax.f32 %v4058, %v3216
  %v4060 = vmax.f32 %v4059, %v3219
  %v4061 = vmax.f32 %v4060, %v3221
  %v4062 = vmax.f32 %v4061, %v3224
  %v4063 = vmax.f32 %v4062, %v3226
  %v4064 = vmax.f32 %v4063, %v3229
  %v4065 = vmax.f32 %v4064, %v3231
  %v4066 = vmax.f32 %v4065, %v3234
  %v4067 = vmax.f32 %v4066, %v3236
  %v4068 = vmax.f32 %v4067, %v3239
  %v4069 = vmax.f32 %v4068, %v3241
  %v4070 = vmax.f32 %v4069, %v3244
  %v4071 = vmax.f32 %v4070, %v3246
  %v4072 = vmax.f32 %v4071, %v3249
  %v4073 = vmax.f32 %v4072, %v3251
  %v4074 = vmax.f32 %v4073, %v3254
  %v4075 = vmax.f32 %v4074, %v3256
  %v4076 = vmax.f32 %v4075, %v3259
  %v4077 = vrot.slane %v4076, 4
  %v4078 = vmax.f32 %v4076, %v4077
  %v4079 = vrot.slane %v4078, 2
  %v4080 = vmax.f32 %v4078, %v4079
  %v4081 = vrot.slane %v4080, 1
  %v4082 = vmax.f32 %v4080, %v4081
  %v4083 = vmax.f32 %v3333, %v3335
  %v4084 = vmax.f32 %v4083, %v3338
  %v4085 = vmax.f32 %v4084, %v3340
  %v4086 = vmax.f32 %v4085, %v3343
  %v4087 = vmax.f32 %v4086, %v3345
  %v4088 = vmax.f32 %v4087, %v3348
  %v4089 = vmax.f32 %v4088, %v3350
  %v4090 = vmax.f32 %v4089, %v3353
  %v4091 = vmax.f32 %v4090, %v3355
  %v4092 = vmax.f32 %v4091, %v3358
  %v4093 = vmax.f32 %v4092, %v3360
  %v4094 = vmax.f32 %v4093, %v3363
  %v4095 = vmax.f32 %v4094, %v3365
  %v4096 = vmax.f32 %v4095, %v3368
  %v4097 = vmax.f32 %v4096, %v3370
  %v4098 = vmax.f32 %v4097, %v3373
  %v4099 = vmax.f32 %v4098, %v3375
  %v4100 = vmax.f32 %v4099, %v3378
  %v4101 = vmax.f32 %v4100, %v3380
  %v4102 = vmax.f32 %v4101, %v3383
  %v4103 = vmax.f32 %v4102, %v3385
  %v4104 = vmax.f32 %v4103, %v3388
  %v4105 = vmax.f32 %v4104, %v3390
  %v4106 = vmax.f32 %v4105, %v3393
  %v4107 = vrot.slane %v4106, 4
  %v4108 = vmax.f32 %v4106, %v4107
  %v4109 = vrot.slane %v4108, 2
  %v4110 = vmax.f32 %v4108, %v4109
  %v4111 = vrot.slane %v4110, 1
  %v4112 = vmax.f32 %v4110, %v4111
  %v4113 = vmax.f32 %v3467, %v3469
  %v4114 = vmax.f32 %v4113, %v3472
  %v4115 = vmax.f32 %v4114, %v3474
  %v4116 = vmax.f32 %v4115, %v3477
  %v4117 = vmax.f32 %v4116, %v3479
  %v4118 = vmax.f32 %v4117, %v3482
  %v4119 = vmax.f32 %v4118, %v3484
  %v4120 = vmax.f32 %v4119, %v3487
  %v4121 = vmax.f32 %v4120, %v3489
  %v4122 = vmax.f32 %v4121, %v3492
  %v4123 = vmax.f32 %v4122, %v3494
  %v4124 = vmax.f32 %v4123, %v3497
  %v4125 = vmax.f32 %v4124, %v3499
  %v4126 = vmax.f32 %v4125, %v3502
  %v4127 = vmax.f32 %v4126, %v3504
  %v4128 = vmax.f32 %v4127, %v3507
  %v4129 = vmax.f32 %v4128, %v3509
  %v4130 = vmax.f32 %v4129, %v3512
  %v4131 = vmax.f32 %v4130, %v3514
  %v4132 = vmax.f32 %v4131, %v3517
  %v4133 = vmax.f32 %v4132, %v3519
  %v4134 = vmax.f32 %v4133, %v3522
  %v4135 = vmax.f32 %v4134, %v3524
  %v4136 = vmax.f32 %v4135, %v3527
  %v4137 = vrot.slane %v4136, 4
  %v4138 = vmax.f32 %v4136, %v4137
  %v4139 = vrot.slane %v4138, 2
  %v4140 = vmax.f32 %v4138, %v4139
  %v4141 = vrot.slane %v4140, 1
  %v4142 = vmax.f32 %v4140, %v4141
  %v4143 = vmax.f32 %v3601, %v3603
  %v4144 = vmax.f32 %v4143, %v3606
  %v4145 = vmax.f32 %v4144, %v3608
  %v4146 = vmax.f32 %v4145, %v3611
  %v4147 = vmax.f32 %v4146, %v3613
  %v4148 = vmax.f32 %v4147, %v3616
  %v4149 = vmax.f32 %v4148, %v3618
  %v4150 = vmax.f32 %v4149, %v3621
  %v4151 = vmax.f32 %v4150, %v3623
  %v4152 = vmax.f32 %v4151, %v3626
  %v4153 = vmax.f32 %v4152, %v3628
  %v4154 = vmax.f32 %v4153, %v3631
  %v4155 = vmax.f32 %v4154, %v3633
  %v4156 = vmax.f32 %v4155, %v3636
  %v4157 = vmax.f32 %v4156, %v3638
  %v4158 = vmax.f32 %v4157, %v3641
  %v4159 = vmax.f32 %v4158, %v3643
  %v4160 = vmax.f32 %v4159, %v3646
  %v4161 = vmax.f32 %v4160, %v3648
  %v4162 = vmax.f32 %v4161, %v3651
  %v4163 = vmax.f32 %v4162, %v3653
  %v4164 = vmax.f32 %v4163, %v3656
  %v4165 = vmax.f32 %v4164, %v3658
  %v4166 = vmax.f32 %v4165, %v3661
  %v4167 = vrot.slane %v4166, 4
  %v4168 = vmax.f32 %v4166, %v4167
  %v4169 = vrot.slane %v4168, 2
  %v4170 = vmax.f32 %v4168, %v4169
  %v4171 = vrot.slane %v4170, 1
  %v4172 = vmax.f32 %v4170, %v4171
  %v4173 = vmax.f32 %v3735, %v3737
  %v4174 = vmax.f32 %v4173, %v3740
  %v4175 = vmax.f32 %v4174, %v3742
  %v4176 = vmax.f32 %v4175, %v3745
  %v4177 = vmax.f32 %v4176, %v3747
  %v4178 = vmax.f32 %v4177, %v3750
  %v4179 = vmax.f32 %v4178, %v3752
  %v4180 = vmax.f32 %v4179, %v3755
  %v4181 = vmax.f32 %v4180, %v3757
  %v4182 = vmax.f32 %v4181, %v3760
  %v4183 = vmax.f32 %v4182, %v3762
  %v4184 = vmax.f32 %v4183, %v3765
  %v4185 = vmax.f32 %v4184, %v3767
  %v4186 = vmax.f32 %v4185, %v3770
  %v4187 = vmax.f32 %v4186, %v3772
  %v4188 = vmax.f32 %v4187, %v3775
  %v4189 = vmax.f32 %v4188, %v3777
  %v4190 = vmax.f32 %v4189, %v3780
  %v4191 = vmax.f32 %v4190, %v3782
  %v4192 = vmax.f32 %v4191, %v3785
  %v4193 = vmax.f32 %v4192, %v3787
  %v4194 = vmax.f32 %v4193, %v3790
  %v4195 = vmax.f32 %v4194, %v3792
  %v4196 = vmax.f32 %v4195, %v3795
  %v4197 = vrot.slane %v4196, 4
  %v4198 = vmax.f32 %v4196, %v4197
  %v4199 = vrot.slane %v4198, 2
  %v4200 = vmax.f32 %v4198, %v4199
  %v4201 = vrot.slane %v4200, 1
  %v4202 = vmax.f32 %v4200, %v4201
  %v4203 = vmax.f32 %v3869, %v3871
  %v4204 = vmax.f32 %v4203, %v3874
  %v4205 = vmax.f32 %v4204, %v3876
  %v4206 = vmax.f32 %v4205, %v3879
  %v4207 = vmax.f32 %v4206, %v3881
  %v4208 = vmax.f32 %v4207, %v3884
  %v4209 = vmax.f32 %v4208, %v3886
  %v4210 = vmax.f32 %v4209, %v3889
  %v4211 = vmax.f32 %v4210, %v3891
  %v4212 = vmax.f32 %v4211, %v3894
  %v4213 = vmax.f32 %v4212, %v3896
  %v4214 = vmax.f32 %v4213, %v3899
  %v4215 = vmax.f32 %v4214, %v3901
  %v4216 = vmax.f32 %v4215, %v3904
  %v4217 = vmax.f32 %v4216, %v3906
  %v4218 = vmax.f32 %v4217, %v3909
  %v4219 = vmax.f32 %v4218, %v3911
  %v4220 = vmax.f32 %v4219, %v3914
  %v4221 = vmax.f32 %v4220, %v3916
  %v4222 = vmax.f32 %v4221, %v3919
  %v4223 = vmax.f32 %v4222, %v3921
  %v4224 = vmax.f32 %v4223, %v3924
  %v4225 = vmax.f32 %v4224, %v3926
  %v4226 = vmax.f32 %v4225, %v3929
  %v4227 = vrot.slane %v4226, 4
  %v4228 = vmax.f32 %v4226, %v4227
  %v4229 = vrot.slane %v4228, 2
  %v4230 = vmax.f32 %v4228, %v4229
  %v4231 = vrot.slane %v4230, 1
  %v4232 = vmax.f32 %v4230, %v4231
  %v4241 = vrot.slane %v4052, 7
  %v4242 = vrot.slane %v4082, 6
  %v4243 = vrot.slane %v4112, 5
  %v4244 = vrot.slane %v4142, 4
  %v4245 = vrot.slane %v4172, 3
  %v4246 = vrot.slane %v4202, 2
  %v4247 = vrot.slane %v4232, 1
  %vm4248 = vcmask 1040384
  %v4249 = vsel %vm4248, %v4022, %v4241
  %vm4250 = vcmask 1042434
  %v4251 = vsel %vm4250, %v4242, %v4243
  %vm4252 = vcmask 1041408
  %v4253 = vsel %vm4252, %v4249, %v4251
  %vm4254 = vcmask 1044484
  %v4255 = vsel %vm4254, %v4244, %v4245
  %vm4256 = vcmask 1046534
  %v4257 = vsel %vm4256, %v4246, %v4247
  %vm4258 = vcmask 1045508
  %v4259 = vsel %vm4258, %v4255, %v4257
  %vm4260 = vcmask 1043456
  %v4261 = vsel %vm4260, %v4253, %v4259
  %4263 = vst [vmem:[#allocation5] ss:$2 sm:$0xff] %v4261
  %v4264 = vmax.f32 %v2993, %v2996
  %v4265 = vmax.f32 %v4264, %v2998
  %v4266 = vmax.f32 %v4265, %v3001
  %v4267 = vmax.f32 %v4266, %v3003
  %v4268 = vmax.f32 %v4267, %v3006
  %v4269 = vmax.f32 %v4268, %v3008
  %v4270 = vmax.f32 %v4269, %v3011
  %v4271 = vmax.f32 %v4270, %v3013
  %v4272 = vmax.f32 %v4271, %v3016
  %v4273 = vmax.f32 %v4272, %v3018
  %v4274 = vmax.f32 %v4273, %v3021
  %v4275 = vmax.f32 %v4274, %v3023
  %v4276 = vmax.f32 %v4275, %v3026
  %v4277 = vmax.f32 %v4276, %v3028
  %v4278 = vmax.f32 %v4277, %v3031
  %v4279 = vmax.f32 %v4278, %v3033
  %v4280 = vmax.f32 %v4279, %v3036
  %v4281 = vmax.f32 %v4280, %v3038
  %v4282 = vmax.f32 %v4281, %v3041
  %v4283 = vmax.f32 %v4282, %v3043
  %v4284 = vmax.f32 %v4283, %v3046
  %v4285 = vmax.f32 %v4284, %v3048
  %v4286 = vmax.f32 %v4285, %v3051
  %v4287 = vmax.f32 %v4286, %v3053
  %v4288 = vrot.slane %v4287, 4
  %v4289 = vmax.f32 %v4287, %v4288
  %v4290 = vrot.slane %v4289, 2
  %v4291 = vmax.f32 %v4289, %v4290
  %v4292 = vrot.slane %v4291, 1
  %v4293 = vmax.f32 %v4291, %v4292
  %v4294 = vmax.f32 %v3127, %v3130
  %v4295 = vmax.f32 %v4294, %v3132
  %v4296 = vmax.f32 %v4295, %v3135
  %v4297 = vmax.f32 %v4296, %v3137
  %v4298 = vmax.f32 %v4297, %v3140
  %v4299 = vmax.f32 %v4298, %v3142
  %v4300 = vmax.f32 %v4299, %v3145
  %v4301 = vmax.f32 %v4300, %v3147
  %v4302 = vmax.f32 %v4301, %v3150
  %v4303 = vmax.f32 %v4302, %v3152
  %v4304 = vmax.f32 %v4303, %v3155
  %v4305 = vmax.f32 %v4304, %v3157
  %v4306 = vmax.f32 %v4305, %v3160
  %v4307 = vmax.f32 %v4306, %v3162
  %v4308 = vmax.f32 %v4307, %v3165
  %v4309 = vmax.f32 %v4308, %v3167
  %v4310 = vmax.f32 %v4309, %v3170
  %v4311 = vmax.f32 %v4310, %v3172
  %v4312 = vmax.f32 %v4311, %v3175
  %v4313 = vmax.f32 %v4312, %v3177
  %v4314 = vmax.f32 %v4313, %v3180
  %v4315 = vmax.f32 %v4314, %v3182
  %v4316 = vmax.f32 %v4315, %v3185
  %v4317 = vmax.f32 %v4316, %v3187
  %v4318 = vrot.slane %v4317, 4
  %v4319 = vmax.f32 %v4317, %v4318
  %v4320 = vrot.slane %v4319, 2
  %v4321 = vmax.f32 %v4319, %v4320
  %v4322 = vrot.slane %v4321, 1
  %v4323 = vmax.f32 %v4321, %v4322
  %v4324 = vmax.f32 %v3261, %v3264
  %v4325 = vmax.f32 %v4324, %v3266
  %v4326 = vmax.f32 %v4325, %v3269
  %v4327 = vmax.f32 %v4326, %v3271
  %v4328 = vmax.f32 %v4327, %v3274
  %v4329 = vmax.f32 %v4328, %v3276
  %v4330 = vmax.f32 %v4329, %v3279
  %v4331 = vmax.f32 %v4330, %v3281
  %v4332 = vmax.f32 %v4331, %v3284
  %v4333 = vmax.f32 %v4332, %v3286
  %v4334 = vmax.f32 %v4333, %v3289
  %v4335 = vmax.f32 %v4334, %v3291
  %v4336 = vmax.f32 %v4335, %v3294
  %v4337 = vmax.f32 %v4336, %v3296
  %v4338 = vmax.f32 %v4337, %v3299
  %v4339 = vmax.f32 %v4338, %v3301
  %v4340 = vmax.f32 %v4339, %v3304
  %v4341 = vmax.f32 %v4340, %v3306
  %v4342 = vmax.f32 %v4341, %v3309
  %v4343 = vmax.f32 %v4342, %v3311
  %v4344 = vmax.f32 %v4343, %v3314
  %v4345 = vmax.f32 %v4344, %v3316
  %v4346 = vmax.f32 %v4345, %v3319
  %v4347 = vmax.f32 %v4346, %v3321
  %v4348 = vrot.slane %v4347, 4
  %v4349 = vmax.f32 %v4347, %v4348
  %v4350 = vrot.slane %v4349, 2
  %v4351 = vmax.f32 %v4349, %v4350
  %v4352 = vrot.slane %v4351, 1
  %v4353 = vmax.f32 %v4351, %v4352
  %v4354 = vmax.f32 %v3395, %v3398
  %v4355 = vmax.f32 %v4354, %v3400
  %v4356 = vmax.f32 %v4355, %v3403
  %v4357 = vmax.f32 %v4356, %v3405
  %v4358 = vmax.f32 %v4357, %v3408
  %v4359 = vmax.f32 %v4358, %v3410
  %v4360 = vmax.f32 %v4359, %v3413
  %v4361 = vmax.f32 %v4360, %v3415
  %v4362 = vmax.f32 %v4361, %v3418
  %v4363 = vmax.f32 %v4362, %v3420
  %v4364 = vmax.f32 %v4363, %v3423
  %v4365 = vmax.f32 %v4364, %v3425
  %v4366 = vmax.f32 %v4365, %v3428
  %v4367 = vmax.f32 %v4366, %v3430
  %v4368 = vmax.f32 %v4367, %v3433
  %v4369 = vmax.f32 %v4368, %v3435
  %v4370 = vmax.f32 %v4369, %v3438
  %v4371 = vmax.f32 %v4370, %v3440
  %v4372 = vmax.f32 %v4371, %v3443
  %v4373 = vmax.f32 %v4372, %v3445
  %v4374 = vmax.f32 %v4373, %v3448
  %v4375 = vmax.f32 %v4374, %v3450
  %v4376 = vmax.f32 %v4375, %v3453
  %v4377 = vmax.f32 %v4376, %v3455
  %v4378 = vrot.slane %v4377, 4
  %v4379 = vmax.f32 %v4377, %v4378
  %v4380 = vrot.slane %v4379, 2
  %v4381 = vmax.f32 %v4379, %v4380
  %v4382 = vrot.slane %v4381, 1
  %v4383 = vmax.f32 %v4381, %v4382
  %v4384 = vmax.f32 %v3529, %v3532
  %v4385 = vmax.f32 %v4384, %v3534
  %v4386 = vmax.f32 %v4385, %v3537
  %v4387 = vmax.f32 %v4386, %v3539
  %v4388 = vmax.f32 %v4387, %v3542
  %v4389 = vmax.f32 %v4388, %v3544
  %v4390 = vmax.f32 %v4389, %v3547
  %v4391 = vmax.f32 %v4390, %v3549
  %v4392 = vmax.f32 %v4391, %v3552
  %v4393 = vmax.f32 %v4392, %v3554
  %v4394 = vmax.f32 %v4393, %v3557
  %v4395 = vmax.f32 %v4394, %v3559
  %v4396 = vmax.f32 %v4395, %v3562
  %v4397 = vmax.f32 %v4396, %v3564
  %v4398 = vmax.f32 %v4397, %v3567
  %v4399 = vmax.f32 %v4398, %v3569
  %v4400 = vmax.f32 %v4399, %v3572
  %v4401 = vmax.f32 %v4400, %v3574
  %v4402 = vmax.f32 %v4401, %v3577
  %v4403 = vmax.f32 %v4402, %v3579
  %v4404 = vmax.f32 %v4403, %v3582
  %v4405 = vmax.f32 %v4404, %v3584
  %v4406 = vmax.f32 %v4405, %v3587
  %v4407 = vmax.f32 %v4406, %v3589
  %v4408 = vrot.slane %v4407, 4
  %v4409 = vmax.f32 %v4407, %v4408
  %v4410 = vrot.slane %v4409, 2
  %v4411 = vmax.f32 %v4409, %v4410
  %v4412 = vrot.slane %v4411, 1
  %v4413 = vmax.f32 %v4411, %v4412
  %v4414 = vmax.f32 %v3663, %v3666
  %v4415 = vmax.f32 %v4414, %v3668
  %v4416 = vmax.f32 %v4415, %v3671
  %v4417 = vmax.f32 %v4416, %v3673
  %v4418 = vmax.f32 %v4417, %v3676
  %v4419 = vmax.f32 %v4418, %v3678
  %v4420 = vmax.f32 %v4419, %v3681
  %v4421 = vmax.f32 %v4420, %v3683
  %v4422 = vmax.f32 %v4421, %v3686
  %v4423 = vmax.f32 %v4422, %v3688
  %v4424 = vmax.f32 %v4423, %v3691
  %v4425 = vmax.f32 %v4424, %v3693
  %v4426 = vmax.f32 %v4425, %v3696
  %v4427 = vmax.f32 %v4426, %v3698
  %v4428 = vmax.f32 %v4427, %v3701
  %v4429 = vmax.f32 %v4428, %v3703
  %v4430 = vmax.f32 %v4429, %v3706
  %v4431 = vmax.f32 %v4430, %v3708
  %v4432 = vmax.f32 %v4431, %v3711
  %v4433 = vmax.f32 %v4432, %v3713
  %v4434 = vmax.f32 %v4433, %v3716
  %v4435 = vmax.f32 %v4434, %v3718
  %v4436 = vmax.f32 %v4435, %v3721
  %v4437 = vmax.f32 %v4436, %v3723
  %v4438 = vrot.slane %v4437, 4
  %v4439 = vmax.f32 %v4437, %v4438
  %v4440 = vrot.slane %v4439, 2
  %v4441 = vmax.f32 %v4439, %v4440
  %v4442 = vrot.slane %v4441, 1
  %v4443 = vmax.f32 %v4441, %v4442
  %v4444 = vmax.f32 %v3797, %v3800
  %v4445 = vmax.f32 %v4444, %v3802
  %v4446 = vmax.f32 %v4445, %v3805
  %v4447 = vmax.f32 %v4446, %v3807
  %v4448 = vmax.f32 %v4447, %v3810
  %v4449 = vmax.f32 %v4448, %v3812
  %v4450 = vmax.f32 %v4449, %v3815
  %v4451 = vmax.f32 %v4450, %v3817
  %v4452 = vmax.f32 %v4451, %v3820
  %v4453 = vmax.f32 %v4452, %v3822
  %v4454 = vmax.f32 %v4453, %v3825
  %v4455 = vmax.f32 %v4454, %v3827
  %v4456 = vmax.f32 %v4455, %v3830
  %v4457 = vmax.f32 %v4456, %v3832
  %v4458 = vmax.f32 %v4457, %v3835
  %v4459 = vmax.f32 %v4458, %v3837
  %v4460 = vmax.f32 %v4459, %v3840
  %v4461 = vmax.f32 %v4460, %v3842
  %v4462 = vmax.f32 %v4461, %v3845
  %v4463 = vmax.f32 %v4462, %v3847
  %v4464 = vmax.f32 %v4463, %v3850
  %v4465 = vmax.f32 %v4464, %v3852
  %v4466 = vmax.f32 %v4465, %v3855
  %v4467 = vmax.f32 %v4466, %v3857
  %v4468 = vrot.slane %v4467, 4
  %v4469 = vmax.f32 %v4467, %v4468
  %v4470 = vrot.slane %v4469, 2
  %v4471 = vmax.f32 %v4469, %v4470
  %v4472 = vrot.slane %v4471, 1
  %v4473 = vmax.f32 %v4471, %v4472
  %v4474 = vmax.f32 %v3931, %v3934
  %v4475 = vmax.f32 %v4474, %v3936
  %v4476 = vmax.f32 %v4475, %v3939
  %v4477 = vmax.f32 %v4476, %v3941
  %v4478 = vmax.f32 %v4477, %v3944
  %v4479 = vmax.f32 %v4478, %v3946
  %v4480 = vmax.f32 %v4479, %v3949
  %v4481 = vmax.f32 %v4480, %v3951
  %v4482 = vmax.f32 %v4481, %v3954
  %v4483 = vmax.f32 %v4482, %v3956
  %v4484 = vmax.f32 %v4483, %v3959
  %v4485 = vmax.f32 %v4484, %v3961
  %v4486 = vmax.f32 %v4485, %v3964
  %v4487 = vmax.f32 %v4486, %v3966
  %v4488 = vmax.f32 %v4487, %v3969
  %v4489 = vmax.f32 %v4488, %v3971
  %v4490 = vmax.f32 %v4489, %v3974
  %v4491 = vmax.f32 %v4490, %v3976
  %v4492 = vmax.f32 %v4491, %v3979
  %v4493 = vmax.f32 %v4492, %v3981
  %v4494 = vmax.f32 %v4493, %v3984
  %v4495 = vmax.f32 %v4494, %v3986
  %v4496 = vmax.f32 %v4495, %v3989
  %v4497 = vmax.f32 %v4496, %v3991
  %v4498 = vrot.slane %v4497, 4
  %v4499 = vmax.f32 %v4497, %v4498
  %v4500 = vrot.slane %v4499, 2
  %v4501 = vmax.f32 %v4499, %v4500
  %v4502 = vrot.slane %v4501, 1
  %v4503 = vmax.f32 %v4501, %v4502
  %v4512 = vrot.slane %v4323, 7
  %v4513 = vrot.slane %v4353, 6
  %v4514 = vrot.slane %v4383, 5
  %v4515 = vrot.slane %v4413, 4
  %v4516 = vrot.slane %v4443, 3
  %v4517 = vrot.slane %v4473, 2
  %v4518 = vrot.slane %v4503, 1
  %v4519 = vsel %vm4248, %v4293, %v4512
  %v4520 = vsel %vm4250, %v4513, %v4514
  %v4521 = vsel %vm4252, %v4519, %v4520
  %v4522 = vsel %vm4254, %v4515, %v4516
  %v4523 = vsel %vm4256, %v4517, %v4518
  %v4524 = vsel %vm4258, %v4522, %v4523
  %v4525 = vsel %vm4260, %v4521, %v4524
  %s4527 = scalar_lea.vmem [#allocation5], 1
  %4528 = vst [vmem:[%s4527] ss:$2 sm:$0xff] %v4525
  %v4529 = vld [vmem:[#allocation5] sm:$0xff]
  %v4530 = vld [vmem:[#allocation5 + $0x8] sm:$0xff]
  %s4531 = smul.u32 4, 128
  %s4532 = smul.u32 %s4531, 4
  %s4533 = sshll.u32 %s4532, 4
  %4534 = dma.done %s207, %s4533
  %v4535 = vld [vmem:[#allocation3] sm:$0xff]
  %v4536 = vld [vmem:[#allocation3 + $0x8] sm:$0xff]
  %v4537 = vld [vmem:[#allocation3 + $0x10] sm:$0xff]
  %v4538 = vld [vmem:[#allocation3 + $0x18] sm:$0xff]
  %v4539 = vld [vmem:[#allocation3 + $0x20] sm:$0xff]
  %v4540 = vld [vmem:[#allocation3 + $0x28] sm:$0xff]
  %v4541 = vld [vmem:[#allocation3 + $0x30] sm:$0xff]
  %v4542 = vld [vmem:[#allocation3 + $0x38] sm:$0xff]
  %v4543 = vld [vmem:[#allocation3 + $0x40] sm:$0xff]
  %v4544 = vld [vmem:[#allocation3 + $0x48] sm:$0xff]
  %v4545 = vld [vmem:[#allocation3 + $0x50] sm:$0xff]
  %v4546 = vld [vmem:[#allocation3 + $0x58] sm:$0xff]
  %v4547 = vld [vmem:[#allocation3 + $0x60] sm:$0xff]
  %v4548 = vld [vmem:[#allocation3 + $0x68] sm:$0xff]
  %v4549 = vld [vmem:[#allocation3 + $0x70] sm:$0xff]
  %v4550 = vld [vmem:[#allocation3 + $0x78] sm:$0xff]
  %v4551 = vld [vmem:[#allocation3 + $0x80] sm:$0xff]
  %v4552 = vld [vmem:[#allocation3 + $0x88] sm:$0xff]
  %v4553 = vld [vmem:[#allocation3 + $0x90] sm:$0xff]
  %v4554 = vld [vmem:[#allocation3 + $0x98] sm:$0xff]
  %v4555 = vld [vmem:[#allocation3 + $0xa0] sm:$0xff]
  %v4556 = vld [vmem:[#allocation3 + $0xa8] sm:$0xff]
  %v4557 = vld [vmem:[#allocation3 + $0xb0] sm:$0xff]
  %v4558 = vld [vmem:[#allocation3 + $0xb8] sm:$0xff]
  %v4559 = vld [vmem:[#allocation3 + $0xc0] sm:$0xff]
  %v4560 = vld [vmem:[#allocation3 + $0xc8] sm:$0xff]
  %v4561 = vld [vmem:[#allocation3 + $0xd0] sm:$0xff]
  %v4562 = vld [vmem:[#allocation3 + $0xd8] sm:$0xff]
  %v4563 = vld [vmem:[#allocation3 + $0xe0] sm:$0xff]
  %v4564 = vld [vmem:[#allocation3 + $0xe8] sm:$0xff]
  %v4565 = vld [vmem:[#allocation3 + $0xf0] sm:$0xff]
  %v4566 = vld [vmem:[#allocation3 + $0xf8] sm:$0xff]
  %v4567 = vld [vmem:[#allocation3 + $0x100] sm:$0xff]
  %v4568 = vld [vmem:[#allocation3 + $0x108] sm:$0xff]
  %v4569 = vld [vmem:[#allocation3 + $0x110] sm:$0xff]
  %v4570 = vld [vmem:[#allocation3 + $0x118] sm:$0xff]
  %v4571 = vld [vmem:[#allocation3 + $0x120] sm:$0xff]
  %v4572 = vld [vmem:[#allocation3 + $0x128] sm:$0xff]
  %v4573 = vld [vmem:[#allocation3 + $0x130] sm:$0xff]
  %v4574 = vld [vmem:[#allocation3 + $0x138] sm:$0xff]
  %v4575 = vld [vmem:[#allocation3 + $0x140] sm:$0xff]
  %v4576 = vld [vmem:[#allocation3 + $0x148] sm:$0xff]
  %v4577 = vld [vmem:[#allocation3 + $0x150] sm:$0xff]
  %v4578 = vld [vmem:[#allocation3 + $0x158] sm:$0xff]
  %v4579 = vld [vmem:[#allocation3 + $0x160] sm:$0xff]
  %v4580 = vld [vmem:[#allocation3 + $0x168] sm:$0xff]
  %v4581 = vld [vmem:[#allocation3 + $0x170] sm:$0xff]
  %v4582 = vld [vmem:[#allocation3 + $0x178] sm:$0xff]
  %v4583 = vld [vmem:[#allocation3 + $0x180] sm:$0xff]
  %v4584 = vld [vmem:[#allocation3 + $0x188] sm:$0xff]
  %v4585 = vld [vmem:[#allocation3 + $0x190] sm:$0xff]
  %v4586 = vld [vmem:[#allocation3 + $0x198] sm:$0xff]
  %v4587 = vld [vmem:[#allocation3 + $0x1a0] sm:$0xff]
  %v4588 = vld [vmem:[#allocation3 + $0x1a8] sm:$0xff]
  %v4589 = vld [vmem:[#allocation3 + $0x1b0] sm:$0xff]
  %v4590 = vld [vmem:[#allocation3 + $0x1b8] sm:$0xff]
  %v4591 = vld [vmem:[#allocation3 + $0x1c0] sm:$0xff]
  %v4592 = vld [vmem:[#allocation3 + $0x1c8] sm:$0xff]
  %v4593 = vld [vmem:[#allocation3 + $0x1d0] sm:$0xff]
  %v4594 = vld [vmem:[#allocation3 + $0x1d8] sm:$0xff]
  %v4595 = vld [vmem:[#allocation3 + $0x1e0] sm:$0xff]
  %v4596 = vld [vmem:[#allocation3 + $0x1e8] sm:$0xff]
  %v4597 = vld [vmem:[#allocation3 + $0x1f0] sm:$0xff]
  %v4598 = vld [vmem:[#allocation3 + $0x1f8] sm:$0xff]
  %v4599 = vld [vmem:[#allocation3 + $0x200] sm:$0xff]
  %v4600 = vld [vmem:[#allocation3 + $0x208] sm:$0xff]
  %v4601 = vld [vmem:[#allocation3 + $0x210] sm:$0xff]
  %v4602 = vld [vmem:[#allocation3 + $0x218] sm:$0xff]
  %v4603 = vld [vmem:[#allocation3 + $0x220] sm:$0xff]
  %v4604 = vld [vmem:[#allocation3 + $0x228] sm:$0xff]
  %v4605 = vld [vmem:[#allocation3 + $0x230] sm:$0xff]
  %v4606 = vld [vmem:[#allocation3 + $0x238] sm:$0xff]
  %v4607 = vld [vmem:[#allocation3 + $0x240] sm:$0xff]
  %v4608 = vld [vmem:[#allocation3 + $0x248] sm:$0xff]
  %v4609 = vld [vmem:[#allocation3 + $0x250] sm:$0xff]
  %v4610 = vld [vmem:[#allocation3 + $0x258] sm:$0xff]
  %v4611 = vld [vmem:[#allocation3 + $0x260] sm:$0xff]
  %v4612 = vld [vmem:[#allocation3 + $0x268] sm:$0xff]
  %v4613 = vld [vmem:[#allocation3 + $0x270] sm:$0xff]
  %v4614 = vld [vmem:[#allocation3 + $0x278] sm:$0xff]
  %v4615 = vld [vmem:[#allocation3 + $0x280] sm:$0xff]
  %v4616 = vld [vmem:[#allocation3 + $0x288] sm:$0xff]
  %v4617 = vld [vmem:[#allocation3 + $0x290] sm:$0xff]
  %v4618 = vld [vmem:[#allocation3 + $0x298] sm:$0xff]
  %v4619 = vld [vmem:[#allocation3 + $0x2a0] sm:$0xff]
  %v4620 = vld [vmem:[#allocation3 + $0x2a8] sm:$0xff]
  %v4621 = vld [vmem:[#allocation3 + $0x2b0] sm:$0xff]
  %v4622 = vld [vmem:[#allocation3 + $0x2b8] sm:$0xff]
  %v4623 = vld [vmem:[#allocation3 + $0x2c0] sm:$0xff]
  %v4624 = vld [vmem:[#allocation3 + $0x2c8] sm:$0xff]
  %v4625 = vld [vmem:[#allocation3 + $0x2d0] sm:$0xff]
  %v4626 = vld [vmem:[#allocation3 + $0x2d8] sm:$0xff]
  %v4627 = vld [vmem:[#allocation3 + $0x2e0] sm:$0xff]
  %v4628 = vld [vmem:[#allocation3 + $0x2e8] sm:$0xff]
  %v4629 = vld [vmem:[#allocation3 + $0x2f0] sm:$0xff]
  %v4630 = vld [vmem:[#allocation3 + $0x2f8] sm:$0xff]
  %v4631 = vld [vmem:[#allocation3 + $0x300] sm:$0xff]
  %v4632 = vld [vmem:[#allocation3 + $0x308] sm:$0xff]
  %v4633 = vld [vmem:[#allocation3 + $0x310] sm:$0xff]
  %v4634 = vld [vmem:[#allocation3 + $0x318] sm:$0xff]
  %v4635 = vld [vmem:[#allocation3 + $0x320] sm:$0xff]
  %v4636 = vld [vmem:[#allocation3 + $0x328] sm:$0xff]
  %v4637 = vld [vmem:[#allocation3 + $0x330] sm:$0xff]
  %v4638 = vld [vmem:[#allocation3 + $0x338] sm:$0xff]
  %v4639 = vld [vmem:[#allocation3 + $0x340] sm:$0xff]
  %v4640 = vld [vmem:[#allocation3 + $0x348] sm:$0xff]
  %v4641 = vld [vmem:[#allocation3 + $0x350] sm:$0xff]
  %v4642 = vld [vmem:[#allocation3 + $0x358] sm:$0xff]
  %v4643 = vld [vmem:[#allocation3 + $0x360] sm:$0xff]
  %v4644 = vld [vmem:[#allocation3 + $0x368] sm:$0xff]
  %v4645 = vld [vmem:[#allocation3 + $0x370] sm:$0xff]
  %v4646 = vld [vmem:[#allocation3 + $0x378] sm:$0xff]
  %v4647 = vld [vmem:[#allocation3 + $0x380] sm:$0xff]
  %v4648 = vld [vmem:[#allocation3 + $0x388] sm:$0xff]
  %v4649 = vld [vmem:[#allocation3 + $0x390] sm:$0xff]
  %v4650 = vld [vmem:[#allocation3 + $0x398] sm:$0xff]
  %v4651 = vld [vmem:[#allocation3 + $0x3a0] sm:$0xff]
  %v4652 = vld [vmem:[#allocation3 + $0x3a8] sm:$0xff]
  %v4653 = vld [vmem:[#allocation3 + $0x3b0] sm:$0xff]
  %v4654 = vld [vmem:[#allocation3 + $0x3b8] sm:$0xff]
  %v4655 = vld [vmem:[#allocation3 + $0x3c0] sm:$0xff]
  %v4656 = vld [vmem:[#allocation3 + $0x3c8] sm:$0xff]
  %v4657 = vld [vmem:[#allocation3 + $0x3d0] sm:$0xff]
  %v4658 = vld [vmem:[#allocation3 + $0x3d8] sm:$0xff]
  %v4659 = vld [vmem:[#allocation3 + $0x3e0] sm:$0xff]
  %v4660 = vld [vmem:[#allocation3 + $0x3e8] sm:$0xff]
  %v4661 = vld [vmem:[#allocation3 + $0x3f0] sm:$0xff]
  %v4662 = vld [vmem:[#allocation3 + $0x3f8] sm:$0xff]
  %v4663 = vld [vmem:[#allocation3 + $0x400] sm:$0xff]
  %v4664 = vld [vmem:[#allocation3 + $0x408] sm:$0xff]
  %v4665 = vld [vmem:[#allocation3 + $0x410] sm:$0xff]
  %v4666 = vld [vmem:[#allocation3 + $0x418] sm:$0xff]
  %v4667 = vld [vmem:[#allocation3 + $0x420] sm:$0xff]
  %v4668 = vld [vmem:[#allocation3 + $0x428] sm:$0xff]
  %v4669 = vld [vmem:[#allocation3 + $0x430] sm:$0xff]
  %v4670 = vld [vmem:[#allocation3 + $0x438] sm:$0xff]
  %v4671 = vld [vmem:[#allocation3 + $0x440] sm:$0xff]
  %v4672 = vld [vmem:[#allocation3 + $0x448] sm:$0xff]
  %v4673 = vld [vmem:[#allocation3 + $0x450] sm:$0xff]
  %v4674 = vld [vmem:[#allocation3 + $0x458] sm:$0xff]
  %v4675 = vld [vmem:[#allocation3 + $0x460] sm:$0xff]
  %v4676 = vld [vmem:[#allocation3 + $0x468] sm:$0xff]
  %v4677 = vld [vmem:[#allocation3 + $0x470] sm:$0xff]
  %v4678 = vld [vmem:[#allocation3 + $0x478] sm:$0xff]
  %v4679 = vld [vmem:[#allocation3 + $0x480] sm:$0xff]
  %v4680 = vld [vmem:[#allocation3 + $0x488] sm:$0xff]
  %v4681 = vld [vmem:[#allocation3 + $0x490] sm:$0xff]
  %v4682 = vld [vmem:[#allocation3 + $0x498] sm:$0xff]
  %v4683 = vld [vmem:[#allocation3 + $0x4a0] sm:$0xff]
  %v4684 = vld [vmem:[#allocation3 + $0x4a8] sm:$0xff]
  %v4685 = vld [vmem:[#allocation3 + $0x4b0] sm:$0xff]
  %v4686 = vld [vmem:[#allocation3 + $0x4b8] sm:$0xff]
  %v4687 = vld [vmem:[#allocation3 + $0x4c0] sm:$0xff]
  %v4688 = vld [vmem:[#allocation3 + $0x4c8] sm:$0xff]
  %v4689 = vld [vmem:[#allocation3 + $0x4d0] sm:$0xff]
  %v4690 = vld [vmem:[#allocation3 + $0x4d8] sm:$0xff]
  %v4691 = vld [vmem:[#allocation3 + $0x4e0] sm:$0xff]
  %v4692 = vld [vmem:[#allocation3 + $0x4e8] sm:$0xff]
  %v4693 = vld [vmem:[#allocation3 + $0x4f0] sm:$0xff]
  %v4694 = vld [vmem:[#allocation3 + $0x4f8] sm:$0xff]
  %v4695 = vld [vmem:[#allocation3 + $0x500] sm:$0xff]
  %v4696 = vld [vmem:[#allocation3 + $0x508] sm:$0xff]
  %v4697 = vld [vmem:[#allocation3 + $0x510] sm:$0xff]
  %v4698 = vld [vmem:[#allocation3 + $0x518] sm:$0xff]
  %v4699 = vld [vmem:[#allocation3 + $0x520] sm:$0xff]
  %v4700 = vld [vmem:[#allocation3 + $0x528] sm:$0xff]
  %v4701 = vld [vmem:[#allocation3 + $0x530] sm:$0xff]
  %v4702 = vld [vmem:[#allocation3 + $0x538] sm:$0xff]
  %v4703 = vld [vmem:[#allocation3 + $0x540] sm:$0xff]
  %v4704 = vld [vmem:[#allocation3 + $0x548] sm:$0xff]
  %v4705 = vld [vmem:[#allocation3 + $0x550] sm:$0xff]
  %v4706 = vld [vmem:[#allocation3 + $0x558] sm:$0xff]
  %v4707 = vld [vmem:[#allocation3 + $0x560] sm:$0xff]
  %v4708 = vld [vmem:[#allocation3 + $0x568] sm:$0xff]
  %v4709 = vld [vmem:[#allocation3 + $0x570] sm:$0xff]
  %v4710 = vld [vmem:[#allocation3 + $0x578] sm:$0xff]
  %v4711 = vld [vmem:[#allocation3 + $0x580] sm:$0xff]
  %v4712 = vld [vmem:[#allocation3 + $0x588] sm:$0xff]
  %v4713 = vld [vmem:[#allocation3 + $0x590] sm:$0xff]
  %v4714 = vld [vmem:[#allocation3 + $0x598] sm:$0xff]
  %v4715 = vld [vmem:[#allocation3 + $0x5a0] sm:$0xff]
  %v4716 = vld [vmem:[#allocation3 + $0x5a8] sm:$0xff]
  %v4717 = vld [vmem:[#allocation3 + $0x5b0] sm:$0xff]
  %v4718 = vld [vmem:[#allocation3 + $0x5b8] sm:$0xff]
  %v4719 = vld [vmem:[#allocation3 + $0x5c0] sm:$0xff]
  %v4720 = vld [vmem:[#allocation3 + $0x5c8] sm:$0xff]
  %v4721 = vld [vmem:[#allocation3 + $0x5d0] sm:$0xff]
  %v4722 = vld [vmem:[#allocation3 + $0x5d8] sm:$0xff]
  %v4723 = vld [vmem:[#allocation3 + $0x5e0] sm:$0xff]
  %v4724 = vld [vmem:[#allocation3 + $0x5e8] sm:$0xff]
  %v4725 = vld [vmem:[#allocation3 + $0x5f0] sm:$0xff]
  %v4726 = vld [vmem:[#allocation3 + $0x5f8] sm:$0xff]
  %v4727 = vld [vmem:[#allocation3 + $0x600] sm:$0xff]
  %v4728 = vld [vmem:[#allocation3 + $0x608] sm:$0xff]
  %v4729 = vld [vmem:[#allocation3 + $0x610] sm:$0xff]
  %v4730 = vld [vmem:[#allocation3 + $0x618] sm:$0xff]
  %v4731 = vld [vmem:[#allocation3 + $0x620] sm:$0xff]
  %v4732 = vld [vmem:[#allocation3 + $0x628] sm:$0xff]
  %v4733 = vld [vmem:[#allocation3 + $0x630] sm:$0xff]
  %v4734 = vld [vmem:[#allocation3 + $0x638] sm:$0xff]
  %v4735 = vld [vmem:[#allocation3 + $0x640] sm:$0xff]
  %v4736 = vld [vmem:[#allocation3 + $0x648] sm:$0xff]
  %v4737 = vld [vmem:[#allocation3 + $0x650] sm:$0xff]
  %v4738 = vld [vmem:[#allocation3 + $0x658] sm:$0xff]
  %v4739 = vld [vmem:[#allocation3 + $0x660] sm:$0xff]
  %v4740 = vld [vmem:[#allocation3 + $0x668] sm:$0xff]
  %v4741 = vld [vmem:[#allocation3 + $0x670] sm:$0xff]
  %v4742 = vld [vmem:[#allocation3 + $0x678] sm:$0xff]
  %v4743 = vld [vmem:[#allocation3 + $0x680] sm:$0xff]
  %v4744 = vld [vmem:[#allocation3 + $0x688] sm:$0xff]
  %v4745 = vld [vmem:[#allocation3 + $0x690] sm:$0xff]
  %v4746 = vld [vmem:[#allocation3 + $0x698] sm:$0xff]
  %v4747 = vld [vmem:[#allocation3 + $0x6a0] sm:$0xff]
  %v4748 = vld [vmem:[#allocation3 + $0x6a8] sm:$0xff]
  %v4749 = vld [vmem:[#allocation3 + $0x6b0] sm:$0xff]
  %v4750 = vld [vmem:[#allocation3 + $0x6b8] sm:$0xff]
  %v4751 = vld [vmem:[#allocation3 + $0x6c0] sm:$0xff]
  %v4752 = vld [vmem:[#allocation3 + $0x6c8] sm:$0xff]
  %v4753 = vld [vmem:[#allocation3 + $0x6d0] sm:$0xff]
  %v4754 = vld [vmem:[#allocation3 + $0x6d8] sm:$0xff]
  %v4755 = vld [vmem:[#allocation3 + $0x6e0] sm:$0xff]
  %v4756 = vld [vmem:[#allocation3 + $0x6e8] sm:$0xff]
  %v4757 = vld [vmem:[#allocation3 + $0x6f0] sm:$0xff]
  %v4758 = vld [vmem:[#allocation3 + $0x6f8] sm:$0xff]
  %v4759 = vld [vmem:[#allocation3 + $0x700] sm:$0xff]
  %v4760 = vld [vmem:[#allocation3 + $0x708] sm:$0xff]
  %v4761 = vld [vmem:[#allocation3 + $0x710] sm:$0xff]
  %v4762 = vld [vmem:[#allocation3 + $0x718] sm:$0xff]
  %v4763 = vld [vmem:[#allocation3 + $0x720] sm:$0xff]
  %v4764 = vld [vmem:[#allocation3 + $0x728] sm:$0xff]
  %v4765 = vld [vmem:[#allocation3 + $0x730] sm:$0xff]
  %v4766 = vld [vmem:[#allocation3 + $0x738] sm:$0xff]
  %v4767 = vld [vmem:[#allocation3 + $0x740] sm:$0xff]
  %v4768 = vld [vmem:[#allocation3 + $0x748] sm:$0xff]
  %v4769 = vld [vmem:[#allocation3 + $0x750] sm:$0xff]
  %v4770 = vld [vmem:[#allocation3 + $0x758] sm:$0xff]
  %v4771 = vld [vmem:[#allocation3 + $0x760] sm:$0xff]
  %v4772 = vld [vmem:[#allocation3 + $0x768] sm:$0xff]
  %v4773 = vld [vmem:[#allocation3 + $0x770] sm:$0xff]
  %v4774 = vld [vmem:[#allocation3 + $0x778] sm:$0xff]
  %v4775 = vld [vmem:[#allocation3 + $0x780] sm:$0xff]
  %v4776 = vld [vmem:[#allocation3 + $0x788] sm:$0xff]
  %v4777 = vld [vmem:[#allocation3 + $0x790] sm:$0xff]
  %v4778 = vld [vmem:[#allocation3 + $0x798] sm:$0xff]
  %v4779 = vld [vmem:[#allocation3 + $0x7a0] sm:$0xff]
  %v4780 = vld [vmem:[#allocation3 + $0x7a8] sm:$0xff]
  %v4781 = vld [vmem:[#allocation3 + $0x7b0] sm:$0xff]
  %v4782 = vld [vmem:[#allocation3 + $0x7b8] sm:$0xff]
  %v4783 = vld [vmem:[#allocation3 + $0x7c0] sm:$0xff]
  %v4784 = vld [vmem:[#allocation3 + $0x7c8] sm:$0xff]
  %v4785 = vld [vmem:[#allocation3 + $0x7d0] sm:$0xff]
  %v4786 = vld [vmem:[#allocation3 + $0x7d8] sm:$0xff]
  %v4787 = vld [vmem:[#allocation3 + $0x7e0] sm:$0xff]
  %v4788 = vld [vmem:[#allocation3 + $0x7e8] sm:$0xff]
  %v4789 = vld [vmem:[#allocation3 + $0x7f0] sm:$0xff]
  %v4790 = vld [vmem:[#allocation3 + $0x7f8] sm:$0xff]
  %v4791 = vld [vmem:[%s14] sm:$0xf]
  %4794 = vst [vmem:[#allocation1] ss:$4 sm:$0xff] %v4529
  %s4795 = scalar_lea.vmem [#allocation1], 32
  %4796 = vst [vmem:[%s4795] ss:$4 sm:$0xff] %v4530
  %v4797 = vld.sshfl [vmem:[#allocation1] sm:$0xff pattern:$0x73625140]
  %v4798 = vld.sshfl [vmem:[#allocation1 + $0x8] sm:$0xff pattern:$0x73625140]
  %v4799 = vld.sshfl [vmem:[#allocation1 + $0x10] sm:$0xff pattern:$0x73625140]
  %v4800 = vld.sshfl [vmem:[#allocation1 + $0x18] sm:$0xff pattern:$0x73625140]
  %v4801 = vld.sshfl [vmem:[#allocation1 + $0x20] sm:$0xff pattern:$0x73625140]
  %v4802 = vld.sshfl [vmem:[#allocation1 + $0x28] sm:$0xff pattern:$0x73625140]
  %v4803 = vld.sshfl [vmem:[#allocation1 + $0x30] sm:$0xff pattern:$0x73625140]
  %v4804 = vld.sshfl [vmem:[#allocation1 + $0x38] sm:$0xff pattern:$0x73625140]
  %v4813 = vpack.c.bf16 %v4797, %v4797
  %v4814 = vpack.c.bf16 %v4798, %v4798
  %v4815 = vpack.c.bf16 %v4799, %v4799
  %v4816 = vpack.c.bf16 %v4800, %v4800
  %v4817 = vpack.c.bf16 %v4801, %v4801
  %v4818 = vpack.c.bf16 %v4802, %v4802
  %v4819 = vpack.c.bf16 %v4803, %v4803
  %v4820 = vpack.c.bf16 %v4804, %v4804
  %v4822 = vperm.slane %v4791, 0
  %v4823 = vperm.slane %v4791, 1
  %v4824 = vperm.slane %v4791, 2
  %v4825 = vperm.slane %v4791, 3
  %v5086 = vunpack.c.l.b16 %v4535
  %v5087 = vunpack.c.h.b16 %v4535
  %v5088 = vunpack.c.l.b16 %v4536
  %v5089 = vunpack.c.h.b16 %v4536
  %v5090 = vunpack.c.l.b16 %v4537
  %v5091 = vunpack.c.h.b16 %v4537
  %v5092 = vunpack.c.l.b16 %v4538
  %v5093 = vunpack.c.h.b16 %v4538
  %v5094 = vunpack.c.l.b16 %v4539
  %v5095 = vunpack.c.h.b16 %v4539
  %v5096 = vunpack.c.l.b16 %v4540
  %v5097 = vunpack.c.h.b16 %v4540
  %v5098 = vunpack.c.l.b16 %v4541
  %v5099 = vunpack.c.h.b16 %v4541
  %v5100 = vunpack.c.l.b16 %v4542
  %v5101 = vunpack.c.h.b16 %v4542
  %v5102 = vunpack.c.l.b16 %v4543
  %v5103 = vunpack.c.h.b16 %v4543
  %v5104 = vunpack.c.l.b16 %v4544
  %v5105 = vunpack.c.h.b16 %v4544
  %v5106 = vunpack.c.l.b16 %v4545
  %v5107 = vunpack.c.h.b16 %v4545
  %v5108 = vunpack.c.l.b16 %v4546
  %v5109 = vunpack.c.h.b16 %v4546
  %v5110 = vunpack.c.l.b16 %v4547
  %v5111 = vunpack.c.h.b16 %v4547
  %v5112 = vunpack.c.l.b16 %v4548
  %v5113 = vunpack.c.h.b16 %v4548
  %v5114 = vunpack.c.l.b16 %v4549
  %v5115 = vunpack.c.h.b16 %v4549
  %v5116 = vunpack.c.l.b16 %v4550
  %v5117 = vunpack.c.h.b16 %v4550
  %v5118 = vunpack.c.l.b16 %v4551
  %v5119 = vunpack.c.h.b16 %v4551
  %v5120 = vunpack.c.l.b16 %v4552
  %v5121 = vunpack.c.h.b16 %v4552
  %v5122 = vunpack.c.l.b16 %v4553
  %v5123 = vunpack.c.h.b16 %v4553
  %v5124 = vunpack.c.l.b16 %v4554
  %v5125 = vunpack.c.h.b16 %v4554
  %v5126 = vunpack.c.l.b16 %v4555
  %v5127 = vunpack.c.h.b16 %v4555
  %v5128 = vunpack.c.l.b16 %v4556
  %v5129 = vunpack.c.h.b16 %v4556
  %v5130 = vunpack.c.l.b16 %v4557
  %v5131 = vunpack.c.h.b16 %v4557
  %v5132 = vunpack.c.l.b16 %v4558
  %v5133 = vunpack.c.h.b16 %v4558
  %v5134 = vunpack.c.l.b16 %v4559
  %v5135 = vunpack.c.h.b16 %v4559
  %v5136 = vunpack.c.l.b16 %v4560
  %v5137 = vunpack.c.h.b16 %v4560
  %v5138 = vunpack.c.l.b16 %v4561
  %v5139 = vunpack.c.h.b16 %v4561
  %v5140 = vunpack.c.l.b16 %v4562
  %v5141 = vunpack.c.h.b16 %v4562
  %v5142 = vunpack.c.l.b16 %v4563
  %v5143 = vunpack.c.h.b16 %v4563
  %v5144 = vunpack.c.l.b16 %v4564
  %v5145 = vunpack.c.h.b16 %v4564
  %v5146 = vunpack.c.l.b16 %v4565
  %v5147 = vunpack.c.h.b16 %v4565
  %v5148 = vunpack.c.l.b16 %v4566
  %v5149 = vunpack.c.h.b16 %v4566
  %v5150 = vunpack.c.l.b16 %v4567
  %v5151 = vunpack.c.h.b16 %v4567
  %v5152 = vunpack.c.l.b16 %v4568
  %v5153 = vunpack.c.h.b16 %v4568
  %v5154 = vunpack.c.l.b16 %v4569
  %v5155 = vunpack.c.h.b16 %v4569
  %v5156 = vunpack.c.l.b16 %v4570
  %v5157 = vunpack.c.h.b16 %v4570
  %v5158 = vunpack.c.l.b16 %v4571
  %v5159 = vunpack.c.h.b16 %v4571
  %v5160 = vunpack.c.l.b16 %v4572
  %v5161 = vunpack.c.h.b16 %v4572
  %v5162 = vunpack.c.l.b16 %v4573
  %v5163 = vunpack.c.h.b16 %v4573
  %v5164 = vunpack.c.l.b16 %v4574
  %v5165 = vunpack.c.h.b16 %v4574
  %v5166 = vunpack.c.l.b16 %v4575
  %v5167 = vunpack.c.h.b16 %v4575
  %v5168 = vunpack.c.l.b16 %v4576
  %v5169 = vunpack.c.h.b16 %v4576
  %v5170 = vunpack.c.l.b16 %v4577
  %v5171 = vunpack.c.h.b16 %v4577
  %v5172 = vunpack.c.l.b16 %v4578
  %v5173 = vunpack.c.h.b16 %v4578
  %v5174 = vunpack.c.l.b16 %v4579
  %v5175 = vunpack.c.h.b16 %v4579
  %v5176 = vunpack.c.l.b16 %v4580
  %v5177 = vunpack.c.h.b16 %v4580
  %v5178 = vunpack.c.l.b16 %v4581
  %v5179 = vunpack.c.h.b16 %v4581
  %v5180 = vunpack.c.l.b16 %v4582
  %v5181 = vunpack.c.h.b16 %v4582
  %v5182 = vunpack.c.l.b16 %v4583
  %v5183 = vunpack.c.h.b16 %v4583
  %v5184 = vunpack.c.l.b16 %v4584
  %v5185 = vunpack.c.h.b16 %v4584
  %v5186 = vunpack.c.l.b16 %v4585
  %v5187 = vunpack.c.h.b16 %v4585
  %v5188 = vunpack.c.l.b16 %v4586
  %v5189 = vunpack.c.h.b16 %v4586
  %v5190 = vunpack.c.l.b16 %v4587
  %v5191 = vunpack.c.h.b16 %v4587
  %v5192 = vunpack.c.l.b16 %v4588
  %v5193 = vunpack.c.h.b16 %v4588
  %v5194 = vunpack.c.l.b16 %v4589
  %v5195 = vunpack.c.h.b16 %v4589
  %v5196 = vunpack.c.l.b16 %v4590
  %v5197 = vunpack.c.h.b16 %v4590
  %v5198 = vunpack.c.l.b16 %v4591
  %v5199 = vunpack.c.h.b16 %v4591
  %v5200 = vunpack.c.l.b16 %v4592
  %v5201 = vunpack.c.h.b16 %v4592
  %v5202 = vunpack.c.l.b16 %v4593
  %v5203 = vunpack.c.h.b16 %v4593
  %v5204 = vunpack.c.l.b16 %v4594
  %v5205 = vunpack.c.h.b16 %v4594
  %v5206 = vunpack.c.l.b16 %v4595
  %v5207 = vunpack.c.h.b16 %v4595
  %v5208 = vunpack.c.l.b16 %v4596
  %v5209 = vunpack.c.h.b16 %v4596
  %v5210 = vunpack.c.l.b16 %v4597
  %v5211 = vunpack.c.h.b16 %v4597
  %v5212 = vunpack.c.l.b16 %v4598
  %v5213 = vunpack.c.h.b16 %v4598
  %v5214 = vunpack.c.l.b16 %v4599
  %v5215 = vunpack.c.h.b16 %v4599
  %v5216 = vunpack.c.l.b16 %v4600
  %v5217 = vunpack.c.h.b16 %v4600
  %v5218 = vunpack.c.l.b16 %v4601
  %v5219 = vunpack.c.h.b16 %v4601
  %v5220 = vunpack.c.l.b16 %v4602
  %v5221 = vunpack.c.h.b16 %v4602
  %v5222 = vunpack.c.l.b16 %v4603
  %v5223 = vunpack.c.h.b16 %v4603
  %v5224 = vunpack.c.l.b16 %v4604
  %v5225 = vunpack.c.h.b16 %v4604
  %v5226 = vunpack.c.l.b16 %v4605
  %v5227 = vunpack.c.h.b16 %v4605
  %v5228 = vunpack.c.l.b16 %v4606
  %v5229 = vunpack.c.h.b16 %v4606
  %v5230 = vunpack.c.l.b16 %v4607
  %v5231 = vunpack.c.h.b16 %v4607
  %v5232 = vunpack.c.l.b16 %v4608
  %v5233 = vunpack.c.h.b16 %v4608
  %v5234 = vunpack.c.l.b16 %v4609
  %v5235 = vunpack.c.h.b16 %v4609
  %v5236 = vunpack.c.l.b16 %v4610
  %v5237 = vunpack.c.h.b16 %v4610
  %v5238 = vunpack.c.l.b16 %v4611
  %v5239 = vunpack.c.h.b16 %v4611
  %v5240 = vunpack.c.l.b16 %v4612
  %v5241 = vunpack.c.h.b16 %v4612
  %v5242 = vunpack.c.l.b16 %v4613
  %v5243 = vunpack.c.h.b16 %v4613
  %v5244 = vunpack.c.l.b16 %v4614
  %v5245 = vunpack.c.h.b16 %v4614
  %v5246 = vunpack.c.l.b16 %v4615
  %v5247 = vunpack.c.h.b16 %v4615
  %v5248 = vunpack.c.l.b16 %v4616
  %v5249 = vunpack.c.h.b16 %v4616
  %v5250 = vunpack.c.l.b16 %v4617
  %v5251 = vunpack.c.h.b16 %v4617
  %v5252 = vunpack.c.l.b16 %v4618
  %v5253 = vunpack.c.h.b16 %v4618
  %v5254 = vunpack.c.l.b16 %v4619
  %v5255 = vunpack.c.h.b16 %v4619
  %v5256 = vunpack.c.l.b16 %v4620
  %v5257 = vunpack.c.h.b16 %v4620
  %v5258 = vunpack.c.l.b16 %v4621
  %v5259 = vunpack.c.h.b16 %v4621
  %v5260 = vunpack.c.l.b16 %v4622
  %v5261 = vunpack.c.h.b16 %v4622
  %v5262 = vunpack.c.l.b16 %v4623
  %v5263 = vunpack.c.h.b16 %v4623
  %v5264 = vunpack.c.l.b16 %v4624
  %v5265 = vunpack.c.h.b16 %v4624
  %v5266 = vunpack.c.l.b16 %v4625
  %v5267 = vunpack.c.h.b16 %v4625
  %v5268 = vunpack.c.l.b16 %v4626
  %v5269 = vunpack.c.h.b16 %v4626
  %v5270 = vunpack.c.l.b16 %v4627
  %v5271 = vunpack.c.h.b16 %v4627
  %v5272 = vunpack.c.l.b16 %v4628
  %v5273 = vunpack.c.h.b16 %v4628
  %v5274 = vunpack.c.l.b16 %v4629
  %v5275 = vunpack.c.h.b16 %v4629
  %v5276 = vunpack.c.l.b16 %v4630
  %v5277 = vunpack.c.h.b16 %v4630
  %v5278 = vunpack.c.l.b16 %v4631
  %v5279 = vunpack.c.h.b16 %v4631
  %v5280 = vunpack.c.l.b16 %v4632
  %v5281 = vunpack.c.h.b16 %v4632
  %v5282 = vunpack.c.l.b16 %v4633
  %v5283 = vunpack.c.h.b16 %v4633
  %v5284 = vunpack.c.l.b16 %v4634
  %v5285 = vunpack.c.h.b16 %v4634
  %v5286 = vunpack.c.l.b16 %v4635
  %v5287 = vunpack.c.h.b16 %v4635
  %v5288 = vunpack.c.l.b16 %v4636
  %v5289 = vunpack.c.h.b16 %v4636
  %v5290 = vunpack.c.l.b16 %v4637
  %v5291 = vunpack.c.h.b16 %v4637
  %v5292 = vunpack.c.l.b16 %v4638
  %v5293 = vunpack.c.h.b16 %v4638
  %v5294 = vunpack.c.l.b16 %v4639
  %v5295 = vunpack.c.h.b16 %v4639
  %v5296 = vunpack.c.l.b16 %v4640
  %v5297 = vunpack.c.h.b16 %v4640
  %v5298 = vunpack.c.l.b16 %v4641
  %v5299 = vunpack.c.h.b16 %v4641
  %v5300 = vunpack.c.l.b16 %v4642
  %v5301 = vunpack.c.h.b16 %v4642
  %v5302 = vunpack.c.l.b16 %v4643
  %v5303 = vunpack.c.h.b16 %v4643
  %v5304 = vunpack.c.l.b16 %v4644
  %v5305 = vunpack.c.h.b16 %v4644
  %v5306 = vunpack.c.l.b16 %v4645
  %v5307 = vunpack.c.h.b16 %v4645
  %v5308 = vunpack.c.l.b16 %v4646
  %v5309 = vunpack.c.h.b16 %v4646
  %v5310 = vunpack.c.l.b16 %v4647
  %v5311 = vunpack.c.h.b16 %v4647
  %v5312 = vunpack.c.l.b16 %v4648
  %v5313 = vunpack.c.h.b16 %v4648
  %v5314 = vunpack.c.l.b16 %v4649
  %v5315 = vunpack.c.h.b16 %v4649
  %v5316 = vunpack.c.l.b16 %v4650
  %v5317 = vunpack.c.h.b16 %v4650
  %v5318 = vunpack.c.l.b16 %v4651
  %v5319 = vunpack.c.h.b16 %v4651
  %v5320 = vunpack.c.l.b16 %v4652
  %v5321 = vunpack.c.h.b16 %v4652
  %v5322 = vunpack.c.l.b16 %v4653
  %v5323 = vunpack.c.h.b16 %v4653
  %v5324 = vunpack.c.l.b16 %v4654
  %v5325 = vunpack.c.h.b16 %v4654
  %v5326 = vunpack.c.l.b16 %v4655
  %v5327 = vunpack.c.h.b16 %v4655
  %v5328 = vunpack.c.l.b16 %v4656
  %v5329 = vunpack.c.h.b16 %v4656
  %v5330 = vunpack.c.l.b16 %v4657
  %v5331 = vunpack.c.h.b16 %v4657
  %v5332 = vunpack.c.l.b16 %v4658
  %v5333 = vunpack.c.h.b16 %v4658
  %v5334 = vunpack.c.l.b16 %v4659
  %v5335 = vunpack.c.h.b16 %v4659
  %v5336 = vunpack.c.l.b16 %v4660
  %v5337 = vunpack.c.h.b16 %v4660
  %v5338 = vunpack.c.l.b16 %v4661
  %v5339 = vunpack.c.h.b16 %v4661
  %v5340 = vunpack.c.l.b16 %v4662
  %v5341 = vunpack.c.h.b16 %v4662
  %v5342 = vunpack.c.l.b16 %v4663
  %v5343 = vunpack.c.h.b16 %v4663
  %v5344 = vunpack.c.l.b16 %v4664
  %v5345 = vunpack.c.h.b16 %v4664
  %v5346 = vunpack.c.l.b16 %v4665
  %v5347 = vunpack.c.h.b16 %v4665
  %v5348 = vunpack.c.l.b16 %v4666
  %v5349 = vunpack.c.h.b16 %v4666
  %v5350 = vunpack.c.l.b16 %v4667
  %v5351 = vunpack.c.h.b16 %v4667
  %v5352 = vunpack.c.l.b16 %v4668
  %v5353 = vunpack.c.h.b16 %v4668
  %v5354 = vunpack.c.l.b16 %v4669
  %v5355 = vunpack.c.h.b16 %v4669
  %v5356 = vunpack.c.l.b16 %v4670
  %v5357 = vunpack.c.h.b16 %v4670
  %v5358 = vunpack.c.l.b16 %v4671
  %v5359 = vunpack.c.h.b16 %v4671
  %v5360 = vunpack.c.l.b16 %v4672
  %v5361 = vunpack.c.h.b16 %v4672
  %v5362 = vunpack.c.l.b16 %v4673
  %v5363 = vunpack.c.h.b16 %v4673
  %v5364 = vunpack.c.l.b16 %v4674
  %v5365 = vunpack.c.h.b16 %v4674
  %v5366 = vunpack.c.l.b16 %v4675
  %v5367 = vunpack.c.h.b16 %v4675
  %v5368 = vunpack.c.l.b16 %v4676
  %v5369 = vunpack.c.h.b16 %v4676
  %v5370 = vunpack.c.l.b16 %v4677
  %v5371 = vunpack.c.h.b16 %v4677
  %v5372 = vunpack.c.l.b16 %v4678
  %v5373 = vunpack.c.h.b16 %v4678
  %v5374 = vunpack.c.l.b16 %v4679
  %v5375 = vunpack.c.h.b16 %v4679
  %v5376 = vunpack.c.l.b16 %v4680
  %v5377 = vunpack.c.h.b16 %v4680
  %v5378 = vunpack.c.l.b16 %v4681
  %v5379 = vunpack.c.h.b16 %v4681
  %v5380 = vunpack.c.l.b16 %v4682
  %v5381 = vunpack.c.h.b16 %v4682
  %v5382 = vunpack.c.l.b16 %v4683
  %v5383 = vunpack.c.h.b16 %v4683
  %v5384 = vunpack.c.l.b16 %v4684
  %v5385 = vunpack.c.h.b16 %v4684
  %v5386 = vunpack.c.l.b16 %v4685
  %v5387 = vunpack.c.h.b16 %v4685
  %v5388 = vunpack.c.l.b16 %v4686
  %v5389 = vunpack.c.h.b16 %v4686
  %v5390 = vunpack.c.l.b16 %v4687
  %v5391 = vunpack.c.h.b16 %v4687
  %v5392 = vunpack.c.l.b16 %v4688
  %v5393 = vunpack.c.h.b16 %v4688
  %v5394 = vunpack.c.l.b16 %v4689
  %v5395 = vunpack.c.h.b16 %v4689
  %v5396 = vunpack.c.l.b16 %v4690
  %v5397 = vunpack.c.h.b16 %v4690
  %v5398 = vunpack.c.l.b16 %v4691
  %v5399 = vunpack.c.h.b16 %v4691
  %v5400 = vunpack.c.l.b16 %v4692
  %v5401 = vunpack.c.h.b16 %v4692
  %v5402 = vunpack.c.l.b16 %v4693
  %v5403 = vunpack.c.h.b16 %v4693
  %v5404 = vunpack.c.l.b16 %v4694
  %v5405 = vunpack.c.h.b16 %v4694
  %v5406 = vunpack.c.l.b16 %v4695
  %v5407 = vunpack.c.h.b16 %v4695
  %v5408 = vunpack.c.l.b16 %v4696
  %v5409 = vunpack.c.h.b16 %v4696
  %v5410 = vunpack.c.l.b16 %v4697
  %v5411 = vunpack.c.h.b16 %v4697
  %v5412 = vunpack.c.l.b16 %v4698
  %v5413 = vunpack.c.h.b16 %v4698
  %v5414 = vunpack.c.l.b16 %v4699
  %v5415 = vunpack.c.h.b16 %v4699
  %v5416 = vunpack.c.l.b16 %v4700
  %v5417 = vunpack.c.h.b16 %v4700
  %v5418 = vunpack.c.l.b16 %v4701
  %v5419 = vunpack.c.h.b16 %v4701
  %v5420 = vunpack.c.l.b16 %v4702
  %v5421 = vunpack.c.h.b16 %v4702
  %v5422 = vunpack.c.l.b16 %v4703
  %v5423 = vunpack.c.h.b16 %v4703
  %v5424 = vunpack.c.l.b16 %v4704
  %v5425 = vunpack.c.h.b16 %v4704
  %v5426 = vunpack.c.l.b16 %v4705
  %v5427 = vunpack.c.h.b16 %v4705
  %v5428 = vunpack.c.l.b16 %v4706
  %v5429 = vunpack.c.h.b16 %v4706
  %v5430 = vunpack.c.l.b16 %v4707
  %v5431 = vunpack.c.h.b16 %v4707
  %v5432 = vunpack.c.l.b16 %v4708
  %v5433 = vunpack.c.h.b16 %v4708
  %v5434 = vunpack.c.l.b16 %v4709
  %v5435 = vunpack.c.h.b16 %v4709
  %v5436 = vunpack.c.l.b16 %v4710
  %v5437 = vunpack.c.h.b16 %v4710
  %v5438 = vunpack.c.l.b16 %v4711
  %v5439 = vunpack.c.h.b16 %v4711
  %v5440 = vunpack.c.l.b16 %v4712
  %v5441 = vunpack.c.h.b16 %v4712
  %v5442 = vunpack.c.l.b16 %v4713
  %v5443 = vunpack.c.h.b16 %v4713
  %v5444 = vunpack.c.l.b16 %v4714
  %v5445 = vunpack.c.h.b16 %v4714
  %v5446 = vunpack.c.l.b16 %v4715
  %v5447 = vunpack.c.h.b16 %v4715
  %v5448 = vunpack.c.l.b16 %v4716
  %v5449 = vunpack.c.h.b16 %v4716
  %v5450 = vunpack.c.l.b16 %v4717
  %v5451 = vunpack.c.h.b16 %v4717
  %v5452 = vunpack.c.l.b16 %v4718
  %v5453 = vunpack.c.h.b16 %v4718
  %v5454 = vunpack.c.l.b16 %v4719
  %v5455 = vunpack.c.h.b16 %v4719
  %v5456 = vunpack.c.l.b16 %v4720
  %v5457 = vunpack.c.h.b16 %v4720
  %v5458 = vunpack.c.l.b16 %v4721
  %v5459 = vunpack.c.h.b16 %v4721
  %v5460 = vunpack.c.l.b16 %v4722
  %v5461 = vunpack.c.h.b16 %v4722
  %v5462 = vunpack.c.l.b16 %v4723
  %v5463 = vunpack.c.h.b16 %v4723
  %v5464 = vunpack.c.l.b16 %v4724
  %v5465 = vunpack.c.h.b16 %v4724
  %v5466 = vunpack.c.l.b16 %v4725
  %v5467 = vunpack.c.h.b16 %v4725
  %v5468 = vunpack.c.l.b16 %v4726
  %v5469 = vunpack.c.h.b16 %v4726
  %v5470 = vunpack.c.l.b16 %v4727
  %v5471 = vunpack.c.h.b16 %v4727
  %v5472 = vunpack.c.l.b16 %v4728
  %v5473 = vunpack.c.h.b16 %v4728
  %v5474 = vunpack.c.l.b16 %v4729
  %v5475 = vunpack.c.h.b16 %v4729
  %v5476 = vunpack.c.l.b16 %v4730
  %v5477 = vunpack.c.h.b16 %v4730
  %v5478 = vunpack.c.l.b16 %v4731
  %v5479 = vunpack.c.h.b16 %v4731
  %v5480 = vunpack.c.l.b16 %v4732
  %v5481 = vunpack.c.h.b16 %v4732
  %v5482 = vunpack.c.l.b16 %v4733
  %v5483 = vunpack.c.h.b16 %v4733
  %v5484 = vunpack.c.l.b16 %v4734
  %v5485 = vunpack.c.h.b16 %v4734
  %v5486 = vunpack.c.l.b16 %v4735
  %v5487 = vunpack.c.h.b16 %v4735
  %v5488 = vunpack.c.l.b16 %v4736
  %v5489 = vunpack.c.h.b16 %v4736
  %v5490 = vunpack.c.l.b16 %v4737
  %v5491 = vunpack.c.h.b16 %v4737
  %v5492 = vunpack.c.l.b16 %v4738
  %v5493 = vunpack.c.h.b16 %v4738
  %v5494 = vunpack.c.l.b16 %v4739
  %v5495 = vunpack.c.h.b16 %v4739
  %v5496 = vunpack.c.l.b16 %v4740
  %v5497 = vunpack.c.h.b16 %v4740
  %v5498 = vunpack.c.l.b16 %v4741
  %v5499 = vunpack.c.h.b16 %v4741
  %v5500 = vunpack.c.l.b16 %v4742
  %v5501 = vunpack.c.h.b16 %v4742
  %v5502 = vunpack.c.l.b16 %v4743
  %v5503 = vunpack.c.h.b16 %v4743
  %v5504 = vunpack.c.l.b16 %v4744
  %v5505 = vunpack.c.h.b16 %v4744
  %v5506 = vunpack.c.l.b16 %v4745
  %v5507 = vunpack.c.h.b16 %v4745
  %v5508 = vunpack.c.l.b16 %v4746
  %v5509 = vunpack.c.h.b16 %v4746
  %v5510 = vunpack.c.l.b16 %v4747
  %v5511 = vunpack.c.h.b16 %v4747
  %v5512 = vunpack.c.l.b16 %v4748
  %v5513 = vunpack.c.h.b16 %v4748
  %v5514 = vunpack.c.l.b16 %v4749
  %v5515 = vunpack.c.h.b16 %v4749
  %v5516 = vunpack.c.l.b16 %v4750
  %v5517 = vunpack.c.h.b16 %v4750
  %v5518 = vunpack.c.l.b16 %v4751
  %v5519 = vunpack.c.h.b16 %v4751
  %v5520 = vunpack.c.l.b16 %v4752
  %v5521 = vunpack.c.h.b16 %v4752
  %v5522 = vunpack.c.l.b16 %v4753
  %v5523 = vunpack.c.h.b16 %v4753
  %v5524 = vunpack.c.l.b16 %v4754
  %v5525 = vunpack.c.h.b16 %v4754
  %v5526 = vunpack.c.l.b16 %v4755
  %v5527 = vunpack.c.h.b16 %v4755
  %v5528 = vunpack.c.l.b16 %v4756
  %v5529 = vunpack.c.h.b16 %v4756
  %v5530 = vunpack.c.l.b16 %v4757
  %v5531 = vunpack.c.h.b16 %v4757
  %v5532 = vunpack.c.l.b16 %v4758
  %v5533 = vunpack.c.h.b16 %v4758
  %v5534 = vunpack.c.l.b16 %v4759
  %v5535 = vunpack.c.h.b16 %v4759
  %v5536 = vunpack.c.l.b16 %v4760
  %v5537 = vunpack.c.h.b16 %v4760
  %v5538 = vunpack.c.l.b16 %v4761
  %v5539 = vunpack.c.h.b16 %v4761
  %v5540 = vunpack.c.l.b16 %v4762
  %v5541 = vunpack.c.h.b16 %v4762
  %v5542 = vunpack.c.l.b16 %v4763
  %v5543 = vunpack.c.h.b16 %v4763
  %v5544 = vunpack.c.l.b16 %v4764
  %v5545 = vunpack.c.h.b16 %v4764
  %v5546 = vunpack.c.l.b16 %v4765
  %v5547 = vunpack.c.h.b16 %v4765
  %v5548 = vunpack.c.l.b16 %v4766
  %v5549 = vunpack.c.h.b16 %v4766
  %v5550 = vunpack.c.l.b16 %v4767
  %v5551 = vunpack.c.h.b16 %v4767
  %v5552 = vunpack.c.l.b16 %v4768
  %v5553 = vunpack.c.h.b16 %v4768
  %v5554 = vunpack.c.l.b16 %v4769
  %v5555 = vunpack.c.h.b16 %v4769
  %v5556 = vunpack.c.l.b16 %v4770
  %v5557 = vunpack.c.h.b16 %v4770
  %v5558 = vunpack.c.l.b16 %v4771
  %v5559 = vunpack.c.h.b16 %v4771
  %v5560 = vunpack.c.l.b16 %v4772
  %v5561 = vunpack.c.h.b16 %v4772
  %v5562 = vunpack.c.l.b16 %v4773
  %v5563 = vunpack.c.h.b16 %v4773
  %v5564 = vunpack.c.l.b16 %v4774
  %v5565 = vunpack.c.h.b16 %v4774
  %v5566 = vunpack.c.l.b16 %v4775
  %v5567 = vunpack.c.h.b16 %v4775
  %v5568 = vunpack.c.l.b16 %v4776
  %v5569 = vunpack.c.h.b16 %v4776
  %v5570 = vunpack.c.l.b16 %v4777
  %v5571 = vunpack.c.h.b16 %v4777
  %v5572 = vunpack.c.l.b16 %v4778
  %v5573 = vunpack.c.h.b16 %v4778
  %v5574 = vunpack.c.l.b16 %v4779
  %v5575 = vunpack.c.h.b16 %v4779
  %v5576 = vunpack.c.l.b16 %v4780
  %v5577 = vunpack.c.h.b16 %v4780
  %v5578 = vunpack.c.l.b16 %v4781
  %v5579 = vunpack.c.h.b16 %v4781
  %v5580 = vunpack.c.l.b16 %v4782
  %v5581 = vunpack.c.h.b16 %v4782
  %v5582 = vunpack.c.l.b16 %v4783
  %v5583 = vunpack.c.h.b16 %v4783
  %v5584 = vunpack.c.l.b16 %v4784
  %v5585 = vunpack.c.h.b16 %v4784
  %v5586 = vunpack.c.l.b16 %v4785
  %v5587 = vunpack.c.h.b16 %v4785
  %v5588 = vunpack.c.l.b16 %v4786
  %v5589 = vunpack.c.h.b16 %v4786
  %v5590 = vunpack.c.l.b16 %v4787
  %v5591 = vunpack.c.h.b16 %v4787
  %v5592 = vunpack.c.l.b16 %v4788
  %v5593 = vunpack.c.h.b16 %v4788
  %v5594 = vunpack.c.l.b16 %v4789
  %v5595 = vunpack.c.h.b16 %v4789
  %v5596 = vunpack.c.l.b16 %v4790
  %v5597 = vunpack.c.h.b16 %v4790
  %v5598 = vpack.c.b16 %v5090, %v5086
  %v5599 = vpack.c.b16 %v5091, %v5087
  %v5600 = vpack.c.b16 %v5092, %v5088
  %v5601 = vpack.c.b16 %v5093, %v5089
  %v5602 = vpack.c.b16 %v5098, %v5094
  %v5603 = vpack.c.b16 %v5099, %v5095
  %v5604 = vpack.c.b16 %v5100, %v5096
  %v5605 = vpack.c.b16 %v5101, %v5097
  %v5606 = vpack.c.b16 %v5106, %v5102
  %v5607 = vpack.c.b16 %v5107, %v5103
  %v5608 = vpack.c.b16 %v5108, %v5104
  %v5609 = vpack.c.b16 %v5109, %v5105
  %v5610 = vpack.c.b16 %v5114, %v5110
  %v5611 = vpack.c.b16 %v5115, %v5111
  %v5612 = vpack.c.b16 %v5116, %v5112
  %v5613 = vpack.c.b16 %v5117, %v5113
  %v5614 = vpack.c.b16 %v5122, %v5118
  %v5615 = vpack.c.b16 %v5123, %v5119
  %v5616 = vpack.c.b16 %v5124, %v5120
  %v5617 = vpack.c.b16 %v5125, %v5121
  %v5618 = vpack.c.b16 %v5130, %v5126
  %v5619 = vpack.c.b16 %v5131, %v5127
  %v5620 = vpack.c.b16 %v5132, %v5128
  %v5621 = vpack.c.b16 %v5133, %v5129
  %v5622 = vpack.c.b16 %v5138, %v5134
  %v5623 = vpack.c.b16 %v5139, %v5135
  %v5624 = vpack.c.b16 %v5140, %v5136
  %v5625 = vpack.c.b16 %v5141, %v5137
  %v5626 = vpack.c.b16 %v5146, %v5142
  %v5627 = vpack.c.b16 %v5147, %v5143
  %v5628 = vpack.c.b16 %v5148, %v5144
  %v5629 = vpack.c.b16 %v5149, %v5145
  %v5630 = vpack.c.b16 %v5154, %v5150
  %v5631 = vpack.c.b16 %v5155, %v5151
  %v5632 = vpack.c.b16 %v5156, %v5152
  %v5633 = vpack.c.b16 %v5157, %v5153
  %v5634 = vpack.c.b16 %v5162, %v5158
  %v5635 = vpack.c.b16 %v5163, %v5159
  %v5636 = vpack.c.b16 %v5164, %v5160
  %v5637 = vpack.c.b16 %v5165, %v5161
  %v5638 = vpack.c.b16 %v5170, %v5166
  %v5639 = vpack.c.b16 %v5171, %v5167
  %v5640 = vpack.c.b16 %v5172, %v5168
  %v5641 = vpack.c.b16 %v5173, %v5169
  %v5642 = vpack.c.b16 %v5178, %v5174
  %v5643 = vpack.c.b16 %v5179, %v5175
  %v5644 = vpack.c.b16 %v5180, %v5176
  %v5645 = vpack.c.b16 %v5181, %v5177
  %v5646 = vpack.c.b16 %v5186, %v5182
  %v5647 = vpack.c.b16 %v5187, %v5183
  %v5648 = vpack.c.b16 %v5188, %v5184
  %v5649 = vpack.c.b16 %v5189, %v5185
  %v5650 = vpack.c.b16 %v5194, %v5190
  %v5651 = vpack.c.b16 %v5195, %v5191
  %v5652 = vpack.c.b16 %v5196, %v5192
  %v5653 = vpack.c.b16 %v5197, %v5193
  %v5654 = vpack.c.b16 %v5202, %v5198
  %v5655 = vpack.c.b16 %v5203, %v5199
  %v5656 = vpack.c.b16 %v5204, %v5200
  %v5657 = vpack.c.b16 %v5205, %v5201
  %v5658 = vpack.c.b16 %v5210, %v5206
  %v5659 = vpack.c.b16 %v5211, %v5207
  %v5660 = vpack.c.b16 %v5212, %v5208
  %v5661 = vpack.c.b16 %v5213, %v5209
  %v5662 = vpack.c.b16 %v5218, %v5214
  %v5663 = vpack.c.b16 %v5219, %v5215
  %v5664 = vpack.c.b16 %v5220, %v5216
  %v5665 = vpack.c.b16 %v5221, %v5217
  %v5666 = vpack.c.b16 %v5226, %v5222
  %v5667 = vpack.c.b16 %v5227, %v5223
  %v5668 = vpack.c.b16 %v5228, %v5224
  %v5669 = vpack.c.b16 %v5229, %v5225
  %v5670 = vpack.c.b16 %v5234, %v5230
  %v5671 = vpack.c.b16 %v5235, %v5231
  %v5672 = vpack.c.b16 %v5236, %v5232
  %v5673 = vpack.c.b16 %v5237, %v5233
  %v5674 = vpack.c.b16 %v5242, %v5238
  %v5675 = vpack.c.b16 %v5243, %v5239
  %v5676 = vpack.c.b16 %v5244, %v5240
  %v5677 = vpack.c.b16 %v5245, %v5241
  %v5678 = vpack.c.b16 %v5250, %v5246
  %v5679 = vpack.c.b16 %v5251, %v5247
  %v5680 = vpack.c.b16 %v5252, %v5248
  %v5681 = vpack.c.b16 %v5253, %v5249
  %v5682 = vpack.c.b16 %v5258, %v5254
  %v5683 = vpack.c.b16 %v5259, %v5255
  %v5684 = vpack.c.b16 %v5260, %v5256
  %v5685 = vpack.c.b16 %v5261, %v5257
  %v5686 = vpack.c.b16 %v5266, %v5262
  %v5687 = vpack.c.b16 %v5267, %v5263
  %v5688 = vpack.c.b16 %v5268, %v5264
  %v5689 = vpack.c.b16 %v5269, %v5265
  %v5690 = vpack.c.b16 %v5274, %v5270
  %v5691 = vpack.c.b16 %v5275, %v5271
  %v5692 = vpack.c.b16 %v5276, %v5272
  %v5693 = vpack.c.b16 %v5277, %v5273
  %v5694 = vpack.c.b16 %v5282, %v5278
  %v5695 = vpack.c.b16 %v5283, %v5279
  %v5696 = vpack.c.b16 %v5284, %v5280
  %v5697 = vpack.c.b16 %v5285, %v5281
  %v5698 = vpack.c.b16 %v5290, %v5286
  %v5699 = vpack.c.b16 %v5291, %v5287
  %v5700 = vpack.c.b16 %v5292, %v5288
  %v5701 = vpack.c.b16 %v5293, %v5289
  %v5702 = vpack.c.b16 %v5298, %v5294
  %v5703 = vpack.c.b16 %v5299, %v5295
  %v5704 = vpack.c.b16 %v5300, %v5296
  %v5705 = vpack.c.b16 %v5301, %v5297
  %v5706 = vpack.c.b16 %v5306, %v5302
  %v5707 = vpack.c.b16 %v5307, %v5303
  %v5708 = vpack.c.b16 %v5308, %v5304
  %v5709 = vpack.c.b16 %v5309, %v5305
  %v5710 = vpack.c.b16 %v5314, %v5310
  %v5711 = vpack.c.b16 %v5315, %v5311
  %v5712 = vpack.c.b16 %v5316, %v5312
  %v5713 = vpack.c.b16 %v5317, %v5313
  %v5714 = vpack.c.b16 %v5322, %v5318
  %v5715 = vpack.c.b16 %v5323, %v5319
  %v5716 = vpack.c.b16 %v5324, %v5320
  %v5717 = vpack.c.b16 %v5325, %v5321
  %v5718 = vpack.c.b16 %v5330, %v5326
  %v5719 = vpack.c.b16 %v5331, %v5327
  %v5720 = vpack.c.b16 %v5332, %v5328
  %v5721 = vpack.c.b16 %v5333, %v5329
  %v5722 = vpack.c.b16 %v5338, %v5334
  %v5723 = vpack.c.b16 %v5339, %v5335
  %v5724 = vpack.c.b16 %v5340, %v5336
  %v5725 = vpack.c.b16 %v5341, %v5337
  %v5726 = vpack.c.b16 %v5346, %v5342
  %v5727 = vpack.c.b16 %v5347, %v5343
  %v5728 = vpack.c.b16 %v5348, %v5344
  %v5729 = vpack.c.b16 %v5349, %v5345
  %v5730 = vpack.c.b16 %v5354, %v5350
  %v5731 = vpack.c.b16 %v5355, %v5351
  %v5732 = vpack.c.b16 %v5356, %v5352
  %v5733 = vpack.c.b16 %v5357, %v5353
  %v5734 = vpack.c.b16 %v5362, %v5358
  %v5735 = vpack.c.b16 %v5363, %v5359
  %v5736 = vpack.c.b16 %v5364, %v5360
  %v5737 = vpack.c.b16 %v5365, %v5361
  %v5738 = vpack.c.b16 %v5370, %v5366
  %v5739 = vpack.c.b16 %v5371, %v5367
  %v5740 = vpack.c.b16 %v5372, %v5368
  %v5741 = vpack.c.b16 %v5373, %v5369
  %v5742 = vpack.c.b16 %v5378, %v5374
  %v5743 = vpack.c.b16 %v5379, %v5375
  %v5744 = vpack.c.b16 %v5380, %v5376
  %v5745 = vpack.c.b16 %v5381, %v5377
  %v5746 = vpack.c.b16 %v5386, %v5382
  %v5747 = vpack.c.b16 %v5387, %v5383
  %v5748 = vpack.c.b16 %v5388, %v5384
  %v5749 = vpack.c.b16 %v5389, %v5385
  %v5750 = vpack.c.b16 %v5394, %v5390
  %v5751 = vpack.c.b16 %v5395, %v5391
  %v5752 = vpack.c.b16 %v5396, %v5392
  %v5753 = vpack.c.b16 %v5397, %v5393
  %v5754 = vpack.c.b16 %v5402, %v5398
  %v5755 = vpack.c.b16 %v5403, %v5399
  %v5756 = vpack.c.b16 %v5404, %v5400
  %v5757 = vpack.c.b16 %v5405, %v5401
  %v5758 = vpack.c.b16 %v5410, %v5406
  %v5759 = vpack.c.b16 %v5411, %v5407
  %v5760 = vpack.c.b16 %v5412, %v5408
  %v5761 = vpack.c.b16 %v5413, %v5409
  %v5762 = vpack.c.b16 %v5418, %v5414
  %v5763 = vpack.c.b16 %v5419, %v5415
  %v5764 = vpack.c.b16 %v5420, %v5416
  %v5765 = vpack.c.b16 %v5421, %v5417
  %v5766 = vpack.c.b16 %v5426, %v5422
  %v5767 = vpack.c.b16 %v5427, %v5423
  %v5768 = vpack.c.b16 %v5428, %v5424
  %v5769 = vpack.c.b16 %v5429, %v5425
  %v5770 = vpack.c.b16 %v5434, %v5430
  %v5771 = vpack.c.b16 %v5435, %v5431
  %v5772 = vpack.c.b16 %v5436, %v5432
  %v5773 = vpack.c.b16 %v5437, %v5433
  %v5774 = vpack.c.b16 %v5442, %v5438
  %v5775 = vpack.c.b16 %v5443, %v5439
  %v5776 = vpack.c.b16 %v5444, %v5440
  %v5777 = vpack.c.b16 %v5445, %v5441
  %v5778 = vpack.c.b16 %v5450, %v5446
  %v5779 = vpack.c.b16 %v5451, %v5447
  %v5780 = vpack.c.b16 %v5452, %v5448
  %v5781 = vpack.c.b16 %v5453, %v5449
  %v5782 = vpack.c.b16 %v5458, %v5454
  %v5783 = vpack.c.b16 %v5459, %v5455
  %v5784 = vpack.c.b16 %v5460, %v5456
  %v5785 = vpack.c.b16 %v5461, %v5457
  %v5786 = vpack.c.b16 %v5466, %v5462
  %v5787 = vpack.c.b16 %v5467, %v5463
  %v5788 = vpack.c.b16 %v5468, %v5464
  %v5789 = vpack.c.b16 %v5469, %v5465
  %v5790 = vpack.c.b16 %v5474, %v5470
  %v5791 = vpack.c.b16 %v5475, %v5471
  %v5792 = vpack.c.b16 %v5476, %v5472
  %v5793 = vpack.c.b16 %v5477, %v5473
  %v5794 = vpack.c.b16 %v5482, %v5478
  %v5795 = vpack.c.b16 %v5483, %v5479
  %v5796 = vpack.c.b16 %v5484, %v5480
  %v5797 = vpack.c.b16 %v5485, %v5481
  %v5798 = vpack.c.b16 %v5490, %v5486
  %v5799 = vpack.c.b16 %v5491, %v5487
  %v5800 = vpack.c.b16 %v5492, %v5488
  %v5801 = vpack.c.b16 %v5493, %v5489
  %v5802 = vpack.c.b16 %v5498, %v5494
  %v5803 = vpack.c.b16 %v5499, %v5495
  %v5804 = vpack.c.b16 %v5500, %v5496
  %v5805 = vpack.c.b16 %v5501, %v5497
  %v5806 = vpack.c.b16 %v5506, %v5502
  %v5807 = vpack.c.b16 %v5507, %v5503
  %v5808 = vpack.c.b16 %v5508, %v5504
  %v5809 = vpack.c.b16 %v5509, %v5505
  %v5810 = vpack.c.b16 %v5514, %v5510
  %v5811 = vpack.c.b16 %v5515, %v5511
  %v5812 = vpack.c.b16 %v5516, %v5512
  %v5813 = vpack.c.b16 %v5517, %v5513
  %v5814 = vpack.c.b16 %v5522, %v5518
  %v5815 = vpack.c.b16 %v5523, %v5519
  %v5816 = vpack.c.b16 %v5524, %v5520
  %v5817 = vpack.c.b16 %v5525, %v5521
  %v5818 = vpack.c.b16 %v5530, %v5526
  %v5819 = vpack.c.b16 %v5531, %v5527
  %v5820 = vpack.c.b16 %v5532, %v5528
  %v5821 = vpack.c.b16 %v5533, %v5529
  %v5822 = vpack.c.b16 %v5538, %v5534
  %v5823 = vpack.c.b16 %v5539, %v5535
  %v5824 = vpack.c.b16 %v5540, %v5536
  %v5825 = vpack.c.b16 %v5541, %v5537
  %v5826 = vpack.c.b16 %v5546, %v5542
  %v5827 = vpack.c.b16 %v5547, %v5543
  %v5828 = vpack.c.b16 %v5548, %v5544
  %v5829 = vpack.c.b16 %v5549, %v5545
  %v5830 = vpack.c.b16 %v5554, %v5550
  %v5831 = vpack.c.b16 %v5555, %v5551
  %v5832 = vpack.c.b16 %v5556, %v5552
  %v5833 = vpack.c.b16 %v5557, %v5553
  %v5834 = vpack.c.b16 %v5562, %v5558
  %v5835 = vpack.c.b16 %v5563, %v5559
  %v5836 = vpack.c.b16 %v5564, %v5560
  %v5837 = vpack.c.b16 %v5565, %v5561
  %v5838 = vpack.c.b16 %v5570, %v5566
  %v5839 = vpack.c.b16 %v5571, %v5567
  %v5840 = vpack.c.b16 %v5572, %v5568
  %v5841 = vpack.c.b16 %v5573, %v5569
  %v5842 = vpack.c.b16 %v5578, %v5574
  %v5843 = vpack.c.b16 %v5579, %v5575
  %v5844 = vpack.c.b16 %v5580, %v5576
  %v5845 = vpack.c.b16 %v5581, %v5577
  %v5846 = vpack.c.b16 %v5586, %v5582
  %v5847 = vpack.c.b16 %v5587, %v5583
  %v5848 = vpack.c.b16 %v5588, %v5584
  %v5849 = vpack.c.b16 %v5589, %v5585
  %v5850 = vpack.c.b16 %v5594, %v5590
  %v5851 = vpack.c.b16 %v5595, %v5591
  %v5852 = vpack.c.b16 %v5596, %v5592
  %v5853 = vpack.c.b16 %v5597, %v5593
  %6110 = vmatpush.bf16.msra.mxu0 %v5626
  %6111 = vmatpush.bf16.msra.mxu0 %v5622
  %6112 = vmatpush.bf16.msra.mxu0 %v5618
  %6113 = vmatpush.bf16.msra.mxu0 %v5614
  %6114 = vmatpush.bf16.msra.mxu0 %v5610
  %6115 = vmatpush.bf16.msra.mxu0 %v5606
  %6116 = vmatpush.bf16.msra.mxu0 %v5602
  %6117 = vmatpush.bf16.msra.mxu0 %v5598
  %6118 = vmatmul.bf16.gmra.mxu0 %v4813
  %v6119 = vpop.f32.mrf.mxu0
  %v6120 = vadd.f32 %v4822, %v6119
  %v6121 = vpop.f32.mrf.mxu0
  %6122 = vdwg.mxu0
  %6123 = vmatpush.bf16.msra.mxu0 %v5658
  %6124 = vmatpush.bf16.msra.mxu0 %v5654
  %6125 = vmatpush.bf16.msra.mxu0 %v5650
  %6126 = vmatpush.bf16.msra.mxu0 %v5646
  %6127 = vmatpush.bf16.msra.mxu0 %v5642
  %6128 = vmatpush.bf16.msra.mxu0 %v5638
  %6129 = vmatpush.bf16.msra.mxu0 %v5634
  %6130 = vmatpush.bf16.msra.mxu0 %v5630
  %6131 = vmatmul.bf16.gmra.mxu0 %v4814
  %v6132 = vpop.f32.mrf.mxu0
  %v6133 = vadd.f32 %v6120, %v6132
  %v6134 = vpop.f32.mrf.mxu0
  %6135 = vdwg.mxu0
  %6136 = vmatpush.bf16.msra.mxu0 %v5690
  %6137 = vmatpush.bf16.msra.mxu0 %v5686
  %6138 = vmatpush.bf16.msra.mxu0 %v5682
  %6139 = vmatpush.bf16.msra.mxu0 %v5678
  %6140 = vmatpush.bf16.msra.mxu0 %v5674
  %6141 = vmatpush.bf16.msra.mxu0 %v5670
  %6142 = vmatpush.bf16.msra.mxu0 %v5666
  %6143 = vmatpush.bf16.msra.mxu0 %v5662
  %6144 = vmatmul.bf16.gmra.mxu0 %v4815
  %v6145 = vpop.f32.mrf.mxu0
  %v6146 = vadd.f32 %v6133, %v6145
  %v6147 = vpop.f32.mrf.mxu0
  %6148 = vdwg.mxu0
  %6149 = vmatpush.bf16.msra.mxu0 %v5722
  %6150 = vmatpush.bf16.msra.mxu0 %v5718
  %6151 = vmatpush.bf16.msra.mxu0 %v5714
  %6152 = vmatpush.bf16.msra.mxu0 %v5710
  %6153 = vmatpush.bf16.msra.mxu0 %v5706
  %6154 = vmatpush.bf16.msra.mxu0 %v5702
  %6155 = vmatpush.bf16.msra.mxu0 %v5698
  %6156 = vmatpush.bf16.msra.mxu0 %v5694
  %6157 = vmatmul.bf16.gmra.mxu0 %v4816
  %v6158 = vpop.f32.mrf.mxu0
  %v6159 = vadd.f32 %v6146, %v6158
  %v6160 = vpop.f32.mrf.mxu0
  %6161 = vdwg.mxu0
  %6162 = vmatpush.bf16.msra.mxu0 %v5754
  %6163 = vmatpush.bf16.msra.mxu0 %v5750
  %6164 = vmatpush.bf16.msra.mxu0 %v5746
  %6165 = vmatpush.bf16.msra.mxu0 %v5742
  %6166 = vmatpush.bf16.msra.mxu0 %v5738
  %6167 = vmatpush.bf16.msra.mxu0 %v5734
  %6168 = vmatpush.bf16.msra.mxu0 %v5730
  %6169 = vmatpush.bf16.msra.mxu0 %v5726
  %6170 = vmatmul.bf16.gmra.mxu0 %v4817
  %v6171 = vpop.f32.mrf.mxu0
  %v6172 = vadd.f32 %v6159, %v6171
  %v6173 = vpop.f32.mrf.mxu0
  %6174 = vdwg.mxu0
  %6175 = vmatpush.bf16.msra.mxu0 %v5786
  %6176 = vmatpush.bf16.msra.mxu0 %v5782
  %6177 = vmatpush.bf16.msra.mxu0 %v5778
  %6178 = vmatpush.bf16.msra.mxu0 %v5774
  %6179 = vmatpush.bf16.msra.mxu0 %v5770
  %6180 = vmatpush.bf16.msra.mxu0 %v5766
  %6181 = vmatpush.bf16.msra.mxu0 %v5762
  %6182 = vmatpush.bf16.msra.mxu0 %v5758
  %6183 = vmatmul.bf16.gmra.mxu0 %v4818
  %v6184 = vpop.f32.mrf.mxu0
  %v6185 = vadd.f32 %v6172, %v6184
  %v6186 = vpop.f32.mrf.mxu0
  %6187 = vdwg.mxu0
  %6188 = vmatpush.bf16.msra.mxu0 %v5818
  %6189 = vmatpush.bf16.msra.mxu0 %v5814
  %6190 = vmatpush.bf16.msra.mxu0 %v5810
  %6191 = vmatpush.bf16.msra.mxu0 %v5806
  %6192 = vmatpush.bf16.msra.mxu0 %v5802
  %6193 = vmatpush.bf16.msra.mxu0 %v5798
  %6194 = vmatpush.bf16.msra.mxu0 %v5794
  %6195 = vmatpush.bf16.msra.mxu0 %v5790
  %6196 = vmatmul.bf16.gmra.mxu0 %v4819
  %v6197 = vpop.f32.mrf.mxu0
  %v6198 = vadd.f32 %v6185, %v6197
  %v6199 = vpop.f32.mrf.mxu0
  %6200 = vdwg.mxu0
  %6201 = vmatpush.bf16.msra.mxu0 %v5850
  %6202 = vmatpush.bf16.msra.mxu0 %v5846
  %6203 = vmatpush.bf16.msra.mxu0 %v5842
  %6204 = vmatpush.bf16.msra.mxu0 %v5838
  %6205 = vmatpush.bf16.msra.mxu0 %v5834
  %6206 = vmatpush.bf16.msra.mxu0 %v5830
  %6207 = vmatpush.bf16.msra.mxu0 %v5826
  %6208 = vmatpush.bf16.msra.mxu0 %v5822
  %6209 = vmatmul.bf16.gmra.mxu0 %v4820
  %v6210 = vpop.f32.mrf.mxu0
  %v6211 = vadd.f32 %v6198, %v6210
  %v6212 = vpop.f32.mrf.mxu0
  %6213 = vdwg.mxu0
  %6214 = vmatpush.bf16.msra.mxu0 %v5627
  %6215 = vmatpush.bf16.msra.mxu0 %v5623
  %6216 = vmatpush.bf16.msra.mxu0 %v5619
  %6217 = vmatpush.bf16.msra.mxu0 %v5615
  %6218 = vmatpush.bf16.msra.mxu0 %v5611
  %6219 = vmatpush.bf16.msra.mxu0 %v5607
  %6220 = vmatpush.bf16.msra.mxu0 %v5603
  %6221 = vmatpush.bf16.msra.mxu0 %v5599
  %6222 = vmatmul.bf16.gmra.mxu0 %v4813
  %v6223 = vpop.f32.mrf.mxu0
  %v6224 = vadd.f32 %v4823, %v6223
  %v6225 = vpop.f32.mrf.mxu0
  %6226 = vdwg.mxu0
  %6227 = vmatpush.bf16.msra.mxu0 %v5659
  %6228 = vmatpush.bf16.msra.mxu0 %v5655
  %6229 = vmatpush.bf16.msra.mxu0 %v5651
  %6230 = vmatpush.bf16.msra.mxu0 %v5647
  %6231 = vmatpush.bf16.msra.mxu0 %v5643
  %6232 = vmatpush.bf16.msra.mxu0 %v5639
  %6233 = vmatpush.bf16.msra.mxu0 %v5635
  %6234 = vmatpush.bf16.msra.mxu0 %v5631
  %6235 = vmatmul.bf16.gmra.mxu0 %v4814
  %v6236 = vpop.f32.mrf.mxu0
  %v6237 = vadd.f32 %v6224, %v6236
  %v6238 = vpop.f32.mrf.mxu0
  %6239 = vdwg.mxu0
  %6240 = vmatpush.bf16.msra.mxu0 %v5691
  %6241 = vmatpush.bf16.msra.mxu0 %v5687
  %6242 = vmatpush.bf16.msra.mxu0 %v5683
  %6243 = vmatpush.bf16.msra.mxu0 %v5679
  %6244 = vmatpush.bf16.msra.mxu0 %v5675
  %6245 = vmatpush.bf16.msra.mxu0 %v5671
  %6246 = vmatpush.bf16.msra.mxu0 %v5667
  %6247 = vmatpush.bf16.msra.mxu0 %v5663
  %6248 = vmatmul.bf16.gmra.mxu0 %v4815
  %v6249 = vpop.f32.mrf.mxu0
  %v6250 = vadd.f32 %v6237, %v6249
  %v6251 = vpop.f32.mrf.mxu0
  %6252 = vdwg.mxu0
  %6253 = vmatpush.bf16.msra.mxu0 %v5723
  %6254 = vmatpush.bf16.msra.mxu0 %v5719
  %6255 = vmatpush.bf16.msra.mxu0 %v5715
  %6256 = vmatpush.bf16.msra.mxu0 %v5711
  %6257 = vmatpush.bf16.msra.mxu0 %v5707
  %6258 = vmatpush.bf16.msra.mxu0 %v5703
  %6259 = vmatpush.bf16.msra.mxu0 %v5699
  %6260 = vmatpush.bf16.msra.mxu0 %v5695
  %6261 = vmatmul.bf16.gmra.mxu0 %v4816
  %v6262 = vpop.f32.mrf.mxu0
  %v6263 = vadd.f32 %v6250, %v6262
  %v6264 = vpop.f32.mrf.mxu0
  %6265 = vdwg.mxu0
  %6266 = vmatpush.bf16.msra.mxu0 %v5755
  %6267 = vmatpush.bf16.msra.mxu0 %v5751
  %6268 = vmatpush.bf16.msra.mxu0 %v5747
  %6269 = vmatpush.bf16.msra.mxu0 %v5743
  %6270 = vmatpush.bf16.msra.mxu0 %v5739
  %6271 = vmatpush.bf16.msra.mxu0 %v5735
  %6272 = vmatpush.bf16.msra.mxu0 %v5731
  %6273 = vmatpush.bf16.msra.mxu0 %v5727
  %6274 = vmatmul.bf16.gmra.mxu0 %v4817
  %v6275 = vpop.f32.mrf.mxu0
  %v6276 = vadd.f32 %v6263, %v6275
  %v6277 = vpop.f32.mrf.mxu0
  %6278 = vdwg.mxu0
  %6279 = vmatpush.bf16.msra.mxu0 %v5787
  %6280 = vmatpush.bf16.msra.mxu0 %v5783
  %6281 = vmatpush.bf16.msra.mxu0 %v5779
  %6282 = vmatpush.bf16.msra.mxu0 %v5775
  %6283 = vmatpush.bf16.msra.mxu0 %v5771
  %6284 = vmatpush.bf16.msra.mxu0 %v5767
  %6285 = vmatpush.bf16.msra.mxu0 %v5763
  %6286 = vmatpush.bf16.msra.mxu0 %v5759
  %6287 = vmatmul.bf16.gmra.mxu0 %v4818
  %v6288 = vpop.f32.mrf.mxu0
  %v6289 = vadd.f32 %v6276, %v6288
  %v6290 = vpop.f32.mrf.mxu0
  %6291 = vdwg.mxu0
  %6292 = vmatpush.bf16.msra.mxu0 %v5819
  %6293 = vmatpush.bf16.msra.mxu0 %v5815
  %6294 = vmatpush.bf16.msra.mxu0 %v5811
  %6295 = vmatpush.bf16.msra.mxu0 %v5807
  %6296 = vmatpush.bf16.msra.mxu0 %v5803
  %6297 = vmatpush.bf16.msra.mxu0 %v5799
  %6298 = vmatpush.bf16.msra.mxu0 %v5795
  %6299 = vmatpush.bf16.msra.mxu0 %v5791
  %6300 = vmatmul.bf16.gmra.mxu0 %v4819
  %v6301 = vpop.f32.mrf.mxu0
  %v6302 = vadd.f32 %v6289, %v6301
  %v6303 = vpop.f32.mrf.mxu0
  %6304 = vdwg.mxu0
  %6305 = vmatpush.bf16.msra.mxu0 %v5851
  %6306 = vmatpush.bf16.msra.mxu0 %v5847
  %6307 = vmatpush.bf16.msra.mxu0 %v5843
  %6308 = vmatpush.bf16.msra.mxu0 %v5839
  %6309 = vmatpush.bf16.msra.mxu0 %v5835
  %6310 = vmatpush.bf16.msra.mxu0 %v5831
  %6311 = vmatpush.bf16.msra.mxu0 %v5827
  %6312 = vmatpush.bf16.msra.mxu0 %v5823
  %6313 = vmatmul.bf16.gmra.mxu0 %v4820
  %v6314 = vpop.f32.mrf.mxu0
  %v6315 = vadd.f32 %v6302, %v6314
  %v6316 = vpop.f32.mrf.mxu0
  %6317 = vdwg.mxu0
  %6318 = vmatpush.bf16.msra.mxu0 %v5628
  %6319 = vmatpush.bf16.msra.mxu0 %v5624
  %6320 = vmatpush.bf16.msra.mxu0 %v5620
  %6321 = vmatpush.bf16.msra.mxu0 %v5616
  %6322 = vmatpush.bf16.msra.mxu0 %v5612
  %6323 = vmatpush.bf16.msra.mxu0 %v5608
  %6324 = vmatpush.bf16.msra.mxu0 %v5604
  %6325 = vmatpush.bf16.msra.mxu0 %v5600
  %6326 = vmatmul.bf16.gmra.mxu0 %v4813
  %v6327 = vpop.f32.mrf.mxu0
  %v6328 = vadd.f32 %v4824, %v6327
  %v6329 = vpop.f32.mrf.mxu0
  %6330 = vdwg.mxu0
  %6331 = vmatpush.bf16.msra.mxu0 %v5660
  %6332 = vmatpush.bf16.msra.mxu0 %v5656
  %6333 = vmatpush.bf16.msra.mxu0 %v5652
  %6334 = vmatpush.bf16.msra.mxu0 %v5648
  %6335 = vmatpush.bf16.msra.mxu0 %v5644
  %6336 = vmatpush.bf16.msra.mxu0 %v5640
  %6337 = vmatpush.bf16.msra.mxu0 %v5636
  %6338 = vmatpush.bf16.msra.mxu0 %v5632
  %6339 = vmatmul.bf16.gmra.mxu0 %v4814
  %v6340 = vpop.f32.mrf.mxu0
  %v6341 = vadd.f32 %v6328, %v6340
  %v6342 = vpop.f32.mrf.mxu0
  %6343 = vdwg.mxu0
  %6344 = vmatpush.bf16.msra.mxu0 %v5692
  %6345 = vmatpush.bf16.msra.mxu0 %v5688
  %6346 = vmatpush.bf16.msra.mxu0 %v5684
  %6347 = vmatpush.bf16.msra.mxu0 %v5680
  %6348 = vmatpush.bf16.msra.mxu0 %v5676
  %6349 = vmatpush.bf16.msra.mxu0 %v5672
  %6350 = vmatpush.bf16.msra.mxu0 %v5668
  %6351 = vmatpush.bf16.msra.mxu0 %v5664
  %6352 = vmatmul.bf16.gmra.mxu0 %v4815
  %v6353 = vpop.f32.mrf.mxu0
  %v6354 = vadd.f32 %v6341, %v6353
  %v6355 = vpop.f32.mrf.mxu0
  %6356 = vdwg.mxu0
  %6357 = vmatpush.bf16.msra.mxu0 %v5724
  %6358 = vmatpush.bf16.msra.mxu0 %v5720
  %6359 = vmatpush.bf16.msra.mxu0 %v5716
  %6360 = vmatpush.bf16.msra.mxu0 %v5712
  %6361 = vmatpush.bf16.msra.mxu0 %v5708
  %6362 = vmatpush.bf16.msra.mxu0 %v5704
  %6363 = vmatpush.bf16.msra.mxu0 %v5700
  %6364 = vmatpush.bf16.msra.mxu0 %v5696
  %6365 = vmatmul.bf16.gmra.mxu0 %v4816
  %v6366 = vpop.f32.mrf.mxu0
  %v6367 = vadd.f32 %v6354, %v6366
  %v6368 = vpop.f32.mrf.mxu0
  %6369 = vdwg.mxu0
  %6370 = vmatpush.bf16.msra.mxu0 %v5756
  %6371 = vmatpush.bf16.msra.mxu0 %v5752
  %6372 = vmatpush.bf16.msra.mxu0 %v5748
  %6373 = vmatpush.bf16.msra.mxu0 %v5744
  %6374 = vmatpush.bf16.msra.mxu0 %v5740
  %6375 = vmatpush.bf16.msra.mxu0 %v5736
  %6376 = vmatpush.bf16.msra.mxu0 %v5732
  %6377 = vmatpush.bf16.msra.mxu0 %v5728
  %6378 = vmatmul.bf16.gmra.mxu0 %v4817
  %v6379 = vpop.f32.mrf.mxu0
  %v6380 = vadd.f32 %v6367, %v6379
  %v6381 = vpop.f32.mrf.mxu0
  %6382 = vdwg.mxu0
  %6383 = vmatpush.bf16.msra.mxu0 %v5788
  %6384 = vmatpush.bf16.msra.mxu0 %v5784
  %6385 = vmatpush.bf16.msra.mxu0 %v5780
  %6386 = vmatpush.bf16.msra.mxu0 %v5776
  %6387 = vmatpush.bf16.msra.mxu0 %v5772
  %6388 = vmatpush.bf16.msra.mxu0 %v5768
  %6389 = vmatpush.bf16.msra.mxu0 %v5764
  %6390 = vmatpush.bf16.msra.mxu0 %v5760
  %6391 = vmatmul.bf16.gmra.mxu0 %v4818
  %v6392 = vpop.f32.mrf.mxu0
  %v6393 = vadd.f32 %v6380, %v6392
  %v6394 = vpop.f32.mrf.mxu0
  %6395 = vdwg.mxu0
  %6396 = vmatpush.bf16.msra.mxu0 %v5820
  %6397 = vmatpush.bf16.msra.mxu0 %v5816
  %6398 = vmatpush.bf16.msra.mxu0 %v5812
  %6399 = vmatpush.bf16.msra.mxu0 %v5808
  %6400 = vmatpush.bf16.msra.mxu0 %v5804
  %6401 = vmatpush.bf16.msra.mxu0 %v5800
  %6402 = vmatpush.bf16.msra.mxu0 %v5796
  %6403 = vmatpush.bf16.msra.mxu0 %v5792
  %6404 = vmatmul.bf16.gmra.mxu0 %v4819
  %v6405 = vpop.f32.mrf.mxu0
  %v6406 = vadd.f32 %v6393, %v6405
  %v6407 = vpop.f32.mrf.mxu0
  %6408 = vdwg.mxu0
  %6409 = vmatpush.bf16.msra.mxu0 %v5852
  %6410 = vmatpush.bf16.msra.mxu0 %v5848
  %6411 = vmatpush.bf16.msra.mxu0 %v5844
  %6412 = vmatpush.bf16.msra.mxu0 %v5840
  %6413 = vmatpush.bf16.msra.mxu0 %v5836
  %6414 = vmatpush.bf16.msra.mxu0 %v5832
  %6415 = vmatpush.bf16.msra.mxu0 %v5828
  %6416 = vmatpush.bf16.msra.mxu0 %v5824
  %6417 = vmatmul.bf16.gmra.mxu0 %v4820
  %v6418 = vpop.f32.mrf.mxu0
  %v6419 = vadd.f32 %v6406, %v6418
  %v6420 = vpop.f32.mrf.mxu0
  %6421 = vdwg.mxu0
  %6422 = vmatpush.bf16.msra.mxu0 %v5629
  %6423 = vmatpush.bf16.msra.mxu0 %v5625
  %6424 = vmatpush.bf16.msra.mxu0 %v5621
  %6425 = vmatpush.bf16.msra.mxu0 %v5617
  %6426 = vmatpush.bf16.msra.mxu0 %v5613
  %6427 = vmatpush.bf16.msra.mxu0 %v5609
  %6428 = vmatpush.bf16.msra.mxu0 %v5605
  %6429 = vmatpush.bf16.msra.mxu0 %v5601
  %6430 = vmatmul.bf16.gmra.mxu0 %v4813
  %v6431 = vpop.f32.mrf.mxu0
  %v6432 = vadd.f32 %v4825, %v6431
  %v6433 = vpop.f32.mrf.mxu0
  %6434 = vdwg.mxu0
  %6435 = vmatpush.bf16.msra.mxu0 %v5661
  %6436 = vmatpush.bf16.msra.mxu0 %v5657
  %6437 = vmatpush.bf16.msra.mxu0 %v5653
  %6438 = vmatpush.bf16.msra.mxu0 %v5649
  %6439 = vmatpush.bf16.msra.mxu0 %v5645
  %6440 = vmatpush.bf16.msra.mxu0 %v5641
  %6441 = vmatpush.bf16.msra.mxu0 %v5637
  %6442 = vmatpush.bf16.msra.mxu0 %v5633
  %6443 = vmatmul.bf16.gmra.mxu0 %v4814
  %v6444 = vpop.f32.mrf.mxu0
  %v6445 = vadd.f32 %v6432, %v6444
  %v6446 = vpop.f32.mrf.mxu0
  %6447 = vdwg.mxu0
  %6448 = vmatpush.bf16.msra.mxu0 %v5693
  %6449 = vmatpush.bf16.msra.mxu0 %v5689
  %6450 = vmatpush.bf16.msra.mxu0 %v5685
  %6451 = vmatpush.bf16.msra.mxu0 %v5681
  %6452 = vmatpush.bf16.msra.mxu0 %v5677
  %6453 = vmatpush.bf16.msra.mxu0 %v5673
  %6454 = vmatpush.bf16.msra.mxu0 %v5669
  %6455 = vmatpush.bf16.msra.mxu0 %v5665
  %6456 = vmatmul.bf16.gmra.mxu0 %v4815
  %v6457 = vpop.f32.mrf.mxu0
  %v6458 = vadd.f32 %v6445, %v6457
  %v6459 = vpop.f32.mrf.mxu0
  %6460 = vdwg.mxu0
  %6461 = vmatpush.bf16.msra.mxu0 %v5725
  %6462 = vmatpush.bf16.msra.mxu0 %v5721
  %6463 = vmatpush.bf16.msra.mxu0 %v5717
  %6464 = vmatpush.bf16.msra.mxu0 %v5713
  %6465 = vmatpush.bf16.msra.mxu0 %v5709
  %6466 = vmatpush.bf16.msra.mxu0 %v5705
  %6467 = vmatpush.bf16.msra.mxu0 %v5701
  %6468 = vmatpush.bf16.msra.mxu0 %v5697
  %6469 = vmatmul.bf16.gmra.mxu0 %v4816
  %v6470 = vpop.f32.mrf.mxu0
  %v6471 = vadd.f32 %v6458, %v6470
  %v6472 = vpop.f32.mrf.mxu0
  %6473 = vdwg.mxu0
  %6474 = vmatpush.bf16.msra.mxu0 %v5757
  %6475 = vmatpush.bf16.msra.mxu0 %v5753
  %6476 = vmatpush.bf16.msra.mxu0 %v5749
  %6477 = vmatpush.bf16.msra.mxu0 %v5745
  %6478 = vmatpush.bf16.msra.mxu0 %v5741
  %6479 = vmatpush.bf16.msra.mxu0 %v5737
  %6480 = vmatpush.bf16.msra.mxu0 %v5733
  %6481 = vmatpush.bf16.msra.mxu0 %v5729
  %6482 = vmatmul.bf16.gmra.mxu0 %v4817
  %v6483 = vpop.f32.mrf.mxu0
  %v6484 = vadd.f32 %v6471, %v6483
  %v6485 = vpop.f32.mrf.mxu0
  %6486 = vdwg.mxu0
  %6487 = vmatpush.bf16.msra.mxu0 %v5789
  %6488 = vmatpush.bf16.msra.mxu0 %v5785
  %6489 = vmatpush.bf16.msra.mxu0 %v5781
  %6490 = vmatpush.bf16.msra.mxu0 %v5777
  %6491 = vmatpush.bf16.msra.mxu0 %v5773
  %6492 = vmatpush.bf16.msra.mxu0 %v5769
  %6493 = vmatpush.bf16.msra.mxu0 %v5765
  %6494 = vmatpush.bf16.msra.mxu0 %v5761
  %6495 = vmatmul.bf16.gmra.mxu0 %v4818
  %v6496 = vpop.f32.mrf.mxu0
  %v6497 = vadd.f32 %v6484, %v6496
  %v6498 = vpop.f32.mrf.mxu0
  %6499 = vdwg.mxu0
  %6500 = vmatpush.bf16.msra.mxu0 %v5821
  %6501 = vmatpush.bf16.msra.mxu0 %v5817
  %6502 = vmatpush.bf16.msra.mxu0 %v5813
  %6503 = vmatpush.bf16.msra.mxu0 %v5809
  %6504 = vmatpush.bf16.msra.mxu0 %v5805
  %6505 = vmatpush.bf16.msra.mxu0 %v5801
  %6506 = vmatpush.bf16.msra.mxu0 %v5797
  %6507 = vmatpush.bf16.msra.mxu0 %v5793
  %6508 = vmatmul.bf16.gmra.mxu0 %v4819
  %v6509 = vpop.f32.mrf.mxu0
  %v6510 = vadd.f32 %v6497, %v6509
  %v6511 = vpop.f32.mrf.mxu0
  %6512 = vdwg.mxu0
  %6513 = vmatpush.bf16.msra.mxu0 %v5853
  %6514 = vmatpush.bf16.msra.mxu0 %v5849
  %6515 = vmatpush.bf16.msra.mxu0 %v5845
  %6516 = vmatpush.bf16.msra.mxu0 %v5841
  %6517 = vmatpush.bf16.msra.mxu0 %v5837
  %6518 = vmatpush.bf16.msra.mxu0 %v5833
  %6519 = vmatpush.bf16.msra.mxu0 %v5829
  %6520 = vmatpush.bf16.msra.mxu0 %v5825
  %6521 = vmatmul.bf16.gmra.mxu0 %v4820
  %v6522 = vpop.f32.mrf.mxu0
  %v6523 = vadd.f32 %v6510, %v6522
  %v6524 = vpop.f32.mrf.mxu0
  %6525 = vdwg.mxu0
  %v6526 = vmax.f32 %v6211, 0.0
  %v6527 = vmax.f32 %v6315, 0.0
  %v6528 = vmax.f32 %v6419, 0.0
  %v6529 = vmax.f32 %v6523, 0.0
  %s6530 = smul.u32 4, 64
  %s6531 = smul.u32 %s6530, 2
  %s6532 = sshll.u32 %s6531, 4
  %6533 = dma.done %s221, %s6532
  %v6534 = vld [vmem:[#allocation4] sm:$0xff]
  %v6535 = vld [vmem:[#allocation4 + $0x8] sm:$0xff]
  %v6536 = vld [vmem:[#allocation4 + $0x10] sm:$0xff]
  %v6537 = vld [vmem:[#allocation4 + $0x18] sm:$0xff]
  %v6538 = vld [vmem:[#allocation4 + $0x20] sm:$0xff]
  %v6539 = vld [vmem:[#allocation4 + $0x28] sm:$0xff]
  %v6540 = vld [vmem:[#allocation4 + $0x30] sm:$0xff]
  %v6541 = vld [vmem:[#allocation4 + $0x38] sm:$0xff]
  %v6542 = vld [vmem:[#allocation4 + $0x40] sm:$0xff]
  %v6543 = vld [vmem:[#allocation4 + $0x48] sm:$0xff]
  %v6544 = vld [vmem:[#allocation4 + $0x50] sm:$0xff]
  %v6545 = vld [vmem:[#allocation4 + $0x58] sm:$0xff]
  %v6546 = vld [vmem:[#allocation4 + $0x60] sm:$0xff]
  %v6547 = vld [vmem:[#allocation4 + $0x68] sm:$0xff]
  %v6548 = vld [vmem:[#allocation4 + $0x70] sm:$0xff]
  %v6549 = vld [vmem:[#allocation4 + $0x78] sm:$0xff]
  %v6550 = vld [vmem:[#allocation4 + $0x80] sm:$0xff]
  %v6551 = vld [vmem:[#allocation4 + $0x88] sm:$0xff]
  %v6552 = vld [vmem:[#allocation4 + $0x90] sm:$0xff]
  %v6553 = vld [vmem:[#allocation4 + $0x98] sm:$0xff]
  %v6554 = vld [vmem:[#allocation4 + $0xa0] sm:$0xff]
  %v6555 = vld [vmem:[#allocation4 + $0xa8] sm:$0xff]
  %v6556 = vld [vmem:[#allocation4 + $0xb0] sm:$0xff]
  %v6557 = vld [vmem:[#allocation4 + $0xb8] sm:$0xff]
  %v6558 = vld [vmem:[#allocation4 + $0xc0] sm:$0xff]
  %v6559 = vld [vmem:[#allocation4 + $0xc8] sm:$0xff]
  %v6560 = vld [vmem:[#allocation4 + $0xd0] sm:$0xff]
  %v6561 = vld [vmem:[#allocation4 + $0xd8] sm:$0xff]
  %v6562 = vld [vmem:[#allocation4 + $0xe0] sm:$0xff]
  %v6563 = vld [vmem:[#allocation4 + $0xe8] sm:$0xff]
  %v6564 = vld [vmem:[#allocation4 + $0xf0] sm:$0xff]
  %v6565 = vld [vmem:[#allocation4 + $0xf8] sm:$0xff]
  %v6566 = vld [vmem:[#allocation4 + $0x100] sm:$0xff]
  %v6567 = vld [vmem:[#allocation4 + $0x108] sm:$0xff]
  %v6568 = vld [vmem:[#allocation4 + $0x110] sm:$0xff]
  %v6569 = vld [vmem:[#allocation4 + $0x118] sm:$0xff]
  %v6570 = vld [vmem:[#allocation4 + $0x120] sm:$0xff]
  %v6571 = vld [vmem:[#allocation4 + $0x128] sm:$0xff]
  %v6572 = vld [vmem:[#allocation4 + $0x130] sm:$0xff]
  %v6573 = vld [vmem:[#allocation4 + $0x138] sm:$0xff]
  %v6574 = vld [vmem:[#allocation4 + $0x140] sm:$0xff]
  %v6575 = vld [vmem:[#allocation4 + $0x148] sm:$0xff]
  %v6576 = vld [vmem:[#allocation4 + $0x150] sm:$0xff]
  %v6577 = vld [vmem:[#allocation4 + $0x158] sm:$0xff]
  %v6578 = vld [vmem:[#allocation4 + $0x160] sm:$0xff]
  %v6579 = vld [vmem:[#allocation4 + $0x168] sm:$0xff]
  %v6580 = vld [vmem:[#allocation4 + $0x170] sm:$0xff]
  %v6581 = vld [vmem:[#allocation4 + $0x178] sm:$0xff]
  %v6582 = vld [vmem:[#allocation4 + $0x180] sm:$0xff]
  %v6583 = vld [vmem:[#allocation4 + $0x188] sm:$0xff]
  %v6584 = vld [vmem:[#allocation4 + $0x190] sm:$0xff]
  %v6585 = vld [vmem:[#allocation4 + $0x198] sm:$0xff]
  %v6586 = vld [vmem:[#allocation4 + $0x1a0] sm:$0xff]
  %v6587 = vld [vmem:[#allocation4 + $0x1a8] sm:$0xff]
  %v6588 = vld [vmem:[#allocation4 + $0x1b0] sm:$0xff]
  %v6589 = vld [vmem:[#allocation4 + $0x1b8] sm:$0xff]
  %v6590 = vld [vmem:[#allocation4 + $0x1c0] sm:$0xff]
  %v6591 = vld [vmem:[#allocation4 + $0x1c8] sm:$0xff]
  %v6592 = vld [vmem:[#allocation4 + $0x1d0] sm:$0xff]
  %v6593 = vld [vmem:[#allocation4 + $0x1d8] sm:$0xff]
  %v6594 = vld [vmem:[#allocation4 + $0x1e0] sm:$0xff]
  %v6595 = vld [vmem:[#allocation4 + $0x1e8] sm:$0xff]
  %v6596 = vld [vmem:[#allocation4 + $0x1f0] sm:$0xff]
  %v6597 = vld [vmem:[#allocation4 + $0x1f8] sm:$0xff]
  %v6598 = vld [vmem:[%s15] sm:$0x3]
  %v6599 = vpack.c.bf16 %v6526, %v6526
  %v6600 = vpack.c.bf16 %v6527, %v6527
  %v6601 = vpack.c.bf16 %v6528, %v6528
  %v6602 = vpack.c.bf16 %v6529, %v6529
  %v6604 = vperm.slane %v6598, 0
  %v6605 = vperm.slane %v6598, 1
  %v6672 = vunpack.c.l.b16 %v6534
  %v6673 = vunpack.c.h.b16 %v6534
  %v6674 = vunpack.c.l.b16 %v6535
  %v6675 = vunpack.c.h.b16 %v6535
  %v6676 = vunpack.c.l.b16 %v6536
  %v6677 = vunpack.c.h.b16 %v6536
  %v6678 = vunpack.c.l.b16 %v6537
  %v6679 = vunpack.c.h.b16 %v6537
  %v6680 = vunpack.c.l.b16 %v6538
  %v6681 = vunpack.c.h.b16 %v6538
  %v6682 = vunpack.c.l.b16 %v6539
  %v6683 = vunpack.c.h.b16 %v6539
  %v6684 = vunpack.c.l.b16 %v6540
  %v6685 = vunpack.c.h.b16 %v6540
  %v6686 = vunpack.c.l.b16 %v6541
  %v6687 = vunpack.c.h.b16 %v6541
  %v6688 = vunpack.c.l.b16 %v6542
  %v6689 = vunpack.c.h.b16 %v6542
  %v6690 = vunpack.c.l.b16 %v6543
  %v6691 = vunpack.c.h.b16 %v6543
  %v6692 = vunpack.c.l.b16 %v6544
  %v6693 = vunpack.c.h.b16 %v6544
  %v6694 = vunpack.c.l.b16 %v6545
  %v6695 = vunpack.c.h.b16 %v6545
  %v6696 = vunpack.c.l.b16 %v6546
  %v6697 = vunpack.c.h.b16 %v6546
  %v6698 = vunpack.c.l.b16 %v6547
  %v6699 = vunpack.c.h.b16 %v6547
  %v6700 = vunpack.c.l.b16 %v6548
  %v6701 = vunpack.c.h.b16 %v6548
  %v6702 = vunpack.c.l.b16 %v6549
  %v6703 = vunpack.c.h.b16 %v6549
  %v6704 = vunpack.c.l.b16 %v6550
  %v6705 = vunpack.c.h.b16 %v6550
  %v6706 = vunpack.c.l.b16 %v6551
  %v6707 = vunpack.c.h.b16 %v6551
  %v6708 = vunpack.c.l.b16 %v6552
  %v6709 = vunpack.c.h.b16 %v6552
  %v6710 = vunpack.c.l.b16 %v6553
  %v6711 = vunpack.c.h.b16 %v6553
  %v6712 = vunpack.c.l.b16 %v6554
  %v6713 = vunpack.c.h.b16 %v6554
  %v6714 = vunpack.c.l.b16 %v6555
  %v6715 = vunpack.c.h.b16 %v6555
  %v6716 = vunpack.c.l.b16 %v6556
  %v6717 = vunpack.c.h.b16 %v6556
  %v6718 = vunpack.c.l.b16 %v6557
  %v6719 = vunpack.c.h.b16 %v6557
  %v6720 = vunpack.c.l.b16 %v6558
  %v6721 = vunpack.c.h.b16 %v6558
  %v6722 = vunpack.c.l.b16 %v6559
  %v6723 = vunpack.c.h.b16 %v6559
  %v6724 = vunpack.c.l.b16 %v6560
  %v6725 = vunpack.c.h.b16 %v6560
  %v6726 = vunpack.c.l.b16 %v6561
  %v6727 = vunpack.c.h.b16 %v6561
  %v6728 = vunpack.c.l.b16 %v6562
  %v6729 = vunpack.c.h.b16 %v6562
  %v6730 = vunpack.c.l.b16 %v6563
  %v6731 = vunpack.c.h.b16 %v6563
  %v6732 = vunpack.c.l.b16 %v6564
  %v6733 = vunpack.c.h.b16 %v6564
  %v6734 = vunpack.c.l.b16 %v6565
  %v6735 = vunpack.c.h.b16 %v6565
  %v6736 = vunpack.c.l.b16 %v6566
  %v6737 = vunpack.c.h.b16 %v6566
  %v6738 = vunpack.c.l.b16 %v6567
  %v6739 = vunpack.c.h.b16 %v6567
  %v6740 = vunpack.c.l.b16 %v6568
  %v6741 = vunpack.c.h.b16 %v6568
  %v6742 = vunpack.c.l.b16 %v6569
  %v6743 = vunpack.c.h.b16 %v6569
  %v6744 = vunpack.c.l.b16 %v6570
  %v6745 = vunpack.c.h.b16 %v6570
  %v6746 = vunpack.c.l.b16 %v6571
  %v6747 = vunpack.c.h.b16 %v6571
  %v6748 = vunpack.c.l.b16 %v6572
  %v6749 = vunpack.c.h.b16 %v6572
  %v6750 = vunpack.c.l.b16 %v6573
  %v6751 = vunpack.c.h.b16 %v6573
  %v6752 = vunpack.c.l.b16 %v6574
  %v6753 = vunpack.c.h.b16 %v6574
  %v6754 = vunpack.c.l.b16 %v6575
  %v6755 = vunpack.c.h.b16 %v6575
  %v6756 = vunpack.c.l.b16 %v6576
  %v6757 = vunpack.c.h.b16 %v6576
  %v6758 = vunpack.c.l.b16 %v6577
  %v6759 = vunpack.c.h.b16 %v6577
  %v6760 = vunpack.c.l.b16 %v6578
  %v6761 = vunpack.c.h.b16 %v6578
  %v6762 = vunpack.c.l.b16 %v6579
  %v6763 = vunpack.c.h.b16 %v6579
  %v6764 = vunpack.c.l.b16 %v6580
  %v6765 = vunpack.c.h.b16 %v6580
  %v6766 = vunpack.c.l.b16 %v6581
  %v6767 = vunpack.c.h.b16 %v6581
  %v6768 = vunpack.c.l.b16 %v6582
  %v6769 = vunpack.c.h.b16 %v6582
  %v6770 = vunpack.c.l.b16 %v6583
  %v6771 = vunpack.c.h.b16 %v6583
  %v6772 = vunpack.c.l.b16 %v6584
  %v6773 = vunpack.c.h.b16 %v6584
  %v6774 = vunpack.c.l.b16 %v6585
  %v6775 = vunpack.c.h.b16 %v6585
  %v6776 = vunpack.c.l.b16 %v6586
  %v6777 = vunpack.c.h.b16 %v6586
  %v6778 = vunpack.c.l.b16 %v6587
  %v6779 = vunpack.c.h.b16 %v6587
  %v6780 = vunpack.c.l.b16 %v6588
  %v6781 = vunpack.c.h.b16 %v6588
  %v6782 = vunpack.c.l.b16 %v6589
  %v6783 = vunpack.c.h.b16 %v6589
  %v6784 = vunpack.c.l.b16 %v6590
  %v6785 = vunpack.c.h.b16 %v6590
  %v6786 = vunpack.c.l.b16 %v6591
  %v6787 = vunpack.c.h.b16 %v6591
  %v6788 = vunpack.c.l.b16 %v6592
  %v6789 = vunpack.c.h.b16 %v6592
  %v6790 = vunpack.c.l.b16 %v6593
  %v6791 = vunpack.c.h.b16 %v6593
  %v6792 = vunpack.c.l.b16 %v6594
  %v6793 = vunpack.c.h.b16 %v6594
  %v6794 = vunpack.c.l.b16 %v6595
  %v6795 = vunpack.c.h.b16 %v6595
  %v6796 = vunpack.c.l.b16 %v6596
  %v6797 = vunpack.c.h.b16 %v6596
  %v6798 = vunpack.c.l.b16 %v6597
  %v6799 = vunpack.c.h.b16 %v6597
  %v6800 = vpack.c.b16 %v6674, %v6672
  %v6801 = vpack.c.b16 %v6675, %v6673
  %v6802 = vpack.c.b16 %v6678, %v6676
  %v6803 = vpack.c.b16 %v6679, %v6677
  %v6804 = vpack.c.b16 %v6682, %v6680
  %v6805 = vpack.c.b16 %v6683, %v6681
  %v6806 = vpack.c.b16 %v6686, %v6684
  %v6807 = vpack.c.b16 %v6687, %v6685
  %v6808 = vpack.c.b16 %v6690, %v6688
  %v6809 = vpack.c.b16 %v6691, %v6689
  %v6810 = vpack.c.b16 %v6694, %v6692
  %v6811 = vpack.c.b16 %v6695, %v6693
  %v6812 = vpack.c.b16 %v6698, %v6696
  %v6813 = vpack.c.b16 %v6699, %v6697
  %v6814 = vpack.c.b16 %v6702, %v6700
  %v6815 = vpack.c.b16 %v6703, %v6701
  %v6816 = vpack.c.b16 %v6706, %v6704
  %v6817 = vpack.c.b16 %v6707, %v6705
  %v6818 = vpack.c.b16 %v6710, %v6708
  %v6819 = vpack.c.b16 %v6711, %v6709
  %v6820 = vpack.c.b16 %v6714, %v6712
  %v6821 = vpack.c.b16 %v6715, %v6713
  %v6822 = vpack.c.b16 %v6718, %v6716
  %v6823 = vpack.c.b16 %v6719, %v6717
  %v6824 = vpack.c.b16 %v6722, %v6720
  %v6825 = vpack.c.b16 %v6723, %v6721
  %v6826 = vpack.c.b16 %v6726, %v6724
  %v6827 = vpack.c.b16 %v6727, %v6725
  %v6828 = vpack.c.b16 %v6730, %v6728
  %v6829 = vpack.c.b16 %v6731, %v6729
  %v6830 = vpack.c.b16 %v6734, %v6732
  %v6831 = vpack.c.b16 %v6735, %v6733
  %v6832 = vpack.c.b16 %v6738, %v6736
  %v6833 = vpack.c.b16 %v6739, %v6737
  %v6834 = vpack.c.b16 %v6742, %v6740
  %v6835 = vpack.c.b16 %v6743, %v6741
  %v6836 = vpack.c.b16 %v6746, %v6744
  %v6837 = vpack.c.b16 %v6747, %v6745
  %v6838 = vpack.c.b16 %v6750, %v6748
  %v6839 = vpack.c.b16 %v6751, %v6749
  %v6840 = vpack.c.b16 %v6754, %v6752
  %v6841 = vpack.c.b16 %v6755, %v6753
  %v6842 = vpack.c.b16 %v6758, %v6756
  %v6843 = vpack.c.b16 %v6759, %v6757
  %v6844 = vpack.c.b16 %v6762, %v6760
  %v6845 = vpack.c.b16 %v6763, %v6761
  %v6846 = vpack.c.b16 %v6766, %v6764
  %v6847 = vpack.c.b16 %v6767, %v6765
  %v6848 = vpack.c.b16 %v6770, %v6768
  %v6849 = vpack.c.b16 %v6771, %v6769
  %v6850 = vpack.c.b16 %v6774, %v6772
  %v6851 = vpack.c.b16 %v6775, %v6773
  %v6852 = vpack.c.b16 %v6778, %v6776
  %v6853 = vpack.c.b16 %v6779, %v6777
  %v6854 = vpack.c.b16 %v6782, %v6780
  %v6855 = vpack.c.b16 %v6783, %v6781
  %v6856 = vpack.c.b16 %v6786, %v6784
  %v6857 = vpack.c.b16 %v6787, %v6785
  %v6858 = vpack.c.b16 %v6790, %v6788
  %v6859 = vpack.c.b16 %v6791, %v6789
  %v6860 = vpack.c.b16 %v6794, %v6792
  %v6861 = vpack.c.b16 %v6795, %v6793
  %v6862 = vpack.c.b16 %v6798, %v6796
  %v6863 = vpack.c.b16 %v6799, %v6797
  %6928 = vmatpush.bf16.msra.mxu0 %v6814
  %6929 = vmatpush.bf16.msra.mxu0 %v6812
  %6930 = vmatpush.bf16.msra.mxu0 %v6810
  %6931 = vmatpush.bf16.msra.mxu0 %v6808
  %6932 = vmatpush.bf16.msra.mxu0 %v6806
  %6933 = vmatpush.bf16.msra.mxu0 %v6804
  %6934 = vmatpush.bf16.msra.mxu0 %v6802
  %6935 = vmatpush.bf16.msra.mxu0 %v6800
  %6936 = vmatmul.bf16.gmra.mxu0 %v6599
  %v6937 = vpop.f32.mrf.mxu0
  %v6938 = vadd.f32 %v6604, %v6937
  %v6939 = vpop.f32.mrf.mxu0
  %6940 = vdwg.mxu0
  %6941 = vmatpush.bf16.msra.mxu0 %v6830
  %6942 = vmatpush.bf16.msra.mxu0 %v6828
  %6943 = vmatpush.bf16.msra.mxu0 %v6826
  %6944 = vmatpush.bf16.msra.mxu0 %v6824
  %6945 = vmatpush.bf16.msra.mxu0 %v6822
  %6946 = vmatpush.bf16.msra.mxu0 %v6820
  %6947 = vmatpush.bf16.msra.mxu0 %v6818
  %6948 = vmatpush.bf16.msra.mxu0 %v6816
  %6949 = vmatmul.bf16.gmra.mxu0 %v6600
  %v6950 = vpop.f32.mrf.mxu0
  %v6951 = vadd.f32 %v6938, %v6950
  %v6952 = vpop.f32.mrf.mxu0
  %6953 = vdwg.mxu0
  %6954 = vmatpush.bf16.msra.mxu0 %v6846
  %6955 = vmatpush.bf16.msra.mxu0 %v6844
  %6956 = vmatpush.bf16.msra.mxu0 %v6842
  %6957 = vmatpush.bf16.msra.mxu0 %v6840
  %6958 = vmatpush.bf16.msra.mxu0 %v6838
  %6959 = vmatpush.bf16.msra.mxu0 %v6836
  %6960 = vmatpush.bf16.msra.mxu0 %v6834
  %6961 = vmatpush.bf16.msra.mxu0 %v6832
  %6962 = vmatmul.bf16.gmra.mxu0 %v6601
  %v6963 = vpop.f32.mrf.mxu0
  %v6964 = vadd.f32 %v6951, %v6963
  %v6965 = vpop.f32.mrf.mxu0
  %6966 = vdwg.mxu0
  %6967 = vmatpush.bf16.msra.mxu0 %v6862
  %6968 = vmatpush.bf16.msra.mxu0 %v6860
  %6969 = vmatpush.bf16.msra.mxu0 %v6858
  %6970 = vmatpush.bf16.msra.mxu0 %v6856
  %6971 = vmatpush.bf16.msra.mxu0 %v6854
  %6972 = vmatpush.bf16.msra.mxu0 %v6852
  %6973 = vmatpush.bf16.msra.mxu0 %v6850
  %6974 = vmatpush.bf16.msra.mxu0 %v6848
  %6975 = vmatmul.bf16.gmra.mxu0 %v6602
  %v6976 = vpop.f32.mrf.mxu0
  %v6977 = vadd.f32 %v6964, %v6976
  %v6978 = vpop.f32.mrf.mxu0
  %6979 = vdwg.mxu0
  %6980 = vmatpush.bf16.msra.mxu0 %v6815
  %6981 = vmatpush.bf16.msra.mxu0 %v6813
  %6982 = vmatpush.bf16.msra.mxu0 %v6811
  %6983 = vmatpush.bf16.msra.mxu0 %v6809
  %6984 = vmatpush.bf16.msra.mxu0 %v6807
  %6985 = vmatpush.bf16.msra.mxu0 %v6805
  %6986 = vmatpush.bf16.msra.mxu0 %v6803
  %6987 = vmatpush.bf16.msra.mxu0 %v6801
  %6988 = vmatmul.bf16.gmra.mxu0 %v6599
  %v6989 = vpop.f32.mrf.mxu0
  %v6990 = vadd.f32 %v6605, %v6989
  %v6991 = vpop.f32.mrf.mxu0
  %6992 = vdwg.mxu0
  %6993 = vmatpush.bf16.msra.mxu0 %v6831
  %6994 = vmatpush.bf16.msra.mxu0 %v6829
  %6995 = vmatpush.bf16.msra.mxu0 %v6827
  %6996 = vmatpush.bf16.msra.mxu0 %v6825
  %6997 = vmatpush.bf16.msra.mxu0 %v6823
  %6998 = vmatpush.bf16.msra.mxu0 %v6821
  %6999 = vmatpush.bf16.msra.mxu0 %v6819
  %7000 = vmatpush.bf16.msra.mxu0 %v6817
  %7001 = vmatmul.bf16.gmra.mxu0 %v6600
  %v7002 = vpop.f32.mrf.mxu0
  %v7003 = vadd.f32 %v6990, %v7002
  %v7004 = vpop.f32.mrf.mxu0
  %7005 = vdwg.mxu0
  %7006 = vmatpush.bf16.msra.mxu0 %v6847
  %7007 = vmatpush.bf16.msra.mxu0 %v6845
  %7008 = vmatpush.bf16.msra.mxu0 %v6843
  %7009 = vmatpush.bf16.msra.mxu0 %v6841
  %7010 = vmatpush.bf16.msra.mxu0 %v6839
  %7011 = vmatpush.bf16.msra.mxu0 %v6837
  %7012 = vmatpush.bf16.msra.mxu0 %v6835
  %7013 = vmatpush.bf16.msra.mxu0 %v6833
  %7014 = vmatmul.bf16.gmra.mxu0 %v6601
  %v7015 = vpop.f32.mrf.mxu0
  %v7016 = vadd.f32 %v7003, %v7015
  %v7017 = vpop.f32.mrf.mxu0
  %7018 = vdwg.mxu0
  %7019 = vmatpush.bf16.msra.mxu0 %v6863
  %7020 = vmatpush.bf16.msra.mxu0 %v6861
  %7021 = vmatpush.bf16.msra.mxu0 %v6859
  %7022 = vmatpush.bf16.msra.mxu0 %v6857
  %7023 = vmatpush.bf16.msra.mxu0 %v6855
  %7024 = vmatpush.bf16.msra.mxu0 %v6853
  %7025 = vmatpush.bf16.msra.mxu0 %v6851
  %7026 = vmatpush.bf16.msra.mxu0 %v6849
  %7027 = vmatmul.bf16.gmra.mxu0 %v6602
  %v7028 = vpop.f32.mrf.mxu0
  %v7029 = vadd.f32 %v7016, %v7028
  %v7030 = vpop.f32.mrf.mxu0
  %7031 = vdwg.mxu0
  %v7032 = vmax.f32 %v6977, 0.0
  %v7033 = vmax.f32 %v7029, 0.0
  %v7034 = vld [vmem:[%s16] sm:$0xf]
  %v7035 = vld [vmem:[%s16 + $0x4] sm:$0xf]
  %v7036 = vld [vmem:[%s16 + $0x8] sm:$0xf]
  %v7037 = vld [vmem:[%s16 + $0xc] sm:$0xf]
  %v7038 = vld [vmem:[%s16 + $0x10] sm:$0xf]
  %v7039 = vld [vmem:[%s16 + $0x14] sm:$0xf]
  %v7040 = vld [vmem:[%s16 + $0x18] sm:$0xf]
  %v7041 = vld [vmem:[%s16 + $0x1c] sm:$0xf]
  %v7042 = vld [vmem:[%s16 + $0x20] sm:$0xf]
  %v7043 = vld [vmem:[%s16 + $0x24] sm:$0xf]
  %v7044 = vld [vmem:[%s16 + $0x28] sm:$0xf]
  %v7045 = vld [vmem:[%s16 + $0x2c] sm:$0xf]
  %v7046 = vld [vmem:[%s16 + $0x30] sm:$0xf]
  %v7047 = vld [vmem:[%s16 + $0x34] sm:$0xf]
  %v7048 = vld [vmem:[%s16 + $0x38] sm:$0xf]
  %v7049 = vld [vmem:[%s16 + $0x3c] sm:$0xf]
  %v7050 = vld [vmem:[%s16 + $0x40] sm:$0xf]
  %v7051 = vld [vmem:[%s16 + $0x44] sm:$0xf]
  %v7052 = vld [vmem:[%s16 + $0x48] sm:$0xf]
  %v7053 = vld [vmem:[%s16 + $0x4c] sm:$0xf]
  %v7054 = vld [vmem:[%s16 + $0x50] sm:$0xf]
  %v7055 = vld [vmem:[%s16 + $0x54] sm:$0xf]
  %v7056 = vld [vmem:[%s16 + $0x58] sm:$0xf]
  %v7057 = vld [vmem:[%s16 + $0x5c] sm:$0xf]
  %v7058 = vld [vmem:[%s16 + $0x60] sm:$0xf]
  %v7059 = vld [vmem:[%s16 + $0x64] sm:$0xf]
  %v7060 = vld [vmem:[%s16 + $0x68] sm:$0xf]
  %v7061 = vld [vmem:[%s16 + $0x6c] sm:$0xf]
  %v7062 = vld [vmem:[%s16 + $0x70] sm:$0xf]
  %v7063 = vld [vmem:[%s16 + $0x74] sm:$0xf]
  %v7064 = vld [vmem:[%s16 + $0x78] sm:$0xf]
  %v7065 = vld [vmem:[%s16 + $0x7c] sm:$0xf]
  %v7066 = vld [vmem:[%s17] sm:$0x1]
  %v7067 = vpack.c.bf16 %v7032, %v7032
  %v7068 = vpack.c.bf16 %v7033, %v7033
  %v7070 = vperm.slane %v7066, 0
  %v7104 = vunpack.c.l.b16 %v7034
  %v7105 = vunpack.c.l.b16 %v7035
  %v7106 = vunpack.c.l.b16 %v7036
  %v7107 = vunpack.c.l.b16 %v7037
  %v7108 = vunpack.c.l.b16 %v7038
  %v7109 = vunpack.c.l.b16 %v7039
  %v7110 = vunpack.c.l.b16 %v7040
  %v7111 = vunpack.c.l.b16 %v7041
  %v7112 = vunpack.c.l.b16 %v7042
  %v7113 = vunpack.c.l.b16 %v7043
  %v7114 = vunpack.c.l.b16 %v7044
  %v7115 = vunpack.c.l.b16 %v7045
  %v7116 = vunpack.c.l.b16 %v7046
  %v7117 = vunpack.c.l.b16 %v7047
  %v7118 = vunpack.c.l.b16 %v7048
  %v7119 = vunpack.c.l.b16 %v7049
  %v7120 = vunpack.c.l.b16 %v7050
  %v7121 = vunpack.c.l.b16 %v7051
  %v7122 = vunpack.c.l.b16 %v7052
  %v7123 = vunpack.c.l.b16 %v7053
  %v7124 = vunpack.c.l.b16 %v7054
  %v7125 = vunpack.c.l.b16 %v7055
  %v7126 = vunpack.c.l.b16 %v7056
  %v7127 = vunpack.c.l.b16 %v7057
  %v7128 = vunpack.c.l.b16 %v7058
  %v7129 = vunpack.c.l.b16 %v7059
  %v7130 = vunpack.c.l.b16 %v7060
  %v7131 = vunpack.c.l.b16 %v7061
  %v7132 = vunpack.c.l.b16 %v7062
  %v7133 = vunpack.c.l.b16 %v7063
  %v7134 = vunpack.c.l.b16 %v7064
  %v7135 = vunpack.c.l.b16 %v7065
  %v7136 = vpack.c.b16 %v7105, %v7104
  %v7137 = vpack.c.b16 %v7107, %v7106
  %v7138 = vpack.c.b16 %v7109, %v7108
  %v7139 = vpack.c.b16 %v7111, %v7110
  %v7140 = vpack.c.b16 %v7113, %v7112
  %v7141 = vpack.c.b16 %v7115, %v7114
  %v7142 = vpack.c.b16 %v7117, %v7116
  %v7143 = vpack.c.b16 %v7119, %v7118
  %v7144 = vpack.c.b16 %v7121, %v7120
  %v7145 = vpack.c.b16 %v7123, %v7122
  %v7146 = vpack.c.b16 %v7125, %v7124
  %v7147 = vpack.c.b16 %v7127, %v7126
  %v7148 = vpack.c.b16 %v7129, %v7128
  %v7149 = vpack.c.b16 %v7131, %v7130
  %v7150 = vpack.c.b16 %v7133, %v7132
  %v7151 = vpack.c.b16 %v7135, %v7134
  %7168 = vmatpush.bf16.msra.mxu0 %v7143
  %7169 = vmatpush.bf16.msra.mxu0 %v7142
  %7170 = vmatpush.bf16.msra.mxu0 %v7141
  %7171 = vmatpush.bf16.msra.mxu0 %v7140
  %7172 = vmatpush.bf16.msra.mxu0 %v7139
  %7173 = vmatpush.bf16.msra.mxu0 %v7138
  %7174 = vmatpush.bf16.msra.mxu0 %v7137
  %7175 = vmatpush.bf16.msra.mxu0 %v7136
  %7176 = vmatmul.bf16.gmra.mxu0 %v7067
  %v7177 = vpop.f32.mrf.mxu0
  %v7178 = vadd.f32 %v7070, %v7177
  %v7179 = vpop.f32.mrf.mxu0
  %7180 = vdwg.mxu0
  %7181 = vmatpush.bf16.msra.mxu0 %v7151
  %7182 = vmatpush.bf16.msra.mxu0 %v7150
  %7183 = vmatpush.bf16.msra.mxu0 %v7149
  %7184 = vmatpush.bf16.msra.mxu0 %v7148
  %7185 = vmatpush.bf16.msra.mxu0 %v7147
  %7186 = vmatpush.bf16.msra.mxu0 %v7146
  %7187 = vmatpush.bf16.msra.mxu0 %v7145
  %7188 = vmatpush.bf16.msra.mxu0 %v7144
  %7189 = vmatmul.bf16.gmra.mxu0 %v7068
  %v7190 = vpop.f32.mrf.mxu0
  %v7191 = vadd.f32 %v7178, %v7190
  %v7192 = vpop.f32.mrf.mxu0
  %7193 = vdwg.mxu0
  %vm7194 = vcmask 66560
  %7195 = vst.msk [vmem:[%s21] sm:$0x3] %vm7194, %v7191
  // Predicated region
  $region116: #{tnet_forward.1} parent=0 // pred_check
    _
  $region117: #{tnet_forward.1} parent=0 // pred_check_branch
    %7197 = sbr.rel (0) target = $region119
  $region118: #{tnet_forward.1} parent=0 // pred_region
    _
  $region119: #{tnet_forward.1} parent=0 // pred_fallthru
    _
  // Predicated region
  $region120: #{tnet_forward.1} parent=0 // pred_check
    _
  $region121: #{tnet_forward.1} parent=0 // pred_check_branch
    %7199 = sbr.rel (0) target = $region123
  $region122: #{tnet_forward.1} parent=0 // pred_region
    _
  $region123: #{tnet_forward.1} parent=0 // pred_fallthru
    _
  %7200 = vsyncmov [#allocation6]
  %s7201 = vpop.sfrf %7200
  %p7202 = scmp.eq.s32.totalorder %s7201, 0
  %p7203 = pneg %p7202
  %7205 = shalt.err (%p7203)
  %s7206 = scalar_lea.sflag [#allocation6], 1
  %7207 = vsyncmov %s7206
  %s7208 = vpop.sfrf %7207
  %p7209 = scmp.eq.s32.totalorder %s7208, 0
  %p7210 = pneg %p7209
  %7212 = shalt.err (%p7210)
  %s7213 = scalar_lea.sflag [#allocation6], 2
  %7214 = vsyncmov %s7213
  %s7215 = vpop.sfrf %7214
  %p7216 = scmp.eq.s32.totalorder %s7215, 0
  %p7217 = pneg %p7216
  %7219 = shalt.err (%p7217)

</llo_original>
